<compile_context>
chip_gen: v7x
topology: tpu7x:2x2x1
jax: 0.10.0
libtpu: 0.0.40
codegen_flags: <defaults>
</compile_context>

<pallas_src>
import functools
import math

import jax
import jax.numpy as jnp
from jax import lax
from jax.experimental import pallas as pl
from jax.experimental.pallas import tpu as pltpu


# ---------------------------------------------------------------------------
# Wrapper-side prep (layout plumbing only; all MACs run inside Pallas)
# ---------------------------------------------------------------------------
def _standardize_pack_3x3(w_oihw, eps):
    """Torch (O, I, 3, 3) weight -> weight-standardized (9, I, O), tap = dy*3 + dx."""
    o, i, kh, kw = w_oihw.shape
    wf = w_oihw.astype(jnp.float32)
    mean = jnp.mean(wf, axis=(1, 2, 3), keepdims=True)
    var = jnp.mean((wf - mean) ** 2, axis=(1, 2, 3), keepdims=True)
    wn = (wf - mean) * lax.rsqrt(var + eps)
    return jnp.transpose(wn, (2, 3, 1, 0)).reshape(kh * kw, i, o)


def _pad_flat(x):
    """(B, H, W, C) -> (B, (H+3)*(W+2), C): SAME 3x3 halo + 1 extra bottom row so every
    tap's contiguous row slice of length H*(W+2) stays in bounds."""
    b, h, w, c = x.shape
    xp = jnp.pad(x, ((0, 0), (1, 2), (1, 1), (0, 0)))
    return xp.reshape(b, (h + 3) * (w + 2), c)


def _pick_vmem_limit():
    """Raise the 32 MB scoped-VMEM default where the chip has headroom (v5e/v6e have
    128 MiB physical); stay ~48 MB on v7x (64 MiB physical)."""
    try:
        info = pltpu.get_tpu_info()
        cap = getattr(info, "vmem_capacity_bytes", None)
        if cap:
            return int(min(cap * 3 // 4, 100 * 1024 * 1024))
    except Exception:
        pass
    return 48 * 1024 * 1024


# ---------------------------------------------------------------------------
# Fused Block kernel: 3x3 shifted-window conv + GroupNorm + [FiLM] + SiLU
# (+ fused residual add / 1x1 conv for the second block)
# ---------------------------------------------------------------------------
def _make_block_kernel(*, taps_off, hwp, eps, with_film, with_residual,
                       residual_proj, res_off, compute_dtype):
    def kernel(xp_ref, w_ref, cvec_ref, mask_ref, gmat_ref, *rest):
        rest = list(rest)
        t_ref = wmlp_ref = xres_ref = wres_ref = None
        if with_film:
            t_ref = rest.pop(0)
            wmlp_ref = rest.pop(0)
        if with_residual:
            xres_ref = rest.pop(0)
            if residual_proj:
                wres_ref = rest.pop(0)
        (o_ref,) = rest

        # --- 3x3 conv: 9 shifted-window MXU matmuls, f32 accumulation ------------
        # Output "row" p = y*(W+2)+x; input row for tap (dy,dx) is p + dy*(W+2)+dx,
        # a contiguous static slice of the padded-flat activation.
        acc = None
        for tap, off in enumerate(taps_off):
            lhs = xp_ref[0, off:off + hwp, :]
            part = jnp.dot(lhs, w_ref[tap], preferred_element_type=jnp.float32)
            acc = part if acc is None else acc + part
        acc = acc + cvec_ref[0:1, :]                              # conv bias

        # --- GroupNorm: masked single-pass stats (garbage columns x>=W excluded) --
        m = mask_ref[...]                                         # (HWp, 1)
        am = acc * m
        s1 = jnp.sum(am, axis=0, keepdims=True)                   # (1, C)  sum
        s2 = jnp.sum(am * acc, axis=0, keepdims=True)             # (1, C)  sum of squares
        mean_c = jnp.dot(s1, gmat_ref[...], preferred_element_type=jnp.float32)
        ex2_c = jnp.dot(s2, gmat_ref[...], preferred_element_type=jnp.float32)
        var_c = jnp.maximum(ex2_c - mean_c * mean_c, 0.0)
        a = lax.rsqrt(var_c + eps) * cvec_ref[1:2, :]             # gamma folded in
        b = cvec_ref[2:3, :] - mean_c * a                         # beta folded in

        # --- FiLM from the time embedding (fused SiLU -> Linear), block1 only -----
        if with_film:
            t = t_ref[0].astype(jnp.float32)                      # (1, Tdim)
            t = (t * jax.nn.sigmoid(t)).astype(compute_dtype)
            scale = jnp.dot(t, wmlp_ref[0], preferred_element_type=jnp.float32) \
                + cvec_ref[4:5, :]
            shift = jnp.dot(t, wmlp_ref[1], preferred_element_type=jnp.float32) \
                + cvec_ref[5:6, :]
            a = a * (scale + 1.0)
            b = b * (scale + 1.0) + shift

        # --- single elementwise pass: normalize/affine/FiLM, then SiLU ------------
        y = acc * a + b
        y = y * jax.nn.sigmoid(y)

        # --- fused residual (1x1 conv if dim != dim_out, else direct add) ---------
        if with_residual:
            xr = xres_ref[0, res_off:res_off + hwp, :]
            if residual_proj:
                y = y + jnp.dot(xr, wres_ref[...],
                                preferred_element_type=jnp.float32) + cvec_ref[3:4, :]
            else:
                y = y + xr.astype(jnp.float32)

        o_ref[0] = y.astype(o_ref.dtype)

    return kernel


def fused_block(xpad, wconv, cvec, mask, gmat, *, H, W, eps, out_dtype, vmem_limit,
                temb=None, wmlp=None, residual=None):
    bsz, rp, cin = xpad.shape
    cout = wconv.shape[-1]
    hwp = H * (W + 2)
    taps_off = tuple(dy * (W + 2) + dx for dy in range(3) for dx in range(3))

    with_film = temb is not None
    with_residual = residual is not None
    residual_proj = False

    inputs = [xpad, wconv, cvec, mask, gmat]
    in_specs = [
        pl.BlockSpec((1, rp, cin), lambda i: (i, 0, 0)),          # padded activation
        pl.BlockSpec(wconv.shape, lambda i: (0, 0, 0)),           # (9, Cin, Cout) weights
        pl.BlockSpec(cvec.shape, lambda i: (0, 0)),               # packed per-channel vecs
        pl.BlockSpec(mask.shape, lambda i: (0, 0)),               # valid-column mask
        pl.BlockSpec(gmat.shape, lambda i: (0, 0)),               # group-averaging matrix
    ]
    if with_film:
        tdim = temb.shape[-1]
        inputs += [temb, wmlp]
        in_specs += [pl.BlockSpec((1, 1, tdim), lambda i: (i, 0, 0)),
                     pl.BlockSpec(wmlp.shape, lambda i: (0, 0, 0))]
    if with_residual:
        xres, wres = residual
        inputs += [xres]
        in_specs += [pl.BlockSpec((1, xres.shape[1], xres.shape[2]),
                                  lambda i: (i, 0, 0))]
        if wres is not None:
            residual_proj = True
            inputs += [wres]
            in_specs += [pl.BlockSpec(wres.shape, lambda i: (0, 0))]

    kernel = _make_block_kernel(
        taps_off=taps_off, hwp=hwp, eps=eps,
        with_film=with_film, with_residual=with_residual,
        residual_proj=residual_proj, res_off=(W + 2) + 1,
        compute_dtype=wconv.dtype)

    return pl.pallas_call(
        kernel,
        out_shape=jax.ShapeDtypeStruct((bsz, hwp, cout), out_dtype),
        grid_spec=pltpu.PrefetchScalarGridSpec(
            num_scalar_prefetch=0,
            grid=(bsz,),
            in_specs=in_specs,
            out_specs=pl.BlockSpec((1, hwp, cout), lambda i: (i, 0, 0)),
        ),
        compiler_params=pltpu.CompilerParams(
            dimension_semantics=("parallel",),
            vmem_limit_bytes=vmem_limit,
        ),
    )(*inputs)


# ---------------------------------------------------------------------------
# Full ResnetBlock forward (NHWC activations, torch-layout conv weights)
# ---------------------------------------------------------------------------
def resnet_block_forward(x, time_emb, params, *, groups, compute_dtype=None):
    """x: (B, H, W, dim) NHWC, time_emb: (B, time_emb_dim) -> (B, H, W, dim_out)."""
    b, h, w, cin = x.shape
    cout = params["w1"].shape[0]
    assert cout % groups == 0, "GroupNorm requires dim_out % groups == 0"
    cdt = compute_dtype if compute_dtype is not None else x.dtype
    eps_gn = 1e-5
    eps_ws = 1e-5 if x.dtype == jnp.float32 else 1e-3

    hwp = h * (w + 2)
    cg = cout // groups
    gid = jnp.arange(cout) // cg
    gmat = (gid[:, None] == gid[None, :]).astype(jnp.float32) / float(h * w * cg)
    mask = (jnp.arange(hwp) % (w + 2) < w).astype(jnp.float32).reshape(hwp, 1)

    # Weight-standardize + pack the 3x3 conv weights (weight prep, plain jnp).
    w1m = _standardize_pack_3x3(params["w1"], eps_ws).astype(cdt)   # (9, cin,  cout)
    w2m = _standardize_pack_3x3(params["w2"], eps_ws).astype(cdt)   # (9, cout, cout)

    zc = jnp.zeros((cout,), jnp.float32)
    if time_emb is not None:
        wm = params["w_mlp"].astype(jnp.float32)                    # (tdim, 2*cout)
        wmlp = jnp.stack([wm[:, :cout], wm[:, cout:]], axis=0).astype(cdt)
        bm = params["b_mlp"].astype(jnp.float32)
        cvec1 = jnp.stack([params["b1"], params["g1"], params["be1"],
                           zc, bm[:cout], bm[cout:]]).astype(jnp.float32)
        temb = time_emb.reshape(b, 1, -1).astype(cdt)
    else:
        wmlp, temb = None, None
        cvec1 = jnp.stack([params["b1"], params["g1"], params["be1"],
                           zc, zc, zc]).astype(jnp.float32)

    if cin != cout:
        wres = params["w_res"].reshape(cout, cin).T.astype(cdt)      # (cin, cout)
        bres = params["b_res"].astype(jnp.float32)
    else:
        wres, bres = None, zc                                        # identity: direct add
    cvec2 = jnp.stack([params["b2"], params["g2"], params["be2"],
                       bres, zc, zc]).astype(jnp.float32)

    vmem_limit = _pick_vmem_limit()
    xpad = _pad_flat(x).astype(cdt)                                  # (B, (H+3)(W+2), cin)

    # block1: conv3x3 + GroupNorm + FiLM (fused time-MLP) + SiLU.
    h1 = fused_block(xpad, w1m, cvec1, mask, gmat, H=h, W=w, eps=eps_gn,
                     out_dtype=x.dtype, vmem_limit=vmem_limit,
                     temb=temb, wmlp=wmlp)                           # (B, H*(W+2), cout)
    h1_img = h1.reshape(b, h, w + 2, cout)[:, :, :w, :]
    h1pad = _pad_flat(h1_img).astype(cdt)

    # block2: conv3x3 + GroupNorm + SiLU, plus fused residual (1x1 conv or identity).
    h2 = fused_block(h1pad, w2m, cvec2, mask, gmat, H=h, W=w, eps=eps_gn,
                     out_dtype=x.dtype, vmem_limit=vmem_limit,
                     residual=(xpad, wres))                          # (B, H*(W+2), cout)
    return h2.reshape(b, h, w + 2, cout)[:, :, :w, :]


# ---------------------------------------------------------------------------
# Pure-JAX reference (validation only)
# ---------------------------------------------------------------------------
def _conv_nhwc_ref(x, w_oihw, bias, padding):
    y = lax.conv_general_dilated(
        x, w_oihw, window_strides=(1, 1), padding=padding,
        dimension_numbers=("NHWC", "OIHW", "NHWC"),
        precision=lax.Precision.HIGHEST)
    return y + bias.reshape(1, 1, 1, -1)


def _wstd_ref(wgt, eps):
    mean = jnp.mean(wgt, axis=(1, 2, 3), keepdims=True)
    var = jnp.mean((wgt - mean) ** 2, axis=(1, 2, 3), keepdims=True)
    return (wgt - mean) * lax.rsqrt(var + eps)


def _group_norm_ref(x, gamma, beta, groups, eps):
    b, h, w, c = x.shape
    xg = x.reshape(b, h, w, groups, c // groups)
    mean = jnp.mean(xg, axis=(1, 2, 4), keepdims=True)
    var = jnp.mean((xg - mean) ** 2, axis=(1, 2, 4), keepdims=True)
    xn = ((xg - mean) * lax.rsqrt(var + eps)).reshape(b, h, w, c)
    return xn * gamma.reshape(1, 1, 1, c) + beta.reshape(1, 1, 1, c)


def _block_ref(x, wconv, bconv, gamma, beta, groups, scale_shift, eps_ws):
    hc = _conv_nhwc_ref(x, _wstd_ref(wconv, eps_ws), bconv, ((1, 1), (1, 1)))
    hn = _group_norm_ref(hc, gamma, beta, groups, 1e-5)
    if scale_shift is not None:
        scale, shift = scale_shift
        hn = hn * (scale[:, None, None, :] + 1.0) + shift[:, None, None, :]
    return hn * jax.nn.sigmoid(hn)


def resnet_block_reference(x, time_emb, params, *, groups):
    cout = params["w1"].shape[0]
    eps_ws = 1e-5 if x.dtype == jnp.float32 else 1e-3
    t = time_emb * jax.nn.sigmoid(time_emb)
    te = jnp.dot(t, params["w_mlp"], precision=lax.Precision.HIGHEST) + params["b_mlp"]
    scale, shift = te[:, :cout], te[:, cout:]
    h1 = _block_ref(x, params["w1"], params["b1"], params["g1"], params["be1"],
                    groups, (scale, shift), eps_ws)
    h2 = _block_ref(h1, params["w2"], params["b2"], params["g2"], params["be2"],
                    groups, None, eps_ws)
    if x.shape[-1] != cout:
        res = _conv_nhwc_ref(x, params["w_res"], params["b_res"], "VALID")
    else:
        res = x
    return h2 + res


if __name__ == "__main__":
    key = jax.random.PRNGKey(0)
    ks = jax.random.split(key, 14)

    batch, height, width = 2, 16, 16
    dim, dim_out, groups, time_emb_dim = 4, 16, 8, 32

    def nrm(k, shape, s=1.0):
        return s * jax.random.normal(k, shape, dtype=jnp.float32)

    x = nrm(ks[0], (batch, height, width, dim))          # NHWC activations
    time_emb = nrm(ks[1], (batch, time_emb_dim))

    params = {
        # time MLP: weight stored (time_emb_dim, 2*dim_out) = transposed torch layout
        "w_mlp": nrm(ks[2], (time_emb_dim, 2 * dim_out), 1.0 / math.sqrt(time_emb_dim)),
        "b_mlp": nrm(ks[3], (2 * dim_out,), 0.1),
        # block1: WeightStandardizedConv2d (torch O,I,kh,kw layout) + GroupNorm affine
        "w1": nrm(ks[4], (dim_out, dim, 3, 3), 0.3),
        "b1": nrm(ks[5], (dim_out,), 0.1),
        "g1": 1.0 + nrm(ks[6], (dim_out,), 0.1),
        "be1": nrm(ks[7], (dim_out,), 0.1),
        # block2
        "w2": nrm(ks[8], (dim_out, dim_out, 3, 3), 0.3),
        "b2": nrm(ks[9], (dim_out,), 0.1),
        "g2": 1.0 + nrm(ks[10], (dim_out,), 0.1),
        "be2": nrm(ks[11], (dim_out,), 0.1),
        # residual 1x1 conv (dim != dim_out)
        "w_res": nrm(ks[12], (dim_out, dim, 1, 1), 0.5),
        "b_res": nrm(ks[13], (dim_out,), 0.1),
    }

    fwd = jax.jit(functools.partial(resnet_block_forward, groups=groups))
    out = fwd(x, time_emb, params)
    jax.block_until_ready(out)

    ref = resnet_block_reference(x, time_emb, params, groups=groups)
    assert out.shape == (batch, height, width, dim_out)
    max_diff = float(jnp.max(jnp.abs(out - ref)))
    # Tolerance tightened vs previous version (f32 MXU operands, f32 accumulation).
    assert jnp.allclose(out, ref, atol=5e-3, rtol=5e-3), \
        f"mismatch vs reference, max abs diff={max_diff}"

    print("KERNEL_OK")
</pallas_src>

<mosaic_0001>
module attributes {stable_mosaic.version = 11 : i64} {
  func.func @kernel(%arg0: i32, %arg1: memref<1x342x4xf32, #tpu.memory_space<vmem>>, %arg2: memref<9x4x16xf32, #tpu.memory_space<vmem>>, %arg3: memref<6x16xf32, #tpu.memory_space<vmem>>, %arg4: memref<288x1xf32, #tpu.memory_space<vmem>>, %arg5: memref<16x16xf32, #tpu.memory_space<vmem>>, %arg6: memref<1x1x32xf32, #tpu.memory_space<vmem>>, %arg7: memref<2x32x16xf32, #tpu.memory_space<vmem>>, %arg8: memref<1x288x16xf32, #tpu.memory_space<vmem>>) attributes {dimension_semantics = [#tpu.dimension_semantics<parallel>], iteration_bounds = array<i64: 2>, scalar_prefetch = 0 : i64, scratch_operands = 0 : i64, tpu.core_type = #tpu.core_type<tc>, window_params = [{transform_indices = @transform_0, window_bounds = array<i64: 1, 342, 4>}, {pipeline_mode = #tpu.pipeline_mode<synchronous>, transform_indices = @transform_1, window_bounds = array<i64: 9, 4, 16>}, {pipeline_mode = #tpu.pipeline_mode<synchronous>, transform_indices = @transform_2, window_bounds = array<i64: 6, 16>}, {pipeline_mode = #tpu.pipeline_mode<synchronous>, transform_indices = @transform_3, window_bounds = array<i64: 288, 1>}, {pipeline_mode = #tpu.pipeline_mode<synchronous>, transform_indices = @transform_4, window_bounds = array<i64: 16, 16>}, {transform_indices = @transform_5, window_bounds = array<i64: 1, 1, 32>}, {pipeline_mode = #tpu.pipeline_mode<synchronous>, transform_indices = @transform_6, window_bounds = array<i64: 2, 32, 16>}, {transform_indices = @transform_7, window_bounds = array<i64: 1, 288, 16>}]} {
    %c0 = arith.constant 0 : index
    %c0_0 = arith.constant 0 : index
    %c0_1 = arith.constant 0 : index
    %0 = vector.load %arg1[%c0, %c0_0, %c0_1] : memref<1x342x4xf32, #tpu.memory_space<vmem>>, vector<1x288x4xf32>
    %1 = vector.shape_cast %0 : vector<1x288x4xf32> to vector<288x4xf32>
    %c0_2 = arith.constant 0 : index
    %c0_3 = arith.constant 0 : index
    %c0_4 = arith.constant 0 : index
    %2 = vector.load %arg2[%c0_2, %c0_3, %c0_4] : memref<9x4x16xf32, #tpu.memory_space<vmem>>, vector<1x4x16xf32>
    %3 = vector.shape_cast %2 : vector<1x4x16xf32> to vector<4x16xf32>
    %cst = arith.constant dense<0.000000e+00> : vector<288x16xf32>
    %4 = tpu.matmul %1, %3, %cst {dimension_numbers = #tpu.dot_dimension_numbers<[1], [0], [0], [1], [0, 0, 1, 1], [], []>} : vector<288x4xf32>, vector<4x16xf32>, vector<288x16xf32> -> vector<288x16xf32>
    %c0_5 = arith.constant 0 : index
    %c1 = arith.constant 1 : index
    %c0_6 = arith.constant 0 : index
    %5 = vector.load %arg1[%c0_5, %c1, %c0_6] : memref<1x342x4xf32, #tpu.memory_space<vmem>>, vector<1x288x4xf32>
    %6 = vector.shape_cast %5 : vector<1x288x4xf32> to vector<288x4xf32>
    %c1_7 = arith.constant 1 : index
    %c0_8 = arith.constant 0 : index
    %c0_9 = arith.constant 0 : index
    %7 = vector.load %arg2[%c1_7, %c0_8, %c0_9] : memref<9x4x16xf32, #tpu.memory_space<vmem>>, vector<1x4x16xf32>
    %8 = vector.shape_cast %7 : vector<1x4x16xf32> to vector<4x16xf32>
    %cst_10 = arith.constant dense<0.000000e+00> : vector<288x16xf32>
    %9 = tpu.matmul %6, %8, %cst_10 {dimension_numbers = #tpu.dot_dimension_numbers<[1], [0], [0], [1], [0, 0, 1, 1], [], []>} : vector<288x4xf32>, vector<4x16xf32>, vector<288x16xf32> -> vector<288x16xf32>
    %10 = arith.addf %4, %9 : vector<288x16xf32>
    %c0_11 = arith.constant 0 : index
    %c2 = arith.constant 2 : index
    %c0_12 = arith.constant 0 : index
    %11 = vector.load %arg1[%c0_11, %c2, %c0_12] : memref<1x342x4xf32, #tpu.memory_space<vmem>>, vector<1x288x4xf32>
    %12 = vector.shape_cast %11 : vector<1x288x4xf32> to vector<288x4xf32>
    %c2_13 = arith.constant 2 : index
    %c0_14 = arith.constant 0 : index
    %c0_15 = arith.constant 0 : index
    %13 = vector.load %arg2[%c2_13, %c0_14, %c0_15] : memref<9x4x16xf32, #tpu.memory_space<vmem>>, vector<1x4x16xf32>
    %14 = vector.shape_cast %13 : vector<1x4x16xf32> to vector<4x16xf32>
    %cst_16 = arith.constant dense<0.000000e+00> : vector<288x16xf32>
    %15 = tpu.matmul %12, %14, %cst_16 {dimension_numbers = #tpu.dot_dimension_numbers<[1], [0], [0], [1], [0, 0, 1, 1], [], []>} : vector<288x4xf32>, vector<4x16xf32>, vector<288x16xf32> -> vector<288x16xf32>
    %16 = arith.addf %10, %15 : vector<288x16xf32>
    %c0_17 = arith.constant 0 : index
    %c18 = arith.constant 18 : index
    %c0_18 = arith.constant 0 : index
    %17 = vector.load %arg1[%c0_17, %c18, %c0_18] : memref<1x342x4xf32, #tpu.memory_space<vmem>>, vector<1x288x4xf32>
    %18 = vector.shape_cast %17 : vector<1x288x4xf32> to vector<288x4xf32>
    %c3 = arith.constant 3 : index
    %c0_19 = arith.constant 0 : index
    %c0_20 = arith.constant 0 : index
    %19 = vector.load %arg2[%c3, %c0_19, %c0_20] : memref<9x4x16xf32, #tpu.memory_space<vmem>>, vector<1x4x16xf32>
    %20 = vector.shape_cast %19 : vector<1x4x16xf32> to vector<4x16xf32>
    %cst_21 = arith.constant dense<0.000000e+00> : vector<288x16xf32>
    %21 = tpu.matmul %18, %20, %cst_21 {dimension_numbers = #tpu.dot_dimension_numbers<[1], [0], [0], [1], [0, 0, 1, 1], [], []>} : vector<288x4xf32>, vector<4x16xf32>, vector<288x16xf32> -> vector<288x16xf32>
    %22 = arith.addf %16, %21 : vector<288x16xf32>
    %c0_22 = arith.constant 0 : index
    %c19 = arith.constant 19 : index
    %c0_23 = arith.constant 0 : index
    %23 = vector.load %arg1[%c0_22, %c19, %c0_23] : memref<1x342x4xf32, #tpu.memory_space<vmem>>, vector<1x288x4xf32>
    %24 = vector.shape_cast %23 : vector<1x288x4xf32> to vector<288x4xf32>
    %c4 = arith.constant 4 : index
    %c0_24 = arith.constant 0 : index
    %c0_25 = arith.constant 0 : index
    %25 = vector.load %arg2[%c4, %c0_24, %c0_25] : memref<9x4x16xf32, #tpu.memory_space<vmem>>, vector<1x4x16xf32>
    %26 = vector.shape_cast %25 : vector<1x4x16xf32> to vector<4x16xf32>
    %cst_26 = arith.constant dense<0.000000e+00> : vector<288x16xf32>
    %27 = tpu.matmul %24, %26, %cst_26 {dimension_numbers = #tpu.dot_dimension_numbers<[1], [0], [0], [1], [0, 0, 1, 1], [], []>} : vector<288x4xf32>, vector<4x16xf32>, vector<288x16xf32> -> vector<288x16xf32>
    %28 = arith.addf %22, %27 : vector<288x16xf32>
    %c0_27 = arith.constant 0 : index
    %c20 = arith.constant 20 : index
    %c0_28 = arith.constant 0 : index
    %29 = vector.load %arg1[%c0_27, %c20, %c0_28] : memref<1x342x4xf32, #tpu.memory_space<vmem>>, vector<1x288x4xf32>
    %30 = vector.shape_cast %29 : vector<1x288x4xf32> to vector<288x4xf32>
    %c5 = arith.constant 5 : index
    %c0_29 = arith.constant 0 : index
    %c0_30 = arith.constant 0 : index
    %31 = vector.load %arg2[%c5, %c0_29, %c0_30] : memref<9x4x16xf32, #tpu.memory_space<vmem>>, vector<1x4x16xf32>
    %32 = vector.shape_cast %31 : vector<1x4x16xf32> to vector<4x16xf32>
    %cst_31 = arith.constant dense<0.000000e+00> : vector<288x16xf32>
    %33 = tpu.matmul %30, %32, %cst_31 {dimension_numbers = #tpu.dot_dimension_numbers<[1], [0], [0], [1], [0, 0, 1, 1], [], []>} : vector<288x4xf32>, vector<4x16xf32>, vector<288x16xf32> -> vector<288x16xf32>
    %34 = arith.addf %28, %33 : vector<288x16xf32>
    %c0_32 = arith.constant 0 : index
    %c36 = arith.constant 36 : index
    %c0_33 = arith.constant 0 : index
    %35 = vector.load %arg1[%c0_32, %c36, %c0_33] : memref<1x342x4xf32, #tpu.memory_space<vmem>>, vector<1x288x4xf32>
    %36 = vector.shape_cast %35 : vector<1x288x4xf32> to vector<288x4xf32>
    %c6 = arith.constant 6 : index
    %c0_34 = arith.constant 0 : index
    %c0_35 = arith.constant 0 : index
    %37 = vector.load %arg2[%c6, %c0_34, %c0_35] : memref<9x4x16xf32, #tpu.memory_space<vmem>>, vector<1x4x16xf32>
    %38 = vector.shape_cast %37 : vector<1x4x16xf32> to vector<4x16xf32>
    %cst_36 = arith.constant dense<0.000000e+00> : vector<288x16xf32>
    %39 = tpu.matmul %36, %38, %cst_36 {dimension_numbers = #tpu.dot_dimension_numbers<[1], [0], [0], [1], [0, 0, 1, 1], [], []>} : vector<288x4xf32>, vector<4x16xf32>, vector<288x16xf32> -> vector<288x16xf32>
    %40 = arith.addf %34, %39 : vector<288x16xf32>
    %c0_37 = arith.constant 0 : index
    %c37 = arith.constant 37 : index
    %c0_38 = arith.constant 0 : index
    %41 = vector.load %arg1[%c0_37, %c37, %c0_38] : memref<1x342x4xf32, #tpu.memory_space<vmem>>, vector<1x288x4xf32>
    %42 = vector.shape_cast %41 : vector<1x288x4xf32> to vector<288x4xf32>
    %c7 = arith.constant 7 : index
    %c0_39 = arith.constant 0 : index
    %c0_40 = arith.constant 0 : index
    %43 = vector.load %arg2[%c7, %c0_39, %c0_40] : memref<9x4x16xf32, #tpu.memory_space<vmem>>, vector<1x4x16xf32>
    %44 = vector.shape_cast %43 : vector<1x4x16xf32> to vector<4x16xf32>
    %cst_41 = arith.constant dense<0.000000e+00> : vector<288x16xf32>
    %45 = tpu.matmul %42, %44, %cst_41 {dimension_numbers = #tpu.dot_dimension_numbers<[1], [0], [0], [1], [0, 0, 1, 1], [], []>} : vector<288x4xf32>, vector<4x16xf32>, vector<288x16xf32> -> vector<288x16xf32>
    %46 = arith.addf %40, %45 : vector<288x16xf32>
    %c0_42 = arith.constant 0 : index
    %c38 = arith.constant 38 : index
    %c0_43 = arith.constant 0 : index
    %47 = vector.load %arg1[%c0_42, %c38, %c0_43] : memref<1x342x4xf32, #tpu.memory_space<vmem>>, vector<1x288x4xf32>
    %48 = vector.shape_cast %47 : vector<1x288x4xf32> to vector<288x4xf32>
    %c8 = arith.constant 8 : index
    %c0_44 = arith.constant 0 : index
    %c0_45 = arith.constant 0 : index
    %49 = vector.load %arg2[%c8, %c0_44, %c0_45] : memref<9x4x16xf32, #tpu.memory_space<vmem>>, vector<1x4x16xf32>
    %50 = vector.shape_cast %49 : vector<1x4x16xf32> to vector<4x16xf32>
    %cst_46 = arith.constant dense<0.000000e+00> : vector<288x16xf32>
    %51 = tpu.matmul %48, %50, %cst_46 {dimension_numbers = #tpu.dot_dimension_numbers<[1], [0], [0], [1], [0, 0, 1, 1], [], []>} : vector<288x4xf32>, vector<4x16xf32>, vector<288x16xf32> -> vector<288x16xf32>
    %52 = arith.addf %46, %51 : vector<288x16xf32>
    %c0_47 = arith.constant 0 : index
    %c0_48 = arith.constant 0 : index
    %53 = vector.load %arg3[%c0_47, %c0_48] : memref<6x16xf32, #tpu.memory_space<vmem>>, vector<1x16xf32>
    %54 = vector.broadcast %53 : vector<1x16xf32> to vector<288x16xf32>
    %55 = arith.addf %52, %54 : vector<288x16xf32>
    %c0_49 = arith.constant 0 : index
    %c0_50 = arith.constant 0 : index
    %56 = vector.load %arg4[%c0_49, %c0_50] : memref<288x1xf32, #tpu.memory_space<vmem>>, vector<288x1xf32>
    %57 = vector.broadcast %56 : vector<288x1xf32> to vector<288x16xf32>
    %58 = arith.mulf %55, %57 : vector<288x16xf32>
    %cst_51 = arith.constant dense<0.000000e+00> : vector<16xf32>
    %59 = vector.multi_reduction <add>, %58, %cst_51 [0] : vector<288x16xf32> to vector<16xf32>
    %60 = vector.shape_cast %59 : vector<16xf32> to vector<1x16xf32>
    %61 = arith.mulf %58, %55 : vector<288x16xf32>
    %cst_52 = arith.constant dense<0.000000e+00> : vector<16xf32>
    %62 = vector.multi_reduction <add>, %61, %cst_52 [0] : vector<288x16xf32> to vector<16xf32>
    %63 = vector.shape_cast %62 : vector<16xf32> to vector<1x16xf32>
    %c0_53 = arith.constant 0 : index
    %c0_54 = arith.constant 0 : index
    %64 = vector.load %arg5[%c0_53, %c0_54] : memref<16x16xf32, #tpu.memory_space<vmem>>, vector<16x16xf32>
    %cst_55 = arith.constant dense<0.000000e+00> : vector<1x16xf32>
    %65 = tpu.matmul %60, %64, %cst_55 {dimension_numbers = #tpu.dot_dimension_numbers<[1], [0], [0], [1], [0, 0, 1, 1], [], []>} : vector<1x16xf32>, vector<16x16xf32>, vector<1x16xf32> -> vector<1x16xf32>
    %c0_56 = arith.constant 0 : index
    %c0_57 = arith.constant 0 : index
    %66 = vector.load %arg5[%c0_56, %c0_57] : memref<16x16xf32, #tpu.memory_space<vmem>>, vector<16x16xf32>
    %cst_58 = arith.constant dense<0.000000e+00> : vector<1x16xf32>
    %67 = tpu.matmul %63, %66, %cst_58 {dimension_numbers = #tpu.dot_dimension_numbers<[1], [0], [0], [1], [0, 0, 1, 1], [], []>} : vector<1x16xf32>, vector<16x16xf32>, vector<1x16xf32> -> vector<1x16xf32>
    %68 = arith.mulf %65, %65 : vector<1x16xf32>
    %69 = arith.subf %67, %68 : vector<1x16xf32>
    %cst_59 = arith.constant 0.000000e+00 : f32
    %70 = vector.broadcast %cst_59 : f32 to vector<1x16xf32>
    %71 = arith.maximumf %69, %70 : vector<1x16xf32>
    %cst_60 = arith.constant 9.99999974E-6 : f32
    %72 = vector.broadcast %cst_60 : f32 to vector<1x16xf32>
    %73 = arith.addf %71, %72 : vector<1x16xf32>
    %74 = math.rsqrt %73 : vector<1x16xf32>
    %c1_61 = arith.constant 1 : index
    %c0_62 = arith.constant 0 : index
    %75 = vector.load %arg3[%c1_61, %c0_62] : memref<6x16xf32, #tpu.memory_space<vmem>>, vector<1x16xf32>
    %76 = arith.mulf %74, %75 : vector<1x16xf32>
    %c2_63 = arith.constant 2 : index
    %c0_64 = arith.constant 0 : index
    %77 = vector.load %arg3[%c2_63, %c0_64] : memref<6x16xf32, #tpu.memory_space<vmem>>, vector<1x16xf32>
    %78 = arith.mulf %65, %76 : vector<1x16xf32>
    %79 = arith.subf %77, %78 : vector<1x16xf32>
    %c0_65 = arith.constant 0 : index
    %c0_66 = arith.constant 0 : index
    %c0_67 = arith.constant 0 : index
    %80 = vector.load %arg6[%c0_65, %c0_66, %c0_67] : memref<1x1x32xf32, #tpu.memory_space<vmem>>, vector<1x1x32xf32>
    %81 = vector.shape_cast %80 : vector<1x1x32xf32> to vector<1x32xf32>
    %82 = arith.negf %81 : vector<1x32xf32>
    %83 = math.exp %82 : vector<1x32xf32>
    %cst_68 = arith.constant 1.000000e+00 : f32
    %84 = vector.broadcast %cst_68 : f32 to vector<1x32xf32>
    %85 = arith.addf %84, %83 : vector<1x32xf32>
    %86 = arith.divf %84, %85 : vector<1x32xf32>
    %87 = arith.mulf %81, %86 : vector<1x32xf32>
    %c0_69 = arith.constant 0 : index
    %c0_70 = arith.constant 0 : index
    %c0_71 = arith.constant 0 : index
    %88 = vector.load %arg7[%c0_69, %c0_70, %c0_71] : memref<2x32x16xf32, #tpu.memory_space<vmem>>, vector<1x32x16xf32>
    %89 = vector.shape_cast %88 : vector<1x32x16xf32> to vector<32x16xf32>
    %cst_72 = arith.constant dense<0.000000e+00> : vector<1x16xf32>
    %90 = tpu.matmul %87, %89, %cst_72 {dimension_numbers = #tpu.dot_dimension_numbers<[1], [0], [0], [1], [0, 0, 1, 1], [], []>} : vector<1x32xf32>, vector<32x16xf32>, vector<1x16xf32> -> vector<1x16xf32>
    %c4_73 = arith.constant 4 : index
    %c0_74 = arith.constant 0 : index
    %91 = vector.load %arg3[%c4_73, %c0_74] : memref<6x16xf32, #tpu.memory_space<vmem>>, vector<1x16xf32>
    %92 = arith.addf %90, %91 : vector<1x16xf32>
    %c1_75 = arith.constant 1 : index
    %c0_76 = arith.constant 0 : index
    %c0_77 = arith.constant 0 : index
    %93 = vector.load %arg7[%c1_75, %c0_76, %c0_77] : memref<2x32x16xf32, #tpu.memory_space<vmem>>, vector<1x32x16xf32>
    %94 = vector.shape_cast %93 : vector<1x32x16xf32> to vector<32x16xf32>
    %cst_78 = arith.constant dense<0.000000e+00> : vector<1x16xf32>
    %95 = tpu.matmul %87, %94, %cst_78 {dimension_numbers = #tpu.dot_dimension_numbers<[1], [0], [0], [1], [0, 0, 1, 1], [], []>} : vector<1x32xf32>, vector<32x16xf32>, vector<1x16xf32> -> vector<1x16xf32>
    %c5_79 = arith.constant 5 : index
    %c0_80 = arith.constant 0 : index
    %96 = vector.load %arg3[%c5_79, %c0_80] : memref<6x16xf32, #tpu.memory_space<vmem>>, vector<1x16xf32>
    %97 = arith.addf %95, %96 : vector<1x16xf32>
    %cst_81 = arith.constant 1.000000e+00 : f32
    %98 = vector.broadcast %cst_81 : f32 to vector<1x16xf32>
    %99 = arith.addf %92, %98 : vector<1x16xf32>
    %100 = arith.mulf %76, %99 : vector<1x16xf32>
    %cst_82 = arith.constant 1.000000e+00 : f32
    %101 = vector.broadcast %cst_82 : f32 to vector<1x16xf32>
    %102 = arith.addf %92, %101 : vector<1x16xf32>
    %103 = arith.mulf %79, %102 : vector<1x16xf32>
    %104 = arith.addf %103, %97 : vector<1x16xf32>
    %105 = vector.broadcast %100 : vector<1x16xf32> to vector<288x16xf32>
    %106 = arith.mulf %55, %105 : vector<288x16xf32>
    %107 = vector.broadcast %104 : vector<1x16xf32> to vector<288x16xf32>
    %108 = arith.addf %106, %107 : vector<288x16xf32>
    %109 = arith.negf %108 : vector<288x16xf32>
    %110 = math.exp %109 : vector<288x16xf32>
    %cst_83 = arith.constant 1.000000e+00 : f32
    %111 = vector.broadcast %cst_83 : f32 to vector<288x16xf32>
    %112 = arith.addf %111, %110 : vector<288x16xf32>
    %113 = arith.divf %111, %112 : vector<288x16xf32>
    %114 = arith.mulf %108, %113 : vector<288x16xf32>
    %c0_84 = arith.constant 0 : index
    %c0_85 = arith.constant 0 : index
    %c0_86 = arith.constant 0 : index
    %115 = vector.load %arg8[%c0_84, %c0_85, %c0_86] : memref<1x288x16xf32, #tpu.memory_space<vmem>>, vector<1x288x16xf32>
    %116 = vector.shape_cast %115 : vector<1x288x16xf32> to vector<288x16xf32>
    %117 = vector.shape_cast %114 : vector<288x16xf32> to vector<1x288x16xf32>
    tpu.vector_store %arg8[%c0_84, %c0_85, %c0_86], %117 {strides = array<i32>} : memref<1x288x16xf32, #tpu.memory_space<vmem>>, vector<1x288x16xf32>,
    return
  }
  func.func @transform_0(%arg0: i32) -> (i32, i32, i32) {
    %c0_i32 = arith.constant 0 : i32
    %c0_i32_0 = arith.constant 0 : i32
    %c0_i32_1 = arith.constant 0 : i32
    return %arg0, %c0_i32, %c0_i32_0 : i32, i32, i32
  }
  func.func @transform_1(%arg0: i32) -> (i32, i32, i32) {
    %c0_i32 = arith.constant 0 : i32
    %c0_i32_0 = arith.constant 0 : i32
    %c0_i32_1 = arith.constant 0 : i32
    %c0_i32_2 = arith.constant 0 : i32
    return %c0_i32, %c0_i32_0, %c0_i32_1 : i32, i32, i32
  }
  func.func @transform_2(%arg0: i32) -> (i32, i32) {
    %c0_i32 = arith.constant 0 : i32
    %c0_i32_0 = arith.constant 0 : i32
    %c0_i32_1 = arith.constant 0 : i32
    return %c0_i32, %c0_i32_0 : i32, i32
  }
  func.func @transform_3(%arg0: i32) -> (i32, i32) {
    %c0_i32 = arith.constant 0 : i32
    %c0_i32_0 = arith.constant 0 : i32
    %c0_i32_1 = arith.constant 0 : i32
    return %c0_i32, %c0_i32_0 : i32, i32
  }
  func.func @transform_4(%arg0: i32) -> (i32, i32) {
    %c0_i32 = arith.constant 0 : i32
    %c0_i32_0 = arith.constant 0 : i32
    %c0_i32_1 = arith.constant 0 : i32
    return %c0_i32, %c0_i32_0 : i32, i32
  }
  func.func @transform_5(%arg0: i32) -> (i32, i32, i32) {
    %c0_i32 = arith.constant 0 : i32
    %c0_i32_0 = arith.constant 0 : i32
    %c0_i32_1 = arith.constant 0 : i32
    return %arg0, %c0_i32, %c0_i32_0 : i32, i32, i32
  }
  func.func @transform_6(%arg0: i32) -> (i32, i32, i32) {
    %c0_i32 = arith.constant 0 : i32
    %c0_i32_0 = arith.constant 0 : i32
    %c0_i32_1 = arith.constant 0 : i32
    %c0_i32_2 = arith.constant 0 : i32
    return %c0_i32, %c0_i32_0, %c0_i32_1 : i32, i32, i32
  }
  func.func @transform_7(%arg0: i32) -> (i32, i32, i32) {
    %c0_i32 = arith.constant 0 : i32
    %c0_i32_0 = arith.constant 0 : i32
    %c0_i32_1 = arith.constant 0 : i32
    return %arg0, %c0_i32, %c0_i32_0 : i32, i32, i32
  }
}

module attributes {stable_mosaic.version = 11 : i64} {
  func.func @kernel(%arg0: i32, %arg1: memref<1x342x16xf32, #tpu.memory_space<vmem>>, %arg2: memref<9x16x16xf32, #tpu.memory_space<vmem>>, %arg3: memref<6x16xf32, #tpu.memory_space<vmem>>, %arg4: memref<288x1xf32, #tpu.memory_space<vmem>>, %arg5: memref<16x16xf32, #tpu.memory_space<vmem>>, %arg6: memref<1x342x4xf32, #tpu.memory_space<vmem>>, %arg7: memref<4x16xf32, #tpu.memory_space<vmem>>, %arg8: memref<1x288x16xf32, #tpu.memory_space<vmem>>) attributes {dimension_semantics = [#tpu.dimension_semantics<parallel>], iteration_bounds = array<i64: 2>, scalar_prefetch = 0 : i64, scratch_operands = 0 : i64, tpu.core_type = #tpu.core_type<tc>, window_params = [{transform_indices = @transform_0, window_bounds = array<i64: 1, 342, 16>}, {pipeline_mode = #tpu.pipeline_mode<synchronous>, transform_indices = @transform_1, window_bounds = array<i64: 9, 16, 16>}, {pipeline_mode = #tpu.pipeline_mode<synchronous>, transform_indices = @transform_2, window_bounds = array<i64: 6, 16>}, {pipeline_mode = #tpu.pipeline_mode<synchronous>, transform_indices = @transform_3, window_bounds = array<i64: 288, 1>}, {pipeline_mode = #tpu.pipeline_mode<synchronous>, transform_indices = @transform_4, window_bounds = array<i64: 16, 16>}, {transform_indices = @transform_5, window_bounds = array<i64: 1, 342, 4>}, {pipeline_mode = #tpu.pipeline_mode<synchronous>, transform_indices = @transform_6, window_bounds = array<i64: 4, 16>}, {transform_indices = @transform_7, window_bounds = array<i64: 1, 288, 16>}]} {
    %c0 = arith.constant 0 : index
    %c0_0 = arith.constant 0 : index
    %c0_1 = arith.constant 0 : index
    %0 = vector.load %arg1[%c0, %c0_0, %c0_1] : memref<1x342x16xf32, #tpu.memory_space<vmem>>, vector<1x288x16xf32>
    %1 = vector.shape_cast %0 : vector<1x288x16xf32> to vector<288x16xf32>
    %c0_2 = arith.constant 0 : index
    %c0_3 = arith.constant 0 : index
    %c0_4 = arith.constant 0 : index
    %2 = vector.load %arg2[%c0_2, %c0_3, %c0_4] : memref<9x16x16xf32, #tpu.memory_space<vmem>>, vector<1x16x16xf32>
    %3 = vector.shape_cast %2 : vector<1x16x16xf32> to vector<16x16xf32>
    %cst = arith.constant dense<0.000000e+00> : vector<288x16xf32>
    %4 = tpu.matmul %1, %3, %cst {dimension_numbers = #tpu.dot_dimension_numbers<[1], [0], [0], [1], [0, 0, 1, 1], [], []>} : vector<288x16xf32>, vector<16x16xf32>, vector<288x16xf32> -> vector<288x16xf32>
    %c0_5 = arith.constant 0 : index
    %c1 = arith.constant 1 : index
    %c0_6 = arith.constant 0 : index
    %5 = vector.load %arg1[%c0_5, %c1, %c0_6] : memref<1x342x16xf32, #tpu.memory_space<vmem>>, vector<1x288x16xf32>
    %6 = vector.shape_cast %5 : vector<1x288x16xf32> to vector<288x16xf32>
    %c1_7 = arith.constant 1 : index
    %c0_8 = arith.constant 0 : index
    %c0_9 = arith.constant 0 : index
    %7 = vector.load %arg2[%c1_7, %c0_8, %c0_9] : memref<9x16x16xf32, #tpu.memory_space<vmem>>, vector<1x16x16xf32>
    %8 = vector.shape_cast %7 : vector<1x16x16xf32> to vector<16x16xf32>
    %cst_10 = arith.constant dense<0.000000e+00> : vector<288x16xf32>
    %9 = tpu.matmul %6, %8, %cst_10 {dimension_numbers = #tpu.dot_dimension_numbers<[1], [0], [0], [1], [0, 0, 1, 1], [], []>} : vector<288x16xf32>, vector<16x16xf32>, vector<288x16xf32> -> vector<288x16xf32>
    %10 = arith.addf %4, %9 : vector<288x16xf32>
    %c0_11 = arith.constant 0 : index
    %c2 = arith.constant 2 : index
    %c0_12 = arith.constant 0 : index
    %11 = vector.load %arg1[%c0_11, %c2, %c0_12] : memref<1x342x16xf32, #tpu.memory_space<vmem>>, vector<1x288x16xf32>
    %12 = vector.shape_cast %11 : vector<1x288x16xf32> to vector<288x16xf32>
    %c2_13 = arith.constant 2 : index
    %c0_14 = arith.constant 0 : index
    %c0_15 = arith.constant 0 : index
    %13 = vector.load %arg2[%c2_13, %c0_14, %c0_15] : memref<9x16x16xf32, #tpu.memory_space<vmem>>, vector<1x16x16xf32>
    %14 = vector.shape_cast %13 : vector<1x16x16xf32> to vector<16x16xf32>
    %cst_16 = arith.constant dense<0.000000e+00> : vector<288x16xf32>
    %15 = tpu.matmul %12, %14, %cst_16 {dimension_numbers = #tpu.dot_dimension_numbers<[1], [0], [0], [1], [0, 0, 1, 1], [], []>} : vector<288x16xf32>, vector<16x16xf32>, vector<288x16xf32> -> vector<288x16xf32>
    %16 = arith.addf %10, %15 : vector<288x16xf32>
    %c0_17 = arith.constant 0 : index
    %c18 = arith.constant 18 : index
    %c0_18 = arith.constant 0 : index
    %17 = vector.load %arg1[%c0_17, %c18, %c0_18] : memref<1x342x16xf32, #tpu.memory_space<vmem>>, vector<1x288x16xf32>
    %18 = vector.shape_cast %17 : vector<1x288x16xf32> to vector<288x16xf32>
    %c3 = arith.constant 3 : index
    %c0_19 = arith.constant 0 : index
    %c0_20 = arith.constant 0 : index
    %19 = vector.load %arg2[%c3, %c0_19, %c0_20] : memref<9x16x16xf32, #tpu.memory_space<vmem>>, vector<1x16x16xf32>
    %20 = vector.shape_cast %19 : vector<1x16x16xf32> to vector<16x16xf32>
    %cst_21 = arith.constant dense<0.000000e+00> : vector<288x16xf32>
    %21 = tpu.matmul %18, %20, %cst_21 {dimension_numbers = #tpu.dot_dimension_numbers<[1], [0], [0], [1], [0, 0, 1, 1], [], []>} : vector<288x16xf32>, vector<16x16xf32>, vector<288x16xf32> -> vector<288x16xf32>
    %22 = arith.addf %16, %21 : vector<288x16xf32>
    %c0_22 = arith.constant 0 : index
    %c19 = arith.constant 19 : index
    %c0_23 = arith.constant 0 : index
    %23 = vector.load %arg1[%c0_22, %c19, %c0_23] : memref<1x342x16xf32, #tpu.memory_space<vmem>>, vector<1x288x16xf32>
    %24 = vector.shape_cast %23 : vector<1x288x16xf32> to vector<288x16xf32>
    %c4 = arith.constant 4 : index
    %c0_24 = arith.constant 0 : index
    %c0_25 = arith.constant 0 : index
    %25 = vector.load %arg2[%c4, %c0_24, %c0_25] : memref<9x16x16xf32, #tpu.memory_space<vmem>>, vector<1x16x16xf32>
    %26 = vector.shape_cast %25 : vector<1x16x16xf32> to vector<16x16xf32>
    %cst_26 = arith.constant dense<0.000000e+00> : vector<288x16xf32>
    %27 = tpu.matmul %24, %26, %cst_26 {dimension_numbers = #tpu.dot_dimension_numbers<[1], [0], [0], [1], [0, 0, 1, 1], [], []>} : vector<288x16xf32>, vector<16x16xf32>, vector<288x16xf32> -> vector<288x16xf32>
    %28 = arith.addf %22, %27 : vector<288x16xf32>
    %c0_27 = arith.constant 0 : index
    %c20 = arith.constant 20 : index
    %c0_28 = arith.constant 0 : index
    %29 = vector.load %arg1[%c0_27, %c20, %c0_28] : memref<1x342x16xf32, #tpu.memory_space<vmem>>, vector<1x288x16xf32>
    %30 = vector.shape_cast %29 : vector<1x288x16xf32> to vector<288x16xf32>
    %c5 = arith.constant 5 : index
    %c0_29 = arith.constant 0 : index
    %c0_30 = arith.constant 0 : index
    %31 = vector.load %arg2[%c5, %c0_29, %c0_30] : memref<9x16x16xf32, #tpu.memory_space<vmem>>, vector<1x16x16xf32>
    %32 = vector.shape_cast %31 : vector<1x16x16xf32> to vector<16x16xf32>
    %cst_31 = arith.constant dense<0.000000e+00> : vector<288x16xf32>
    %33 = tpu.matmul %30, %32, %cst_31 {dimension_numbers = #tpu.dot_dimension_numbers<[1], [0], [0], [1], [0, 0, 1, 1], [], []>} : vector<288x16xf32>, vector<16x16xf32>, vector<288x16xf32> -> vector<288x16xf32>
    %34 = arith.addf %28, %33 : vector<288x16xf32>
    %c0_32 = arith.constant 0 : index
    %c36 = arith.constant 36 : index
    %c0_33 = arith.constant 0 : index
    %35 = vector.load %arg1[%c0_32, %c36, %c0_33] : memref<1x342x16xf32, #tpu.memory_space<vmem>>, vector<1x288x16xf32>
    %36 = vector.shape_cast %35 : vector<1x288x16xf32> to vector<288x16xf32>
    %c6 = arith.constant 6 : index
    %c0_34 = arith.constant 0 : index
    %c0_35 = arith.constant 0 : index
    %37 = vector.load %arg2[%c6, %c0_34, %c0_35] : memref<9x16x16xf32, #tpu.memory_space<vmem>>, vector<1x16x16xf32>
    %38 = vector.shape_cast %37 : vector<1x16x16xf32> to vector<16x16xf32>
    %cst_36 = arith.constant dense<0.000000e+00> : vector<288x16xf32>
    %39 = tpu.matmul %36, %38, %cst_36 {dimension_numbers = #tpu.dot_dimension_numbers<[1], [0], [0], [1], [0, 0, 1, 1], [], []>} : vector<288x16xf32>, vector<16x16xf32>, vector<288x16xf32> -> vector<288x16xf32>
    %40 = arith.addf %34, %39 : vector<288x16xf32>
    %c0_37 = arith.constant 0 : index
    %c37 = arith.constant 37 : index
    %c0_38 = arith.constant 0 : index
    %41 = vector.load %arg1[%c0_37, %c37, %c0_38] : memref<1x342x16xf32, #tpu.memory_space<vmem>>, vector<1x288x16xf32>
    %42 = vector.shape_cast %41 : vector<1x288x16xf32> to vector<288x16xf32>
    %c7 = arith.constant 7 : index
    %c0_39 = arith.constant 0 : index
    %c0_40 = arith.constant 0 : index
    %43 = vector.load %arg2[%c7, %c0_39, %c0_40] : memref<9x16x16xf32, #tpu.memory_space<vmem>>, vector<1x16x16xf32>
    %44 = vector.shape_cast %43 : vector<1x16x16xf32> to vector<16x16xf32>
    %cst_41 = arith.constant dense<0.000000e+00> : vector<288x16xf32>
    %45 = tpu.matmul %42, %44, %cst_41 {dimension_numbers = #tpu.dot_dimension_numbers<[1], [0], [0], [1], [0, 0, 1, 1], [], []>} : vector<288x16xf32>, vector<16x16xf32>, vector<288x16xf32> -> vector<288x16xf32>
    %46 = arith.addf %40, %45 : vector<288x16xf32>
    %c0_42 = arith.constant 0 : index
    %c38 = arith.constant 38 : index
    %c0_43 = arith.constant 0 : index
    %47 = vector.load %arg1[%c0_42, %c38, %c0_43] : memref<1x342x16xf32, #tpu.memory_space<vmem>>, vector<1x288x16xf32>
    %48 = vector.shape_cast %47 : vector<1x288x16xf32> to vector<288x16xf32>
    %c8 = arith.constant 8 : index
    %c0_44 = arith.constant 0 : index
    %c0_45 = arith.constant 0 : index
    %49 = vector.load %arg2[%c8, %c0_44, %c0_45] : memref<9x16x16xf32, #tpu.memory_space<vmem>>, vector<1x16x16xf32>
    %50 = vector.shape_cast %49 : vector<1x16x16xf32> to vector<16x16xf32>
    %cst_46 = arith.constant dense<0.000000e+00> : vector<288x16xf32>
    %51 = tpu.matmul %48, %50, %cst_46 {dimension_numbers = #tpu.dot_dimension_numbers<[1], [0], [0], [1], [0, 0, 1, 1], [], []>} : vector<288x16xf32>, vector<16x16xf32>, vector<288x16xf32> -> vector<288x16xf32>
    %52 = arith.addf %46, %51 : vector<288x16xf32>
    %c0_47 = arith.constant 0 : index
    %c0_48 = arith.constant 0 : index
    %53 = vector.load %arg3[%c0_47, %c0_48] : memref<6x16xf32, #tpu.memory_space<vmem>>, vector<1x16xf32>
    %54 = vector.broadcast %53 : vector<1x16xf32> to vector<288x16xf32>
    %55 = arith.addf %52, %54 : vector<288x16xf32>
    %c0_49 = arith.constant 0 : index
    %c0_50 = arith.constant 0 : index
    %56 = vector.load %arg4[%c0_49, %c0_50] : memref<288x1xf32, #tpu.memory_space<vmem>>, vector<288x1xf32>
    %57 = vector.broadcast %56 : vector<288x1xf32> to vector<288x16xf32>
    %58 = arith.mulf %55, %57 : vector<288x16xf32>
    %cst_51 = arith.constant dense<0.000000e+00> : vector<16xf32>
    %59 = vector.multi_reduction <add>, %58, %cst_51 [0] : vector<288x16xf32> to vector<16xf32>
    %60 = vector.shape_cast %59 : vector<16xf32> to vector<1x16xf32>
    %61 = arith.mulf %58, %55 : vector<288x16xf32>
    %cst_52 = arith.constant dense<0.000000e+00> : vector<16xf32>
    %62 = vector.multi_reduction <add>, %61, %cst_52 [0] : vector<288x16xf32> to vector<16xf32>
    %63 = vector.shape_cast %62 : vector<16xf32> to vector<1x16xf32>
    %c0_53 = arith.constant 0 : index
    %c0_54 = arith.constant 0 : index
    %64 = vector.load %arg5[%c0_53, %c0_54] : memref<16x16xf32, #tpu.memory_space<vmem>>, vector<16x16xf32>
    %cst_55 = arith.constant dense<0.000000e+00> : vector<1x16xf32>
    %65 = tpu.matmul %60, %64, %cst_55 {dimension_numbers = #tpu.dot_dimension_numbers<[1], [0], [0], [1], [0, 0, 1, 1], [], []>} : vector<1x16xf32>, vector<16x16xf32>, vector<1x16xf32> -> vector<1x16xf32>
    %c0_56 = arith.constant 0 : index
    %c0_57 = arith.constant 0 : index
    %66 = vector.load %arg5[%c0_56, %c0_57] : memref<16x16xf32, #tpu.memory_space<vmem>>, vector<16x16xf32>
    %cst_58 = arith.constant dense<0.000000e+00> : vector<1x16xf32>
    %67 = tpu.matmul %63, %66, %cst_58 {dimension_numbers = #tpu.dot_dimension_numbers<[1], [0], [0], [1], [0, 0, 1, 1], [], []>} : vector<1x16xf32>, vector<16x16xf32>, vector<1x16xf32> -> vector<1x16xf32>
    %68 = arith.mulf %65, %65 : vector<1x16xf32>
    %69 = arith.subf %67, %68 : vector<1x16xf32>
    %cst_59 = arith.constant 0.000000e+00 : f32
    %70 = vector.broadcast %cst_59 : f32 to vector<1x16xf32>
    %71 = arith.maximumf %69, %70 : vector<1x16xf32>
    %cst_60 = arith.constant 9.99999974E-6 : f32
    %72 = vector.broadcast %cst_60 : f32 to vector<1x16xf32>
    %73 = arith.addf %71, %72 : vector<1x16xf32>
    %74 = math.rsqrt %73 : vector<1x16xf32>
    %c1_61 = arith.constant 1 : index
    %c0_62 = arith.constant 0 : index
    %75 = vector.load %arg3[%c1_61, %c0_62] : memref<6x16xf32, #tpu.memory_space<vmem>>, vector<1x16xf32>
    %76 = arith.mulf %74, %75 : vector<1x16xf32>
    %c2_63 = arith.constant 2 : index
    %c0_64 = arith.constant 0 : index
    %77 = vector.load %arg3[%c2_63, %c0_64] : memref<6x16xf32, #tpu.memory_space<vmem>>, vector<1x16xf32>
    %78 = arith.mulf %65, %76 : vector<1x16xf32>
    %79 = arith.subf %77, %78 : vector<1x16xf32>
    %80 = vector.broadcast %76 : vector<1x16xf32> to vector<288x16xf32>
    %81 = arith.mulf %55, %80 : vector<288x16xf32>
    %82 = vector.broadcast %79 : vector<1x16xf32> to vector<288x16xf32>
    %83 = arith.addf %81, %82 : vector<288x16xf32>
    %84 = arith.negf %83 : vector<288x16xf32>
    %85 = math.exp %84 : vector<288x16xf32>
    %cst_65 = arith.constant 1.000000e+00 : f32
    %86 = vector.broadcast %cst_65 : f32 to vector<288x16xf32>
    %87 = arith.addf %86, %85 : vector<288x16xf32>
    %88 = arith.divf %86, %87 : vector<288x16xf32>
    %89 = arith.mulf %83, %88 : vector<288x16xf32>
    %c0_66 = arith.constant 0 : index
    %c19_67 = arith.constant 19 : index
    %c0_68 = arith.constant 0 : index
    %90 = vector.load %arg6[%c0_66, %c19_67, %c0_68] : memref<1x342x4xf32, #tpu.memory_space<vmem>>, vector<1x288x4xf32>
    %91 = vector.shape_cast %90 : vector<1x288x4xf32> to vector<288x4xf32>
    %c0_69 = arith.constant 0 : index
    %c0_70 = arith.constant 0 : index
    %92 = vector.load %arg7[%c0_69, %c0_70] : memref<4x16xf32, #tpu.memory_space<vmem>>, vector<4x16xf32>
    %cst_71 = arith.constant dense<0.000000e+00> : vector<288x16xf32>
    %93 = tpu.matmul %91, %92, %cst_71 {dimension_numbers = #tpu.dot_dimension_numbers<[1], [0], [0], [1], [0, 0, 1, 1], [], []>} : vector<288x4xf32>, vector<4x16xf32>, vector<288x16xf32> -> vector<288x16xf32>
    %94 = arith.addf %89, %93 : vector<288x16xf32>
    %c3_72 = arith.constant 3 : index
    %c0_73 = arith.constant 0 : index
    %95 = vector.load %arg3[%c3_72, %c0_73] : memref<6x16xf32, #tpu.memory_space<vmem>>, vector<1x16xf32>
    %96 = vector.broadcast %95 : vector<1x16xf32> to vector<288x16xf32>
    %97 = arith.addf %94, %96 : vector<288x16xf32>
    %c0_74 = arith.constant 0 : index
    %c0_75 = arith.constant 0 : index
    %c0_76 = arith.constant 0 : index
    %98 = vector.load %arg8[%c0_74, %c0_75, %c0_76] : memref<1x288x16xf32, #tpu.memory_space<vmem>>, vector<1x288x16xf32>
    %99 = vector.shape_cast %98 : vector<1x288x16xf32> to vector<288x16xf32>
    %100 = vector.shape_cast %97 : vector<288x16xf32> to vector<1x288x16xf32>
    tpu.vector_store %arg8[%c0_74, %c0_75, %c0_76], %100 {strides = array<i32>} : memref<1x288x16xf32, #tpu.memory_space<vmem>>, vector<1x288x16xf32>,
    return
  }
  func.func @transform_0(%arg0: i32) -> (i32, i32, i32) {
    %c0_i32 = arith.constant 0 : i32
    %c0_i32_0 = arith.constant 0 : i32
    %c0_i32_1 = arith.constant 0 : i32
    return %arg0, %c0_i32, %c0_i32_0 : i32, i32, i32
  }
  func.func @transform_1(%arg0: i32) -> (i32, i32, i32) {
    %c0_i32 = arith.constant 0 : i32
    %c0_i32_0 = arith.constant 0 : i32
    %c0_i32_1 = arith.constant 0 : i32
    %c0_i32_2 = arith.constant 0 : i32
    return %c0_i32, %c0_i32_0, %c0_i32_1 : i32, i32, i32
  }
  func.func @transform_2(%arg0: i32) -> (i32, i32) {
    %c0_i32 = arith.constant 0 : i32
    %c0_i32_0 = arith.constant 0 : i32
    %c0_i32_1 = arith.constant 0 : i32
    return %c0_i32, %c0_i32_0 : i32, i32
  }
  func.func @transform_3(%arg0: i32) -> (i32, i32) {
    %c0_i32 = arith.constant 0 : i32
    %c0_i32_0 = arith.constant 0 : i32
    %c0_i32_1 = arith.constant 0 : i32
    return %c0_i32, %c0_i32_0 : i32, i32
  }
  func.func @transform_4(%arg0: i32) -> (i32, i32) {
    %c0_i32 = arith.constant 0 : i32
    %c0_i32_0 = arith.constant 0 : i32
    %c0_i32_1 = arith.constant 0 : i32
    return %c0_i32, %c0_i32_0 : i32, i32
  }
  func.func @transform_5(%arg0: i32) -> (i32, i32, i32) {
    %c0_i32 = arith.constant 0 : i32
    %c0_i32_0 = arith.constant 0 : i32
    %c0_i32_1 = arith.constant 0 : i32
    return %arg0, %c0_i32, %c0_i32_0 : i32, i32, i32
  }
  func.func @transform_6(%arg0: i32) -> (i32, i32) {
    %c0_i32 = arith.constant 0 : i32
    %c0_i32_0 = arith.constant 0 : i32
    %c0_i32_1 = arith.constant 0 : i32
    return %c0_i32, %c0_i32_0 : i32, i32
  }
  func.func @transform_7(%arg0: i32) -> (i32, i32, i32) {
    %c0_i32 = arith.constant 0 : i32
    %c0_i32_0 = arith.constant 0 : i32
    %c0_i32_1 = arith.constant 0 : i32
    return %arg0, %c0_i32, %c0_i32_0 : i32, i32, i32
  }
}

</mosaic_0001>

<llo_original>
// kernel: resnet_block_forward.2
$region0: #{resnet_block_forward.2}
  #allocation0 [shape = 'u32[]', space=smem, size = 0x4, offset = 0x4, fixed_abs, tag = 'smem constant byte address 0x4 - core index']
  #allocation1 [shape = 'u32[144,128]{1,0:T(1,128)}', space=vmem, size = 0x12000, scoped, tag = 'internal scratch']
  %s0 = inlined_call_operand.vmem [shape: f32[2,342,4], index: 0, kind: input, shape index: {}]
  %s1 = inlined_call_operand.vmem [shape: f32[9,4,16], index: 1, kind: input, shape index: {}]
  %s2 = inlined_call_operand.vmem [shape: f32[6,16], index: 2, kind: input, shape index: {}]
  %s3 = inlined_call_operand.vmem [shape: f32[288,1], index: 3, kind: input, shape index: {}]
  %s4 = inlined_call_operand.vmem [shape: f32[16,16], index: 4, kind: input, shape index: {}]
  %s5 = inlined_call_operand.vmem [shape: f32[2,1,32], index: 5, kind: input, shape index: {}]
  %s6 = inlined_call_operand.vmem [shape: f32[2,32,16], index: 6, kind: input, shape index: {}]
  %s7 = inlined_call_operand.vmem [shape: f32[2,288,16], index: 7, kind: output, shape index: {}]
  %s8 = sld [smem:[#allocation0]]
  $region61: #{resnet_block_forward.2} parent=0
    _
  %s10 = ssub.s32 1, %s8
  %s11 = scalar_select 0, %s10, %s8
  loop: start=0, step=1, limit=4
  $region2: #{resnet_block_forward.2} parent=0 // loop_pre_header
    _
  $region3: #{resnet_block_forward.2} parent=0 // loop_header
    %s13 = sphi 0, %s17
    %p14 = scmp.ge.s32.totalorder %s13, 4
    %s23 = sphi 0, %s25
    %s26 = sphi 0, %s23
    %s27 = sphi 0, %s26
    %s43 = sphi 0, %s27
    %s47 = sphi 0, %s47
    %s49 = sphi 0, %s47
    %s50 = sphi 0, %s49
    %s64 = sphi 0, %s50
    %s68 = sphi 0, %s68
    %s70 = sphi 0, %s68
    %s71 = sphi 0, %s70
    %s85 = sphi 0, %s71
    %s89 = sphi 0, %s89
    %s91 = sphi 0, %s89
    %s92 = sphi 0, %s91
    %s106 = sphi 0, %s92
    %s110 = sphi 0, %s110
    %s112 = sphi 0, %s110
    %s113 = sphi 0, %s112
    %s127 = sphi 0, %s113
    %s133 = sphi 0, %s135
    %s136 = sphi 0, %s133
    %s137 = sphi 0, %s136
    %s153 = sphi 0, %s137
    %s157 = sphi 0, %s157
    %s159 = sphi 0, %s157
    %s160 = sphi 0, %s159
    %s174 = sphi 0, %s160
    %s180 = sphi 0, %s182
    %s183 = sphi 0, %s180
    %s184 = sphi 0, %s183
    %s200 = sphi 0, %s184
  $region4: #{resnet_block_forward.2} parent=0 // loop_header_branch
    %16 = sbr.rel (%p14) target = $region8
  $region5: #{resnet_block_forward.2} parent=0 // loop_body
    %s18 = ssub.s32 %s13, 1
    %s19 = ssub.s32 %s13, 2
    %s20 = sadd.s32 %s13, 1
    %s21 = ssub.s32 %s13, %s20
    %p22 = scmp.eq.s32.totalorder %s21, 0
    %s24 = sadd.s32 %s23, 1
    %s25 = scalar_select %p22, %s23, %s24
    %p28 = pneg %p22
    %p29 = scmp.eq.s32.totalorder %s13, 1
    %p30 = por %p28, %p29
    %p31 = scmp.ne.s32.totalorder %s23, %s26
    %p32 = scmp.eq.s32.totalorder %s13, 0
    %p33 = por %p31, %p32
    %p34 = scmp.ne.s32.totalorder %s23, %s26
    %p35 = scmp.eq.s32.totalorder %s18, 1
    %p36 = por %p34, %p35
    %p37 = scmp.ne.s32.totalorder %s26, %s27
    %p38 = scmp.eq.s32.totalorder %s18, 0
    %p39 = por %p37, %p38
    %p40 = scmp.ne.s32.totalorder %s26, %s27
    %p41 = scmp.eq.s32.totalorder %s19, 1
    %p42 = por %p40, %p41
    %p44 = scmp.ne.s32.totalorder %s27, %s43
    %p45 = scmp.eq.s32.totalorder %s19, 0
    %p46 = por %p44, %p45
    %s48 = sadd.s32 %s47, 1
    %p51 = scmp.eq.s32.totalorder %s13, 1
    %p52 = scmp.ne.s32.totalorder %s47, %s49
    %p53 = scmp.eq.s32.totalorder %s13, 0
    %p54 = por %p52, %p53
    %p55 = scmp.ne.s32.totalorder %s47, %s49
    %p56 = scmp.eq.s32.totalorder %s18, 1
    %p57 = por %p55, %p56
    %p58 = scmp.ne.s32.totalorder %s49, %s50
    %p59 = scmp.eq.s32.totalorder %s18, 0
    %p60 = por %p58, %p59
    %p61 = scmp.ne.s32.totalorder %s49, %s50
    %p62 = scmp.eq.s32.totalorder %s19, 1
    %p63 = por %p61, %p62
    %p65 = scmp.ne.s32.totalorder %s50, %s64
    %p66 = scmp.eq.s32.totalorder %s19, 0
    %p67 = por %p65, %p66
    %s69 = sadd.s32 %s68, 1
    %p72 = scmp.eq.s32.totalorder %s13, 1
    %p73 = scmp.ne.s32.totalorder %s68, %s70
    %p74 = scmp.eq.s32.totalorder %s13, 0
    %p75 = por %p73, %p74
    %p76 = scmp.ne.s32.totalorder %s68, %s70
    %p77 = scmp.eq.s32.totalorder %s18, 1
    %p78 = por %p76, %p77
    %p79 = scmp.ne.s32.totalorder %s70, %s71
    %p80 = scmp.eq.s32.totalorder %s18, 0
    %p81 = por %p79, %p80
    %p82 = scmp.ne.s32.totalorder %s70, %s71
    %p83 = scmp.eq.s32.totalorder %s19, 1
    %p84 = por %p82, %p83
    %p86 = scmp.ne.s32.totalorder %s71, %s85
    %p87 = scmp.eq.s32.totalorder %s19, 0
    %p88 = por %p86, %p87
    %s90 = sadd.s32 %s89, 1
    %p93 = scmp.eq.s32.totalorder %s13, 1
    %p94 = scmp.ne.s32.totalorder %s89, %s91
    %p95 = scmp.eq.s32.totalorder %s13, 0
    %p96 = por %p94, %p95
    %p97 = scmp.ne.s32.totalorder %s89, %s91
    %p98 = scmp.eq.s32.totalorder %s18, 1
    %p99 = por %p97, %p98
    %p100 = scmp.ne.s32.totalorder %s91, %s92
    %p101 = scmp.eq.s32.totalorder %s18, 0
    %p102 = por %p100, %p101
    %p103 = scmp.ne.s32.totalorder %s91, %s92
    %p104 = scmp.eq.s32.totalorder %s19, 1
    %p105 = por %p103, %p104
    %p107 = scmp.ne.s32.totalorder %s92, %s106
    %p108 = scmp.eq.s32.totalorder %s19, 0
    %p109 = por %p107, %p108
    %s111 = sadd.s32 %s110, 1
    %p114 = scmp.eq.s32.totalorder %s13, 1
    %p115 = scmp.ne.s32.totalorder %s110, %s112
    %p116 = scmp.eq.s32.totalorder %s13, 0
    %p117 = por %p115, %p116
    %p118 = scmp.ne.s32.totalorder %s110, %s112
    %p119 = scmp.eq.s32.totalorder %s18, 1
    %p120 = por %p118, %p119
    %p121 = scmp.ne.s32.totalorder %s112, %s113
    %p122 = scmp.eq.s32.totalorder %s18, 0
    %p123 = por %p121, %p122
    %p124 = scmp.ne.s32.totalorder %s112, %s113
    %p125 = scmp.eq.s32.totalorder %s19, 1
    %p126 = por %p124, %p125
    %p128 = scmp.ne.s32.totalorder %s113, %s127
    %p129 = scmp.eq.s32.totalorder %s19, 0
    %p130 = por %p128, %p129
    %s131 = ssub.s32 %s13, %s20
    %p132 = scmp.eq.s32.totalorder %s131, 0
    %s134 = sadd.s32 %s133, 1
    %s135 = scalar_select %p132, %s133, %s134
    %p138 = pneg %p132
    %p139 = scmp.eq.s32.totalorder %s13, 1
    %p140 = por %p138, %p139
    %p141 = scmp.ne.s32.totalorder %s133, %s136
    %p142 = scmp.eq.s32.totalorder %s13, 0
    %p143 = por %p141, %p142
    %p144 = scmp.ne.s32.totalorder %s133, %s136
    %p145 = scmp.eq.s32.totalorder %s18, 1
    %p146 = por %p144, %p145
    %p147 = scmp.ne.s32.totalorder %s136, %s137
    %p148 = scmp.eq.s32.totalorder %s18, 0
    %p149 = por %p147, %p148
    %p150 = scmp.ne.s32.totalorder %s136, %s137
    %p151 = scmp.eq.s32.totalorder %s19, 1
    %p152 = por %p150, %p151
    %p154 = scmp.ne.s32.totalorder %s137, %s153
    %p155 = scmp.eq.s32.totalorder %s19, 0
    %p156 = por %p154, %p155
    %s158 = sadd.s32 %s157, 1
    %p161 = scmp.eq.s32.totalorder %s13, 1
    %p162 = scmp.ne.s32.totalorder %s157, %s159
    %p163 = scmp.eq.s32.totalorder %s13, 0
    %p164 = por %p162, %p163
    %p165 = scmp.ne.s32.totalorder %s157, %s159
    %p166 = scmp.eq.s32.totalorder %s18, 1
    %p167 = por %p165, %p166
    %p168 = scmp.ne.s32.totalorder %s159, %s160
    %p169 = scmp.eq.s32.totalorder %s18, 0
    %p170 = por %p168, %p169
    %p171 = scmp.ne.s32.totalorder %s159, %s160
    %p172 = scmp.eq.s32.totalorder %s19, 1
    %p173 = por %p171, %p172
    %p175 = scmp.ne.s32.totalorder %s160, %s174
    %p176 = scmp.eq.s32.totalorder %s19, 0
    %p177 = por %p175, %p176
    %s178 = ssub.s32 %s13, %s20
    %p179 = scmp.eq.s32.totalorder %s178, 0
    %s181 = sadd.s32 %s180, 1
    %s182 = scalar_select %p179, %s180, %s181
    %p185 = pneg %p179
    %p186 = scmp.eq.s32.totalorder %s13, 1
    %p187 = por %p185, %p186
    %p188 = scmp.ne.s32.totalorder %s180, %s183
    %p189 = scmp.eq.s32.totalorder %s13, 0
    %p190 = por %p188, %p189
    %p191 = scmp.ne.s32.totalorder %s180, %s183
    %p192 = scmp.eq.s32.totalorder %s18, 1
    %p193 = por %p191, %p192
    %p194 = scmp.ne.s32.totalorder %s183, %s184
    %p195 = scmp.eq.s32.totalorder %s18, 0
    %p196 = por %p194, %p195
    %p197 = scmp.ne.s32.totalorder %s183, %s184
    %p198 = scmp.eq.s32.totalorder %s19, 1
    %p199 = por %p197, %p198
    %p201 = scmp.ne.s32.totalorder %s184, %s200
    %p202 = scmp.eq.s32.totalorder %s19, 0
    %p203 = por %p201, %p202
    %p204 = scmp.le.s32.totalorder 1, %s13
    %p205 = scmp.lt.s32.totalorder %s13, 3
    %p206 = pnand %p204, %p205
    %p207 = pneg %p206
    // Predicated region
    $region9: #{resnet_block_forward.2} parent=5 // pred_check
      _
    $region10: #{resnet_block_forward.2} parent=5 // pred_check_branch
      %209 = sbr.rel (%p206) target = $region12
    $region11: #{resnet_block_forward.2} parent=5 // pred_region
      %s210 = ssub.s32 %s13, 1
      // Predicated region
      $region13: #{resnet_block_forward.2} parent=11 // pred_check
        %p211 = pneg %p60
      $region14: #{resnet_block_forward.2} parent=11 // pred_check_branch
        %213 = sbr.rel (%p211) target = $region16
      $region15: #{resnet_block_forward.2} parent=11 // pred_region
        _
      $region16: #{resnet_block_forward.2} parent=11 // pred_fallthru
        _
      // Predicated region
      $region17: #{resnet_block_forward.2} parent=11 // pred_check
        %p214 = pneg %p81
      $region18: #{resnet_block_forward.2} parent=11 // pred_check_branch
        %216 = sbr.rel (%p214) target = $region20
      $region19: #{resnet_block_forward.2} parent=11 // pred_region
        _
      $region20: #{resnet_block_forward.2} parent=11 // pred_fallthru
        _
      // Predicated region
      $region21: #{resnet_block_forward.2} parent=11 // pred_check
        %p217 = pneg %p102
      $region22: #{resnet_block_forward.2} parent=11 // pred_check_branch
        %219 = sbr.rel (%p217) target = $region24
      $region23: #{resnet_block_forward.2} parent=11 // pred_region
        _
      $region24: #{resnet_block_forward.2} parent=11 // pred_fallthru
        _
      // Predicated region
      $region25: #{resnet_block_forward.2} parent=11 // pred_check
        %p220 = pneg %p123
      $region26: #{resnet_block_forward.2} parent=11 // pred_check_branch
        %222 = sbr.rel (%p220) target = $region28
      $region27: #{resnet_block_forward.2} parent=11 // pred_region
        _
      $region28: #{resnet_block_forward.2} parent=11 // pred_fallthru
        _
      // Predicated region
      $region29: #{resnet_block_forward.2} parent=11 // pred_check
        %p223 = pneg %p170
      $region30: #{resnet_block_forward.2} parent=11 // pred_check_branch
        %225 = sbr.rel (%p223) target = $region32
      $region31: #{resnet_block_forward.2} parent=11 // pred_region
        _
      $region32: #{resnet_block_forward.2} parent=11 // pred_fallthru
        _
    $region12: #{resnet_block_forward.2} parent=5 // pred_fallthru
      _
    %p226 = scmp.lt.s32.totalorder %s13, 2
    // Predicated region
    $region33: #{resnet_block_forward.2} parent=5 // pred_check
      %p227 = pneg %p226
    $region34: #{resnet_block_forward.2} parent=5 // pred_check_branch
      %229 = sbr.rel (%p227) target = $region36
    $region35: #{resnet_block_forward.2} parent=5 // pred_region
      // Predicated region
      $region37: #{resnet_block_forward.2} parent=35 // pred_check
        %p230 = pneg %p33
      $region38: #{resnet_block_forward.2} parent=35 // pred_check_branch
        %232 = sbr.rel (%p230) target = $region40
      $region39: #{resnet_block_forward.2} parent=35 // pred_region
        %p233 = scmp.lt.s32.totalorder %s13, 1
        %s234 = scalar_select %p233, %s13, 1
        %s235 = smul.addr %s234, 43
        %s236 = smul.addr %s235, 8
        %s237 = scalar_lea.vmem %s0, %s236
      $region40: #{resnet_block_forward.2} parent=35 // pred_fallthru
        _
      // Predicated region
      $region41: #{resnet_block_forward.2} parent=35 // pred_check
        %p238 = pneg %p143
      $region42: #{resnet_block_forward.2} parent=35 // pred_check_branch
        %240 = sbr.rel (%p238) target = $region44
      $region43: #{resnet_block_forward.2} parent=35 // pred_region
        %p241 = scmp.lt.s32.totalorder %s13, 1
        %s242 = scalar_select %p241, %s13, 1
        %s243 = scalar_lea.vmem %s5, %s242
      $region44: #{resnet_block_forward.2} parent=35 // pred_fallthru
        _
    $region36: #{resnet_block_forward.2} parent=5 // pred_fallthru
      _
    %p244 = scmp.le.s32.totalorder 1, %s13
    %p245 = scmp.lt.s32.totalorder %s13, 3
    %p246 = pnand %p244, %p245
    %p247 = pneg %p246
    // Predicated region
    $region45: #{resnet_block_forward.2} parent=5 // pred_check
      _
    $region46: #{resnet_block_forward.2} parent=5 // pred_check_branch
      %249 = sbr.rel (%p246) target = $region48
    $region47: #{resnet_block_forward.2} parent=5 // pred_region
      %s250 = ssub.s32 %s13, 1
      %p251 = scmp.lt.s32.totalorder %s18, 1
      %s252 = scalar_select %p251, %s18, 1
      %s253 = smul.addr %s252, 43
      %s254 = smul.addr %s253, 8
      %s255 = scalar_lea.vmem %s0, %s254
      %p256 = pneg %p39
      %p257 = pneg %p36
      %p258 = pneg %p60
      %p259 = pneg %p57
      %p260 = pneg %p81
      %p261 = pneg %p78
      %p262 = pneg %p102
      %p263 = pneg %p99
      %p264 = pneg %p123
      %p265 = pneg %p120
      %p266 = scmp.lt.s32.totalorder %s18, 1
      %s267 = scalar_select %p266, %s18, 1
      %s268 = scalar_lea.vmem %s5, %s267
      %p269 = pneg %p149
      %p270 = pneg %p146
      %p271 = pneg %p170
      %p272 = pneg %p167
      %p273 = pneg %p196
      %p274 = pneg %p193
      %p275 = scmp.lt.s32.totalorder %s18, 1
      %s276 = scalar_select %p275, %s18, 1
      %s277 = smul.addr %s276, 36
      %s278 = smul.addr %s277, 8
      %s279 = scalar_lea.vmem %s7, %s278
      %p280 = scmp.lt.s32.totalorder %s18, 1
      %s281 = scalar_select %p280, %s18, 1
      %s282 = smul.addr %s281, 43
      %s283 = smul.addr %s282, 8
      %s284 = scalar_lea.vmem %s0, %s283
      %p285 = scmp.lt.s32.totalorder %s18, 1
      %s286 = scalar_select %p285, %s18, 1
      %s287 = scalar_lea.vmem %s5, %s286
      %p288 = scmp.lt.s32.totalorder %s18, 1
      %s289 = scalar_select %p288, %s18, 1
      %s290 = smul.addr %s289, 36
      %s291 = smul.addr %s290, 8
      %s292 = scalar_lea.vmem %s7, %s291
      %v293 = vld [vmem:[%s284] sm:$0xff]
      %v294 = vld [vmem:[%s284 + $0x8] sm:$0xff]
      %v295 = vld [vmem:[%s284 + $0x10] sm:$0xff]
      %v296 = vld [vmem:[%s284 + $0x18] sm:$0xff]
      %v297 = vld [vmem:[%s284 + $0x20] sm:$0xff]
      %v298 = vld [vmem:[%s284 + $0x28] sm:$0xff]
      %v299 = vld [vmem:[%s284 + $0x30] sm:$0xff]
      %v300 = vld [vmem:[%s284 + $0x38] sm:$0xff]
      %v301 = vld [vmem:[%s284 + $0x40] sm:$0xff]
      %v302 = vld [vmem:[%s284 + $0x48] sm:$0xff]
      %v303 = vld [vmem:[%s284 + $0x50] sm:$0xff]
      %v304 = vld [vmem:[%s284 + $0x58] sm:$0xff]
      %v305 = vld [vmem:[%s284 + $0x60] sm:$0xff]
      %v306 = vld [vmem:[%s284 + $0x68] sm:$0xff]
      %v307 = vld [vmem:[%s284 + $0x70] sm:$0xff]
      %v308 = vld [vmem:[%s284 + $0x78] sm:$0xff]
      %v309 = vld [vmem:[%s284 + $0x80] sm:$0xff]
      %v310 = vld [vmem:[%s284 + $0x88] sm:$0xff]
      %v311 = vld [vmem:[%s284 + $0x90] sm:$0xff]
      %v312 = vld [vmem:[%s284 + $0x98] sm:$0xff]
      %v313 = vld [vmem:[%s284 + $0xa0] sm:$0xff]
      %v314 = vld [vmem:[%s284 + $0xa8] sm:$0xff]
      %v315 = vld [vmem:[%s284 + $0xb0] sm:$0xff]
      %v316 = vld [vmem:[%s284 + $0xb8] sm:$0xff]
      %v317 = vld [vmem:[%s284 + $0xc0] sm:$0xff]
      %v318 = vld [vmem:[%s284 + $0xc8] sm:$0xff]
      %v319 = vld [vmem:[%s284 + $0xd0] sm:$0xff]
      %v320 = vld [vmem:[%s284 + $0xd8] sm:$0xff]
      %v321 = vld [vmem:[%s284 + $0xe0] sm:$0xff]
      %v322 = vld [vmem:[%s284 + $0xe8] sm:$0xff]
      %v323 = vld [vmem:[%s284 + $0xf0] sm:$0xff]
      %v324 = vld [vmem:[%s284 + $0xf8] sm:$0xff]
      %v325 = vld [vmem:[%s284 + $0x100] sm:$0xff]
      %v326 = vld [vmem:[%s284 + $0x108] sm:$0xff]
      %v327 = vld [vmem:[%s284 + $0x110] sm:$0xff]
      %v328 = vld [vmem:[%s284 + $0x118] sm:$0xff]
      %v329 = vld [vmem:[%s1] sm:$0xf]
      %v330 = vld [vmem:[%s284 + $0x1] sm:$0xff]
      %v331 = vld [vmem:[%s284 + $0x9] sm:$0xff]
      %v332 = vld [vmem:[%s284 + $0x11] sm:$0xff]
      %v333 = vld [vmem:[%s284 + $0x19] sm:$0xff]
      %v334 = vld [vmem:[%s284 + $0x21] sm:$0xff]
      %v335 = vld [vmem:[%s284 + $0x29] sm:$0xff]
      %v336 = vld [vmem:[%s284 + $0x31] sm:$0xff]
      %v337 = vld [vmem:[%s284 + $0x39] sm:$0xff]
      %v338 = vld [vmem:[%s284 + $0x41] sm:$0xff]
      %v339 = vld [vmem:[%s284 + $0x49] sm:$0xff]
      %v340 = vld [vmem:[%s284 + $0x51] sm:$0xff]
      %v341 = vld [vmem:[%s284 + $0x59] sm:$0xff]
      %v342 = vld [vmem:[%s284 + $0x61] sm:$0xff]
      %v343 = vld [vmem:[%s284 + $0x69] sm:$0xff]
      %v344 = vld [vmem:[%s284 + $0x71] sm:$0xff]
      %v345 = vld [vmem:[%s284 + $0x79] sm:$0xff]
      %v346 = vld [vmem:[%s284 + $0x81] sm:$0xff]
      %v347 = vld [vmem:[%s284 + $0x89] sm:$0xff]
      %v348 = vld [vmem:[%s284 + $0x91] sm:$0xff]
      %v349 = vld [vmem:[%s284 + $0x99] sm:$0xff]
      %v350 = vld [vmem:[%s284 + $0xa1] sm:$0xff]
      %v351 = vld [vmem:[%s284 + $0xa9] sm:$0xff]
      %v352 = vld [vmem:[%s284 + $0xb1] sm:$0xff]
      %v353 = vld [vmem:[%s284 + $0xb9] sm:$0xff]
      %v354 = vld [vmem:[%s284 + $0xc1] sm:$0xff]
      %v355 = vld [vmem:[%s284 + $0xc9] sm:$0xff]
      %v356 = vld [vmem:[%s284 + $0xd1] sm:$0xff]
      %v357 = vld [vmem:[%s284 + $0xd9] sm:$0xff]
      %v358 = vld [vmem:[%s284 + $0xe1] sm:$0xff]
      %v359 = vld [vmem:[%s284 + $0xe9] sm:$0xff]
      %v360 = vld [vmem:[%s284 + $0xf1] sm:$0xff]
      %v361 = vld [vmem:[%s284 + $0xf9] sm:$0xff]
      %v362 = vld [vmem:[%s284 + $0x101] sm:$0xff]
      %v363 = vld [vmem:[%s284 + $0x109] sm:$0xff]
      %v364 = vld [vmem:[%s284 + $0x111] sm:$0xff]
      %v365 = vld [vmem:[%s284 + $0x119] sm:$0xff]
      %s366 = scalar_lea.vmem %s1, 4
      %v367 = vld [vmem:[%s366] sm:$0xf]
      %vm368 = vcmask 31744
      %v370 = vsel %vm368, %v330, 0
      %v373 = vsel %vm368, %v331, 0
      %v376 = vsel %vm368, %v332, 0
      %v379 = vsel %vm368, %v333, 0
      %v382 = vsel %vm368, %v334, 0
      %v385 = vsel %vm368, %v335, 0
      %v388 = vsel %vm368, %v336, 0
      %v391 = vsel %vm368, %v337, 0
      %v394 = vsel %vm368, %v338, 0
      %v397 = vsel %vm368, %v339, 0
      %v400 = vsel %vm368, %v340, 0
      %v403 = vsel %vm368, %v341, 0
      %v406 = vsel %vm368, %v342, 0
      %v409 = vsel %vm368, %v343, 0
      %v412 = vsel %vm368, %v344, 0
      %v415 = vsel %vm368, %v345, 0
      %v418 = vsel %vm368, %v346, 0
      %v421 = vsel %vm368, %v347, 0
      %v424 = vsel %vm368, %v348, 0
      %v427 = vsel %vm368, %v349, 0
      %v430 = vsel %vm368, %v350, 0
      %v433 = vsel %vm368, %v351, 0
      %v436 = vsel %vm368, %v352, 0
      %v439 = vsel %vm368, %v353, 0
      %v442 = vsel %vm368, %v354, 0
      %v445 = vsel %vm368, %v355, 0
      %v448 = vsel %vm368, %v356, 0
      %v451 = vsel %vm368, %v357, 0
      %v454 = vsel %vm368, %v358, 0
      %v457 = vsel %vm368, %v359, 0
      %v460 = vsel %vm368, %v360, 0
      %v463 = vsel %vm368, %v361, 0
      %v466 = vsel %vm368, %v362, 0
      %v469 = vsel %vm368, %v363, 0
      %v472 = vsel %vm368, %v364, 0
      %v475 = vsel %vm368, %v365, 0
      %vm477 = vcmask 1043456
      %v479 = vsel %vm477, %v367, 0
      %481 = vmatprep.subr.mxu0 0.0
      %482 = vmatpush1.msra.mxu0 %v479
      %483 = vmatprep.subr.mxu0 0.0
      %484 = vmatpush1.msra.mxu0 0.0
      %485 = vmatprep.subr.mxu0 0.0
      %486 = vmatpush1.msra.mxu0 0.0
      %487 = vmatprep.subr.mxu0 0.0
      %488 = vmatpush1.msra.mxu0 0.0
      %489 = vmatprep.subr.mxu0 0.0
      %490 = vmatpush1.msra.mxu0 0.0
      %491 = vmatprep.subr.mxu0 0.0
      %492 = vmatpush1.msra.mxu0 0.0
      %493 = vmatprep.subr.mxu0 0.0
      %494 = vmatpush1.msra.mxu0 0.0
      %495 = vmatprep.subr.mxu0 0.0
      %496 = vmatpush1.msra.mxu0 0.0
      %497 = vmatprep.subr.mxu0 0.0
      %498 = vmatpush1.msra.mxu0 0.0
      %499 = vmatprep.subr.mxu0 0.0
      %500 = vmatpush1.msra.mxu0 0.0
      %501 = vmatprep.subr.mxu0 0.0
      %502 = vmatpush1.msra.mxu0 0.0
      %503 = vmatprep.subr.mxu0 0.0
      %504 = vmatpush1.msra.mxu0 0.0
      %505 = vmatprep.subr.mxu0 0.0
      %506 = vmatpush1.msra.mxu0 0.0
      %507 = vmatprep.subr.mxu0 0.0
      %508 = vmatpush1.msra.mxu0 0.0
      %509 = vmatprep.subr.mxu0 0.0
      %510 = vmatpush1.msra.mxu0 0.0
      %511 = vmatprep.subr.mxu0 0.0
      %512 = vmatpush1.msra.mxu0 0.0
      %513 = vmatprep.subr.mxu0 0.0
      %514 = vmatpush1.msra.mxu0 0.0
      %515 = vmatprep.subr.mxu0 0.0
      %516 = vmatpush1.msra.mxu0 0.0
      %517 = vmatprep.subr.mxu0 0.0
      %518 = vmatpush1.msra.mxu0 0.0
      %519 = vmatprep.subr.mxu0 0.0
      %520 = vmatpush1.msra.mxu0 0.0
      %521 = vmatprep.subr.mxu0 0.0
      %522 = vmatpush1.msra.mxu0 0.0
      %523 = vmatprep.subr.mxu0 0.0
      %524 = vmatpush1.msra.mxu0 0.0
      %525 = vmatprep.subr.mxu0 0.0
      %526 = vmatpush1.msra.mxu0 0.0
      %527 = vmatprep.subr.mxu0 0.0
      %528 = vmatpush1.msra.mxu0 0.0
      %529 = vmatprep.subr.mxu0 0.0
      %530 = vmatpush1.msra.mxu0 0.0
      %531 = vmatprep.subr.mxu0 0.0
      %532 = vmatpush1.msra.mxu0 0.0
      %533 = vmatprep.subr.mxu0 0.0
      %534 = vmatpush1.msra.mxu0 0.0
      %535 = vmatprep.subr.mxu0 0.0
      %536 = vmatpush1.msra.mxu0 0.0
      %537 = vmatprep.subr.mxu0 0.0
      %538 = vmatpush1.msra.mxu0 0.0
      %539 = vmatprep.subr.mxu0 0.0
      %540 = vmatpush1.msra.mxu0 0.0
      %541 = vmatprep.subr.mxu0 0.0
      %542 = vmatpush1.msra.mxu0 0.0
      %543 = vmatprep.subr.mxu0 0.0
      %544 = vmatpush1.msra.mxu0 0.0
      %545 = vmatprep.mubr.f32.mxu0 0.0
      %546 = vmatmul.mubr.f32.gmra.mrb[0].mxu0 %v370
      %v547 = vpop.f32.mrb[0].mxu0
      %v548 = vadd.f32 0.0, %v547
      %v549 = vpop.f32.mrb[0].mxu0
      %550 = vmatprep.mubr.f32.mxu0 0.0
      %551 = vmatmul.mubr.f32.gmra.mrb[0].mxu0 %v373
      %v552 = vpop.f32.mrb[0].mxu0
      %v553 = vadd.f32 0.0, %v552
      %v554 = vpop.f32.mrb[0].mxu0
      %555 = vmatprep.mubr.f32.mxu0 0.0
      %556 = vmatmul.mubr.f32.gmra.mrb[0].mxu0 %v376
      %v557 = vpop.f32.mrb[0].mxu0
      %v558 = vadd.f32 0.0, %v557
      %v559 = vpop.f32.mrb[0].mxu0
      %560 = vmatprep.mubr.f32.mxu0 0.0
      %561 = vmatmul.mubr.f32.gmra.mrb[0].mxu0 %v379
      %v562 = vpop.f32.mrb[0].mxu0
      %v563 = vadd.f32 0.0, %v562
      %v564 = vpop.f32.mrb[0].mxu0
      %565 = vmatprep.mubr.f32.mxu0 0.0
      %566 = vmatmul.mubr.f32.gmra.mrb[0].mxu0 %v382
      %v567 = vpop.f32.mrb[0].mxu0
      %v568 = vadd.f32 0.0, %v567
      %v569 = vpop.f32.mrb[0].mxu0
      %570 = vmatprep.mubr.f32.mxu0 0.0
      %571 = vmatmul.mubr.f32.gmra.mrb[0].mxu0 %v385
      %v572 = vpop.f32.mrb[0].mxu0
      %v573 = vadd.f32 0.0, %v572
      %v574 = vpop.f32.mrb[0].mxu0
      %575 = vmatprep.mubr.f32.mxu0 0.0
      %576 = vmatmul.mubr.f32.gmra.mrb[0].mxu0 %v388
      %v577 = vpop.f32.mrb[0].mxu0
      %v578 = vadd.f32 0.0, %v577
      %v579 = vpop.f32.mrb[0].mxu0
      %580 = vmatprep.mubr.f32.mxu0 0.0
      %581 = vmatmul.mubr.f32.gmra.mrb[0].mxu0 %v391
      %v582 = vpop.f32.mrb[0].mxu0
      %v583 = vadd.f32 0.0, %v582
      %v584 = vpop.f32.mrb[0].mxu0
      %585 = vmatprep.mubr.f32.mxu0 0.0
      %586 = vmatmul.mubr.f32.gmra.mrb[0].mxu0 %v394
      %v587 = vpop.f32.mrb[0].mxu0
      %v588 = vadd.f32 0.0, %v587
      %v589 = vpop.f32.mrb[0].mxu0
      %590 = vmatprep.mubr.f32.mxu0 0.0
      %591 = vmatmul.mubr.f32.gmra.mrb[0].mxu0 %v397
      %v592 = vpop.f32.mrb[0].mxu0
      %v593 = vadd.f32 0.0, %v592
      %v594 = vpop.f32.mrb[0].mxu0
      %595 = vmatprep.mubr.f32.mxu0 0.0
      %596 = vmatmul.mubr.f32.gmra.mrb[0].mxu0 %v400
      %v597 = vpop.f32.mrb[0].mxu0
      %v598 = vadd.f32 0.0, %v597
      %v599 = vpop.f32.mrb[0].mxu0
      %600 = vmatprep.mubr.f32.mxu0 0.0
      %601 = vmatmul.mubr.f32.gmra.mrb[0].mxu0 %v403
      %v602 = vpop.f32.mrb[0].mxu0
      %v603 = vadd.f32 0.0, %v602
      %v604 = vpop.f32.mrb[0].mxu0
      %605 = vmatprep.mubr.f32.mxu0 0.0
      %606 = vmatmul.mubr.f32.gmra.mrb[0].mxu0 %v406
      %v607 = vpop.f32.mrb[0].mxu0
      %v608 = vadd.f32 0.0, %v607
      %v609 = vpop.f32.mrb[0].mxu0
      %610 = vmatprep.mubr.f32.mxu0 0.0
      %611 = vmatmul.mubr.f32.gmra.mrb[0].mxu0 %v409
      %v612 = vpop.f32.mrb[0].mxu0
      %v613 = vadd.f32 0.0, %v612
      %v614 = vpop.f32.mrb[0].mxu0
      %615 = vmatprep.mubr.f32.mxu0 0.0
      %616 = vmatmul.mubr.f32.gmra.mrb[0].mxu0 %v412
      %v617 = vpop.f32.mrb[0].mxu0
      %v618 = vadd.f32 0.0, %v617
      %v619 = vpop.f32.mrb[0].mxu0
      %620 = vmatprep.mubr.f32.mxu0 0.0
      %621 = vmatmul.mubr.f32.gmra.mrb[0].mxu0 %v415
      %v622 = vpop.f32.mrb[0].mxu0
      %v623 = vadd.f32 0.0, %v622
      %v624 = vpop.f32.mrb[0].mxu0
      %625 = vmatprep.mubr.f32.mxu0 0.0
      %626 = vmatmul.mubr.f32.gmra.mrb[0].mxu0 %v418
      %v627 = vpop.f32.mrb[0].mxu0
      %v628 = vadd.f32 0.0, %v627
      %v629 = vpop.f32.mrb[0].mxu0
      %630 = vmatprep.mubr.f32.mxu0 0.0
      %631 = vmatmul.mubr.f32.gmra.mrb[0].mxu0 %v421
      %v632 = vpop.f32.mrb[0].mxu0
      %v633 = vadd.f32 0.0, %v632
      %v634 = vpop.f32.mrb[0].mxu0
      %635 = vmatprep.mubr.f32.mxu0 0.0
      %636 = vmatmul.mubr.f32.gmra.mrb[0].mxu0 %v424
      %v637 = vpop.f32.mrb[0].mxu0
      %v638 = vadd.f32 0.0, %v637
      %v639 = vpop.f32.mrb[0].mxu0
      %640 = vmatprep.mubr.f32.mxu0 0.0
      %641 = vmatmul.mubr.f32.gmra.mrb[0].mxu0 %v427
      %v642 = vpop.f32.mrb[0].mxu0
      %v643 = vadd.f32 0.0, %v642
      %v644 = vpop.f32.mrb[0].mxu0
      %645 = vmatprep.mubr.f32.mxu0 0.0
      %646 = vmatmul.mubr.f32.gmra.mrb[0].mxu0 %v430
      %v647 = vpop.f32.mrb[0].mxu0
      %v648 = vadd.f32 0.0, %v647
      %v649 = vpop.f32.mrb[0].mxu0
      %650 = vmatprep.mubr.f32.mxu0 0.0
      %651 = vmatmul.mubr.f32.gmra.mrb[0].mxu0 %v433
      %v652 = vpop.f32.mrb[0].mxu0
      %v653 = vadd.f32 0.0, %v652
      %v654 = vpop.f32.mrb[0].mxu0
      %655 = vmatprep.mubr.f32.mxu0 0.0
      %656 = vmatmul.mubr.f32.gmra.mrb[0].mxu0 %v436
      %v657 = vpop.f32.mrb[0].mxu0
      %v658 = vadd.f32 0.0, %v657
      %v659 = vpop.f32.mrb[0].mxu0
      %660 = vmatprep.mubr.f32.mxu0 0.0
      %661 = vmatmul.mubr.f32.gmra.mrb[0].mxu0 %v439
      %v662 = vpop.f32.mrb[0].mxu0
      %v663 = vadd.f32 0.0, %v662
      %v664 = vpop.f32.mrb[0].mxu0
      %665 = vmatprep.mubr.f32.mxu0 0.0
      %666 = vmatmul.mubr.f32.gmra.mrb[0].mxu0 %v442
      %v667 = vpop.f32.mrb[0].mxu0
      %v668 = vadd.f32 0.0, %v667
      %v669 = vpop.f32.mrb[0].mxu0
      %670 = vmatprep.mubr.f32.mxu0 0.0
      %671 = vmatmul.mubr.f32.gmra.mrb[0].mxu0 %v445
      %v672 = vpop.f32.mrb[0].mxu0
      %v673 = vadd.f32 0.0, %v672
      %v674 = vpop.f32.mrb[0].mxu0
      %675 = vmatprep.mubr.f32.mxu0 0.0
      %676 = vmatmul.mubr.f32.gmra.mrb[0].mxu0 %v448
      %v677 = vpop.f32.mrb[0].mxu0
      %v678 = vadd.f32 0.0, %v677
      %v679 = vpop.f32.mrb[0].mxu0
      %680 = vmatprep.mubr.f32.mxu0 0.0
      %681 = vmatmul.mubr.f32.gmra.mrb[0].mxu0 %v451
      %v682 = vpop.f32.mrb[0].mxu0
      %v683 = vadd.f32 0.0, %v682
      %v684 = vpop.f32.mrb[0].mxu0
      %685 = vmatprep.mubr.f32.mxu0 0.0
      %686 = vmatmul.mubr.f32.gmra.mrb[0].mxu0 %v454
      %v687 = vpop.f32.mrb[0].mxu0
      %v688 = vadd.f32 0.0, %v687
      %v689 = vpop.f32.mrb[0].mxu0
      %690 = vmatprep.mubr.f32.mxu0 0.0
      %691 = vmatmul.mubr.f32.gmra.mrb[0].mxu0 %v457
      %v692 = vpop.f32.mrb[0].mxu0
      %v693 = vadd.f32 0.0, %v692
      %v694 = vpop.f32.mrb[0].mxu0
      %695 = vmatprep.mubr.f32.mxu0 0.0
      %696 = vmatmul.mubr.f32.gmra.mrb[0].mxu0 %v460
      %v697 = vpop.f32.mrb[0].mxu0
      %v698 = vadd.f32 0.0, %v697
      %v699 = vpop.f32.mrb[0].mxu0
      %700 = vmatprep.mubr.f32.mxu0 0.0
      %701 = vmatmul.mubr.f32.gmra.mrb[0].mxu0 %v463
      %v702 = vpop.f32.mrb[0].mxu0
      %v703 = vadd.f32 0.0, %v702
      %v704 = vpop.f32.mrb[0].mxu0
      %705 = vmatprep.mubr.f32.mxu0 0.0
      %706 = vmatmul.mubr.f32.gmra.mrb[0].mxu0 %v466
      %v707 = vpop.f32.mrb[0].mxu0
      %v708 = vadd.f32 0.0, %v707
      %v709 = vpop.f32.mrb[0].mxu0
      %710 = vmatprep.mubr.f32.mxu0 0.0
      %711 = vmatmul.mubr.f32.gmra.mrb[0].mxu0 %v469
      %v712 = vpop.f32.mrb[0].mxu0
      %v713 = vadd.f32 0.0, %v712
      %v714 = vpop.f32.mrb[0].mxu0
      %715 = vmatprep.mubr.f32.mxu0 0.0
      %716 = vmatmul.mubr.f32.gmra.mrb[0].mxu0 %v472
      %v717 = vpop.f32.mrb[0].mxu0
      %v718 = vadd.f32 0.0, %v717
      %v719 = vpop.f32.mrb[0].mxu0
      %720 = vmatprep.mubr.f32.mxu0 0.0
      %721 = vmatmul.mubr.f32.gmra.mrb[0].mxu0 %v475
      %v722 = vpop.f32.mrb[0].mxu0
      %v723 = vadd.f32 0.0, %v722
      %v724 = vpop.f32.mrb[0].mxu0
      %725 = vdwg.mxu0
      %v727 = vsel %vm368, %v293, 0
      %v730 = vsel %vm368, %v294, 0
      %v733 = vsel %vm368, %v295, 0
      %v736 = vsel %vm368, %v296, 0
      %v739 = vsel %vm368, %v297, 0
      %v742 = vsel %vm368, %v298, 0
      %v745 = vsel %vm368, %v299, 0
      %v748 = vsel %vm368, %v300, 0
      %v751 = vsel %vm368, %v301, 0
      %v754 = vsel %vm368, %v302, 0
      %v757 = vsel %vm368, %v303, 0
      %v760 = vsel %vm368, %v304, 0
      %v763 = vsel %vm368, %v305, 0
      %v766 = vsel %vm368, %v306, 0
      %v769 = vsel %vm368, %v307, 0
      %v772 = vsel %vm368, %v308, 0
      %v775 = vsel %vm368, %v309, 0
      %v778 = vsel %vm368, %v310, 0
      %v781 = vsel %vm368, %v311, 0
      %v784 = vsel %vm368, %v312, 0
      %v787 = vsel %vm368, %v313, 0
      %v790 = vsel %vm368, %v314, 0
      %v793 = vsel %vm368, %v315, 0
      %v796 = vsel %vm368, %v316, 0
      %v799 = vsel %vm368, %v317, 0
      %v802 = vsel %vm368, %v318, 0
      %v805 = vsel %vm368, %v319, 0
      %v808 = vsel %vm368, %v320, 0
      %v811 = vsel %vm368, %v321, 0
      %v814 = vsel %vm368, %v322, 0
      %v817 = vsel %vm368, %v323, 0
      %v820 = vsel %vm368, %v324, 0
      %v823 = vsel %vm368, %v325, 0
      %v826 = vsel %vm368, %v326, 0
      %v829 = vsel %vm368, %v327, 0
      %v832 = vsel %vm368, %v328, 0
      %v835 = vsel %vm477, %v329, 0
      %837 = vmatprep.subr.mxu0 0.0
      %838 = vmatpush1.msra.mxu0 %v835
      %839 = vmatprep.subr.mxu0 0.0
      %840 = vmatpush1.msra.mxu0 0.0
      %841 = vmatprep.subr.mxu0 0.0
      %842 = vmatpush1.msra.mxu0 0.0
      %843 = vmatprep.subr.mxu0 0.0
      %844 = vmatpush1.msra.mxu0 0.0
      %845 = vmatprep.subr.mxu0 0.0
      %846 = vmatpush1.msra.mxu0 0.0
      %847 = vmatprep.subr.mxu0 0.0
      %848 = vmatpush1.msra.mxu0 0.0
      %849 = vmatprep.subr.mxu0 0.0
      %850 = vmatpush1.msra.mxu0 0.0
      %851 = vmatprep.subr.mxu0 0.0
      %852 = vmatpush1.msra.mxu0 0.0
      %853 = vmatprep.subr.mxu0 0.0
      %854 = vmatpush1.msra.mxu0 0.0
      %855 = vmatprep.subr.mxu0 0.0
      %856 = vmatpush1.msra.mxu0 0.0
      %857 = vmatprep.subr.mxu0 0.0
      %858 = vmatpush1.msra.mxu0 0.0
      %859 = vmatprep.subr.mxu0 0.0
      %860 = vmatpush1.msra.mxu0 0.0
      %861 = vmatprep.subr.mxu0 0.0
      %862 = vmatpush1.msra.mxu0 0.0
      %863 = vmatprep.subr.mxu0 0.0
      %864 = vmatpush1.msra.mxu0 0.0
      %865 = vmatprep.subr.mxu0 0.0
      %866 = vmatpush1.msra.mxu0 0.0
      %867 = vmatprep.subr.mxu0 0.0
      %868 = vmatpush1.msra.mxu0 0.0
      %869 = vmatprep.subr.mxu0 0.0
      %870 = vmatpush1.msra.mxu0 0.0
      %871 = vmatprep.subr.mxu0 0.0
      %872 = vmatpush1.msra.mxu0 0.0
      %873 = vmatprep.subr.mxu0 0.0
      %874 = vmatpush1.msra.mxu0 0.0
      %875 = vmatprep.subr.mxu0 0.0
      %876 = vmatpush1.msra.mxu0 0.0
      %877 = vmatprep.subr.mxu0 0.0
      %878 = vmatpush1.msra.mxu0 0.0
      %879 = vmatprep.subr.mxu0 0.0
      %880 = vmatpush1.msra.mxu0 0.0
      %881 = vmatprep.subr.mxu0 0.0
      %882 = vmatpush1.msra.mxu0 0.0
      %883 = vmatprep.subr.mxu0 0.0
      %884 = vmatpush1.msra.mxu0 0.0
      %885 = vmatprep.subr.mxu0 0.0
      %886 = vmatpush1.msra.mxu0 0.0
      %887 = vmatprep.subr.mxu0 0.0
      %888 = vmatpush1.msra.mxu0 0.0
      %889 = vmatprep.subr.mxu0 0.0
      %890 = vmatpush1.msra.mxu0 0.0
      %891 = vmatprep.subr.mxu0 0.0
      %892 = vmatpush1.msra.mxu0 0.0
      %893 = vmatprep.subr.mxu0 0.0
      %894 = vmatpush1.msra.mxu0 0.0
      %895 = vmatprep.subr.mxu0 0.0
      %896 = vmatpush1.msra.mxu0 0.0
      %897 = vmatprep.subr.mxu0 0.0
      %898 = vmatpush1.msra.mxu0 0.0
      %899 = vmatprep.subr.mxu0 0.0
      %900 = vmatpush1.msra.mxu0 0.0
      %901 = vmatprep.mubr.f32.mxu0 0.0
      %902 = vmatmul.mubr.f32.gmra.mrb[0].mxu0 %v727
      %v903 = vpop.f32.mrb[0].mxu0
      %v904 = vadd.f32 %v548, %v903
      %v905 = vpop.f32.mrb[0].mxu0
      %906 = vmatprep.mubr.f32.mxu0 0.0
      %907 = vmatmul.mubr.f32.gmra.mrb[0].mxu0 %v730
      %v908 = vpop.f32.mrb[0].mxu0
      %v909 = vadd.f32 %v553, %v908
      %v910 = vpop.f32.mrb[0].mxu0
      %911 = vmatprep.mubr.f32.mxu0 0.0
      %912 = vmatmul.mubr.f32.gmra.mrb[0].mxu0 %v733
      %v913 = vpop.f32.mrb[0].mxu0
      %v914 = vadd.f32 %v558, %v913
      %v915 = vpop.f32.mrb[0].mxu0
      %916 = vmatprep.mubr.f32.mxu0 0.0
      %917 = vmatmul.mubr.f32.gmra.mrb[0].mxu0 %v736
      %v918 = vpop.f32.mrb[0].mxu0
      %v919 = vadd.f32 %v563, %v918
      %v920 = vpop.f32.mrb[0].mxu0
      %921 = vmatprep.mubr.f32.mxu0 0.0
      %922 = vmatmul.mubr.f32.gmra.mrb[0].mxu0 %v739
      %v923 = vpop.f32.mrb[0].mxu0
      %v924 = vadd.f32 %v568, %v923
      %v925 = vpop.f32.mrb[0].mxu0
      %926 = vmatprep.mubr.f32.mxu0 0.0
      %927 = vmatmul.mubr.f32.gmra.mrb[0].mxu0 %v742
      %v928 = vpop.f32.mrb[0].mxu0
      %v929 = vadd.f32 %v573, %v928
      %v930 = vpop.f32.mrb[0].mxu0
      %931 = vmatprep.mubr.f32.mxu0 0.0
      %932 = vmatmul.mubr.f32.gmra.mrb[0].mxu0 %v745
      %v933 = vpop.f32.mrb[0].mxu0
      %v934 = vadd.f32 %v578, %v933
      %v935 = vpop.f32.mrb[0].mxu0
      %936 = vmatprep.mubr.f32.mxu0 0.0
      %937 = vmatmul.mubr.f32.gmra.mrb[0].mxu0 %v748
      %v938 = vpop.f32.mrb[0].mxu0
      %v939 = vadd.f32 %v583, %v938
      %v940 = vpop.f32.mrb[0].mxu0
      %941 = vmatprep.mubr.f32.mxu0 0.0
      %942 = vmatmul.mubr.f32.gmra.mrb[0].mxu0 %v751
      %v943 = vpop.f32.mrb[0].mxu0
      %v944 = vadd.f32 %v588, %v943
      %v945 = vpop.f32.mrb[0].mxu0
      %946 = vmatprep.mubr.f32.mxu0 0.0
      %947 = vmatmul.mubr.f32.gmra.mrb[0].mxu0 %v754
      %v948 = vpop.f32.mrb[0].mxu0
      %v949 = vadd.f32 %v593, %v948
      %v950 = vpop.f32.mrb[0].mxu0
      %951 = vmatprep.mubr.f32.mxu0 0.0
      %952 = vmatmul.mubr.f32.gmra.mrb[0].mxu0 %v757
      %v953 = vpop.f32.mrb[0].mxu0
      %v954 = vadd.f32 %v598, %v953
      %v955 = vpop.f32.mrb[0].mxu0
      %956 = vmatprep.mubr.f32.mxu0 0.0
      %957 = vmatmul.mubr.f32.gmra.mrb[0].mxu0 %v760
      %v958 = vpop.f32.mrb[0].mxu0
      %v959 = vadd.f32 %v603, %v958
      %v960 = vpop.f32.mrb[0].mxu0
      %961 = vmatprep.mubr.f32.mxu0 0.0
      %962 = vmatmul.mubr.f32.gmra.mrb[0].mxu0 %v763
      %v963 = vpop.f32.mrb[0].mxu0
      %v964 = vadd.f32 %v608, %v963
      %v965 = vpop.f32.mrb[0].mxu0
      %966 = vmatprep.mubr.f32.mxu0 0.0
      %967 = vmatmul.mubr.f32.gmra.mrb[0].mxu0 %v766
      %v968 = vpop.f32.mrb[0].mxu0
      %v969 = vadd.f32 %v613, %v968
      %v970 = vpop.f32.mrb[0].mxu0
      %971 = vmatprep.mubr.f32.mxu0 0.0
      %972 = vmatmul.mubr.f32.gmra.mrb[0].mxu0 %v769
      %v973 = vpop.f32.mrb[0].mxu0
      %v974 = vadd.f32 %v618, %v973
      %v975 = vpop.f32.mrb[0].mxu0
      %976 = vmatprep.mubr.f32.mxu0 0.0
      %977 = vmatmul.mubr.f32.gmra.mrb[0].mxu0 %v772
      %v978 = vpop.f32.mrb[0].mxu0
      %v979 = vadd.f32 %v623, %v978
      %v980 = vpop.f32.mrb[0].mxu0
      %981 = vmatprep.mubr.f32.mxu0 0.0
      %982 = vmatmul.mubr.f32.gmra.mrb[0].mxu0 %v775
      %v983 = vpop.f32.mrb[0].mxu0
      %v984 = vadd.f32 %v628, %v983
      %v985 = vpop.f32.mrb[0].mxu0
      %986 = vmatprep.mubr.f32.mxu0 0.0
      %987 = vmatmul.mubr.f32.gmra.mrb[0].mxu0 %v778
      %v988 = vpop.f32.mrb[0].mxu0
      %v989 = vadd.f32 %v633, %v988
      %v990 = vpop.f32.mrb[0].mxu0
      %991 = vmatprep.mubr.f32.mxu0 0.0
      %992 = vmatmul.mubr.f32.gmra.mrb[0].mxu0 %v781
      %v993 = vpop.f32.mrb[0].mxu0
      %v994 = vadd.f32 %v638, %v993
      %v995 = vpop.f32.mrb[0].mxu0
      %996 = vmatprep.mubr.f32.mxu0 0.0
      %997 = vmatmul.mubr.f32.gmra.mrb[0].mxu0 %v784
      %v998 = vpop.f32.mrb[0].mxu0
      %v999 = vadd.f32 %v643, %v998
      %v1000 = vpop.f32.mrb[0].mxu0
      %1001 = vmatprep.mubr.f32.mxu0 0.0
      %1002 = vmatmul.mubr.f32.gmra.mrb[0].mxu0 %v787
      %v1003 = vpop.f32.mrb[0].mxu0
      %v1004 = vadd.f32 %v648, %v1003
      %v1005 = vpop.f32.mrb[0].mxu0
      %1006 = vmatprep.mubr.f32.mxu0 0.0
      %1007 = vmatmul.mubr.f32.gmra.mrb[0].mxu0 %v790
      %v1008 = vpop.f32.mrb[0].mxu0
      %v1009 = vadd.f32 %v653, %v1008
      %v1010 = vpop.f32.mrb[0].mxu0
      %1011 = vmatprep.mubr.f32.mxu0 0.0
      %1012 = vmatmul.mubr.f32.gmra.mrb[0].mxu0 %v793
      %v1013 = vpop.f32.mrb[0].mxu0
      %v1014 = vadd.f32 %v658, %v1013
      %v1015 = vpop.f32.mrb[0].mxu0
      %1016 = vmatprep.mubr.f32.mxu0 0.0
      %1017 = vmatmul.mubr.f32.gmra.mrb[0].mxu0 %v796
      %v1018 = vpop.f32.mrb[0].mxu0
      %v1019 = vadd.f32 %v663, %v1018
      %v1020 = vpop.f32.mrb[0].mxu0
      %1021 = vmatprep.mubr.f32.mxu0 0.0
      %1022 = vmatmul.mubr.f32.gmra.mrb[0].mxu0 %v799
      %v1023 = vpop.f32.mrb[0].mxu0
      %v1024 = vadd.f32 %v668, %v1023
      %v1025 = vpop.f32.mrb[0].mxu0
      %1026 = vmatprep.mubr.f32.mxu0 0.0
      %1027 = vmatmul.mubr.f32.gmra.mrb[0].mxu0 %v802
      %v1028 = vpop.f32.mrb[0].mxu0
      %v1029 = vadd.f32 %v673, %v1028
      %v1030 = vpop.f32.mrb[0].mxu0
      %1031 = vmatprep.mubr.f32.mxu0 0.0
      %1032 = vmatmul.mubr.f32.gmra.mrb[0].mxu0 %v805
      %v1033 = vpop.f32.mrb[0].mxu0
      %v1034 = vadd.f32 %v678, %v1033
      %v1035 = vpop.f32.mrb[0].mxu0
      %1036 = vmatprep.mubr.f32.mxu0 0.0
      %1037 = vmatmul.mubr.f32.gmra.mrb[0].mxu0 %v808
      %v1038 = vpop.f32.mrb[0].mxu0
      %v1039 = vadd.f32 %v683, %v1038
      %v1040 = vpop.f32.mrb[0].mxu0
      %1041 = vmatprep.mubr.f32.mxu0 0.0
      %1042 = vmatmul.mubr.f32.gmra.mrb[0].mxu0 %v811
      %v1043 = vpop.f32.mrb[0].mxu0
      %v1044 = vadd.f32 %v688, %v1043
      %v1045 = vpop.f32.mrb[0].mxu0
      %1046 = vmatprep.mubr.f32.mxu0 0.0
      %1047 = vmatmul.mubr.f32.gmra.mrb[0].mxu0 %v814
      %v1048 = vpop.f32.mrb[0].mxu0
      %v1049 = vadd.f32 %v693, %v1048
      %v1050 = vpop.f32.mrb[0].mxu0
      %1051 = vmatprep.mubr.f32.mxu0 0.0
      %1052 = vmatmul.mubr.f32.gmra.mrb[0].mxu0 %v817
      %v1053 = vpop.f32.mrb[0].mxu0
      %v1054 = vadd.f32 %v698, %v1053
      %v1055 = vpop.f32.mrb[0].mxu0
      %1056 = vmatprep.mubr.f32.mxu0 0.0
      %1057 = vmatmul.mubr.f32.gmra.mrb[0].mxu0 %v820
      %v1058 = vpop.f32.mrb[0].mxu0
      %v1059 = vadd.f32 %v703, %v1058
      %v1060 = vpop.f32.mrb[0].mxu0
      %1061 = vmatprep.mubr.f32.mxu0 0.0
      %1062 = vmatmul.mubr.f32.gmra.mrb[0].mxu0 %v823
      %v1063 = vpop.f32.mrb[0].mxu0
      %v1064 = vadd.f32 %v708, %v1063
      %v1065 = vpop.f32.mrb[0].mxu0
      %1066 = vmatprep.mubr.f32.mxu0 0.0
      %1067 = vmatmul.mubr.f32.gmra.mrb[0].mxu0 %v826
      %v1068 = vpop.f32.mrb[0].mxu0
      %v1069 = vadd.f32 %v713, %v1068
      %v1070 = vpop.f32.mrb[0].mxu0
      %1071 = vmatprep.mubr.f32.mxu0 0.0
      %1072 = vmatmul.mubr.f32.gmra.mrb[0].mxu0 %v829
      %v1073 = vpop.f32.mrb[0].mxu0
      %v1074 = vadd.f32 %v718, %v1073
      %v1075 = vpop.f32.mrb[0].mxu0
      %1076 = vmatprep.mubr.f32.mxu0 0.0
      %1077 = vmatmul.mubr.f32.gmra.mrb[0].mxu0 %v832
      %v1078 = vpop.f32.mrb[0].mxu0
      %v1079 = vadd.f32 %v723, %v1078
      %v1080 = vpop.f32.mrb[0].mxu0
      %1081 = vdwg.mxu0
      %v1082 = vld [vmem:[%s284 + $0x2] sm:$0xff]
      %v1083 = vld [vmem:[%s284 + $0xa] sm:$0xff]
      %v1084 = vld [vmem:[%s284 + $0x12] sm:$0xff]
      %v1085 = vld [vmem:[%s284 + $0x1a] sm:$0xff]
      %v1086 = vld [vmem:[%s284 + $0x22] sm:$0xff]
      %v1087 = vld [vmem:[%s284 + $0x2a] sm:$0xff]
      %v1088 = vld [vmem:[%s284 + $0x32] sm:$0xff]
      %v1089 = vld [vmem:[%s284 + $0x3a] sm:$0xff]
      %v1090 = vld [vmem:[%s284 + $0x42] sm:$0xff]
      %v1091 = vld [vmem:[%s284 + $0x4a] sm:$0xff]
      %v1092 = vld [vmem:[%s284 + $0x52] sm:$0xff]
      %v1093 = vld [vmem:[%s284 + $0x5a] sm:$0xff]
      %v1094 = vld [vmem:[%s284 + $0x62] sm:$0xff]
      %v1095 = vld [vmem:[%s284 + $0x6a] sm:$0xff]
      %v1096 = vld [vmem:[%s284 + $0x72] sm:$0xff]
      %v1097 = vld [vmem:[%s284 + $0x7a] sm:$0xff]
      %v1098 = vld [vmem:[%s284 + $0x82] sm:$0xff]
      %v1099 = vld [vmem:[%s284 + $0x8a] sm:$0xff]
      %v1100 = vld [vmem:[%s284 + $0x92] sm:$0xff]
      %v1101 = vld [vmem:[%s284 + $0x9a] sm:$0xff]
      %v1102 = vld [vmem:[%s284 + $0xa2] sm:$0xff]
      %v1103 = vld [vmem:[%s284 + $0xaa] sm:$0xff]
      %v1104 = vld [vmem:[%s284 + $0xb2] sm:$0xff]
      %v1105 = vld [vmem:[%s284 + $0xba] sm:$0xff]
      %v1106 = vld [vmem:[%s284 + $0xc2] sm:$0xff]
      %v1107 = vld [vmem:[%s284 + $0xca] sm:$0xff]
      %v1108 = vld [vmem:[%s284 + $0xd2] sm:$0xff]
      %v1109 = vld [vmem:[%s284 + $0xda] sm:$0xff]
      %v1110 = vld [vmem:[%s284 + $0xe2] sm:$0xff]
      %v1111 = vld [vmem:[%s284 + $0xea] sm:$0xff]
      %v1112 = vld [vmem:[%s284 + $0xf2] sm:$0xff]
      %v1113 = vld [vmem:[%s284 + $0xfa] sm:$0xff]
      %v1114 = vld [vmem:[%s284 + $0x102] sm:$0xff]
      %v1115 = vld [vmem:[%s284 + $0x10a] sm:$0xff]
      %v1116 = vld [vmem:[%s284 + $0x112] sm:$0xff]
      %v1117 = vld [vmem:[%s284 + $0x11a] sm:$0xff]
      %s1118 = scalar_lea.vmem %s1, 8
      %v1119 = vld [vmem:[%s1118] sm:$0xf]
      %v1121 = vsel %vm368, %v1082, 0
      %v1124 = vsel %vm368, %v1083, 0
      %v1127 = vsel %vm368, %v1084, 0
      %v1130 = vsel %vm368, %v1085, 0
      %v1133 = vsel %vm368, %v1086, 0
      %v1136 = vsel %vm368, %v1087, 0
      %v1139 = vsel %vm368, %v1088, 0
      %v1142 = vsel %vm368, %v1089, 0
      %v1145 = vsel %vm368, %v1090, 0
      %v1148 = vsel %vm368, %v1091, 0
      %v1151 = vsel %vm368, %v1092, 0
      %v1154 = vsel %vm368, %v1093, 0
      %v1157 = vsel %vm368, %v1094, 0
      %v1160 = vsel %vm368, %v1095, 0
      %v1163 = vsel %vm368, %v1096, 0
      %v1166 = vsel %vm368, %v1097, 0
      %v1169 = vsel %vm368, %v1098, 0
      %v1172 = vsel %vm368, %v1099, 0
      %v1175 = vsel %vm368, %v1100, 0
      %v1178 = vsel %vm368, %v1101, 0
      %v1181 = vsel %vm368, %v1102, 0
      %v1184 = vsel %vm368, %v1103, 0
      %v1187 = vsel %vm368, %v1104, 0
      %v1190 = vsel %vm368, %v1105, 0
      %v1193 = vsel %vm368, %v1106, 0
      %v1196 = vsel %vm368, %v1107, 0
      %v1199 = vsel %vm368, %v1108, 0
      %v1202 = vsel %vm368, %v1109, 0
      %v1205 = vsel %vm368, %v1110, 0
      %v1208 = vsel %vm368, %v1111, 0
      %v1211 = vsel %vm368, %v1112, 0
      %v1214 = vsel %vm368, %v1113, 0
      %v1217 = vsel %vm368, %v1114, 0
      %v1220 = vsel %vm368, %v1115, 0
      %v1223 = vsel %vm368, %v1116, 0
      %v1226 = vsel %vm368, %v1117, 0
      %v1229 = vsel %vm477, %v1119, 0
      %1231 = vmatprep.subr.mxu0 0.0
      %1232 = vmatpush1.msra.mxu0 %v1229
      %1233 = vmatprep.subr.mxu0 0.0
      %1234 = vmatpush1.msra.mxu0 0.0
      %1235 = vmatprep.subr.mxu0 0.0
      %1236 = vmatpush1.msra.mxu0 0.0
      %1237 = vmatprep.subr.mxu0 0.0
      %1238 = vmatpush1.msra.mxu0 0.0
      %1239 = vmatprep.subr.mxu0 0.0
      %1240 = vmatpush1.msra.mxu0 0.0
      %1241 = vmatprep.subr.mxu0 0.0
      %1242 = vmatpush1.msra.mxu0 0.0
      %1243 = vmatprep.subr.mxu0 0.0
      %1244 = vmatpush1.msra.mxu0 0.0
      %1245 = vmatprep.subr.mxu0 0.0
      %1246 = vmatpush1.msra.mxu0 0.0
      %1247 = vmatprep.subr.mxu0 0.0
      %1248 = vmatpush1.msra.mxu0 0.0
      %1249 = vmatprep.subr.mxu0 0.0
      %1250 = vmatpush1.msra.mxu0 0.0
      %1251 = vmatprep.subr.mxu0 0.0
      %1252 = vmatpush1.msra.mxu0 0.0
      %1253 = vmatprep.subr.mxu0 0.0
      %1254 = vmatpush1.msra.mxu0 0.0
      %1255 = vmatprep.subr.mxu0 0.0
      %1256 = vmatpush1.msra.mxu0 0.0
      %1257 = vmatprep.subr.mxu0 0.0
      %1258 = vmatpush1.msra.mxu0 0.0
      %1259 = vmatprep.subr.mxu0 0.0
      %1260 = vmatpush1.msra.mxu0 0.0
      %1261 = vmatprep.subr.mxu0 0.0
      %1262 = vmatpush1.msra.mxu0 0.0
      %1263 = vmatprep.subr.mxu0 0.0
      %1264 = vmatpush1.msra.mxu0 0.0
      %1265 = vmatprep.subr.mxu0 0.0
      %1266 = vmatpush1.msra.mxu0 0.0
      %1267 = vmatprep.subr.mxu0 0.0
      %1268 = vmatpush1.msra.mxu0 0.0
      %1269 = vmatprep.subr.mxu0 0.0
      %1270 = vmatpush1.msra.mxu0 0.0
      %1271 = vmatprep.subr.mxu0 0.0
      %1272 = vmatpush1.msra.mxu0 0.0
      %1273 = vmatprep.subr.mxu0 0.0
      %1274 = vmatpush1.msra.mxu0 0.0
      %1275 = vmatprep.subr.mxu0 0.0
      %1276 = vmatpush1.msra.mxu0 0.0
      %1277 = vmatprep.subr.mxu0 0.0
      %1278 = vmatpush1.msra.mxu0 0.0
      %1279 = vmatprep.subr.mxu0 0.0
      %1280 = vmatpush1.msra.mxu0 0.0
      %1281 = vmatprep.subr.mxu0 0.0
      %1282 = vmatpush1.msra.mxu0 0.0
      %1283 = vmatprep.subr.mxu0 0.0
      %1284 = vmatpush1.msra.mxu0 0.0
      %1285 = vmatprep.subr.mxu0 0.0
      %1286 = vmatpush1.msra.mxu0 0.0
      %1287 = vmatprep.subr.mxu0 0.0
      %1288 = vmatpush1.msra.mxu0 0.0
      %1289 = vmatprep.subr.mxu0 0.0
      %1290 = vmatpush1.msra.mxu0 0.0
      %1291 = vmatprep.subr.mxu0 0.0
      %1292 = vmatpush1.msra.mxu0 0.0
      %1293 = vmatprep.subr.mxu0 0.0
      %1294 = vmatpush1.msra.mxu0 0.0
      %1295 = vmatprep.mubr.f32.mxu0 0.0
      %1296 = vmatmul.mubr.f32.gmra.mrb[0].mxu0 %v1121
      %v1297 = vpop.f32.mrb[0].mxu0
      %v1298 = vadd.f32 0.0, %v1297
      %v1299 = vpop.f32.mrb[0].mxu0
      %1300 = vmatprep.mubr.f32.mxu0 0.0
      %1301 = vmatmul.mubr.f32.gmra.mrb[0].mxu0 %v1124
      %v1302 = vpop.f32.mrb[0].mxu0
      %v1303 = vadd.f32 0.0, %v1302
      %v1304 = vpop.f32.mrb[0].mxu0
      %1305 = vmatprep.mubr.f32.mxu0 0.0
      %1306 = vmatmul.mubr.f32.gmra.mrb[0].mxu0 %v1127
      %v1307 = vpop.f32.mrb[0].mxu0
      %v1308 = vadd.f32 0.0, %v1307
      %v1309 = vpop.f32.mrb[0].mxu0
      %1310 = vmatprep.mubr.f32.mxu0 0.0
      %1311 = vmatmul.mubr.f32.gmra.mrb[0].mxu0 %v1130
      %v1312 = vpop.f32.mrb[0].mxu0
      %v1313 = vadd.f32 0.0, %v1312
      %v1314 = vpop.f32.mrb[0].mxu0
      %1315 = vmatprep.mubr.f32.mxu0 0.0
      %1316 = vmatmul.mubr.f32.gmra.mrb[0].mxu0 %v1133
      %v1317 = vpop.f32.mrb[0].mxu0
      %v1318 = vadd.f32 0.0, %v1317
      %v1319 = vpop.f32.mrb[0].mxu0
      %1320 = vmatprep.mubr.f32.mxu0 0.0
      %1321 = vmatmul.mubr.f32.gmra.mrb[0].mxu0 %v1136
      %v1322 = vpop.f32.mrb[0].mxu0
      %v1323 = vadd.f32 0.0, %v1322
      %v1324 = vpop.f32.mrb[0].mxu0
      %1325 = vmatprep.mubr.f32.mxu0 0.0
      %1326 = vmatmul.mubr.f32.gmra.mrb[0].mxu0 %v1139
      %v1327 = vpop.f32.mrb[0].mxu0
      %v1328 = vadd.f32 0.0, %v1327
      %v1329 = vpop.f32.mrb[0].mxu0
      %1330 = vmatprep.mubr.f32.mxu0 0.0
      %1331 = vmatmul.mubr.f32.gmra.mrb[0].mxu0 %v1142
      %v1332 = vpop.f32.mrb[0].mxu0
      %v1333 = vadd.f32 0.0, %v1332
      %v1334 = vpop.f32.mrb[0].mxu0
      %1335 = vmatprep.mubr.f32.mxu0 0.0
      %1336 = vmatmul.mubr.f32.gmra.mrb[0].mxu0 %v1145
      %v1337 = vpop.f32.mrb[0].mxu0
      %v1338 = vadd.f32 0.0, %v1337
      %v1339 = vpop.f32.mrb[0].mxu0
      %1340 = vmatprep.mubr.f32.mxu0 0.0
      %1341 = vmatmul.mubr.f32.gmra.mrb[0].mxu0 %v1148
      %v1342 = vpop.f32.mrb[0].mxu0
      %v1343 = vadd.f32 0.0, %v1342
      %v1344 = vpop.f32.mrb[0].mxu0
      %1345 = vmatprep.mubr.f32.mxu0 0.0
      %1346 = vmatmul.mubr.f32.gmra.mrb[0].mxu0 %v1151
      %v1347 = vpop.f32.mrb[0].mxu0
      %v1348 = vadd.f32 0.0, %v1347
      %v1349 = vpop.f32.mrb[0].mxu0
      %1350 = vmatprep.mubr.f32.mxu0 0.0
      %1351 = vmatmul.mubr.f32.gmra.mrb[0].mxu0 %v1154
      %v1352 = vpop.f32.mrb[0].mxu0
      %v1353 = vadd.f32 0.0, %v1352
      %v1354 = vpop.f32.mrb[0].mxu0
      %1355 = vmatprep.mubr.f32.mxu0 0.0
      %1356 = vmatmul.mubr.f32.gmra.mrb[0].mxu0 %v1157
      %v1357 = vpop.f32.mrb[0].mxu0
      %v1358 = vadd.f32 0.0, %v1357
      %v1359 = vpop.f32.mrb[0].mxu0
      %1360 = vmatprep.mubr.f32.mxu0 0.0
      %1361 = vmatmul.mubr.f32.gmra.mrb[0].mxu0 %v1160
      %v1362 = vpop.f32.mrb[0].mxu0
      %v1363 = vadd.f32 0.0, %v1362
      %v1364 = vpop.f32.mrb[0].mxu0
      %1365 = vmatprep.mubr.f32.mxu0 0.0
      %1366 = vmatmul.mubr.f32.gmra.mrb[0].mxu0 %v1163
      %v1367 = vpop.f32.mrb[0].mxu0
      %v1368 = vadd.f32 0.0, %v1367
      %v1369 = vpop.f32.mrb[0].mxu0
      %1370 = vmatprep.mubr.f32.mxu0 0.0
      %1371 = vmatmul.mubr.f32.gmra.mrb[0].mxu0 %v1166
      %v1372 = vpop.f32.mrb[0].mxu0
      %v1373 = vadd.f32 0.0, %v1372
      %v1374 = vpop.f32.mrb[0].mxu0
      %1375 = vmatprep.mubr.f32.mxu0 0.0
      %1376 = vmatmul.mubr.f32.gmra.mrb[0].mxu0 %v1169
      %v1377 = vpop.f32.mrb[0].mxu0
      %v1378 = vadd.f32 0.0, %v1377
      %v1379 = vpop.f32.mrb[0].mxu0
      %1380 = vmatprep.mubr.f32.mxu0 0.0
      %1381 = vmatmul.mubr.f32.gmra.mrb[0].mxu0 %v1172
      %v1382 = vpop.f32.mrb[0].mxu0
      %v1383 = vadd.f32 0.0, %v1382
      %v1384 = vpop.f32.mrb[0].mxu0
      %1385 = vmatprep.mubr.f32.mxu0 0.0
      %1386 = vmatmul.mubr.f32.gmra.mrb[0].mxu0 %v1175
      %v1387 = vpop.f32.mrb[0].mxu0
      %v1388 = vadd.f32 0.0, %v1387
      %v1389 = vpop.f32.mrb[0].mxu0
      %1390 = vmatprep.mubr.f32.mxu0 0.0
      %1391 = vmatmul.mubr.f32.gmra.mrb[0].mxu0 %v1178
      %v1392 = vpop.f32.mrb[0].mxu0
      %v1393 = vadd.f32 0.0, %v1392
      %v1394 = vpop.f32.mrb[0].mxu0
      %1395 = vmatprep.mubr.f32.mxu0 0.0
      %1396 = vmatmul.mubr.f32.gmra.mrb[0].mxu0 %v1181
      %v1397 = vpop.f32.mrb[0].mxu0
      %v1398 = vadd.f32 0.0, %v1397
      %v1399 = vpop.f32.mrb[0].mxu0
      %1400 = vmatprep.mubr.f32.mxu0 0.0
      %1401 = vmatmul.mubr.f32.gmra.mrb[0].mxu0 %v1184
      %v1402 = vpop.f32.mrb[0].mxu0
      %v1403 = vadd.f32 0.0, %v1402
      %v1404 = vpop.f32.mrb[0].mxu0
      %1405 = vmatprep.mubr.f32.mxu0 0.0
      %1406 = vmatmul.mubr.f32.gmra.mrb[0].mxu0 %v1187
      %v1407 = vpop.f32.mrb[0].mxu0
      %v1408 = vadd.f32 0.0, %v1407
      %v1409 = vpop.f32.mrb[0].mxu0
      %1410 = vmatprep.mubr.f32.mxu0 0.0
      %1411 = vmatmul.mubr.f32.gmra.mrb[0].mxu0 %v1190
      %v1412 = vpop.f32.mrb[0].mxu0
      %v1413 = vadd.f32 0.0, %v1412
      %v1414 = vpop.f32.mrb[0].mxu0
      %1415 = vmatprep.mubr.f32.mxu0 0.0
      %1416 = vmatmul.mubr.f32.gmra.mrb[0].mxu0 %v1193
      %v1417 = vpop.f32.mrb[0].mxu0
      %v1418 = vadd.f32 0.0, %v1417
      %v1419 = vpop.f32.mrb[0].mxu0
      %1420 = vmatprep.mubr.f32.mxu0 0.0
      %1421 = vmatmul.mubr.f32.gmra.mrb[0].mxu0 %v1196
      %v1422 = vpop.f32.mrb[0].mxu0
      %v1423 = vadd.f32 0.0, %v1422
      %v1424 = vpop.f32.mrb[0].mxu0
      %1425 = vmatprep.mubr.f32.mxu0 0.0
      %1426 = vmatmul.mubr.f32.gmra.mrb[0].mxu0 %v1199
      %v1427 = vpop.f32.mrb[0].mxu0
      %v1428 = vadd.f32 0.0, %v1427
      %v1429 = vpop.f32.mrb[0].mxu0
      %1430 = vmatprep.mubr.f32.mxu0 0.0
      %1431 = vmatmul.mubr.f32.gmra.mrb[0].mxu0 %v1202
      %v1432 = vpop.f32.mrb[0].mxu0
      %v1433 = vadd.f32 0.0, %v1432
      %v1434 = vpop.f32.mrb[0].mxu0
      %1435 = vmatprep.mubr.f32.mxu0 0.0
      %1436 = vmatmul.mubr.f32.gmra.mrb[0].mxu0 %v1205
      %v1437 = vpop.f32.mrb[0].mxu0
      %v1438 = vadd.f32 0.0, %v1437
      %v1439 = vpop.f32.mrb[0].mxu0
      %1440 = vmatprep.mubr.f32.mxu0 0.0
      %1441 = vmatmul.mubr.f32.gmra.mrb[0].mxu0 %v1208
      %v1442 = vpop.f32.mrb[0].mxu0
      %v1443 = vadd.f32 0.0, %v1442
      %v1444 = vpop.f32.mrb[0].mxu0
      %1445 = vmatprep.mubr.f32.mxu0 0.0
      %1446 = vmatmul.mubr.f32.gmra.mrb[0].mxu0 %v1211
      %v1447 = vpop.f32.mrb[0].mxu0
      %v1448 = vadd.f32 0.0, %v1447
      %v1449 = vpop.f32.mrb[0].mxu0
      %1450 = vmatprep.mubr.f32.mxu0 0.0
      %1451 = vmatmul.mubr.f32.gmra.mrb[0].mxu0 %v1214
      %v1452 = vpop.f32.mrb[0].mxu0
      %v1453 = vadd.f32 0.0, %v1452
      %v1454 = vpop.f32.mrb[0].mxu0
      %1455 = vmatprep.mubr.f32.mxu0 0.0
      %1456 = vmatmul.mubr.f32.gmra.mrb[0].mxu0 %v1217
      %v1457 = vpop.f32.mrb[0].mxu0
      %v1458 = vadd.f32 0.0, %v1457
      %v1459 = vpop.f32.mrb[0].mxu0
      %1460 = vmatprep.mubr.f32.mxu0 0.0
      %1461 = vmatmul.mubr.f32.gmra.mrb[0].mxu0 %v1220
      %v1462 = vpop.f32.mrb[0].mxu0
      %v1463 = vadd.f32 0.0, %v1462
      %v1464 = vpop.f32.mrb[0].mxu0
      %1465 = vmatprep.mubr.f32.mxu0 0.0
      %1466 = vmatmul.mubr.f32.gmra.mrb[0].mxu0 %v1223
      %v1467 = vpop.f32.mrb[0].mxu0
      %v1468 = vadd.f32 0.0, %v1467
      %v1469 = vpop.f32.mrb[0].mxu0
      %1470 = vmatprep.mubr.f32.mxu0 0.0
      %1471 = vmatmul.mubr.f32.gmra.mrb[0].mxu0 %v1226
      %v1472 = vpop.f32.mrb[0].mxu0
      %v1473 = vadd.f32 0.0, %v1472
      %v1474 = vpop.f32.mrb[0].mxu0
      %1475 = vdwg.mxu0
      %v1476 = vadd.f32 %v904, %v1298
      %v1477 = vadd.f32 %v909, %v1303
      %v1478 = vadd.f32 %v914, %v1308
      %v1479 = vadd.f32 %v919, %v1313
      %v1480 = vadd.f32 %v924, %v1318
      %v1481 = vadd.f32 %v929, %v1323
      %v1482 = vadd.f32 %v934, %v1328
      %v1483 = vadd.f32 %v939, %v1333
      %v1484 = vadd.f32 %v944, %v1338
      %v1485 = vadd.f32 %v949, %v1343
      %v1486 = vadd.f32 %v954, %v1348
      %v1487 = vadd.f32 %v959, %v1353
      %v1488 = vadd.f32 %v964, %v1358
      %v1489 = vadd.f32 %v969, %v1363
      %v1490 = vadd.f32 %v974, %v1368
      %v1491 = vadd.f32 %v979, %v1373
      %v1492 = vadd.f32 %v984, %v1378
      %v1493 = vadd.f32 %v989, %v1383
      %v1494 = vadd.f32 %v994, %v1388
      %v1495 = vadd.f32 %v999, %v1393
      %v1496 = vadd.f32 %v1004, %v1398
      %v1497 = vadd.f32 %v1009, %v1403
      %v1498 = vadd.f32 %v1014, %v1408
      %v1499 = vadd.f32 %v1019, %v1413
      %v1500 = vadd.f32 %v1024, %v1418
      %v1501 = vadd.f32 %v1029, %v1423
      %v1502 = vadd.f32 %v1034, %v1428
      %v1503 = vadd.f32 %v1039, %v1433
      %v1504 = vadd.f32 %v1044, %v1438
      %v1505 = vadd.f32 %v1049, %v1443
      %v1506 = vadd.f32 %v1054, %v1448
      %v1507 = vadd.f32 %v1059, %v1453
      %v1508 = vadd.f32 %v1064, %v1458
      %v1509 = vadd.f32 %v1069, %v1463
      %v1510 = vadd.f32 %v1074, %v1468
      %v1511 = vadd.f32 %v1079, %v1473
      %v1512 = vld [vmem:[%s284 + $0x12] sm:$0xff]
      %v1513 = vld [vmem:[%s284 + $0x1a] sm:$0xff]
      %v1514 = vld [vmem:[%s284 + $0x22] sm:$0xff]
      %v1515 = vld [vmem:[%s284 + $0x2a] sm:$0xff]
      %v1516 = vld [vmem:[%s284 + $0x32] sm:$0xff]
      %v1517 = vld [vmem:[%s284 + $0x3a] sm:$0xff]
      %v1518 = vld [vmem:[%s284 + $0x42] sm:$0xff]
      %v1519 = vld [vmem:[%s284 + $0x4a] sm:$0xff]
      %v1520 = vld [vmem:[%s284 + $0x52] sm:$0xff]
      %v1521 = vld [vmem:[%s284 + $0x5a] sm:$0xff]
      %v1522 = vld [vmem:[%s284 + $0x62] sm:$0xff]
      %v1523 = vld [vmem:[%s284 + $0x6a] sm:$0xff]
      %v1524 = vld [vmem:[%s284 + $0x72] sm:$0xff]
      %v1525 = vld [vmem:[%s284 + $0x7a] sm:$0xff]
      %v1526 = vld [vmem:[%s284 + $0x82] sm:$0xff]
      %v1527 = vld [vmem:[%s284 + $0x8a] sm:$0xff]
      %v1528 = vld [vmem:[%s284 + $0x92] sm:$0xff]
      %v1529 = vld [vmem:[%s284 + $0x9a] sm:$0xff]
      %v1530 = vld [vmem:[%s284 + $0xa2] sm:$0xff]
      %v1531 = vld [vmem:[%s284 + $0xaa] sm:$0xff]
      %v1532 = vld [vmem:[%s284 + $0xb2] sm:$0xff]
      %v1533 = vld [vmem:[%s284 + $0xba] sm:$0xff]
      %v1534 = vld [vmem:[%s284 + $0xc2] sm:$0xff]
      %v1535 = vld [vmem:[%s284 + $0xca] sm:$0xff]
      %v1536 = vld [vmem:[%s284 + $0xd2] sm:$0xff]
      %v1537 = vld [vmem:[%s284 + $0xda] sm:$0xff]
      %v1538 = vld [vmem:[%s284 + $0xe2] sm:$0xff]
      %v1539 = vld [vmem:[%s284 + $0xea] sm:$0xff]
      %v1540 = vld [vmem:[%s284 + $0xf2] sm:$0xff]
      %v1541 = vld [vmem:[%s284 + $0xfa] sm:$0xff]
      %v1542 = vld [vmem:[%s284 + $0x102] sm:$0xff]
      %v1543 = vld [vmem:[%s284 + $0x10a] sm:$0xff]
      %v1544 = vld [vmem:[%s284 + $0x112] sm:$0xff]
      %v1545 = vld [vmem:[%s284 + $0x11a] sm:$0xff]
      %v1546 = vld [vmem:[%s284 + $0x122] sm:$0xff]
      %v1547 = vld [vmem:[%s284 + $0x12a] sm:$0xff]
      %s1548 = scalar_lea.vmem %s1, 12
      %v1549 = vld [vmem:[%s1548] sm:$0xf]
      %v1551 = vsel %vm368, %v1512, 0
      %v1554 = vsel %vm368, %v1513, 0
      %v1557 = vsel %vm368, %v1514, 0
      %v1560 = vsel %vm368, %v1515, 0
      %v1563 = vsel %vm368, %v1516, 0
      %v1566 = vsel %vm368, %v1517, 0
      %v1569 = vsel %vm368, %v1518, 0
      %v1572 = vsel %vm368, %v1519, 0
      %v1575 = vsel %vm368, %v1520, 0
      %v1578 = vsel %vm368, %v1521, 0
      %v1581 = vsel %vm368, %v1522, 0
      %v1584 = vsel %vm368, %v1523, 0
      %v1587 = vsel %vm368, %v1524, 0
      %v1590 = vsel %vm368, %v1525, 0
      %v1593 = vsel %vm368, %v1526, 0
      %v1596 = vsel %vm368, %v1527, 0
      %v1599 = vsel %vm368, %v1528, 0
      %v1602 = vsel %vm368, %v1529, 0
      %v1605 = vsel %vm368, %v1530, 0
      %v1608 = vsel %vm368, %v1531, 0
      %v1611 = vsel %vm368, %v1532, 0
      %v1614 = vsel %vm368, %v1533, 0
      %v1617 = vsel %vm368, %v1534, 0
      %v1620 = vsel %vm368, %v1535, 0
      %v1623 = vsel %vm368, %v1536, 0
      %v1626 = vsel %vm368, %v1537, 0
      %v1629 = vsel %vm368, %v1538, 0
      %v1632 = vsel %vm368, %v1539, 0
      %v1635 = vsel %vm368, %v1540, 0
      %v1638 = vsel %vm368, %v1541, 0
      %v1641 = vsel %vm368, %v1542, 0
      %v1644 = vsel %vm368, %v1543, 0
      %v1647 = vsel %vm368, %v1544, 0
      %v1650 = vsel %vm368, %v1545, 0
      %v1653 = vsel %vm368, %v1546, 0
      %v1656 = vsel %vm368, %v1547, 0
      %v1659 = vsel %vm477, %v1549, 0
      %1661 = vmatprep.subr.mxu0 0.0
      %1662 = vmatpush1.msra.mxu0 %v1659
      %1663 = vmatprep.subr.mxu0 0.0
      %1664 = vmatpush1.msra.mxu0 0.0
      %1665 = vmatprep.subr.mxu0 0.0
      %1666 = vmatpush1.msra.mxu0 0.0
      %1667 = vmatprep.subr.mxu0 0.0
      %1668 = vmatpush1.msra.mxu0 0.0
      %1669 = vmatprep.subr.mxu0 0.0
      %1670 = vmatpush1.msra.mxu0 0.0
      %1671 = vmatprep.subr.mxu0 0.0
      %1672 = vmatpush1.msra.mxu0 0.0
      %1673 = vmatprep.subr.mxu0 0.0
      %1674 = vmatpush1.msra.mxu0 0.0
      %1675 = vmatprep.subr.mxu0 0.0
      %1676 = vmatpush1.msra.mxu0 0.0
      %1677 = vmatprep.subr.mxu0 0.0
      %1678 = vmatpush1.msra.mxu0 0.0
      %1679 = vmatprep.subr.mxu0 0.0
      %1680 = vmatpush1.msra.mxu0 0.0
      %1681 = vmatprep.subr.mxu0 0.0
      %1682 = vmatpush1.msra.mxu0 0.0
      %1683 = vmatprep.subr.mxu0 0.0
      %1684 = vmatpush1.msra.mxu0 0.0
      %1685 = vmatprep.subr.mxu0 0.0
      %1686 = vmatpush1.msra.mxu0 0.0
      %1687 = vmatprep.subr.mxu0 0.0
      %1688 = vmatpush1.msra.mxu0 0.0
      %1689 = vmatprep.subr.mxu0 0.0
      %1690 = vmatpush1.msra.mxu0 0.0
      %1691 = vmatprep.subr.mxu0 0.0
      %1692 = vmatpush1.msra.mxu0 0.0
      %1693 = vmatprep.subr.mxu0 0.0
      %1694 = vmatpush1.msra.mxu0 0.0
      %1695 = vmatprep.subr.mxu0 0.0
      %1696 = vmatpush1.msra.mxu0 0.0
      %1697 = vmatprep.subr.mxu0 0.0
      %1698 = vmatpush1.msra.mxu0 0.0
      %1699 = vmatprep.subr.mxu0 0.0
      %1700 = vmatpush1.msra.mxu0 0.0
      %1701 = vmatprep.subr.mxu0 0.0
      %1702 = vmatpush1.msra.mxu0 0.0
      %1703 = vmatprep.subr.mxu0 0.0
      %1704 = vmatpush1.msra.mxu0 0.0
      %1705 = vmatprep.subr.mxu0 0.0
      %1706 = vmatpush1.msra.mxu0 0.0
      %1707 = vmatprep.subr.mxu0 0.0
      %1708 = vmatpush1.msra.mxu0 0.0
      %1709 = vmatprep.subr.mxu0 0.0
      %1710 = vmatpush1.msra.mxu0 0.0
      %1711 = vmatprep.subr.mxu0 0.0
      %1712 = vmatpush1.msra.mxu0 0.0
      %1713 = vmatprep.subr.mxu0 0.0
      %1714 = vmatpush1.msra.mxu0 0.0
      %1715 = vmatprep.subr.mxu0 0.0
      %1716 = vmatpush1.msra.mxu0 0.0
      %1717 = vmatprep.subr.mxu0 0.0
      %1718 = vmatpush1.msra.mxu0 0.0
      %1719 = vmatprep.subr.mxu0 0.0
      %1720 = vmatpush1.msra.mxu0 0.0
      %1721 = vmatprep.subr.mxu0 0.0
      %1722 = vmatpush1.msra.mxu0 0.0
      %1723 = vmatprep.subr.mxu0 0.0
      %1724 = vmatpush1.msra.mxu0 0.0
      %1725 = vmatprep.mubr.f32.mxu0 0.0
      %1726 = vmatmul.mubr.f32.gmra.mrb[0].mxu0 %v1551
      %v1727 = vpop.f32.mrb[0].mxu0
      %v1728 = vadd.f32 0.0, %v1727
      %v1729 = vpop.f32.mrb[0].mxu0
      %1730 = vmatprep.mubr.f32.mxu0 0.0
      %1731 = vmatmul.mubr.f32.gmra.mrb[0].mxu0 %v1554
      %v1732 = vpop.f32.mrb[0].mxu0
      %v1733 = vadd.f32 0.0, %v1732
      %v1734 = vpop.f32.mrb[0].mxu0
      %1735 = vmatprep.mubr.f32.mxu0 0.0
      %1736 = vmatmul.mubr.f32.gmra.mrb[0].mxu0 %v1557
      %v1737 = vpop.f32.mrb[0].mxu0
      %v1738 = vadd.f32 0.0, %v1737
      %v1739 = vpop.f32.mrb[0].mxu0
      %1740 = vmatprep.mubr.f32.mxu0 0.0
      %1741 = vmatmul.mubr.f32.gmra.mrb[0].mxu0 %v1560
      %v1742 = vpop.f32.mrb[0].mxu0
      %v1743 = vadd.f32 0.0, %v1742
      %v1744 = vpop.f32.mrb[0].mxu0
      %1745 = vmatprep.mubr.f32.mxu0 0.0
      %1746 = vmatmul.mubr.f32.gmra.mrb[0].mxu0 %v1563
      %v1747 = vpop.f32.mrb[0].mxu0
      %v1748 = vadd.f32 0.0, %v1747
      %v1749 = vpop.f32.mrb[0].mxu0
      %1750 = vmatprep.mubr.f32.mxu0 0.0
      %1751 = vmatmul.mubr.f32.gmra.mrb[0].mxu0 %v1566
      %v1752 = vpop.f32.mrb[0].mxu0
      %v1753 = vadd.f32 0.0, %v1752
      %v1754 = vpop.f32.mrb[0].mxu0
      %1755 = vmatprep.mubr.f32.mxu0 0.0
      %1756 = vmatmul.mubr.f32.gmra.mrb[0].mxu0 %v1569
      %v1757 = vpop.f32.mrb[0].mxu0
      %v1758 = vadd.f32 0.0, %v1757
      %v1759 = vpop.f32.mrb[0].mxu0
      %1760 = vmatprep.mubr.f32.mxu0 0.0
      %1761 = vmatmul.mubr.f32.gmra.mrb[0].mxu0 %v1572
      %v1762 = vpop.f32.mrb[0].mxu0
      %v1763 = vadd.f32 0.0, %v1762
      %v1764 = vpop.f32.mrb[0].mxu0
      %1765 = vmatprep.mubr.f32.mxu0 0.0
      %1766 = vmatmul.mubr.f32.gmra.mrb[0].mxu0 %v1575
      %v1767 = vpop.f32.mrb[0].mxu0
      %v1768 = vadd.f32 0.0, %v1767
      %v1769 = vpop.f32.mrb[0].mxu0
      %1770 = vmatprep.mubr.f32.mxu0 0.0
      %1771 = vmatmul.mubr.f32.gmra.mrb[0].mxu0 %v1578
      %v1772 = vpop.f32.mrb[0].mxu0
      %v1773 = vadd.f32 0.0, %v1772
      %v1774 = vpop.f32.mrb[0].mxu0
      %1775 = vmatprep.mubr.f32.mxu0 0.0
      %1776 = vmatmul.mubr.f32.gmra.mrb[0].mxu0 %v1581
      %v1777 = vpop.f32.mrb[0].mxu0
      %v1778 = vadd.f32 0.0, %v1777
      %v1779 = vpop.f32.mrb[0].mxu0
      %1780 = vmatprep.mubr.f32.mxu0 0.0
      %1781 = vmatmul.mubr.f32.gmra.mrb[0].mxu0 %v1584
      %v1782 = vpop.f32.mrb[0].mxu0
      %v1783 = vadd.f32 0.0, %v1782
      %v1784 = vpop.f32.mrb[0].mxu0
      %1785 = vmatprep.mubr.f32.mxu0 0.0
      %1786 = vmatmul.mubr.f32.gmra.mrb[0].mxu0 %v1587
      %v1787 = vpop.f32.mrb[0].mxu0
      %v1788 = vadd.f32 0.0, %v1787
      %v1789 = vpop.f32.mrb[0].mxu0
      %1790 = vmatprep.mubr.f32.mxu0 0.0
      %1791 = vmatmul.mubr.f32.gmra.mrb[0].mxu0 %v1590
      %v1792 = vpop.f32.mrb[0].mxu0
      %v1793 = vadd.f32 0.0, %v1792
      %v1794 = vpop.f32.mrb[0].mxu0
      %1795 = vmatprep.mubr.f32.mxu0 0.0
      %1796 = vmatmul.mubr.f32.gmra.mrb[0].mxu0 %v1593
      %v1797 = vpop.f32.mrb[0].mxu0
      %v1798 = vadd.f32 0.0, %v1797
      %v1799 = vpop.f32.mrb[0].mxu0
      %1800 = vmatprep.mubr.f32.mxu0 0.0
      %1801 = vmatmul.mubr.f32.gmra.mrb[0].mxu0 %v1596
      %v1802 = vpop.f32.mrb[0].mxu0
      %v1803 = vadd.f32 0.0, %v1802
      %v1804 = vpop.f32.mrb[0].mxu0
      %1805 = vmatprep.mubr.f32.mxu0 0.0
      %1806 = vmatmul.mubr.f32.gmra.mrb[0].mxu0 %v1599
      %v1807 = vpop.f32.mrb[0].mxu0
      %v1808 = vadd.f32 0.0, %v1807
      %v1809 = vpop.f32.mrb[0].mxu0
      %1810 = vmatprep.mubr.f32.mxu0 0.0
      %1811 = vmatmul.mubr.f32.gmra.mrb[0].mxu0 %v1602
      %v1812 = vpop.f32.mrb[0].mxu0
      %v1813 = vadd.f32 0.0, %v1812
      %v1814 = vpop.f32.mrb[0].mxu0
      %1815 = vmatprep.mubr.f32.mxu0 0.0
      %1816 = vmatmul.mubr.f32.gmra.mrb[0].mxu0 %v1605
      %v1817 = vpop.f32.mrb[0].mxu0
      %v1818 = vadd.f32 0.0, %v1817
      %v1819 = vpop.f32.mrb[0].mxu0
      %1820 = vmatprep.mubr.f32.mxu0 0.0
      %1821 = vmatmul.mubr.f32.gmra.mrb[0].mxu0 %v1608
      %v1822 = vpop.f32.mrb[0].mxu0
      %v1823 = vadd.f32 0.0, %v1822
      %v1824 = vpop.f32.mrb[0].mxu0
      %1825 = vmatprep.mubr.f32.mxu0 0.0
      %1826 = vmatmul.mubr.f32.gmra.mrb[0].mxu0 %v1611
      %v1827 = vpop.f32.mrb[0].mxu0
      %v1828 = vadd.f32 0.0, %v1827
      %v1829 = vpop.f32.mrb[0].mxu0
      %1830 = vmatprep.mubr.f32.mxu0 0.0
      %1831 = vmatmul.mubr.f32.gmra.mrb[0].mxu0 %v1614
      %v1832 = vpop.f32.mrb[0].mxu0
      %v1833 = vadd.f32 0.0, %v1832
      %v1834 = vpop.f32.mrb[0].mxu0
      %1835 = vmatprep.mubr.f32.mxu0 0.0
      %1836 = vmatmul.mubr.f32.gmra.mrb[0].mxu0 %v1617
      %v1837 = vpop.f32.mrb[0].mxu0
      %v1838 = vadd.f32 0.0, %v1837
      %v1839 = vpop.f32.mrb[0].mxu0
      %1840 = vmatprep.mubr.f32.mxu0 0.0
      %1841 = vmatmul.mubr.f32.gmra.mrb[0].mxu0 %v1620
      %v1842 = vpop.f32.mrb[0].mxu0
      %v1843 = vadd.f32 0.0, %v1842
      %v1844 = vpop.f32.mrb[0].mxu0
      %1845 = vmatprep.mubr.f32.mxu0 0.0
      %1846 = vmatmul.mubr.f32.gmra.mrb[0].mxu0 %v1623
      %v1847 = vpop.f32.mrb[0].mxu0
      %v1848 = vadd.f32 0.0, %v1847
      %v1849 = vpop.f32.mrb[0].mxu0
      %1850 = vmatprep.mubr.f32.mxu0 0.0
      %1851 = vmatmul.mubr.f32.gmra.mrb[0].mxu0 %v1626
      %v1852 = vpop.f32.mrb[0].mxu0
      %v1853 = vadd.f32 0.0, %v1852
      %v1854 = vpop.f32.mrb[0].mxu0
      %1855 = vmatprep.mubr.f32.mxu0 0.0
      %1856 = vmatmul.mubr.f32.gmra.mrb[0].mxu0 %v1629
      %v1857 = vpop.f32.mrb[0].mxu0
      %v1858 = vadd.f32 0.0, %v1857
      %v1859 = vpop.f32.mrb[0].mxu0
      %1860 = vmatprep.mubr.f32.mxu0 0.0
      %1861 = vmatmul.mubr.f32.gmra.mrb[0].mxu0 %v1632
      %v1862 = vpop.f32.mrb[0].mxu0
      %v1863 = vadd.f32 0.0, %v1862
      %v1864 = vpop.f32.mrb[0].mxu0
      %1865 = vmatprep.mubr.f32.mxu0 0.0
      %1866 = vmatmul.mubr.f32.gmra.mrb[0].mxu0 %v1635
      %v1867 = vpop.f32.mrb[0].mxu0
      %v1868 = vadd.f32 0.0, %v1867
      %v1869 = vpop.f32.mrb[0].mxu0
      %1870 = vmatprep.mubr.f32.mxu0 0.0
      %1871 = vmatmul.mubr.f32.gmra.mrb[0].mxu0 %v1638
      %v1872 = vpop.f32.mrb[0].mxu0
      %v1873 = vadd.f32 0.0, %v1872
      %v1874 = vpop.f32.mrb[0].mxu0
      %1875 = vmatprep.mubr.f32.mxu0 0.0
      %1876 = vmatmul.mubr.f32.gmra.mrb[0].mxu0 %v1641
      %v1877 = vpop.f32.mrb[0].mxu0
      %v1878 = vadd.f32 0.0, %v1877
      %v1879 = vpop.f32.mrb[0].mxu0
      %1880 = vmatprep.mubr.f32.mxu0 0.0
      %1881 = vmatmul.mubr.f32.gmra.mrb[0].mxu0 %v1644
      %v1882 = vpop.f32.mrb[0].mxu0
      %v1883 = vadd.f32 0.0, %v1882
      %v1884 = vpop.f32.mrb[0].mxu0
      %1885 = vmatprep.mubr.f32.mxu0 0.0
      %1886 = vmatmul.mubr.f32.gmra.mrb[0].mxu0 %v1647
      %v1887 = vpop.f32.mrb[0].mxu0
      %v1888 = vadd.f32 0.0, %v1887
      %v1889 = vpop.f32.mrb[0].mxu0
      %1890 = vmatprep.mubr.f32.mxu0 0.0
      %1891 = vmatmul.mubr.f32.gmra.mrb[0].mxu0 %v1650
      %v1892 = vpop.f32.mrb[0].mxu0
      %v1893 = vadd.f32 0.0, %v1892
      %v1894 = vpop.f32.mrb[0].mxu0
      %1895 = vmatprep.mubr.f32.mxu0 0.0
      %1896 = vmatmul.mubr.f32.gmra.mrb[0].mxu0 %v1653
      %v1897 = vpop.f32.mrb[0].mxu0
      %v1898 = vadd.f32 0.0, %v1897
      %v1899 = vpop.f32.mrb[0].mxu0
      %1900 = vmatprep.mubr.f32.mxu0 0.0
      %1901 = vmatmul.mubr.f32.gmra.mrb[0].mxu0 %v1656
      %v1902 = vpop.f32.mrb[0].mxu0
      %v1903 = vadd.f32 0.0, %v1902
      %v1904 = vpop.f32.mrb[0].mxu0
      %1905 = vdwg.mxu0
      %v1906 = vadd.f32 %v1476, %v1728
      %v1907 = vadd.f32 %v1477, %v1733
      %v1908 = vadd.f32 %v1478, %v1738
      %v1909 = vadd.f32 %v1479, %v1743
      %v1910 = vadd.f32 %v1480, %v1748
      %v1911 = vadd.f32 %v1481, %v1753
      %v1912 = vadd.f32 %v1482, %v1758
      %v1913 = vadd.f32 %v1483, %v1763
      %v1914 = vadd.f32 %v1484, %v1768
      %v1915 = vadd.f32 %v1485, %v1773
      %v1916 = vadd.f32 %v1486, %v1778
      %v1917 = vadd.f32 %v1487, %v1783
      %v1918 = vadd.f32 %v1488, %v1788
      %v1919 = vadd.f32 %v1489, %v1793
      %v1920 = vadd.f32 %v1490, %v1798
      %v1921 = vadd.f32 %v1491, %v1803
      %v1922 = vadd.f32 %v1492, %v1808
      %v1923 = vadd.f32 %v1493, %v1813
      %v1924 = vadd.f32 %v1494, %v1818
      %v1925 = vadd.f32 %v1495, %v1823
      %v1926 = vadd.f32 %v1496, %v1828
      %v1927 = vadd.f32 %v1497, %v1833
      %v1928 = vadd.f32 %v1498, %v1838
      %v1929 = vadd.f32 %v1499, %v1843
      %v1930 = vadd.f32 %v1500, %v1848
      %v1931 = vadd.f32 %v1501, %v1853
      %v1932 = vadd.f32 %v1502, %v1858
      %v1933 = vadd.f32 %v1503, %v1863
      %v1934 = vadd.f32 %v1504, %v1868
      %v1935 = vadd.f32 %v1505, %v1873
      %v1936 = vadd.f32 %v1506, %v1878
      %v1937 = vadd.f32 %v1507, %v1883
      %v1938 = vadd.f32 %v1508, %v1888
      %v1939 = vadd.f32 %v1509, %v1893
      %v1940 = vadd.f32 %v1510, %v1898
      %v1941 = vadd.f32 %v1511, %v1903
      %v1942 = vld [vmem:[%s284 + $0x13] sm:$0xff]
      %v1943 = vld [vmem:[%s284 + $0x1b] sm:$0xff]
      %v1944 = vld [vmem:[%s284 + $0x23] sm:$0xff]
      %v1945 = vld [vmem:[%s284 + $0x2b] sm:$0xff]
      %v1946 = vld [vmem:[%s284 + $0x33] sm:$0xff]
      %v1947 = vld [vmem:[%s284 + $0x3b] sm:$0xff]
      %v1948 = vld [vmem:[%s284 + $0x43] sm:$0xff]
      %v1949 = vld [vmem:[%s284 + $0x4b] sm:$0xff]
      %v1950 = vld [vmem:[%s284 + $0x53] sm:$0xff]
      %v1951 = vld [vmem:[%s284 + $0x5b] sm:$0xff]
      %v1952 = vld [vmem:[%s284 + $0x63] sm:$0xff]
      %v1953 = vld [vmem:[%s284 + $0x6b] sm:$0xff]
      %v1954 = vld [vmem:[%s284 + $0x73] sm:$0xff]
      %v1955 = vld [vmem:[%s284 + $0x7b] sm:$0xff]
      %v1956 = vld [vmem:[%s284 + $0x83] sm:$0xff]
      %v1957 = vld [vmem:[%s284 + $0x8b] sm:$0xff]
      %v1958 = vld [vmem:[%s284 + $0x93] sm:$0xff]
      %v1959 = vld [vmem:[%s284 + $0x9b] sm:$0xff]
      %v1960 = vld [vmem:[%s284 + $0xa3] sm:$0xff]
      %v1961 = vld [vmem:[%s284 + $0xab] sm:$0xff]
      %v1962 = vld [vmem:[%s284 + $0xb3] sm:$0xff]
      %v1963 = vld [vmem:[%s284 + $0xbb] sm:$0xff]
      %v1964 = vld [vmem:[%s284 + $0xc3] sm:$0xff]
      %v1965 = vld [vmem:[%s284 + $0xcb] sm:$0xff]
      %v1966 = vld [vmem:[%s284 + $0xd3] sm:$0xff]
      %v1967 = vld [vmem:[%s284 + $0xdb] sm:$0xff]
      %v1968 = vld [vmem:[%s284 + $0xe3] sm:$0xff]
      %v1969 = vld [vmem:[%s284 + $0xeb] sm:$0xff]
      %v1970 = vld [vmem:[%s284 + $0xf3] sm:$0xff]
      %v1971 = vld [vmem:[%s284 + $0xfb] sm:$0xff]
      %v1972 = vld [vmem:[%s284 + $0x103] sm:$0xff]
      %v1973 = vld [vmem:[%s284 + $0x10b] sm:$0xff]
      %v1974 = vld [vmem:[%s284 + $0x113] sm:$0xff]
      %v1975 = vld [vmem:[%s284 + $0x11b] sm:$0xff]
      %v1976 = vld [vmem:[%s284 + $0x123] sm:$0xff]
      %v1977 = vld [vmem:[%s284 + $0x12b] sm:$0xff]
      %s1978 = scalar_lea.vmem %s1, 16
      %v1979 = vld [vmem:[%s1978] sm:$0xf]
      %v1981 = vsel %vm368, %v1942, 0
      %v1984 = vsel %vm368, %v1943, 0
      %v1987 = vsel %vm368, %v1944, 0
      %v1990 = vsel %vm368, %v1945, 0
      %v1993 = vsel %vm368, %v1946, 0
      %v1996 = vsel %vm368, %v1947, 0
      %v1999 = vsel %vm368, %v1948, 0
      %v2002 = vsel %vm368, %v1949, 0
      %v2005 = vsel %vm368, %v1950, 0
      %v2008 = vsel %vm368, %v1951, 0
      %v2011 = vsel %vm368, %v1952, 0
      %v2014 = vsel %vm368, %v1953, 0
      %v2017 = vsel %vm368, %v1954, 0
      %v2020 = vsel %vm368, %v1955, 0
      %v2023 = vsel %vm368, %v1956, 0
      %v2026 = vsel %vm368, %v1957, 0
      %v2029 = vsel %vm368, %v1958, 0
      %v2032 = vsel %vm368, %v1959, 0
      %v2035 = vsel %vm368, %v1960, 0
      %v2038 = vsel %vm368, %v1961, 0
      %v2041 = vsel %vm368, %v1962, 0
      %v2044 = vsel %vm368, %v1963, 0
      %v2047 = vsel %vm368, %v1964, 0
      %v2050 = vsel %vm368, %v1965, 0
      %v2053 = vsel %vm368, %v1966, 0
      %v2056 = vsel %vm368, %v1967, 0
      %v2059 = vsel %vm368, %v1968, 0
      %v2062 = vsel %vm368, %v1969, 0
      %v2065 = vsel %vm368, %v1970, 0
      %v2068 = vsel %vm368, %v1971, 0
      %v2071 = vsel %vm368, %v1972, 0
      %v2074 = vsel %vm368, %v1973, 0
      %v2077 = vsel %vm368, %v1974, 0
      %v2080 = vsel %vm368, %v1975, 0
      %v2083 = vsel %vm368, %v1976, 0
      %v2086 = vsel %vm368, %v1977, 0
      %v2089 = vsel %vm477, %v1979, 0
      %2091 = vmatprep.subr.mxu0 0.0
      %2092 = vmatpush1.msra.mxu0 %v2089
      %2093 = vmatprep.subr.mxu0 0.0
      %2094 = vmatpush1.msra.mxu0 0.0
      %2095 = vmatprep.subr.mxu0 0.0
      %2096 = vmatpush1.msra.mxu0 0.0
      %2097 = vmatprep.subr.mxu0 0.0
      %2098 = vmatpush1.msra.mxu0 0.0
      %2099 = vmatprep.subr.mxu0 0.0
      %2100 = vmatpush1.msra.mxu0 0.0
      %2101 = vmatprep.subr.mxu0 0.0
      %2102 = vmatpush1.msra.mxu0 0.0
      %2103 = vmatprep.subr.mxu0 0.0
      %2104 = vmatpush1.msra.mxu0 0.0
      %2105 = vmatprep.subr.mxu0 0.0
      %2106 = vmatpush1.msra.mxu0 0.0
      %2107 = vmatprep.subr.mxu0 0.0
      %2108 = vmatpush1.msra.mxu0 0.0
      %2109 = vmatprep.subr.mxu0 0.0
      %2110 = vmatpush1.msra.mxu0 0.0
      %2111 = vmatprep.subr.mxu0 0.0
      %2112 = vmatpush1.msra.mxu0 0.0
      %2113 = vmatprep.subr.mxu0 0.0
      %2114 = vmatpush1.msra.mxu0 0.0
      %2115 = vmatprep.subr.mxu0 0.0
      %2116 = vmatpush1.msra.mxu0 0.0
      %2117 = vmatprep.subr.mxu0 0.0
      %2118 = vmatpush1.msra.mxu0 0.0
      %2119 = vmatprep.subr.mxu0 0.0
      %2120 = vmatpush1.msra.mxu0 0.0
      %2121 = vmatprep.subr.mxu0 0.0
      %2122 = vmatpush1.msra.mxu0 0.0
      %2123 = vmatprep.subr.mxu0 0.0
      %2124 = vmatpush1.msra.mxu0 0.0
      %2125 = vmatprep.subr.mxu0 0.0
      %2126 = vmatpush1.msra.mxu0 0.0
      %2127 = vmatprep.subr.mxu0 0.0
      %2128 = vmatpush1.msra.mxu0 0.0
      %2129 = vmatprep.subr.mxu0 0.0
      %2130 = vmatpush1.msra.mxu0 0.0
      %2131 = vmatprep.subr.mxu0 0.0
      %2132 = vmatpush1.msra.mxu0 0.0
      %2133 = vmatprep.subr.mxu0 0.0
      %2134 = vmatpush1.msra.mxu0 0.0
      %2135 = vmatprep.subr.mxu0 0.0
      %2136 = vmatpush1.msra.mxu0 0.0
      %2137 = vmatprep.subr.mxu0 0.0
      %2138 = vmatpush1.msra.mxu0 0.0
      %2139 = vmatprep.subr.mxu0 0.0
      %2140 = vmatpush1.msra.mxu0 0.0
      %2141 = vmatprep.subr.mxu0 0.0
      %2142 = vmatpush1.msra.mxu0 0.0
      %2143 = vmatprep.subr.mxu0 0.0
      %2144 = vmatpush1.msra.mxu0 0.0
      %2145 = vmatprep.subr.mxu0 0.0
      %2146 = vmatpush1.msra.mxu0 0.0
      %2147 = vmatprep.subr.mxu0 0.0
      %2148 = vmatpush1.msra.mxu0 0.0
      %2149 = vmatprep.subr.mxu0 0.0
      %2150 = vmatpush1.msra.mxu0 0.0
      %2151 = vmatprep.subr.mxu0 0.0
      %2152 = vmatpush1.msra.mxu0 0.0
      %2153 = vmatprep.subr.mxu0 0.0
      %2154 = vmatpush1.msra.mxu0 0.0
      %2155 = vmatprep.mubr.f32.mxu0 0.0
      %2156 = vmatmul.mubr.f32.gmra.mrb[0].mxu0 %v1981
      %v2157 = vpop.f32.mrb[0].mxu0
      %v2158 = vadd.f32 0.0, %v2157
      %v2159 = vpop.f32.mrb[0].mxu0
      %2160 = vmatprep.mubr.f32.mxu0 0.0
      %2161 = vmatmul.mubr.f32.gmra.mrb[0].mxu0 %v1984
      %v2162 = vpop.f32.mrb[0].mxu0
      %v2163 = vadd.f32 0.0, %v2162
      %v2164 = vpop.f32.mrb[0].mxu0
      %2165 = vmatprep.mubr.f32.mxu0 0.0
      %2166 = vmatmul.mubr.f32.gmra.mrb[0].mxu0 %v1987
      %v2167 = vpop.f32.mrb[0].mxu0
      %v2168 = vadd.f32 0.0, %v2167
      %v2169 = vpop.f32.mrb[0].mxu0
      %2170 = vmatprep.mubr.f32.mxu0 0.0
      %2171 = vmatmul.mubr.f32.gmra.mrb[0].mxu0 %v1990
      %v2172 = vpop.f32.mrb[0].mxu0
      %v2173 = vadd.f32 0.0, %v2172
      %v2174 = vpop.f32.mrb[0].mxu0
      %2175 = vmatprep.mubr.f32.mxu0 0.0
      %2176 = vmatmul.mubr.f32.gmra.mrb[0].mxu0 %v1993
      %v2177 = vpop.f32.mrb[0].mxu0
      %v2178 = vadd.f32 0.0, %v2177
      %v2179 = vpop.f32.mrb[0].mxu0
      %2180 = vmatprep.mubr.f32.mxu0 0.0
      %2181 = vmatmul.mubr.f32.gmra.mrb[0].mxu0 %v1996
      %v2182 = vpop.f32.mrb[0].mxu0
      %v2183 = vadd.f32 0.0, %v2182
      %v2184 = vpop.f32.mrb[0].mxu0
      %2185 = vmatprep.mubr.f32.mxu0 0.0
      %2186 = vmatmul.mubr.f32.gmra.mrb[0].mxu0 %v1999
      %v2187 = vpop.f32.mrb[0].mxu0
      %v2188 = vadd.f32 0.0, %v2187
      %v2189 = vpop.f32.mrb[0].mxu0
      %2190 = vmatprep.mubr.f32.mxu0 0.0
      %2191 = vmatmul.mubr.f32.gmra.mrb[0].mxu0 %v2002
      %v2192 = vpop.f32.mrb[0].mxu0
      %v2193 = vadd.f32 0.0, %v2192
      %v2194 = vpop.f32.mrb[0].mxu0
      %2195 = vmatprep.mubr.f32.mxu0 0.0
      %2196 = vmatmul.mubr.f32.gmra.mrb[0].mxu0 %v2005
      %v2197 = vpop.f32.mrb[0].mxu0
      %v2198 = vadd.f32 0.0, %v2197
      %v2199 = vpop.f32.mrb[0].mxu0
      %2200 = vmatprep.mubr.f32.mxu0 0.0
      %2201 = vmatmul.mubr.f32.gmra.mrb[0].mxu0 %v2008
      %v2202 = vpop.f32.mrb[0].mxu0
      %v2203 = vadd.f32 0.0, %v2202
      %v2204 = vpop.f32.mrb[0].mxu0
      %2205 = vmatprep.mubr.f32.mxu0 0.0
      %2206 = vmatmul.mubr.f32.gmra.mrb[0].mxu0 %v2011
      %v2207 = vpop.f32.mrb[0].mxu0
      %v2208 = vadd.f32 0.0, %v2207
      %v2209 = vpop.f32.mrb[0].mxu0
      %2210 = vmatprep.mubr.f32.mxu0 0.0
      %2211 = vmatmul.mubr.f32.gmra.mrb[0].mxu0 %v2014
      %v2212 = vpop.f32.mrb[0].mxu0
      %v2213 = vadd.f32 0.0, %v2212
      %v2214 = vpop.f32.mrb[0].mxu0
      %2215 = vmatprep.mubr.f32.mxu0 0.0
      %2216 = vmatmul.mubr.f32.gmra.mrb[0].mxu0 %v2017
      %v2217 = vpop.f32.mrb[0].mxu0
      %v2218 = vadd.f32 0.0, %v2217
      %v2219 = vpop.f32.mrb[0].mxu0
      %2220 = vmatprep.mubr.f32.mxu0 0.0
      %2221 = vmatmul.mubr.f32.gmra.mrb[0].mxu0 %v2020
      %v2222 = vpop.f32.mrb[0].mxu0
      %v2223 = vadd.f32 0.0, %v2222
      %v2224 = vpop.f32.mrb[0].mxu0
      %2225 = vmatprep.mubr.f32.mxu0 0.0
      %2226 = vmatmul.mubr.f32.gmra.mrb[0].mxu0 %v2023
      %v2227 = vpop.f32.mrb[0].mxu0
      %v2228 = vadd.f32 0.0, %v2227
      %v2229 = vpop.f32.mrb[0].mxu0
      %2230 = vmatprep.mubr.f32.mxu0 0.0
      %2231 = vmatmul.mubr.f32.gmra.mrb[0].mxu0 %v2026
      %v2232 = vpop.f32.mrb[0].mxu0
      %v2233 = vadd.f32 0.0, %v2232
      %v2234 = vpop.f32.mrb[0].mxu0
      %2235 = vmatprep.mubr.f32.mxu0 0.0
      %2236 = vmatmul.mubr.f32.gmra.mrb[0].mxu0 %v2029
      %v2237 = vpop.f32.mrb[0].mxu0
      %v2238 = vadd.f32 0.0, %v2237
      %v2239 = vpop.f32.mrb[0].mxu0
      %2240 = vmatprep.mubr.f32.mxu0 0.0
      %2241 = vmatmul.mubr.f32.gmra.mrb[0].mxu0 %v2032
      %v2242 = vpop.f32.mrb[0].mxu0
      %v2243 = vadd.f32 0.0, %v2242
      %v2244 = vpop.f32.mrb[0].mxu0
      %2245 = vmatprep.mubr.f32.mxu0 0.0
      %2246 = vmatmul.mubr.f32.gmra.mrb[0].mxu0 %v2035
      %v2247 = vpop.f32.mrb[0].mxu0
      %v2248 = vadd.f32 0.0, %v2247
      %v2249 = vpop.f32.mrb[0].mxu0
      %2250 = vmatprep.mubr.f32.mxu0 0.0
      %2251 = vmatmul.mubr.f32.gmra.mrb[0].mxu0 %v2038
      %v2252 = vpop.f32.mrb[0].mxu0
      %v2253 = vadd.f32 0.0, %v2252
      %v2254 = vpop.f32.mrb[0].mxu0
      %2255 = vmatprep.mubr.f32.mxu0 0.0
      %2256 = vmatmul.mubr.f32.gmra.mrb[0].mxu0 %v2041
      %v2257 = vpop.f32.mrb[0].mxu0
      %v2258 = vadd.f32 0.0, %v2257
      %v2259 = vpop.f32.mrb[0].mxu0
      %2260 = vmatprep.mubr.f32.mxu0 0.0
      %2261 = vmatmul.mubr.f32.gmra.mrb[0].mxu0 %v2044
      %v2262 = vpop.f32.mrb[0].mxu0
      %v2263 = vadd.f32 0.0, %v2262
      %v2264 = vpop.f32.mrb[0].mxu0
      %2265 = vmatprep.mubr.f32.mxu0 0.0
      %2266 = vmatmul.mubr.f32.gmra.mrb[0].mxu0 %v2047
      %v2267 = vpop.f32.mrb[0].mxu0
      %v2268 = vadd.f32 0.0, %v2267
      %v2269 = vpop.f32.mrb[0].mxu0
      %2270 = vmatprep.mubr.f32.mxu0 0.0
      %2271 = vmatmul.mubr.f32.gmra.mrb[0].mxu0 %v2050
      %v2272 = vpop.f32.mrb[0].mxu0
      %v2273 = vadd.f32 0.0, %v2272
      %v2274 = vpop.f32.mrb[0].mxu0
      %2275 = vmatprep.mubr.f32.mxu0 0.0
      %2276 = vmatmul.mubr.f32.gmra.mrb[0].mxu0 %v2053
      %v2277 = vpop.f32.mrb[0].mxu0
      %v2278 = vadd.f32 0.0, %v2277
      %v2279 = vpop.f32.mrb[0].mxu0
      %2280 = vmatprep.mubr.f32.mxu0 0.0
      %2281 = vmatmul.mubr.f32.gmra.mrb[0].mxu0 %v2056
      %v2282 = vpop.f32.mrb[0].mxu0
      %v2283 = vadd.f32 0.0, %v2282
      %v2284 = vpop.f32.mrb[0].mxu0
      %2285 = vmatprep.mubr.f32.mxu0 0.0
      %2286 = vmatmul.mubr.f32.gmra.mrb[0].mxu0 %v2059
      %v2287 = vpop.f32.mrb[0].mxu0
      %v2288 = vadd.f32 0.0, %v2287
      %v2289 = vpop.f32.mrb[0].mxu0
      %2290 = vmatprep.mubr.f32.mxu0 0.0
      %2291 = vmatmul.mubr.f32.gmra.mrb[0].mxu0 %v2062
      %v2292 = vpop.f32.mrb[0].mxu0
      %v2293 = vadd.f32 0.0, %v2292
      %v2294 = vpop.f32.mrb[0].mxu0
      %2295 = vmatprep.mubr.f32.mxu0 0.0
      %2296 = vmatmul.mubr.f32.gmra.mrb[0].mxu0 %v2065
      %v2297 = vpop.f32.mrb[0].mxu0
      %v2298 = vadd.f32 0.0, %v2297
      %v2299 = vpop.f32.mrb[0].mxu0
      %2300 = vmatprep.mubr.f32.mxu0 0.0
      %2301 = vmatmul.mubr.f32.gmra.mrb[0].mxu0 %v2068
      %v2302 = vpop.f32.mrb[0].mxu0
      %v2303 = vadd.f32 0.0, %v2302
      %v2304 = vpop.f32.mrb[0].mxu0
      %2305 = vmatprep.mubr.f32.mxu0 0.0
      %2306 = vmatmul.mubr.f32.gmra.mrb[0].mxu0 %v2071
      %v2307 = vpop.f32.mrb[0].mxu0
      %v2308 = vadd.f32 0.0, %v2307
      %v2309 = vpop.f32.mrb[0].mxu0
      %2310 = vmatprep.mubr.f32.mxu0 0.0
      %2311 = vmatmul.mubr.f32.gmra.mrb[0].mxu0 %v2074
      %v2312 = vpop.f32.mrb[0].mxu0
      %v2313 = vadd.f32 0.0, %v2312
      %v2314 = vpop.f32.mrb[0].mxu0
      %2315 = vmatprep.mubr.f32.mxu0 0.0
      %2316 = vmatmul.mubr.f32.gmra.mrb[0].mxu0 %v2077
      %v2317 = vpop.f32.mrb[0].mxu0
      %v2318 = vadd.f32 0.0, %v2317
      %v2319 = vpop.f32.mrb[0].mxu0
      %2320 = vmatprep.mubr.f32.mxu0 0.0
      %2321 = vmatmul.mubr.f32.gmra.mrb[0].mxu0 %v2080
      %v2322 = vpop.f32.mrb[0].mxu0
      %v2323 = vadd.f32 0.0, %v2322
      %v2324 = vpop.f32.mrb[0].mxu0
      %2325 = vmatprep.mubr.f32.mxu0 0.0
      %2326 = vmatmul.mubr.f32.gmra.mrb[0].mxu0 %v2083
      %v2327 = vpop.f32.mrb[0].mxu0
      %v2328 = vadd.f32 0.0, %v2327
      %v2329 = vpop.f32.mrb[0].mxu0
      %2330 = vmatprep.mubr.f32.mxu0 0.0
      %2331 = vmatmul.mubr.f32.gmra.mrb[0].mxu0 %v2086
      %v2332 = vpop.f32.mrb[0].mxu0
      %v2333 = vadd.f32 0.0, %v2332
      %v2334 = vpop.f32.mrb[0].mxu0
      %2335 = vdwg.mxu0
      %v2336 = vadd.f32 %v1906, %v2158
      %v2337 = vadd.f32 %v1907, %v2163
      %v2338 = vadd.f32 %v1908, %v2168
      %v2339 = vadd.f32 %v1909, %v2173
      %v2340 = vadd.f32 %v1910, %v2178
      %v2341 = vadd.f32 %v1911, %v2183
      %v2342 = vadd.f32 %v1912, %v2188
      %v2343 = vadd.f32 %v1913, %v2193
      %v2344 = vadd.f32 %v1914, %v2198
      %v2345 = vadd.f32 %v1915, %v2203
      %v2346 = vadd.f32 %v1916, %v2208
      %v2347 = vadd.f32 %v1917, %v2213
      %v2348 = vadd.f32 %v1918, %v2218
      %v2349 = vadd.f32 %v1919, %v2223
      %v2350 = vadd.f32 %v1920, %v2228
      %v2351 = vadd.f32 %v1921, %v2233
      %v2352 = vadd.f32 %v1922, %v2238
      %v2353 = vadd.f32 %v1923, %v2243
      %v2354 = vadd.f32 %v1924, %v2248
      %v2355 = vadd.f32 %v1925, %v2253
      %v2356 = vadd.f32 %v1926, %v2258
      %v2357 = vadd.f32 %v1927, %v2263
      %v2358 = vadd.f32 %v1928, %v2268
      %v2359 = vadd.f32 %v1929, %v2273
      %v2360 = vadd.f32 %v1930, %v2278
      %v2361 = vadd.f32 %v1931, %v2283
      %v2362 = vadd.f32 %v1932, %v2288
      %v2363 = vadd.f32 %v1933, %v2293
      %v2364 = vadd.f32 %v1934, %v2298
      %v2365 = vadd.f32 %v1935, %v2303
      %v2366 = vadd.f32 %v1936, %v2308
      %v2367 = vadd.f32 %v1937, %v2313
      %v2368 = vadd.f32 %v1938, %v2318
      %v2369 = vadd.f32 %v1939, %v2323
      %v2370 = vadd.f32 %v1940, %v2328
      %v2371 = vadd.f32 %v1941, %v2333
      %v2372 = vld [vmem:[%s284 + $0x14] sm:$0xff]
      %v2373 = vld [vmem:[%s284 + $0x1c] sm:$0xff]
      %v2374 = vld [vmem:[%s284 + $0x24] sm:$0xff]
      %v2375 = vld [vmem:[%s284 + $0x2c] sm:$0xff]
      %v2376 = vld [vmem:[%s284 + $0x34] sm:$0xff]
      %v2377 = vld [vmem:[%s284 + $0x3c] sm:$0xff]
      %v2378 = vld [vmem:[%s284 + $0x44] sm:$0xff]
      %v2379 = vld [vmem:[%s284 + $0x4c] sm:$0xff]
      %v2380 = vld [vmem:[%s284 + $0x54] sm:$0xff]
      %v2381 = vld [vmem:[%s284 + $0x5c] sm:$0xff]
      %v2382 = vld [vmem:[%s284 + $0x64] sm:$0xff]
      %v2383 = vld [vmem:[%s284 + $0x6c] sm:$0xff]
      %v2384 = vld [vmem:[%s284 + $0x74] sm:$0xff]
      %v2385 = vld [vmem:[%s284 + $0x7c] sm:$0xff]
      %v2386 = vld [vmem:[%s284 + $0x84] sm:$0xff]
      %v2387 = vld [vmem:[%s284 + $0x8c] sm:$0xff]
      %v2388 = vld [vmem:[%s284 + $0x94] sm:$0xff]
      %v2389 = vld [vmem:[%s284 + $0x9c] sm:$0xff]
      %v2390 = vld [vmem:[%s284 + $0xa4] sm:$0xff]
      %v2391 = vld [vmem:[%s284 + $0xac] sm:$0xff]
      %v2392 = vld [vmem:[%s284 + $0xb4] sm:$0xff]
      %v2393 = vld [vmem:[%s284 + $0xbc] sm:$0xff]
      %v2394 = vld [vmem:[%s284 + $0xc4] sm:$0xff]
      %v2395 = vld [vmem:[%s284 + $0xcc] sm:$0xff]
      %v2396 = vld [vmem:[%s284 + $0xd4] sm:$0xff]
      %v2397 = vld [vmem:[%s284 + $0xdc] sm:$0xff]
      %v2398 = vld [vmem:[%s284 + $0xe4] sm:$0xff]
      %v2399 = vld [vmem:[%s284 + $0xec] sm:$0xff]
      %v2400 = vld [vmem:[%s284 + $0xf4] sm:$0xff]
      %v2401 = vld [vmem:[%s284 + $0xfc] sm:$0xff]
      %v2402 = vld [vmem:[%s284 + $0x104] sm:$0xff]
      %v2403 = vld [vmem:[%s284 + $0x10c] sm:$0xff]
      %v2404 = vld [vmem:[%s284 + $0x114] sm:$0xff]
      %v2405 = vld [vmem:[%s284 + $0x11c] sm:$0xff]
      %v2406 = vld [vmem:[%s284 + $0x124] sm:$0xff]
      %v2407 = vld [vmem:[%s284 + $0x12c] sm:$0xff]
      %s2408 = scalar_lea.vmem %s1, 20
      %v2409 = vld [vmem:[%s2408] sm:$0xf]
      %v2411 = vsel %vm368, %v2372, 0
      %v2414 = vsel %vm368, %v2373, 0
      %v2417 = vsel %vm368, %v2374, 0
      %v2420 = vsel %vm368, %v2375, 0
      %v2423 = vsel %vm368, %v2376, 0
      %v2426 = vsel %vm368, %v2377, 0
      %v2429 = vsel %vm368, %v2378, 0
      %v2432 = vsel %vm368, %v2379, 0
      %v2435 = vsel %vm368, %v2380, 0
      %v2438 = vsel %vm368, %v2381, 0
      %v2441 = vsel %vm368, %v2382, 0
      %v2444 = vsel %vm368, %v2383, 0
      %v2447 = vsel %vm368, %v2384, 0
      %v2450 = vsel %vm368, %v2385, 0
      %v2453 = vsel %vm368, %v2386, 0
      %v2456 = vsel %vm368, %v2387, 0
      %v2459 = vsel %vm368, %v2388, 0
      %v2462 = vsel %vm368, %v2389, 0
      %v2465 = vsel %vm368, %v2390, 0
      %v2468 = vsel %vm368, %v2391, 0
      %v2471 = vsel %vm368, %v2392, 0
      %v2474 = vsel %vm368, %v2393, 0
      %v2477 = vsel %vm368, %v2394, 0
      %v2480 = vsel %vm368, %v2395, 0
      %v2483 = vsel %vm368, %v2396, 0
      %v2486 = vsel %vm368, %v2397, 0
      %v2489 = vsel %vm368, %v2398, 0
      %v2492 = vsel %vm368, %v2399, 0
      %v2495 = vsel %vm368, %v2400, 0
      %v2498 = vsel %vm368, %v2401, 0
      %v2501 = vsel %vm368, %v2402, 0
      %v2504 = vsel %vm368, %v2403, 0
      %v2507 = vsel %vm368, %v2404, 0
      %v2510 = vsel %vm368, %v2405, 0
      %v2513 = vsel %vm368, %v2406, 0
      %v2516 = vsel %vm368, %v2407, 0
      %v2519 = vsel %vm477, %v2409, 0
      %2521 = vmatprep.subr.mxu0 0.0
      %2522 = vmatpush1.msra.mxu0 %v2519
      %2523 = vmatprep.subr.mxu0 0.0
      %2524 = vmatpush1.msra.mxu0 0.0
      %2525 = vmatprep.subr.mxu0 0.0
      %2526 = vmatpush1.msra.mxu0 0.0
      %2527 = vmatprep.subr.mxu0 0.0
      %2528 = vmatpush1.msra.mxu0 0.0
      %2529 = vmatprep.subr.mxu0 0.0
      %2530 = vmatpush1.msra.mxu0 0.0
      %2531 = vmatprep.subr.mxu0 0.0
      %2532 = vmatpush1.msra.mxu0 0.0
      %2533 = vmatprep.subr.mxu0 0.0
      %2534 = vmatpush1.msra.mxu0 0.0
      %2535 = vmatprep.subr.mxu0 0.0
      %2536 = vmatpush1.msra.mxu0 0.0
      %2537 = vmatprep.subr.mxu0 0.0
      %2538 = vmatpush1.msra.mxu0 0.0
      %2539 = vmatprep.subr.mxu0 0.0
      %2540 = vmatpush1.msra.mxu0 0.0
      %2541 = vmatprep.subr.mxu0 0.0
      %2542 = vmatpush1.msra.mxu0 0.0
      %2543 = vmatprep.subr.mxu0 0.0
      %2544 = vmatpush1.msra.mxu0 0.0
      %2545 = vmatprep.subr.mxu0 0.0
      %2546 = vmatpush1.msra.mxu0 0.0
      %2547 = vmatprep.subr.mxu0 0.0
      %2548 = vmatpush1.msra.mxu0 0.0
      %2549 = vmatprep.subr.mxu0 0.0
      %2550 = vmatpush1.msra.mxu0 0.0
      %2551 = vmatprep.subr.mxu0 0.0
      %2552 = vmatpush1.msra.mxu0 0.0
      %2553 = vmatprep.subr.mxu0 0.0
      %2554 = vmatpush1.msra.mxu0 0.0
      %2555 = vmatprep.subr.mxu0 0.0
      %2556 = vmatpush1.msra.mxu0 0.0
      %2557 = vmatprep.subr.mxu0 0.0
      %2558 = vmatpush1.msra.mxu0 0.0
      %2559 = vmatprep.subr.mxu0 0.0
      %2560 = vmatpush1.msra.mxu0 0.0
      %2561 = vmatprep.subr.mxu0 0.0
      %2562 = vmatpush1.msra.mxu0 0.0
      %2563 = vmatprep.subr.mxu0 0.0
      %2564 = vmatpush1.msra.mxu0 0.0
      %2565 = vmatprep.subr.mxu0 0.0
      %2566 = vmatpush1.msra.mxu0 0.0
      %2567 = vmatprep.subr.mxu0 0.0
      %2568 = vmatpush1.msra.mxu0 0.0
      %2569 = vmatprep.subr.mxu0 0.0
      %2570 = vmatpush1.msra.mxu0 0.0
      %2571 = vmatprep.subr.mxu0 0.0
      %2572 = vmatpush1.msra.mxu0 0.0
      %2573 = vmatprep.subr.mxu0 0.0
      %2574 = vmatpush1.msra.mxu0 0.0
      %2575 = vmatprep.subr.mxu0 0.0
      %2576 = vmatpush1.msra.mxu0 0.0
      %2577 = vmatprep.subr.mxu0 0.0
      %2578 = vmatpush1.msra.mxu0 0.0
      %2579 = vmatprep.subr.mxu0 0.0
      %2580 = vmatpush1.msra.mxu0 0.0
      %2581 = vmatprep.subr.mxu0 0.0
      %2582 = vmatpush1.msra.mxu0 0.0
      %2583 = vmatprep.subr.mxu0 0.0
      %2584 = vmatpush1.msra.mxu0 0.0
      %2585 = vmatprep.mubr.f32.mxu0 0.0
      %2586 = vmatmul.mubr.f32.gmra.mrb[0].mxu0 %v2411
      %v2587 = vpop.f32.mrb[0].mxu0
      %v2588 = vadd.f32 0.0, %v2587
      %v2589 = vpop.f32.mrb[0].mxu0
      %2590 = vmatprep.mubr.f32.mxu0 0.0
      %2591 = vmatmul.mubr.f32.gmra.mrb[0].mxu0 %v2414
      %v2592 = vpop.f32.mrb[0].mxu0
      %v2593 = vadd.f32 0.0, %v2592
      %v2594 = vpop.f32.mrb[0].mxu0
      %2595 = vmatprep.mubr.f32.mxu0 0.0
      %2596 = vmatmul.mubr.f32.gmra.mrb[0].mxu0 %v2417
      %v2597 = vpop.f32.mrb[0].mxu0
      %v2598 = vadd.f32 0.0, %v2597
      %v2599 = vpop.f32.mrb[0].mxu0
      %2600 = vmatprep.mubr.f32.mxu0 0.0
      %2601 = vmatmul.mubr.f32.gmra.mrb[0].mxu0 %v2420
      %v2602 = vpop.f32.mrb[0].mxu0
      %v2603 = vadd.f32 0.0, %v2602
      %v2604 = vpop.f32.mrb[0].mxu0
      %2605 = vmatprep.mubr.f32.mxu0 0.0
      %2606 = vmatmul.mubr.f32.gmra.mrb[0].mxu0 %v2423
      %v2607 = vpop.f32.mrb[0].mxu0
      %v2608 = vadd.f32 0.0, %v2607
      %v2609 = vpop.f32.mrb[0].mxu0
      %2610 = vmatprep.mubr.f32.mxu0 0.0
      %2611 = vmatmul.mubr.f32.gmra.mrb[0].mxu0 %v2426
      %v2612 = vpop.f32.mrb[0].mxu0
      %v2613 = vadd.f32 0.0, %v2612
      %v2614 = vpop.f32.mrb[0].mxu0
      %2615 = vmatprep.mubr.f32.mxu0 0.0
      %2616 = vmatmul.mubr.f32.gmra.mrb[0].mxu0 %v2429
      %v2617 = vpop.f32.mrb[0].mxu0
      %v2618 = vadd.f32 0.0, %v2617
      %v2619 = vpop.f32.mrb[0].mxu0
      %2620 = vmatprep.mubr.f32.mxu0 0.0
      %2621 = vmatmul.mubr.f32.gmra.mrb[0].mxu0 %v2432
      %v2622 = vpop.f32.mrb[0].mxu0
      %v2623 = vadd.f32 0.0, %v2622
      %v2624 = vpop.f32.mrb[0].mxu0
      %2625 = vmatprep.mubr.f32.mxu0 0.0
      %2626 = vmatmul.mubr.f32.gmra.mrb[0].mxu0 %v2435
      %v2627 = vpop.f32.mrb[0].mxu0
      %v2628 = vadd.f32 0.0, %v2627
      %v2629 = vpop.f32.mrb[0].mxu0
      %2630 = vmatprep.mubr.f32.mxu0 0.0
      %2631 = vmatmul.mubr.f32.gmra.mrb[0].mxu0 %v2438
      %v2632 = vpop.f32.mrb[0].mxu0
      %v2633 = vadd.f32 0.0, %v2632
      %v2634 = vpop.f32.mrb[0].mxu0
      %2635 = vmatprep.mubr.f32.mxu0 0.0
      %2636 = vmatmul.mubr.f32.gmra.mrb[0].mxu0 %v2441
      %v2637 = vpop.f32.mrb[0].mxu0
      %v2638 = vadd.f32 0.0, %v2637
      %v2639 = vpop.f32.mrb[0].mxu0
      %2640 = vmatprep.mubr.f32.mxu0 0.0
      %2641 = vmatmul.mubr.f32.gmra.mrb[0].mxu0 %v2444
      %v2642 = vpop.f32.mrb[0].mxu0
      %v2643 = vadd.f32 0.0, %v2642
      %v2644 = vpop.f32.mrb[0].mxu0
      %2645 = vmatprep.mubr.f32.mxu0 0.0
      %2646 = vmatmul.mubr.f32.gmra.mrb[0].mxu0 %v2447
      %v2647 = vpop.f32.mrb[0].mxu0
      %v2648 = vadd.f32 0.0, %v2647
      %v2649 = vpop.f32.mrb[0].mxu0
      %2650 = vmatprep.mubr.f32.mxu0 0.0
      %2651 = vmatmul.mubr.f32.gmra.mrb[0].mxu0 %v2450
      %v2652 = vpop.f32.mrb[0].mxu0
      %v2653 = vadd.f32 0.0, %v2652
      %v2654 = vpop.f32.mrb[0].mxu0
      %2655 = vmatprep.mubr.f32.mxu0 0.0
      %2656 = vmatmul.mubr.f32.gmra.mrb[0].mxu0 %v2453
      %v2657 = vpop.f32.mrb[0].mxu0
      %v2658 = vadd.f32 0.0, %v2657
      %v2659 = vpop.f32.mrb[0].mxu0
      %2660 = vmatprep.mubr.f32.mxu0 0.0
      %2661 = vmatmul.mubr.f32.gmra.mrb[0].mxu0 %v2456
      %v2662 = vpop.f32.mrb[0].mxu0
      %v2663 = vadd.f32 0.0, %v2662
      %v2664 = vpop.f32.mrb[0].mxu0
      %2665 = vmatprep.mubr.f32.mxu0 0.0
      %2666 = vmatmul.mubr.f32.gmra.mrb[0].mxu0 %v2459
      %v2667 = vpop.f32.mrb[0].mxu0
      %v2668 = vadd.f32 0.0, %v2667
      %v2669 = vpop.f32.mrb[0].mxu0
      %2670 = vmatprep.mubr.f32.mxu0 0.0
      %2671 = vmatmul.mubr.f32.gmra.mrb[0].mxu0 %v2462
      %v2672 = vpop.f32.mrb[0].mxu0
      %v2673 = vadd.f32 0.0, %v2672
      %v2674 = vpop.f32.mrb[0].mxu0
      %2675 = vmatprep.mubr.f32.mxu0 0.0
      %2676 = vmatmul.mubr.f32.gmra.mrb[0].mxu0 %v2465
      %v2677 = vpop.f32.mrb[0].mxu0
      %v2678 = vadd.f32 0.0, %v2677
      %v2679 = vpop.f32.mrb[0].mxu0
      %2680 = vmatprep.mubr.f32.mxu0 0.0
      %2681 = vmatmul.mubr.f32.gmra.mrb[0].mxu0 %v2468
      %v2682 = vpop.f32.mrb[0].mxu0
      %v2683 = vadd.f32 0.0, %v2682
      %v2684 = vpop.f32.mrb[0].mxu0
      %2685 = vmatprep.mubr.f32.mxu0 0.0
      %2686 = vmatmul.mubr.f32.gmra.mrb[0].mxu0 %v2471
      %v2687 = vpop.f32.mrb[0].mxu0
      %v2688 = vadd.f32 0.0, %v2687
      %v2689 = vpop.f32.mrb[0].mxu0
      %2690 = vmatprep.mubr.f32.mxu0 0.0
      %2691 = vmatmul.mubr.f32.gmra.mrb[0].mxu0 %v2474
      %v2692 = vpop.f32.mrb[0].mxu0
      %v2693 = vadd.f32 0.0, %v2692
      %v2694 = vpop.f32.mrb[0].mxu0
      %2695 = vmatprep.mubr.f32.mxu0 0.0
      %2696 = vmatmul.mubr.f32.gmra.mrb[0].mxu0 %v2477
      %v2697 = vpop.f32.mrb[0].mxu0
      %v2698 = vadd.f32 0.0, %v2697
      %v2699 = vpop.f32.mrb[0].mxu0
      %2700 = vmatprep.mubr.f32.mxu0 0.0
      %2701 = vmatmul.mubr.f32.gmra.mrb[0].mxu0 %v2480
      %v2702 = vpop.f32.mrb[0].mxu0
      %v2703 = vadd.f32 0.0, %v2702
      %v2704 = vpop.f32.mrb[0].mxu0
      %2705 = vmatprep.mubr.f32.mxu0 0.0
      %2706 = vmatmul.mubr.f32.gmra.mrb[0].mxu0 %v2483
      %v2707 = vpop.f32.mrb[0].mxu0
      %v2708 = vadd.f32 0.0, %v2707
      %v2709 = vpop.f32.mrb[0].mxu0
      %2710 = vmatprep.mubr.f32.mxu0 0.0
      %2711 = vmatmul.mubr.f32.gmra.mrb[0].mxu0 %v2486
      %v2712 = vpop.f32.mrb[0].mxu0
      %v2713 = vadd.f32 0.0, %v2712
      %v2714 = vpop.f32.mrb[0].mxu0
      %2715 = vmatprep.mubr.f32.mxu0 0.0
      %2716 = vmatmul.mubr.f32.gmra.mrb[0].mxu0 %v2489
      %v2717 = vpop.f32.mrb[0].mxu0
      %v2718 = vadd.f32 0.0, %v2717
      %v2719 = vpop.f32.mrb[0].mxu0
      %2720 = vmatprep.mubr.f32.mxu0 0.0
      %2721 = vmatmul.mubr.f32.gmra.mrb[0].mxu0 %v2492
      %v2722 = vpop.f32.mrb[0].mxu0
      %v2723 = vadd.f32 0.0, %v2722
      %v2724 = vpop.f32.mrb[0].mxu0
      %2725 = vmatprep.mubr.f32.mxu0 0.0
      %2726 = vmatmul.mubr.f32.gmra.mrb[0].mxu0 %v2495
      %v2727 = vpop.f32.mrb[0].mxu0
      %v2728 = vadd.f32 0.0, %v2727
      %v2729 = vpop.f32.mrb[0].mxu0
      %2730 = vmatprep.mubr.f32.mxu0 0.0
      %2731 = vmatmul.mubr.f32.gmra.mrb[0].mxu0 %v2498
      %v2732 = vpop.f32.mrb[0].mxu0
      %v2733 = vadd.f32 0.0, %v2732
      %v2734 = vpop.f32.mrb[0].mxu0
      %2735 = vmatprep.mubr.f32.mxu0 0.0
      %2736 = vmatmul.mubr.f32.gmra.mrb[0].mxu0 %v2501
      %v2737 = vpop.f32.mrb[0].mxu0
      %v2738 = vadd.f32 0.0, %v2737
      %v2739 = vpop.f32.mrb[0].mxu0
      %2740 = vmatprep.mubr.f32.mxu0 0.0
      %2741 = vmatmul.mubr.f32.gmra.mrb[0].mxu0 %v2504
      %v2742 = vpop.f32.mrb[0].mxu0
      %v2743 = vadd.f32 0.0, %v2742
      %v2744 = vpop.f32.mrb[0].mxu0
      %2745 = vmatprep.mubr.f32.mxu0 0.0
      %2746 = vmatmul.mubr.f32.gmra.mrb[0].mxu0 %v2507
      %v2747 = vpop.f32.mrb[0].mxu0
      %v2748 = vadd.f32 0.0, %v2747
      %v2749 = vpop.f32.mrb[0].mxu0
      %2750 = vmatprep.mubr.f32.mxu0 0.0
      %2751 = vmatmul.mubr.f32.gmra.mrb[0].mxu0 %v2510
      %v2752 = vpop.f32.mrb[0].mxu0
      %v2753 = vadd.f32 0.0, %v2752
      %v2754 = vpop.f32.mrb[0].mxu0
      %2755 = vmatprep.mubr.f32.mxu0 0.0
      %2756 = vmatmul.mubr.f32.gmra.mrb[0].mxu0 %v2513
      %v2757 = vpop.f32.mrb[0].mxu0
      %v2758 = vadd.f32 0.0, %v2757
      %v2759 = vpop.f32.mrb[0].mxu0
      %2760 = vmatprep.mubr.f32.mxu0 0.0
      %2761 = vmatmul.mubr.f32.gmra.mrb[0].mxu0 %v2516
      %v2762 = vpop.f32.mrb[0].mxu0
      %v2763 = vadd.f32 0.0, %v2762
      %v2764 = vpop.f32.mrb[0].mxu0
      %2765 = vdwg.mxu0
      %v2766 = vadd.f32 %v2336, %v2588
      %v2767 = vadd.f32 %v2337, %v2593
      %v2768 = vadd.f32 %v2338, %v2598
      %v2769 = vadd.f32 %v2339, %v2603
      %v2770 = vadd.f32 %v2340, %v2608
      %v2771 = vadd.f32 %v2341, %v2613
      %v2772 = vadd.f32 %v2342, %v2618
      %v2773 = vadd.f32 %v2343, %v2623
      %v2774 = vadd.f32 %v2344, %v2628
      %v2775 = vadd.f32 %v2345, %v2633
      %v2776 = vadd.f32 %v2346, %v2638
      %v2777 = vadd.f32 %v2347, %v2643
      %v2778 = vadd.f32 %v2348, %v2648
      %v2779 = vadd.f32 %v2349, %v2653
      %v2780 = vadd.f32 %v2350, %v2658
      %v2781 = vadd.f32 %v2351, %v2663
      %v2782 = vadd.f32 %v2352, %v2668
      %v2783 = vadd.f32 %v2353, %v2673
      %v2784 = vadd.f32 %v2354, %v2678
      %v2785 = vadd.f32 %v2355, %v2683
      %v2786 = vadd.f32 %v2356, %v2688
      %v2787 = vadd.f32 %v2357, %v2693
      %v2788 = vadd.f32 %v2358, %v2698
      %v2789 = vadd.f32 %v2359, %v2703
      %v2790 = vadd.f32 %v2360, %v2708
      %v2791 = vadd.f32 %v2361, %v2713
      %v2792 = vadd.f32 %v2362, %v2718
      %v2793 = vadd.f32 %v2363, %v2723
      %v2794 = vadd.f32 %v2364, %v2728
      %v2795 = vadd.f32 %v2365, %v2733
      %v2796 = vadd.f32 %v2366, %v2738
      %v2797 = vadd.f32 %v2367, %v2743
      %v2798 = vadd.f32 %v2368, %v2748
      %v2799 = vadd.f32 %v2369, %v2753
      %v2800 = vadd.f32 %v2370, %v2758
      %v2801 = vadd.f32 %v2371, %v2763
      %v2802 = vld [vmem:[%s284 + $0x24] sm:$0xff]
      %v2803 = vld [vmem:[%s284 + $0x2c] sm:$0xff]
      %v2804 = vld [vmem:[%s284 + $0x34] sm:$0xff]
      %v2805 = vld [vmem:[%s284 + $0x3c] sm:$0xff]
      %v2806 = vld [vmem:[%s284 + $0x44] sm:$0xff]
      %v2807 = vld [vmem:[%s284 + $0x4c] sm:$0xff]
      %v2808 = vld [vmem:[%s284 + $0x54] sm:$0xff]
      %v2809 = vld [vmem:[%s284 + $0x5c] sm:$0xff]
      %v2810 = vld [vmem:[%s284 + $0x64] sm:$0xff]
      %v2811 = vld [vmem:[%s284 + $0x6c] sm:$0xff]
      %v2812 = vld [vmem:[%s284 + $0x74] sm:$0xff]
      %v2813 = vld [vmem:[%s284 + $0x7c] sm:$0xff]
      %v2814 = vld [vmem:[%s284 + $0x84] sm:$0xff]
      %v2815 = vld [vmem:[%s284 + $0x8c] sm:$0xff]
      %v2816 = vld [vmem:[%s284 + $0x94] sm:$0xff]
      %v2817 = vld [vmem:[%s284 + $0x9c] sm:$0xff]
      %v2818 = vld [vmem:[%s284 + $0xa4] sm:$0xff]
      %v2819 = vld [vmem:[%s284 + $0xac] sm:$0xff]
      %v2820 = vld [vmem:[%s284 + $0xb4] sm:$0xff]
      %v2821 = vld [vmem:[%s284 + $0xbc] sm:$0xff]
      %v2822 = vld [vmem:[%s284 + $0xc4] sm:$0xff]
      %v2823 = vld [vmem:[%s284 + $0xcc] sm:$0xff]
      %v2824 = vld [vmem:[%s284 + $0xd4] sm:$0xff]
      %v2825 = vld [vmem:[%s284 + $0xdc] sm:$0xff]
      %v2826 = vld [vmem:[%s284 + $0xe4] sm:$0xff]
      %v2827 = vld [vmem:[%s284 + $0xec] sm:$0xff]
      %v2828 = vld [vmem:[%s284 + $0xf4] sm:$0xff]
      %v2829 = vld [vmem:[%s284 + $0xfc] sm:$0xff]
      %v2830 = vld [vmem:[%s284 + $0x104] sm:$0xff]
      %v2831 = vld [vmem:[%s284 + $0x10c] sm:$0xff]
      %v2832 = vld [vmem:[%s284 + $0x114] sm:$0xff]
      %v2833 = vld [vmem:[%s284 + $0x11c] sm:$0xff]
      %v2834 = vld [vmem:[%s284 + $0x124] sm:$0xff]
      %v2835 = vld [vmem:[%s284 + $0x12c] sm:$0xff]
      %v2836 = vld [vmem:[%s284 + $0x134] sm:$0xff]
      %v2837 = vld [vmem:[%s284 + $0x13c] sm:$0xff]
      %s2838 = scalar_lea.vmem %s1, 24
      %v2839 = vld [vmem:[%s2838] sm:$0xf]
      %v2841 = vsel %vm368, %v2802, 0
      %v2844 = vsel %vm368, %v2803, 0
      %v2847 = vsel %vm368, %v2804, 0
      %v2850 = vsel %vm368, %v2805, 0
      %v2853 = vsel %vm368, %v2806, 0
      %v2856 = vsel %vm368, %v2807, 0
      %v2859 = vsel %vm368, %v2808, 0
      %v2862 = vsel %vm368, %v2809, 0
      %v2865 = vsel %vm368, %v2810, 0
      %v2868 = vsel %vm368, %v2811, 0
      %v2871 = vsel %vm368, %v2812, 0
      %v2874 = vsel %vm368, %v2813, 0
      %v2877 = vsel %vm368, %v2814, 0
      %v2880 = vsel %vm368, %v2815, 0
      %v2883 = vsel %vm368, %v2816, 0
      %v2886 = vsel %vm368, %v2817, 0
      %v2889 = vsel %vm368, %v2818, 0
      %v2892 = vsel %vm368, %v2819, 0
      %v2895 = vsel %vm368, %v2820, 0
      %v2898 = vsel %vm368, %v2821, 0
      %v2901 = vsel %vm368, %v2822, 0
      %v2904 = vsel %vm368, %v2823, 0
      %v2907 = vsel %vm368, %v2824, 0
      %v2910 = vsel %vm368, %v2825, 0
      %v2913 = vsel %vm368, %v2826, 0
      %v2916 = vsel %vm368, %v2827, 0
      %v2919 = vsel %vm368, %v2828, 0
      %v2922 = vsel %vm368, %v2829, 0
      %v2925 = vsel %vm368, %v2830, 0
      %v2928 = vsel %vm368, %v2831, 0
      %v2931 = vsel %vm368, %v2832, 0
      %v2934 = vsel %vm368, %v2833, 0
      %v2937 = vsel %vm368, %v2834, 0
      %v2940 = vsel %vm368, %v2835, 0
      %v2943 = vsel %vm368, %v2836, 0
      %v2946 = vsel %vm368, %v2837, 0
      %v2949 = vsel %vm477, %v2839, 0
      %2951 = vmatprep.subr.mxu0 0.0
      %2952 = vmatpush1.msra.mxu0 %v2949
      %2953 = vmatprep.subr.mxu0 0.0
      %2954 = vmatpush1.msra.mxu0 0.0
      %2955 = vmatprep.subr.mxu0 0.0
      %2956 = vmatpush1.msra.mxu0 0.0
      %2957 = vmatprep.subr.mxu0 0.0
      %2958 = vmatpush1.msra.mxu0 0.0
      %2959 = vmatprep.subr.mxu0 0.0
      %2960 = vmatpush1.msra.mxu0 0.0
      %2961 = vmatprep.subr.mxu0 0.0
      %2962 = vmatpush1.msra.mxu0 0.0
      %2963 = vmatprep.subr.mxu0 0.0
      %2964 = vmatpush1.msra.mxu0 0.0
      %2965 = vmatprep.subr.mxu0 0.0
      %2966 = vmatpush1.msra.mxu0 0.0
      %2967 = vmatprep.subr.mxu0 0.0
      %2968 = vmatpush1.msra.mxu0 0.0
      %2969 = vmatprep.subr.mxu0 0.0
      %2970 = vmatpush1.msra.mxu0 0.0
      %2971 = vmatprep.subr.mxu0 0.0
      %2972 = vmatpush1.msra.mxu0 0.0
      %2973 = vmatprep.subr.mxu0 0.0
      %2974 = vmatpush1.msra.mxu0 0.0
      %2975 = vmatprep.subr.mxu0 0.0
      %2976 = vmatpush1.msra.mxu0 0.0
      %2977 = vmatprep.subr.mxu0 0.0
      %2978 = vmatpush1.msra.mxu0 0.0
      %2979 = vmatprep.subr.mxu0 0.0
      %2980 = vmatpush1.msra.mxu0 0.0
      %2981 = vmatprep.subr.mxu0 0.0
      %2982 = vmatpush1.msra.mxu0 0.0
      %2983 = vmatprep.subr.mxu0 0.0
      %2984 = vmatpush1.msra.mxu0 0.0
      %2985 = vmatprep.subr.mxu0 0.0
      %2986 = vmatpush1.msra.mxu0 0.0
      %2987 = vmatprep.subr.mxu0 0.0
      %2988 = vmatpush1.msra.mxu0 0.0
      %2989 = vmatprep.subr.mxu0 0.0
      %2990 = vmatpush1.msra.mxu0 0.0
      %2991 = vmatprep.subr.mxu0 0.0
      %2992 = vmatpush1.msra.mxu0 0.0
      %2993 = vmatprep.subr.mxu0 0.0
      %2994 = vmatpush1.msra.mxu0 0.0
      %2995 = vmatprep.subr.mxu0 0.0
      %2996 = vmatpush1.msra.mxu0 0.0
      %2997 = vmatprep.subr.mxu0 0.0
      %2998 = vmatpush1.msra.mxu0 0.0
      %2999 = vmatprep.subr.mxu0 0.0
      %3000 = vmatpush1.msra.mxu0 0.0
      %3001 = vmatprep.subr.mxu0 0.0
      %3002 = vmatpush1.msra.mxu0 0.0
      %3003 = vmatprep.subr.mxu0 0.0
      %3004 = vmatpush1.msra.mxu0 0.0
      %3005 = vmatprep.subr.mxu0 0.0
      %3006 = vmatpush1.msra.mxu0 0.0
      %3007 = vmatprep.subr.mxu0 0.0
      %3008 = vmatpush1.msra.mxu0 0.0
      %3009 = vmatprep.subr.mxu0 0.0
      %3010 = vmatpush1.msra.mxu0 0.0
      %3011 = vmatprep.subr.mxu0 0.0
      %3012 = vmatpush1.msra.mxu0 0.0
      %3013 = vmatprep.subr.mxu0 0.0
      %3014 = vmatpush1.msra.mxu0 0.0
      %3015 = vmatprep.mubr.f32.mxu0 0.0
      %3016 = vmatmul.mubr.f32.gmra.mrb[0].mxu0 %v2841
      %v3017 = vpop.f32.mrb[0].mxu0
      %v3018 = vadd.f32 0.0, %v3017
      %v3019 = vpop.f32.mrb[0].mxu0
      %3020 = vmatprep.mubr.f32.mxu0 0.0
      %3021 = vmatmul.mubr.f32.gmra.mrb[0].mxu0 %v2844
      %v3022 = vpop.f32.mrb[0].mxu0
      %v3023 = vadd.f32 0.0, %v3022
      %v3024 = vpop.f32.mrb[0].mxu0
      %3025 = vmatprep.mubr.f32.mxu0 0.0
      %3026 = vmatmul.mubr.f32.gmra.mrb[0].mxu0 %v2847
      %v3027 = vpop.f32.mrb[0].mxu0
      %v3028 = vadd.f32 0.0, %v3027
      %v3029 = vpop.f32.mrb[0].mxu0
      %3030 = vmatprep.mubr.f32.mxu0 0.0
      %3031 = vmatmul.mubr.f32.gmra.mrb[0].mxu0 %v2850
      %v3032 = vpop.f32.mrb[0].mxu0
      %v3033 = vadd.f32 0.0, %v3032
      %v3034 = vpop.f32.mrb[0].mxu0
      %3035 = vmatprep.mubr.f32.mxu0 0.0
      %3036 = vmatmul.mubr.f32.gmra.mrb[0].mxu0 %v2853
      %v3037 = vpop.f32.mrb[0].mxu0
      %v3038 = vadd.f32 0.0, %v3037
      %v3039 = vpop.f32.mrb[0].mxu0
      %3040 = vmatprep.mubr.f32.mxu0 0.0
      %3041 = vmatmul.mubr.f32.gmra.mrb[0].mxu0 %v2856
      %v3042 = vpop.f32.mrb[0].mxu0
      %v3043 = vadd.f32 0.0, %v3042
      %v3044 = vpop.f32.mrb[0].mxu0
      %3045 = vmatprep.mubr.f32.mxu0 0.0
      %3046 = vmatmul.mubr.f32.gmra.mrb[0].mxu0 %v2859
      %v3047 = vpop.f32.mrb[0].mxu0
      %v3048 = vadd.f32 0.0, %v3047
      %v3049 = vpop.f32.mrb[0].mxu0
      %3050 = vmatprep.mubr.f32.mxu0 0.0
      %3051 = vmatmul.mubr.f32.gmra.mrb[0].mxu0 %v2862
      %v3052 = vpop.f32.mrb[0].mxu0
      %v3053 = vadd.f32 0.0, %v3052
      %v3054 = vpop.f32.mrb[0].mxu0
      %3055 = vmatprep.mubr.f32.mxu0 0.0
      %3056 = vmatmul.mubr.f32.gmra.mrb[0].mxu0 %v2865
      %v3057 = vpop.f32.mrb[0].mxu0
      %v3058 = vadd.f32 0.0, %v3057
      %v3059 = vpop.f32.mrb[0].mxu0
      %3060 = vmatprep.mubr.f32.mxu0 0.0
      %3061 = vmatmul.mubr.f32.gmra.mrb[0].mxu0 %v2868
      %v3062 = vpop.f32.mrb[0].mxu0
      %v3063 = vadd.f32 0.0, %v3062
      %v3064 = vpop.f32.mrb[0].mxu0
      %3065 = vmatprep.mubr.f32.mxu0 0.0
      %3066 = vmatmul.mubr.f32.gmra.mrb[0].mxu0 %v2871
      %v3067 = vpop.f32.mrb[0].mxu0
      %v3068 = vadd.f32 0.0, %v3067
      %v3069 = vpop.f32.mrb[0].mxu0
      %3070 = vmatprep.mubr.f32.mxu0 0.0
      %3071 = vmatmul.mubr.f32.gmra.mrb[0].mxu0 %v2874
      %v3072 = vpop.f32.mrb[0].mxu0
      %v3073 = vadd.f32 0.0, %v3072
      %v3074 = vpop.f32.mrb[0].mxu0
      %3075 = vmatprep.mubr.f32.mxu0 0.0
      %3076 = vmatmul.mubr.f32.gmra.mrb[0].mxu0 %v2877
      %v3077 = vpop.f32.mrb[0].mxu0
      %v3078 = vadd.f32 0.0, %v3077
      %v3079 = vpop.f32.mrb[0].mxu0
      %3080 = vmatprep.mubr.f32.mxu0 0.0
      %3081 = vmatmul.mubr.f32.gmra.mrb[0].mxu0 %v2880
      %v3082 = vpop.f32.mrb[0].mxu0
      %v3083 = vadd.f32 0.0, %v3082
      %v3084 = vpop.f32.mrb[0].mxu0
      %3085 = vmatprep.mubr.f32.mxu0 0.0
      %3086 = vmatmul.mubr.f32.gmra.mrb[0].mxu0 %v2883
      %v3087 = vpop.f32.mrb[0].mxu0
      %v3088 = vadd.f32 0.0, %v3087
      %v3089 = vpop.f32.mrb[0].mxu0
      %3090 = vmatprep.mubr.f32.mxu0 0.0
      %3091 = vmatmul.mubr.f32.gmra.mrb[0].mxu0 %v2886
      %v3092 = vpop.f32.mrb[0].mxu0
      %v3093 = vadd.f32 0.0, %v3092
      %v3094 = vpop.f32.mrb[0].mxu0
      %3095 = vmatprep.mubr.f32.mxu0 0.0
      %3096 = vmatmul.mubr.f32.gmra.mrb[0].mxu0 %v2889
      %v3097 = vpop.f32.mrb[0].mxu0
      %v3098 = vadd.f32 0.0, %v3097
      %v3099 = vpop.f32.mrb[0].mxu0
      %3100 = vmatprep.mubr.f32.mxu0 0.0
      %3101 = vmatmul.mubr.f32.gmra.mrb[0].mxu0 %v2892
      %v3102 = vpop.f32.mrb[0].mxu0
      %v3103 = vadd.f32 0.0, %v3102
      %v3104 = vpop.f32.mrb[0].mxu0
      %3105 = vmatprep.mubr.f32.mxu0 0.0
      %3106 = vmatmul.mubr.f32.gmra.mrb[0].mxu0 %v2895
      %v3107 = vpop.f32.mrb[0].mxu0
      %v3108 = vadd.f32 0.0, %v3107
      %v3109 = vpop.f32.mrb[0].mxu0
      %3110 = vmatprep.mubr.f32.mxu0 0.0
      %3111 = vmatmul.mubr.f32.gmra.mrb[0].mxu0 %v2898
      %v3112 = vpop.f32.mrb[0].mxu0
      %v3113 = vadd.f32 0.0, %v3112
      %v3114 = vpop.f32.mrb[0].mxu0
      %3115 = vmatprep.mubr.f32.mxu0 0.0
      %3116 = vmatmul.mubr.f32.gmra.mrb[0].mxu0 %v2901
      %v3117 = vpop.f32.mrb[0].mxu0
      %v3118 = vadd.f32 0.0, %v3117
      %v3119 = vpop.f32.mrb[0].mxu0
      %3120 = vmatprep.mubr.f32.mxu0 0.0
      %3121 = vmatmul.mubr.f32.gmra.mrb[0].mxu0 %v2904
      %v3122 = vpop.f32.mrb[0].mxu0
      %v3123 = vadd.f32 0.0, %v3122
      %v3124 = vpop.f32.mrb[0].mxu0
      %3125 = vmatprep.mubr.f32.mxu0 0.0
      %3126 = vmatmul.mubr.f32.gmra.mrb[0].mxu0 %v2907
      %v3127 = vpop.f32.mrb[0].mxu0
      %v3128 = vadd.f32 0.0, %v3127
      %v3129 = vpop.f32.mrb[0].mxu0
      %3130 = vmatprep.mubr.f32.mxu0 0.0
      %3131 = vmatmul.mubr.f32.gmra.mrb[0].mxu0 %v2910
      %v3132 = vpop.f32.mrb[0].mxu0
      %v3133 = vadd.f32 0.0, %v3132
      %v3134 = vpop.f32.mrb[0].mxu0
      %3135 = vmatprep.mubr.f32.mxu0 0.0
      %3136 = vmatmul.mubr.f32.gmra.mrb[0].mxu0 %v2913
      %v3137 = vpop.f32.mrb[0].mxu0
      %v3138 = vadd.f32 0.0, %v3137
      %v3139 = vpop.f32.mrb[0].mxu0
      %3140 = vmatprep.mubr.f32.mxu0 0.0
      %3141 = vmatmul.mubr.f32.gmra.mrb[0].mxu0 %v2916
      %v3142 = vpop.f32.mrb[0].mxu0
      %v3143 = vadd.f32 0.0, %v3142
      %v3144 = vpop.f32.mrb[0].mxu0
      %3145 = vmatprep.mubr.f32.mxu0 0.0
      %3146 = vmatmul.mubr.f32.gmra.mrb[0].mxu0 %v2919
      %v3147 = vpop.f32.mrb[0].mxu0
      %v3148 = vadd.f32 0.0, %v3147
      %v3149 = vpop.f32.mrb[0].mxu0
      %3150 = vmatprep.mubr.f32.mxu0 0.0
      %3151 = vmatmul.mubr.f32.gmra.mrb[0].mxu0 %v2922
      %v3152 = vpop.f32.mrb[0].mxu0
      %v3153 = vadd.f32 0.0, %v3152
      %v3154 = vpop.f32.mrb[0].mxu0
      %3155 = vmatprep.mubr.f32.mxu0 0.0
      %3156 = vmatmul.mubr.f32.gmra.mrb[0].mxu0 %v2925
      %v3157 = vpop.f32.mrb[0].mxu0
      %v3158 = vadd.f32 0.0, %v3157
      %v3159 = vpop.f32.mrb[0].mxu0
      %3160 = vmatprep.mubr.f32.mxu0 0.0
      %3161 = vmatmul.mubr.f32.gmra.mrb[0].mxu0 %v2928
      %v3162 = vpop.f32.mrb[0].mxu0
      %v3163 = vadd.f32 0.0, %v3162
      %v3164 = vpop.f32.mrb[0].mxu0
      %3165 = vmatprep.mubr.f32.mxu0 0.0
      %3166 = vmatmul.mubr.f32.gmra.mrb[0].mxu0 %v2931
      %v3167 = vpop.f32.mrb[0].mxu0
      %v3168 = vadd.f32 0.0, %v3167
      %v3169 = vpop.f32.mrb[0].mxu0
      %3170 = vmatprep.mubr.f32.mxu0 0.0
      %3171 = vmatmul.mubr.f32.gmra.mrb[0].mxu0 %v2934
      %v3172 = vpop.f32.mrb[0].mxu0
      %v3173 = vadd.f32 0.0, %v3172
      %v3174 = vpop.f32.mrb[0].mxu0
      %3175 = vmatprep.mubr.f32.mxu0 0.0
      %3176 = vmatmul.mubr.f32.gmra.mrb[0].mxu0 %v2937
      %v3177 = vpop.f32.mrb[0].mxu0
      %v3178 = vadd.f32 0.0, %v3177
      %v3179 = vpop.f32.mrb[0].mxu0
      %3180 = vmatprep.mubr.f32.mxu0 0.0
      %3181 = vmatmul.mubr.f32.gmra.mrb[0].mxu0 %v2940
      %v3182 = vpop.f32.mrb[0].mxu0
      %v3183 = vadd.f32 0.0, %v3182
      %v3184 = vpop.f32.mrb[0].mxu0
      %3185 = vmatprep.mubr.f32.mxu0 0.0
      %3186 = vmatmul.mubr.f32.gmra.mrb[0].mxu0 %v2943
      %v3187 = vpop.f32.mrb[0].mxu0
      %v3188 = vadd.f32 0.0, %v3187
      %v3189 = vpop.f32.mrb[0].mxu0
      %3190 = vmatprep.mubr.f32.mxu0 0.0
      %3191 = vmatmul.mubr.f32.gmra.mrb[0].mxu0 %v2946
      %v3192 = vpop.f32.mrb[0].mxu0
      %v3193 = vadd.f32 0.0, %v3192
      %v3194 = vpop.f32.mrb[0].mxu0
      %3195 = vdwg.mxu0
      %v3196 = vadd.f32 %v2766, %v3018
      %v3197 = vadd.f32 %v2767, %v3023
      %v3198 = vadd.f32 %v2768, %v3028
      %v3199 = vadd.f32 %v2769, %v3033
      %v3200 = vadd.f32 %v2770, %v3038
      %v3201 = vadd.f32 %v2771, %v3043
      %v3202 = vadd.f32 %v2772, %v3048
      %v3203 = vadd.f32 %v2773, %v3053
      %v3204 = vadd.f32 %v2774, %v3058
      %v3205 = vadd.f32 %v2775, %v3063
      %v3206 = vadd.f32 %v2776, %v3068
      %v3207 = vadd.f32 %v2777, %v3073
      %v3208 = vadd.f32 %v2778, %v3078
      %v3209 = vadd.f32 %v2779, %v3083
      %v3210 = vadd.f32 %v2780, %v3088
      %v3211 = vadd.f32 %v2781, %v3093
      %v3212 = vadd.f32 %v2782, %v3098
      %v3213 = vadd.f32 %v2783, %v3103
      %v3214 = vadd.f32 %v2784, %v3108
      %v3215 = vadd.f32 %v2785, %v3113
      %v3216 = vadd.f32 %v2786, %v3118
      %v3217 = vadd.f32 %v2787, %v3123
      %v3218 = vadd.f32 %v2788, %v3128
      %v3219 = vadd.f32 %v2789, %v3133
      %v3220 = vadd.f32 %v2790, %v3138
      %v3221 = vadd.f32 %v2791, %v3143
      %v3222 = vadd.f32 %v2792, %v3148
      %v3223 = vadd.f32 %v2793, %v3153
      %v3224 = vadd.f32 %v2794, %v3158
      %v3225 = vadd.f32 %v2795, %v3163
      %v3226 = vadd.f32 %v2796, %v3168
      %v3227 = vadd.f32 %v2797, %v3173
      %v3228 = vadd.f32 %v2798, %v3178
      %v3229 = vadd.f32 %v2799, %v3183
      %v3230 = vadd.f32 %v2800, %v3188
      %v3231 = vadd.f32 %v2801, %v3193
      %v3232 = vld [vmem:[%s284 + $0x25] sm:$0xff]
      %v3233 = vld [vmem:[%s284 + $0x2d] sm:$0xff]
      %v3234 = vld [vmem:[%s284 + $0x35] sm:$0xff]
      %v3235 = vld [vmem:[%s284 + $0x3d] sm:$0xff]
      %v3236 = vld [vmem:[%s284 + $0x45] sm:$0xff]
      %v3237 = vld [vmem:[%s284 + $0x4d] sm:$0xff]
      %v3238 = vld [vmem:[%s284 + $0x55] sm:$0xff]
      %v3239 = vld [vmem:[%s284 + $0x5d] sm:$0xff]
      %v3240 = vld [vmem:[%s284 + $0x65] sm:$0xff]
      %v3241 = vld [vmem:[%s284 + $0x6d] sm:$0xff]
      %v3242 = vld [vmem:[%s284 + $0x75] sm:$0xff]
      %v3243 = vld [vmem:[%s284 + $0x7d] sm:$0xff]
      %v3244 = vld [vmem:[%s284 + $0x85] sm:$0xff]
      %v3245 = vld [vmem:[%s284 + $0x8d] sm:$0xff]
      %v3246 = vld [vmem:[%s284 + $0x95] sm:$0xff]
      %v3247 = vld [vmem:[%s284 + $0x9d] sm:$0xff]
      %v3248 = vld [vmem:[%s284 + $0xa5] sm:$0xff]
      %v3249 = vld [vmem:[%s284 + $0xad] sm:$0xff]
      %v3250 = vld [vmem:[%s284 + $0xb5] sm:$0xff]
      %v3251 = vld [vmem:[%s284 + $0xbd] sm:$0xff]
      %v3252 = vld [vmem:[%s284 + $0xc5] sm:$0xff]
      %v3253 = vld [vmem:[%s284 + $0xcd] sm:$0xff]
      %v3254 = vld [vmem:[%s284 + $0xd5] sm:$0xff]
      %v3255 = vld [vmem:[%s284 + $0xdd] sm:$0xff]
      %v3256 = vld [vmem:[%s284 + $0xe5] sm:$0xff]
      %v3257 = vld [vmem:[%s284 + $0xed] sm:$0xff]
      %v3258 = vld [vmem:[%s284 + $0xf5] sm:$0xff]
      %v3259 = vld [vmem:[%s284 + $0xfd] sm:$0xff]
      %v3260 = vld [vmem:[%s284 + $0x105] sm:$0xff]
      %v3261 = vld [vmem:[%s284 + $0x10d] sm:$0xff]
      %v3262 = vld [vmem:[%s284 + $0x115] sm:$0xff]
      %v3263 = vld [vmem:[%s284 + $0x11d] sm:$0xff]
      %v3264 = vld [vmem:[%s284 + $0x125] sm:$0xff]
      %v3265 = vld [vmem:[%s284 + $0x12d] sm:$0xff]
      %v3266 = vld [vmem:[%s284 + $0x135] sm:$0xff]
      %v3267 = vld [vmem:[%s284 + $0x13d] sm:$0xff]
      %s3268 = scalar_lea.vmem %s1, 28
      %v3269 = vld [vmem:[%s3268] sm:$0xf]
      %v3271 = vsel %vm368, %v3232, 0
      %v3274 = vsel %vm368, %v3233, 0
      %v3277 = vsel %vm368, %v3234, 0
      %v3280 = vsel %vm368, %v3235, 0
      %v3283 = vsel %vm368, %v3236, 0
      %v3286 = vsel %vm368, %v3237, 0
      %v3289 = vsel %vm368, %v3238, 0
      %v3292 = vsel %vm368, %v3239, 0
      %v3295 = vsel %vm368, %v3240, 0
      %v3298 = vsel %vm368, %v3241, 0
      %v3301 = vsel %vm368, %v3242, 0
      %v3304 = vsel %vm368, %v3243, 0
      %v3307 = vsel %vm368, %v3244, 0
      %v3310 = vsel %vm368, %v3245, 0
      %v3313 = vsel %vm368, %v3246, 0
      %v3316 = vsel %vm368, %v3247, 0
      %v3319 = vsel %vm368, %v3248, 0
      %v3322 = vsel %vm368, %v3249, 0
      %v3325 = vsel %vm368, %v3250, 0
      %v3328 = vsel %vm368, %v3251, 0
      %v3331 = vsel %vm368, %v3252, 0
      %v3334 = vsel %vm368, %v3253, 0
      %v3337 = vsel %vm368, %v3254, 0
      %v3340 = vsel %vm368, %v3255, 0
      %v3343 = vsel %vm368, %v3256, 0
      %v3346 = vsel %vm368, %v3257, 0
      %v3349 = vsel %vm368, %v3258, 0
      %v3352 = vsel %vm368, %v3259, 0
      %v3355 = vsel %vm368, %v3260, 0
      %v3358 = vsel %vm368, %v3261, 0
      %v3361 = vsel %vm368, %v3262, 0
      %v3364 = vsel %vm368, %v3263, 0
      %v3367 = vsel %vm368, %v3264, 0
      %v3370 = vsel %vm368, %v3265, 0
      %v3373 = vsel %vm368, %v3266, 0
      %v3376 = vsel %vm368, %v3267, 0
      %v3379 = vsel %vm477, %v3269, 0
      %3381 = vmatprep.subr.mxu0 0.0
      %3382 = vmatpush1.msra.mxu0 %v3379
      %3383 = vmatprep.subr.mxu0 0.0
      %3384 = vmatpush1.msra.mxu0 0.0
      %3385 = vmatprep.subr.mxu0 0.0
      %3386 = vmatpush1.msra.mxu0 0.0
      %3387 = vmatprep.subr.mxu0 0.0
      %3388 = vmatpush1.msra.mxu0 0.0
      %3389 = vmatprep.subr.mxu0 0.0
      %3390 = vmatpush1.msra.mxu0 0.0
      %3391 = vmatprep.subr.mxu0 0.0
      %3392 = vmatpush1.msra.mxu0 0.0
      %3393 = vmatprep.subr.mxu0 0.0
      %3394 = vmatpush1.msra.mxu0 0.0
      %3395 = vmatprep.subr.mxu0 0.0
      %3396 = vmatpush1.msra.mxu0 0.0
      %3397 = vmatprep.subr.mxu0 0.0
      %3398 = vmatpush1.msra.mxu0 0.0
      %3399 = vmatprep.subr.mxu0 0.0
      %3400 = vmatpush1.msra.mxu0 0.0
      %3401 = vmatprep.subr.mxu0 0.0
      %3402 = vmatpush1.msra.mxu0 0.0
      %3403 = vmatprep.subr.mxu0 0.0
      %3404 = vmatpush1.msra.mxu0 0.0
      %3405 = vmatprep.subr.mxu0 0.0
      %3406 = vmatpush1.msra.mxu0 0.0
      %3407 = vmatprep.subr.mxu0 0.0
      %3408 = vmatpush1.msra.mxu0 0.0
      %3409 = vmatprep.subr.mxu0 0.0
      %3410 = vmatpush1.msra.mxu0 0.0
      %3411 = vmatprep.subr.mxu0 0.0
      %3412 = vmatpush1.msra.mxu0 0.0
      %3413 = vmatprep.subr.mxu0 0.0
      %3414 = vmatpush1.msra.mxu0 0.0
      %3415 = vmatprep.subr.mxu0 0.0
      %3416 = vmatpush1.msra.mxu0 0.0
      %3417 = vmatprep.subr.mxu0 0.0
      %3418 = vmatpush1.msra.mxu0 0.0
      %3419 = vmatprep.subr.mxu0 0.0
      %3420 = vmatpush1.msra.mxu0 0.0
      %3421 = vmatprep.subr.mxu0 0.0
      %3422 = vmatpush1.msra.mxu0 0.0
      %3423 = vmatprep.subr.mxu0 0.0
      %3424 = vmatpush1.msra.mxu0 0.0
      %3425 = vmatprep.subr.mxu0 0.0
      %3426 = vmatpush1.msra.mxu0 0.0
      %3427 = vmatprep.subr.mxu0 0.0
      %3428 = vmatpush1.msra.mxu0 0.0
      %3429 = vmatprep.subr.mxu0 0.0
      %3430 = vmatpush1.msra.mxu0 0.0
      %3431 = vmatprep.subr.mxu0 0.0
      %3432 = vmatpush1.msra.mxu0 0.0
      %3433 = vmatprep.subr.mxu0 0.0
      %3434 = vmatpush1.msra.mxu0 0.0
      %3435 = vmatprep.subr.mxu0 0.0
      %3436 = vmatpush1.msra.mxu0 0.0
      %3437 = vmatprep.subr.mxu0 0.0
      %3438 = vmatpush1.msra.mxu0 0.0
      %3439 = vmatprep.subr.mxu0 0.0
      %3440 = vmatpush1.msra.mxu0 0.0
      %3441 = vmatprep.subr.mxu0 0.0
      %3442 = vmatpush1.msra.mxu0 0.0
      %3443 = vmatprep.subr.mxu0 0.0
      %3444 = vmatpush1.msra.mxu0 0.0
      %3445 = vmatprep.mubr.f32.mxu0 0.0
      %3446 = vmatmul.mubr.f32.gmra.mrb[0].mxu0 %v3271
      %v3447 = vpop.f32.mrb[0].mxu0
      %v3448 = vadd.f32 0.0, %v3447
      %v3449 = vpop.f32.mrb[0].mxu0
      %3450 = vmatprep.mubr.f32.mxu0 0.0
      %3451 = vmatmul.mubr.f32.gmra.mrb[0].mxu0 %v3274
      %v3452 = vpop.f32.mrb[0].mxu0
      %v3453 = vadd.f32 0.0, %v3452
      %v3454 = vpop.f32.mrb[0].mxu0
      %3455 = vmatprep.mubr.f32.mxu0 0.0
      %3456 = vmatmul.mubr.f32.gmra.mrb[0].mxu0 %v3277
      %v3457 = vpop.f32.mrb[0].mxu0
      %v3458 = vadd.f32 0.0, %v3457
      %v3459 = vpop.f32.mrb[0].mxu0
      %3460 = vmatprep.mubr.f32.mxu0 0.0
      %3461 = vmatmul.mubr.f32.gmra.mrb[0].mxu0 %v3280
      %v3462 = vpop.f32.mrb[0].mxu0
      %v3463 = vadd.f32 0.0, %v3462
      %v3464 = vpop.f32.mrb[0].mxu0
      %3465 = vmatprep.mubr.f32.mxu0 0.0
      %3466 = vmatmul.mubr.f32.gmra.mrb[0].mxu0 %v3283
      %v3467 = vpop.f32.mrb[0].mxu0
      %v3468 = vadd.f32 0.0, %v3467
      %v3469 = vpop.f32.mrb[0].mxu0
      %3470 = vmatprep.mubr.f32.mxu0 0.0
      %3471 = vmatmul.mubr.f32.gmra.mrb[0].mxu0 %v3286
      %v3472 = vpop.f32.mrb[0].mxu0
      %v3473 = vadd.f32 0.0, %v3472
      %v3474 = vpop.f32.mrb[0].mxu0
      %3475 = vmatprep.mubr.f32.mxu0 0.0
      %3476 = vmatmul.mubr.f32.gmra.mrb[0].mxu0 %v3289
      %v3477 = vpop.f32.mrb[0].mxu0
      %v3478 = vadd.f32 0.0, %v3477
      %v3479 = vpop.f32.mrb[0].mxu0
      %3480 = vmatprep.mubr.f32.mxu0 0.0
      %3481 = vmatmul.mubr.f32.gmra.mrb[0].mxu0 %v3292
      %v3482 = vpop.f32.mrb[0].mxu0
      %v3483 = vadd.f32 0.0, %v3482
      %v3484 = vpop.f32.mrb[0].mxu0
      %3485 = vmatprep.mubr.f32.mxu0 0.0
      %3486 = vmatmul.mubr.f32.gmra.mrb[0].mxu0 %v3295
      %v3487 = vpop.f32.mrb[0].mxu0
      %v3488 = vadd.f32 0.0, %v3487
      %v3489 = vpop.f32.mrb[0].mxu0
      %3490 = vmatprep.mubr.f32.mxu0 0.0
      %3491 = vmatmul.mubr.f32.gmra.mrb[0].mxu0 %v3298
      %v3492 = vpop.f32.mrb[0].mxu0
      %v3493 = vadd.f32 0.0, %v3492
      %v3494 = vpop.f32.mrb[0].mxu0
      %3495 = vmatprep.mubr.f32.mxu0 0.0
      %3496 = vmatmul.mubr.f32.gmra.mrb[0].mxu0 %v3301
      %v3497 = vpop.f32.mrb[0].mxu0
      %v3498 = vadd.f32 0.0, %v3497
      %v3499 = vpop.f32.mrb[0].mxu0
      %3500 = vmatprep.mubr.f32.mxu0 0.0
      %3501 = vmatmul.mubr.f32.gmra.mrb[0].mxu0 %v3304
      %v3502 = vpop.f32.mrb[0].mxu0
      %v3503 = vadd.f32 0.0, %v3502
      %v3504 = vpop.f32.mrb[0].mxu0
      %3505 = vmatprep.mubr.f32.mxu0 0.0
      %3506 = vmatmul.mubr.f32.gmra.mrb[0].mxu0 %v3307
      %v3507 = vpop.f32.mrb[0].mxu0
      %v3508 = vadd.f32 0.0, %v3507
      %v3509 = vpop.f32.mrb[0].mxu0
      %3510 = vmatprep.mubr.f32.mxu0 0.0
      %3511 = vmatmul.mubr.f32.gmra.mrb[0].mxu0 %v3310
      %v3512 = vpop.f32.mrb[0].mxu0
      %v3513 = vadd.f32 0.0, %v3512
      %v3514 = vpop.f32.mrb[0].mxu0
      %3515 = vmatprep.mubr.f32.mxu0 0.0
      %3516 = vmatmul.mubr.f32.gmra.mrb[0].mxu0 %v3313
      %v3517 = vpop.f32.mrb[0].mxu0
      %v3518 = vadd.f32 0.0, %v3517
      %v3519 = vpop.f32.mrb[0].mxu0
      %3520 = vmatprep.mubr.f32.mxu0 0.0
      %3521 = vmatmul.mubr.f32.gmra.mrb[0].mxu0 %v3316
      %v3522 = vpop.f32.mrb[0].mxu0
      %v3523 = vadd.f32 0.0, %v3522
      %v3524 = vpop.f32.mrb[0].mxu0
      %3525 = vmatprep.mubr.f32.mxu0 0.0
      %3526 = vmatmul.mubr.f32.gmra.mrb[0].mxu0 %v3319
      %v3527 = vpop.f32.mrb[0].mxu0
      %v3528 = vadd.f32 0.0, %v3527
      %v3529 = vpop.f32.mrb[0].mxu0
      %3530 = vmatprep.mubr.f32.mxu0 0.0
      %3531 = vmatmul.mubr.f32.gmra.mrb[0].mxu0 %v3322
      %v3532 = vpop.f32.mrb[0].mxu0
      %v3533 = vadd.f32 0.0, %v3532
      %v3534 = vpop.f32.mrb[0].mxu0
      %3535 = vmatprep.mubr.f32.mxu0 0.0
      %3536 = vmatmul.mubr.f32.gmra.mrb[0].mxu0 %v3325
      %v3537 = vpop.f32.mrb[0].mxu0
      %v3538 = vadd.f32 0.0, %v3537
      %v3539 = vpop.f32.mrb[0].mxu0
      %3540 = vmatprep.mubr.f32.mxu0 0.0
      %3541 = vmatmul.mubr.f32.gmra.mrb[0].mxu0 %v3328
      %v3542 = vpop.f32.mrb[0].mxu0
      %v3543 = vadd.f32 0.0, %v3542
      %v3544 = vpop.f32.mrb[0].mxu0
      %3545 = vmatprep.mubr.f32.mxu0 0.0
      %3546 = vmatmul.mubr.f32.gmra.mrb[0].mxu0 %v3331
      %v3547 = vpop.f32.mrb[0].mxu0
      %v3548 = vadd.f32 0.0, %v3547
      %v3549 = vpop.f32.mrb[0].mxu0
      %3550 = vmatprep.mubr.f32.mxu0 0.0
      %3551 = vmatmul.mubr.f32.gmra.mrb[0].mxu0 %v3334
      %v3552 = vpop.f32.mrb[0].mxu0
      %v3553 = vadd.f32 0.0, %v3552
      %v3554 = vpop.f32.mrb[0].mxu0
      %3555 = vmatprep.mubr.f32.mxu0 0.0
      %3556 = vmatmul.mubr.f32.gmra.mrb[0].mxu0 %v3337
      %v3557 = vpop.f32.mrb[0].mxu0
      %v3558 = vadd.f32 0.0, %v3557
      %v3559 = vpop.f32.mrb[0].mxu0
      %3560 = vmatprep.mubr.f32.mxu0 0.0
      %3561 = vmatmul.mubr.f32.gmra.mrb[0].mxu0 %v3340
      %v3562 = vpop.f32.mrb[0].mxu0
      %v3563 = vadd.f32 0.0, %v3562
      %v3564 = vpop.f32.mrb[0].mxu0
      %3565 = vmatprep.mubr.f32.mxu0 0.0
      %3566 = vmatmul.mubr.f32.gmra.mrb[0].mxu0 %v3343
      %v3567 = vpop.f32.mrb[0].mxu0
      %v3568 = vadd.f32 0.0, %v3567
      %v3569 = vpop.f32.mrb[0].mxu0
      %3570 = vmatprep.mubr.f32.mxu0 0.0
      %3571 = vmatmul.mubr.f32.gmra.mrb[0].mxu0 %v3346
      %v3572 = vpop.f32.mrb[0].mxu0
      %v3573 = vadd.f32 0.0, %v3572
      %v3574 = vpop.f32.mrb[0].mxu0
      %3575 = vmatprep.mubr.f32.mxu0 0.0
      %3576 = vmatmul.mubr.f32.gmra.mrb[0].mxu0 %v3349
      %v3577 = vpop.f32.mrb[0].mxu0
      %v3578 = vadd.f32 0.0, %v3577
      %v3579 = vpop.f32.mrb[0].mxu0
      %3580 = vmatprep.mubr.f32.mxu0 0.0
      %3581 = vmatmul.mubr.f32.gmra.mrb[0].mxu0 %v3352
      %v3582 = vpop.f32.mrb[0].mxu0
      %v3583 = vadd.f32 0.0, %v3582
      %v3584 = vpop.f32.mrb[0].mxu0
      %3585 = vmatprep.mubr.f32.mxu0 0.0
      %3586 = vmatmul.mubr.f32.gmra.mrb[0].mxu0 %v3355
      %v3587 = vpop.f32.mrb[0].mxu0
      %v3588 = vadd.f32 0.0, %v3587
      %v3589 = vpop.f32.mrb[0].mxu0
      %3590 = vmatprep.mubr.f32.mxu0 0.0
      %3591 = vmatmul.mubr.f32.gmra.mrb[0].mxu0 %v3358
      %v3592 = vpop.f32.mrb[0].mxu0
      %v3593 = vadd.f32 0.0, %v3592
      %v3594 = vpop.f32.mrb[0].mxu0
      %3595 = vmatprep.mubr.f32.mxu0 0.0
      %3596 = vmatmul.mubr.f32.gmra.mrb[0].mxu0 %v3361
      %v3597 = vpop.f32.mrb[0].mxu0
      %v3598 = vadd.f32 0.0, %v3597
      %v3599 = vpop.f32.mrb[0].mxu0
      %3600 = vmatprep.mubr.f32.mxu0 0.0
      %3601 = vmatmul.mubr.f32.gmra.mrb[0].mxu0 %v3364
      %v3602 = vpop.f32.mrb[0].mxu0
      %v3603 = vadd.f32 0.0, %v3602
      %v3604 = vpop.f32.mrb[0].mxu0
      %3605 = vmatprep.mubr.f32.mxu0 0.0
      %3606 = vmatmul.mubr.f32.gmra.mrb[0].mxu0 %v3367
      %v3607 = vpop.f32.mrb[0].mxu0
      %v3608 = vadd.f32 0.0, %v3607
      %v3609 = vpop.f32.mrb[0].mxu0
      %3610 = vmatprep.mubr.f32.mxu0 0.0
      %3611 = vmatmul.mubr.f32.gmra.mrb[0].mxu0 %v3370
      %v3612 = vpop.f32.mrb[0].mxu0
      %v3613 = vadd.f32 0.0, %v3612
      %v3614 = vpop.f32.mrb[0].mxu0
      %3615 = vmatprep.mubr.f32.mxu0 0.0
      %3616 = vmatmul.mubr.f32.gmra.mrb[0].mxu0 %v3373
      %v3617 = vpop.f32.mrb[0].mxu0
      %v3618 = vadd.f32 0.0, %v3617
      %v3619 = vpop.f32.mrb[0].mxu0
      %3620 = vmatprep.mubr.f32.mxu0 0.0
      %3621 = vmatmul.mubr.f32.gmra.mrb[0].mxu0 %v3376
      %v3622 = vpop.f32.mrb[0].mxu0
      %v3623 = vadd.f32 0.0, %v3622
      %v3624 = vpop.f32.mrb[0].mxu0
      %3625 = vdwg.mxu0
      %v3626 = vadd.f32 %v3196, %v3448
      %v3627 = vadd.f32 %v3197, %v3453
      %v3628 = vadd.f32 %v3198, %v3458
      %v3629 = vadd.f32 %v3199, %v3463
      %v3630 = vadd.f32 %v3200, %v3468
      %v3631 = vadd.f32 %v3201, %v3473
      %v3632 = vadd.f32 %v3202, %v3478
      %v3633 = vadd.f32 %v3203, %v3483
      %v3634 = vadd.f32 %v3204, %v3488
      %v3635 = vadd.f32 %v3205, %v3493
      %v3636 = vadd.f32 %v3206, %v3498
      %v3637 = vadd.f32 %v3207, %v3503
      %v3638 = vadd.f32 %v3208, %v3508
      %v3639 = vadd.f32 %v3209, %v3513
      %v3640 = vadd.f32 %v3210, %v3518
      %v3641 = vadd.f32 %v3211, %v3523
      %v3642 = vadd.f32 %v3212, %v3528
      %v3643 = vadd.f32 %v3213, %v3533
      %v3644 = vadd.f32 %v3214, %v3538
      %v3645 = vadd.f32 %v3215, %v3543
      %v3646 = vadd.f32 %v3216, %v3548
      %v3647 = vadd.f32 %v3217, %v3553
      %v3648 = vadd.f32 %v3218, %v3558
      %v3649 = vadd.f32 %v3219, %v3563
      %v3650 = vadd.f32 %v3220, %v3568
      %v3651 = vadd.f32 %v3221, %v3573
      %v3652 = vadd.f32 %v3222, %v3578
      %v3653 = vadd.f32 %v3223, %v3583
      %v3654 = vadd.f32 %v3224, %v3588
      %v3655 = vadd.f32 %v3225, %v3593
      %v3656 = vadd.f32 %v3226, %v3598
      %v3657 = vadd.f32 %v3227, %v3603
      %v3658 = vadd.f32 %v3228, %v3608
      %v3659 = vadd.f32 %v3229, %v3613
      %v3660 = vadd.f32 %v3230, %v3618
      %v3661 = vadd.f32 %v3231, %v3623
      %v3662 = vld [vmem:[%s284 + $0x26] sm:$0xff]
      %v3663 = vld [vmem:[%s284 + $0x2e] sm:$0xff]
      %v3664 = vld [vmem:[%s284 + $0x36] sm:$0xff]
      %v3665 = vld [vmem:[%s284 + $0x3e] sm:$0xff]
      %v3666 = vld [vmem:[%s284 + $0x46] sm:$0xff]
      %v3667 = vld [vmem:[%s284 + $0x4e] sm:$0xff]
      %v3668 = vld [vmem:[%s284 + $0x56] sm:$0xff]
      %v3669 = vld [vmem:[%s284 + $0x5e] sm:$0xff]
      %v3670 = vld [vmem:[%s284 + $0x66] sm:$0xff]
      %v3671 = vld [vmem:[%s284 + $0x6e] sm:$0xff]
      %v3672 = vld [vmem:[%s284 + $0x76] sm:$0xff]
      %v3673 = vld [vmem:[%s284 + $0x7e] sm:$0xff]
      %v3674 = vld [vmem:[%s284 + $0x86] sm:$0xff]
      %v3675 = vld [vmem:[%s284 + $0x8e] sm:$0xff]
      %v3676 = vld [vmem:[%s284 + $0x96] sm:$0xff]
      %v3677 = vld [vmem:[%s284 + $0x9e] sm:$0xff]
      %v3678 = vld [vmem:[%s284 + $0xa6] sm:$0xff]
      %v3679 = vld [vmem:[%s284 + $0xae] sm:$0xff]
      %v3680 = vld [vmem:[%s284 + $0xb6] sm:$0xff]
      %v3681 = vld [vmem:[%s284 + $0xbe] sm:$0xff]
      %v3682 = vld [vmem:[%s284 + $0xc6] sm:$0xff]
      %v3683 = vld [vmem:[%s284 + $0xce] sm:$0xff]
      %v3684 = vld [vmem:[%s284 + $0xd6] sm:$0xff]
      %v3685 = vld [vmem:[%s284 + $0xde] sm:$0xff]
      %v3686 = vld [vmem:[%s284 + $0xe6] sm:$0xff]
      %v3687 = vld [vmem:[%s284 + $0xee] sm:$0xff]
      %v3688 = vld [vmem:[%s284 + $0xf6] sm:$0xff]
      %v3689 = vld [vmem:[%s284 + $0xfe] sm:$0xff]
      %v3690 = vld [vmem:[%s284 + $0x106] sm:$0xff]
      %v3691 = vld [vmem:[%s284 + $0x10e] sm:$0xff]
      %v3692 = vld [vmem:[%s284 + $0x116] sm:$0xff]
      %v3693 = vld [vmem:[%s284 + $0x11e] sm:$0xff]
      %v3694 = vld [vmem:[%s284 + $0x126] sm:$0xff]
      %v3695 = vld [vmem:[%s284 + $0x12e] sm:$0xff]
      %v3696 = vld [vmem:[%s284 + $0x136] sm:$0xff]
      %v3697 = vld [vmem:[%s284 + $0x13e] sm:$0xff]
      %s3698 = scalar_lea.vmem %s1, 32
      %v3699 = vld [vmem:[%s3698] sm:$0xf]
      %v3701 = vsel %vm368, %v3662, 0
      %v3704 = vsel %vm368, %v3663, 0
      %v3707 = vsel %vm368, %v3664, 0
      %v3710 = vsel %vm368, %v3665, 0
      %v3713 = vsel %vm368, %v3666, 0
      %v3716 = vsel %vm368, %v3667, 0
      %v3719 = vsel %vm368, %v3668, 0
      %v3722 = vsel %vm368, %v3669, 0
      %v3725 = vsel %vm368, %v3670, 0
      %v3728 = vsel %vm368, %v3671, 0
      %v3731 = vsel %vm368, %v3672, 0
      %v3734 = vsel %vm368, %v3673, 0
      %v3737 = vsel %vm368, %v3674, 0
      %v3740 = vsel %vm368, %v3675, 0
      %v3743 = vsel %vm368, %v3676, 0
      %v3746 = vsel %vm368, %v3677, 0
      %v3749 = vsel %vm368, %v3678, 0
      %v3752 = vsel %vm368, %v3679, 0
      %v3755 = vsel %vm368, %v3680, 0
      %v3758 = vsel %vm368, %v3681, 0
      %v3761 = vsel %vm368, %v3682, 0
      %v3764 = vsel %vm368, %v3683, 0
      %v3767 = vsel %vm368, %v3684, 0
      %v3770 = vsel %vm368, %v3685, 0
      %v3773 = vsel %vm368, %v3686, 0
      %v3776 = vsel %vm368, %v3687, 0
      %v3779 = vsel %vm368, %v3688, 0
      %v3782 = vsel %vm368, %v3689, 0
      %v3785 = vsel %vm368, %v3690, 0
      %v3788 = vsel %vm368, %v3691, 0
      %v3791 = vsel %vm368, %v3692, 0
      %v3794 = vsel %vm368, %v3693, 0
      %v3797 = vsel %vm368, %v3694, 0
      %v3800 = vsel %vm368, %v3695, 0
      %v3803 = vsel %vm368, %v3696, 0
      %v3806 = vsel %vm368, %v3697, 0
      %v3809 = vsel %vm477, %v3699, 0
      %3811 = vmatprep.subr.mxu0 0.0
      %3812 = vmatpush1.msra.mxu0 %v3809
      %3813 = vmatprep.subr.mxu0 0.0
      %3814 = vmatpush1.msra.mxu0 0.0
      %3815 = vmatprep.subr.mxu0 0.0
      %3816 = vmatpush1.msra.mxu0 0.0
      %3817 = vmatprep.subr.mxu0 0.0
      %3818 = vmatpush1.msra.mxu0 0.0
      %3819 = vmatprep.subr.mxu0 0.0
      %3820 = vmatpush1.msra.mxu0 0.0
      %3821 = vmatprep.subr.mxu0 0.0
      %3822 = vmatpush1.msra.mxu0 0.0
      %3823 = vmatprep.subr.mxu0 0.0
      %3824 = vmatpush1.msra.mxu0 0.0
      %3825 = vmatprep.subr.mxu0 0.0
      %3826 = vmatpush1.msra.mxu0 0.0
      %3827 = vmatprep.subr.mxu0 0.0
      %3828 = vmatpush1.msra.mxu0 0.0
      %3829 = vmatprep.subr.mxu0 0.0
      %3830 = vmatpush1.msra.mxu0 0.0
      %3831 = vmatprep.subr.mxu0 0.0
      %3832 = vmatpush1.msra.mxu0 0.0
      %3833 = vmatprep.subr.mxu0 0.0
      %3834 = vmatpush1.msra.mxu0 0.0
      %3835 = vmatprep.subr.mxu0 0.0
      %3836 = vmatpush1.msra.mxu0 0.0
      %3837 = vmatprep.subr.mxu0 0.0
      %3838 = vmatpush1.msra.mxu0 0.0
      %3839 = vmatprep.subr.mxu0 0.0
      %3840 = vmatpush1.msra.mxu0 0.0
      %3841 = vmatprep.subr.mxu0 0.0
      %3842 = vmatpush1.msra.mxu0 0.0
      %3843 = vmatprep.subr.mxu0 0.0
      %3844 = vmatpush1.msra.mxu0 0.0
      %3845 = vmatprep.subr.mxu0 0.0
      %3846 = vmatpush1.msra.mxu0 0.0
      %3847 = vmatprep.subr.mxu0 0.0
      %3848 = vmatpush1.msra.mxu0 0.0
      %3849 = vmatprep.subr.mxu0 0.0
      %3850 = vmatpush1.msra.mxu0 0.0
      %3851 = vmatprep.subr.mxu0 0.0
      %3852 = vmatpush1.msra.mxu0 0.0
      %3853 = vmatprep.subr.mxu0 0.0
      %3854 = vmatpush1.msra.mxu0 0.0
      %3855 = vmatprep.subr.mxu0 0.0
      %3856 = vmatpush1.msra.mxu0 0.0
      %3857 = vmatprep.subr.mxu0 0.0
      %3858 = vmatpush1.msra.mxu0 0.0
      %3859 = vmatprep.subr.mxu0 0.0
      %3860 = vmatpush1.msra.mxu0 0.0
      %3861 = vmatprep.subr.mxu0 0.0
      %3862 = vmatpush1.msra.mxu0 0.0
      %3863 = vmatprep.subr.mxu0 0.0
      %3864 = vmatpush1.msra.mxu0 0.0
      %3865 = vmatprep.subr.mxu0 0.0
      %3866 = vmatpush1.msra.mxu0 0.0
      %3867 = vmatprep.subr.mxu0 0.0
      %3868 = vmatpush1.msra.mxu0 0.0
      %3869 = vmatprep.subr.mxu0 0.0
      %3870 = vmatpush1.msra.mxu0 0.0
      %3871 = vmatprep.subr.mxu0 0.0
      %3872 = vmatpush1.msra.mxu0 0.0
      %3873 = vmatprep.subr.mxu0 0.0
      %3874 = vmatpush1.msra.mxu0 0.0
      %3875 = vmatprep.mubr.f32.mxu0 0.0
      %3876 = vmatmul.mubr.f32.gmra.mrb[0].mxu0 %v3701
      %v3877 = vpop.f32.mrb[0].mxu0
      %v3878 = vadd.f32 0.0, %v3877
      %v3879 = vpop.f32.mrb[0].mxu0
      %3880 = vmatprep.mubr.f32.mxu0 0.0
      %3881 = vmatmul.mubr.f32.gmra.mrb[0].mxu0 %v3704
      %v3882 = vpop.f32.mrb[0].mxu0
      %v3883 = vadd.f32 0.0, %v3882
      %v3884 = vpop.f32.mrb[0].mxu0
      %3885 = vmatprep.mubr.f32.mxu0 0.0
      %3886 = vmatmul.mubr.f32.gmra.mrb[0].mxu0 %v3707
      %v3887 = vpop.f32.mrb[0].mxu0
      %v3888 = vadd.f32 0.0, %v3887
      %v3889 = vpop.f32.mrb[0].mxu0
      %3890 = vmatprep.mubr.f32.mxu0 0.0
      %3891 = vmatmul.mubr.f32.gmra.mrb[0].mxu0 %v3710
      %v3892 = vpop.f32.mrb[0].mxu0
      %v3893 = vadd.f32 0.0, %v3892
      %v3894 = vpop.f32.mrb[0].mxu0
      %3895 = vmatprep.mubr.f32.mxu0 0.0
      %3896 = vmatmul.mubr.f32.gmra.mrb[0].mxu0 %v3713
      %v3897 = vpop.f32.mrb[0].mxu0
      %v3898 = vadd.f32 0.0, %v3897
      %v3899 = vpop.f32.mrb[0].mxu0
      %3900 = vmatprep.mubr.f32.mxu0 0.0
      %3901 = vmatmul.mubr.f32.gmra.mrb[0].mxu0 %v3716
      %v3902 = vpop.f32.mrb[0].mxu0
      %v3903 = vadd.f32 0.0, %v3902
      %v3904 = vpop.f32.mrb[0].mxu0
      %3905 = vmatprep.mubr.f32.mxu0 0.0
      %3906 = vmatmul.mubr.f32.gmra.mrb[0].mxu0 %v3719
      %v3907 = vpop.f32.mrb[0].mxu0
      %v3908 = vadd.f32 0.0, %v3907
      %v3909 = vpop.f32.mrb[0].mxu0
      %3910 = vmatprep.mubr.f32.mxu0 0.0
      %3911 = vmatmul.mubr.f32.gmra.mrb[0].mxu0 %v3722
      %v3912 = vpop.f32.mrb[0].mxu0
      %v3913 = vadd.f32 0.0, %v3912
      %v3914 = vpop.f32.mrb[0].mxu0
      %3915 = vmatprep.mubr.f32.mxu0 0.0
      %3916 = vmatmul.mubr.f32.gmra.mrb[0].mxu0 %v3725
      %v3917 = vpop.f32.mrb[0].mxu0
      %v3918 = vadd.f32 0.0, %v3917
      %v3919 = vpop.f32.mrb[0].mxu0
      %3920 = vmatprep.mubr.f32.mxu0 0.0
      %3921 = vmatmul.mubr.f32.gmra.mrb[0].mxu0 %v3728
      %v3922 = vpop.f32.mrb[0].mxu0
      %v3923 = vadd.f32 0.0, %v3922
      %v3924 = vpop.f32.mrb[0].mxu0
      %3925 = vmatprep.mubr.f32.mxu0 0.0
      %3926 = vmatmul.mubr.f32.gmra.mrb[0].mxu0 %v3731
      %v3927 = vpop.f32.mrb[0].mxu0
      %v3928 = vadd.f32 0.0, %v3927
      %v3929 = vpop.f32.mrb[0].mxu0
      %3930 = vmatprep.mubr.f32.mxu0 0.0
      %3931 = vmatmul.mubr.f32.gmra.mrb[0].mxu0 %v3734
      %v3932 = vpop.f32.mrb[0].mxu0
      %v3933 = vadd.f32 0.0, %v3932
      %v3934 = vpop.f32.mrb[0].mxu0
      %3935 = vmatprep.mubr.f32.mxu0 0.0
      %3936 = vmatmul.mubr.f32.gmra.mrb[0].mxu0 %v3737
      %v3937 = vpop.f32.mrb[0].mxu0
      %v3938 = vadd.f32 0.0, %v3937
      %v3939 = vpop.f32.mrb[0].mxu0
      %3940 = vmatprep.mubr.f32.mxu0 0.0
      %3941 = vmatmul.mubr.f32.gmra.mrb[0].mxu0 %v3740
      %v3942 = vpop.f32.mrb[0].mxu0
      %v3943 = vadd.f32 0.0, %v3942
      %v3944 = vpop.f32.mrb[0].mxu0
      %3945 = vmatprep.mubr.f32.mxu0 0.0
      %3946 = vmatmul.mubr.f32.gmra.mrb[0].mxu0 %v3743
      %v3947 = vpop.f32.mrb[0].mxu0
      %v3948 = vadd.f32 0.0, %v3947
      %v3949 = vpop.f32.mrb[0].mxu0
      %3950 = vmatprep.mubr.f32.mxu0 0.0
      %3951 = vmatmul.mubr.f32.gmra.mrb[0].mxu0 %v3746
      %v3952 = vpop.f32.mrb[0].mxu0
      %v3953 = vadd.f32 0.0, %v3952
      %v3954 = vpop.f32.mrb[0].mxu0
      %3955 = vmatprep.mubr.f32.mxu0 0.0
      %3956 = vmatmul.mubr.f32.gmra.mrb[0].mxu0 %v3749
      %v3957 = vpop.f32.mrb[0].mxu0
      %v3958 = vadd.f32 0.0, %v3957
      %v3959 = vpop.f32.mrb[0].mxu0
      %3960 = vmatprep.mubr.f32.mxu0 0.0
      %3961 = vmatmul.mubr.f32.gmra.mrb[0].mxu0 %v3752
      %v3962 = vpop.f32.mrb[0].mxu0
      %v3963 = vadd.f32 0.0, %v3962
      %v3964 = vpop.f32.mrb[0].mxu0
      %3965 = vmatprep.mubr.f32.mxu0 0.0
      %3966 = vmatmul.mubr.f32.gmra.mrb[0].mxu0 %v3755
      %v3967 = vpop.f32.mrb[0].mxu0
      %v3968 = vadd.f32 0.0, %v3967
      %v3969 = vpop.f32.mrb[0].mxu0
      %3970 = vmatprep.mubr.f32.mxu0 0.0
      %3971 = vmatmul.mubr.f32.gmra.mrb[0].mxu0 %v3758
      %v3972 = vpop.f32.mrb[0].mxu0
      %v3973 = vadd.f32 0.0, %v3972
      %v3974 = vpop.f32.mrb[0].mxu0
      %3975 = vmatprep.mubr.f32.mxu0 0.0
      %3976 = vmatmul.mubr.f32.gmra.mrb[0].mxu0 %v3761
      %v3977 = vpop.f32.mrb[0].mxu0
      %v3978 = vadd.f32 0.0, %v3977
      %v3979 = vpop.f32.mrb[0].mxu0
      %3980 = vmatprep.mubr.f32.mxu0 0.0
      %3981 = vmatmul.mubr.f32.gmra.mrb[0].mxu0 %v3764
      %v3982 = vpop.f32.mrb[0].mxu0
      %v3983 = vadd.f32 0.0, %v3982
      %v3984 = vpop.f32.mrb[0].mxu0
      %3985 = vmatprep.mubr.f32.mxu0 0.0
      %3986 = vmatmul.mubr.f32.gmra.mrb[0].mxu0 %v3767
      %v3987 = vpop.f32.mrb[0].mxu0
      %v3988 = vadd.f32 0.0, %v3987
      %v3989 = vpop.f32.mrb[0].mxu0
      %3990 = vmatprep.mubr.f32.mxu0 0.0
      %3991 = vmatmul.mubr.f32.gmra.mrb[0].mxu0 %v3770
      %v3992 = vpop.f32.mrb[0].mxu0
      %v3993 = vadd.f32 0.0, %v3992
      %v3994 = vpop.f32.mrb[0].mxu0
      %3995 = vmatprep.mubr.f32.mxu0 0.0
      %3996 = vmatmul.mubr.f32.gmra.mrb[0].mxu0 %v3773
      %v3997 = vpop.f32.mrb[0].mxu0
      %v3998 = vadd.f32 0.0, %v3997
      %v3999 = vpop.f32.mrb[0].mxu0
      %4000 = vmatprep.mubr.f32.mxu0 0.0
      %4001 = vmatmul.mubr.f32.gmra.mrb[0].mxu0 %v3776
      %v4002 = vpop.f32.mrb[0].mxu0
      %v4003 = vadd.f32 0.0, %v4002
      %v4004 = vpop.f32.mrb[0].mxu0
      %4005 = vmatprep.mubr.f32.mxu0 0.0
      %4006 = vmatmul.mubr.f32.gmra.mrb[0].mxu0 %v3779
      %v4007 = vpop.f32.mrb[0].mxu0
      %v4008 = vadd.f32 0.0, %v4007
      %v4009 = vpop.f32.mrb[0].mxu0
      %4010 = vmatprep.mubr.f32.mxu0 0.0
      %4011 = vmatmul.mubr.f32.gmra.mrb[0].mxu0 %v3782
      %v4012 = vpop.f32.mrb[0].mxu0
      %v4013 = vadd.f32 0.0, %v4012
      %v4014 = vpop.f32.mrb[0].mxu0
      %4015 = vmatprep.mubr.f32.mxu0 0.0
      %4016 = vmatmul.mubr.f32.gmra.mrb[0].mxu0 %v3785
      %v4017 = vpop.f32.mrb[0].mxu0
      %v4018 = vadd.f32 0.0, %v4017
      %v4019 = vpop.f32.mrb[0].mxu0
      %4020 = vmatprep.mubr.f32.mxu0 0.0
      %4021 = vmatmul.mubr.f32.gmra.mrb[0].mxu0 %v3788
      %v4022 = vpop.f32.mrb[0].mxu0
      %v4023 = vadd.f32 0.0, %v4022
      %v4024 = vpop.f32.mrb[0].mxu0
      %4025 = vmatprep.mubr.f32.mxu0 0.0
      %4026 = vmatmul.mubr.f32.gmra.mrb[0].mxu0 %v3791
      %v4027 = vpop.f32.mrb[0].mxu0
      %v4028 = vadd.f32 0.0, %v4027
      %v4029 = vpop.f32.mrb[0].mxu0
      %4030 = vmatprep.mubr.f32.mxu0 0.0
      %4031 = vmatmul.mubr.f32.gmra.mrb[0].mxu0 %v3794
      %v4032 = vpop.f32.mrb[0].mxu0
      %v4033 = vadd.f32 0.0, %v4032
      %v4034 = vpop.f32.mrb[0].mxu0
      %4035 = vmatprep.mubr.f32.mxu0 0.0
      %4036 = vmatmul.mubr.f32.gmra.mrb[0].mxu0 %v3797
      %v4037 = vpop.f32.mrb[0].mxu0
      %v4038 = vadd.f32 0.0, %v4037
      %v4039 = vpop.f32.mrb[0].mxu0
      %4040 = vmatprep.mubr.f32.mxu0 0.0
      %4041 = vmatmul.mubr.f32.gmra.mrb[0].mxu0 %v3800
      %v4042 = vpop.f32.mrb[0].mxu0
      %v4043 = vadd.f32 0.0, %v4042
      %v4044 = vpop.f32.mrb[0].mxu0
      %4045 = vmatprep.mubr.f32.mxu0 0.0
      %4046 = vmatmul.mubr.f32.gmra.mrb[0].mxu0 %v3803
      %v4047 = vpop.f32.mrb[0].mxu0
      %v4048 = vadd.f32 0.0, %v4047
      %v4049 = vpop.f32.mrb[0].mxu0
      %4050 = vmatprep.mubr.f32.mxu0 0.0
      %4051 = vmatmul.mubr.f32.gmra.mrb[0].mxu0 %v3806
      %v4052 = vpop.f32.mrb[0].mxu0
      %v4053 = vadd.f32 0.0, %v4052
      %v4054 = vpop.f32.mrb[0].mxu0
      %4055 = vdwg.mxu0
      %v4056 = vadd.f32 %v3626, %v3878
      %v4057 = vadd.f32 %v3627, %v3883
      %v4058 = vadd.f32 %v3628, %v3888
      %v4059 = vadd.f32 %v3629, %v3893
      %v4060 = vadd.f32 %v3630, %v3898
      %v4061 = vadd.f32 %v3631, %v3903
      %v4062 = vadd.f32 %v3632, %v3908
      %v4063 = vadd.f32 %v3633, %v3913
      %v4064 = vadd.f32 %v3634, %v3918
      %v4065 = vadd.f32 %v3635, %v3923
      %v4066 = vadd.f32 %v3636, %v3928
      %v4067 = vadd.f32 %v3637, %v3933
      %v4068 = vadd.f32 %v3638, %v3938
      %v4069 = vadd.f32 %v3639, %v3943
      %v4070 = vadd.f32 %v3640, %v3948
      %v4071 = vadd.f32 %v3641, %v3953
      %v4072 = vadd.f32 %v3642, %v3958
      %v4073 = vadd.f32 %v3643, %v3963
      %v4074 = vadd.f32 %v3644, %v3968
      %v4075 = vadd.f32 %v3645, %v3973
      %v4076 = vadd.f32 %v3646, %v3978
      %v4077 = vadd.f32 %v3647, %v3983
      %v4078 = vadd.f32 %v3648, %v3988
      %v4079 = vadd.f32 %v3649, %v3993
      %v4080 = vadd.f32 %v3650, %v3998
      %v4081 = vadd.f32 %v3651, %v4003
      %v4082 = vadd.f32 %v3652, %v4008
      %v4083 = vadd.f32 %v3653, %v4013
      %v4084 = vadd.f32 %v3654, %v4018
      %v4085 = vadd.f32 %v3655, %v4023
      %v4086 = vadd.f32 %v3656, %v4028
      %v4087 = vadd.f32 %v3657, %v4033
      %v4088 = vadd.f32 %v3658, %v4038
      %v4089 = vadd.f32 %v3659, %v4043
      %v4090 = vadd.f32 %v3660, %v4048
      %v4091 = vadd.f32 %v3661, %v4053
      %v4092 = vld [vmem:[%s2] sm:$0x1]
      %v4093 = vlaneseq
      %v4094 = vshrl.u32 %v4093, 7
      %v4095 = vsub.s32 0, %v4094
      %v4096 = vrot.slane %v4092, %v4095
      %v4097 = vadd.f32 %v4056, %v4096
      %v4098 = vadd.f32 %v4057, %v4096
      %v4099 = vadd.f32 %v4058, %v4096
      %v4100 = vadd.f32 %v4059, %v4096
      %v4101 = vadd.f32 %v4060, %v4096
      %v4102 = vadd.f32 %v4061, %v4096
      %v4103 = vadd.f32 %v4062, %v4096
      %v4104 = vadd.f32 %v4063, %v4096
      %v4105 = vadd.f32 %v4064, %v4096
      %v4106 = vadd.f32 %v4065, %v4096
      %v4107 = vadd.f32 %v4066, %v4096
      %v4108 = vadd.f32 %v4067, %v4096
      %v4109 = vadd.f32 %v4068, %v4096
      %v4110 = vadd.f32 %v4069, %v4096
      %v4111 = vadd.f32 %v4070, %v4096
      %v4112 = vadd.f32 %v4071, %v4096
      %v4113 = vadd.f32 %v4072, %v4096
      %v4114 = vadd.f32 %v4073, %v4096
      %v4115 = vadd.f32 %v4074, %v4096
      %v4116 = vadd.f32 %v4075, %v4096
      %v4117 = vadd.f32 %v4076, %v4096
      %v4118 = vadd.f32 %v4077, %v4096
      %v4119 = vadd.f32 %v4078, %v4096
      %v4120 = vadd.f32 %v4079, %v4096
      %v4121 = vadd.f32 %v4080, %v4096
      %v4122 = vadd.f32 %v4081, %v4096
      %v4123 = vadd.f32 %v4082, %v4096
      %v4124 = vadd.f32 %v4083, %v4096
      %v4125 = vadd.f32 %v4084, %v4096
      %v4126 = vadd.f32 %v4085, %v4096
      %v4127 = vadd.f32 %v4086, %v4096
      %v4128 = vadd.f32 %v4087, %v4096
      %v4129 = vadd.f32 %v4088, %v4096
      %v4130 = vadd.f32 %v4089, %v4096
      %v4131 = vadd.f32 %v4090, %v4096
      %v4132 = vadd.f32 %v4091, %v4096
      %v4133 = vld [vmem:[%s3] sm:$0xff]
      %v4134 = vld [vmem:[%s3 + $0x8] sm:$0xff]
      %v4135 = vld [vmem:[%s3 + $0x10] sm:$0xff]
      %v4136 = vld [vmem:[%s3 + $0x18] sm:$0xff]
      %v4137 = vld [vmem:[%s3 + $0x20] sm:$0xff]
      %v4138 = vld [vmem:[%s3 + $0x28] sm:$0xff]
      %v4139 = vld [vmem:[%s3 + $0x30] sm:$0xff]
      %v4140 = vld [vmem:[%s3 + $0x38] sm:$0xff]
      %v4141 = vld [vmem:[%s3 + $0x40] sm:$0xff]
      %v4142 = vld [vmem:[%s3 + $0x48] sm:$0xff]
      %v4143 = vld [vmem:[%s3 + $0x50] sm:$0xff]
      %v4144 = vld [vmem:[%s3 + $0x58] sm:$0xff]
      %v4145 = vld [vmem:[%s3 + $0x60] sm:$0xff]
      %v4146 = vld [vmem:[%s3 + $0x68] sm:$0xff]
      %v4147 = vld [vmem:[%s3 + $0x70] sm:$0xff]
      %v4148 = vld [vmem:[%s3 + $0x78] sm:$0xff]
      %v4149 = vld [vmem:[%s3 + $0x80] sm:$0xff]
      %v4150 = vld [vmem:[%s3 + $0x88] sm:$0xff]
      %v4151 = vld [vmem:[%s3 + $0x90] sm:$0xff]
      %v4152 = vld [vmem:[%s3 + $0x98] sm:$0xff]
      %v4153 = vld [vmem:[%s3 + $0xa0] sm:$0xff]
      %v4154 = vld [vmem:[%s3 + $0xa8] sm:$0xff]
      %v4155 = vld [vmem:[%s3 + $0xb0] sm:$0xff]
      %v4156 = vld [vmem:[%s3 + $0xb8] sm:$0xff]
      %v4157 = vld [vmem:[%s3 + $0xc0] sm:$0xff]
      %v4158 = vld [vmem:[%s3 + $0xc8] sm:$0xff]
      %v4159 = vld [vmem:[%s3 + $0xd0] sm:$0xff]
      %v4160 = vld [vmem:[%s3 + $0xd8] sm:$0xff]
      %v4161 = vld [vmem:[%s3 + $0xe0] sm:$0xff]
      %v4162 = vld [vmem:[%s3 + $0xe8] sm:$0xff]
      %v4163 = vld [vmem:[%s3 + $0xf0] sm:$0xff]
      %v4164 = vld [vmem:[%s3 + $0xf8] sm:$0xff]
      %v4165 = vld [vmem:[%s3 + $0x100] sm:$0xff]
      %v4166 = vld [vmem:[%s3 + $0x108] sm:$0xff]
      %v4167 = vld [vmem:[%s3 + $0x110] sm:$0xff]
      %v4168 = vld [vmem:[%s3 + $0x118] sm:$0xff]
      %4170 = vset.pattern.permute.xlu0 0
      %4171 = vperm.xlu0 %4170, %v4133
      %v4172 = vpop.permute.xlu0 %4171
      %4175 = vset.pattern.permute.xlu0 0
      %4176 = vperm.xlu0 %4175, %v4134
      %v4177 = vpop.permute.xlu0 %4176
      %4180 = vset.pattern.permute.xlu0 0
      %4181 = vperm.xlu0 %4180, %v4135
      %v4182 = vpop.permute.xlu0 %4181
      %4185 = vset.pattern.permute.xlu0 0
      %4186 = vperm.xlu0 %4185, %v4136
      %v4187 = vpop.permute.xlu0 %4186
      %4190 = vset.pattern.permute.xlu0 0
      %4191 = vperm.xlu0 %4190, %v4137
      %v4192 = vpop.permute.xlu0 %4191
      %4195 = vset.pattern.permute.xlu0 0
      %4196 = vperm.xlu0 %4195, %v4138
      %v4197 = vpop.permute.xlu0 %4196
      %4200 = vset.pattern.permute.xlu0 0
      %4201 = vperm.xlu0 %4200, %v4139
      %v4202 = vpop.permute.xlu0 %4201
      %4205 = vset.pattern.permute.xlu0 0
      %4206 = vperm.xlu0 %4205, %v4140
      %v4207 = vpop.permute.xlu0 %4206
      %4210 = vset.pattern.permute.xlu0 0
      %4211 = vperm.xlu0 %4210, %v4141
      %v4212 = vpop.permute.xlu0 %4211
      %4215 = vset.pattern.permute.xlu0 0
      %4216 = vperm.xlu0 %4215, %v4142
      %v4217 = vpop.permute.xlu0 %4216
      %4220 = vset.pattern.permute.xlu0 0
      %4221 = vperm.xlu0 %4220, %v4143
      %v4222 = vpop.permute.xlu0 %4221
      %4225 = vset.pattern.permute.xlu0 0
      %4226 = vperm.xlu0 %4225, %v4144
      %v4227 = vpop.permute.xlu0 %4226
      %4230 = vset.pattern.permute.xlu0 0
      %4231 = vperm.xlu0 %4230, %v4145
      %v4232 = vpop.permute.xlu0 %4231
      %4235 = vset.pattern.permute.xlu0 0
      %4236 = vperm.xlu0 %4235, %v4146
      %v4237 = vpop.permute.xlu0 %4236
      %4240 = vset.pattern.permute.xlu0 0
      %4241 = vperm.xlu0 %4240, %v4147
      %v4242 = vpop.permute.xlu0 %4241
      %4245 = vset.pattern.permute.xlu0 0
      %4246 = vperm.xlu0 %4245, %v4148
      %v4247 = vpop.permute.xlu0 %4246
      %4250 = vset.pattern.permute.xlu0 0
      %4251 = vperm.xlu0 %4250, %v4149
      %v4252 = vpop.permute.xlu0 %4251
      %4255 = vset.pattern.permute.xlu0 0
      %4256 = vperm.xlu0 %4255, %v4150
      %v4257 = vpop.permute.xlu0 %4256
      %4260 = vset.pattern.permute.xlu0 0
      %4261 = vperm.xlu0 %4260, %v4151
      %v4262 = vpop.permute.xlu0 %4261
      %4265 = vset.pattern.permute.xlu0 0
      %4266 = vperm.xlu0 %4265, %v4152
      %v4267 = vpop.permute.xlu0 %4266
      %4270 = vset.pattern.permute.xlu0 0
      %4271 = vperm.xlu0 %4270, %v4153
      %v4272 = vpop.permute.xlu0 %4271
      %4275 = vset.pattern.permute.xlu0 0
      %4276 = vperm.xlu0 %4275, %v4154
      %v4277 = vpop.permute.xlu0 %4276
      %4280 = vset.pattern.permute.xlu0 0
      %4281 = vperm.xlu0 %4280, %v4155
      %v4282 = vpop.permute.xlu0 %4281
      %4285 = vset.pattern.permute.xlu0 0
      %4286 = vperm.xlu0 %4285, %v4156
      %v4287 = vpop.permute.xlu0 %4286
      %4290 = vset.pattern.permute.xlu0 0
      %4291 = vperm.xlu0 %4290, %v4157
      %v4292 = vpop.permute.xlu0 %4291
      %4295 = vset.pattern.permute.xlu0 0
      %4296 = vperm.xlu0 %4295, %v4158
      %v4297 = vpop.permute.xlu0 %4296
      %4300 = vset.pattern.permute.xlu0 0
      %4301 = vperm.xlu0 %4300, %v4159
      %v4302 = vpop.permute.xlu0 %4301
      %4305 = vset.pattern.permute.xlu0 0
      %4306 = vperm.xlu0 %4305, %v4160
      %v4307 = vpop.permute.xlu0 %4306
      %4310 = vset.pattern.permute.xlu0 0
      %4311 = vperm.xlu0 %4310, %v4161
      %v4312 = vpop.permute.xlu0 %4311
      %4315 = vset.pattern.permute.xlu0 0
      %4316 = vperm.xlu0 %4315, %v4162
      %v4317 = vpop.permute.xlu0 %4316
      %4320 = vset.pattern.permute.xlu0 0
      %4321 = vperm.xlu0 %4320, %v4163
      %v4322 = vpop.permute.xlu0 %4321
      %4325 = vset.pattern.permute.xlu0 0
      %4326 = vperm.xlu0 %4325, %v4164
      %v4327 = vpop.permute.xlu0 %4326
      %4330 = vset.pattern.permute.xlu0 0
      %4331 = vperm.xlu0 %4330, %v4165
      %v4332 = vpop.permute.xlu0 %4331
      %4335 = vset.pattern.permute.xlu0 0
      %4336 = vperm.xlu0 %4335, %v4166
      %v4337 = vpop.permute.xlu0 %4336
      %4340 = vset.pattern.permute.xlu0 0
      %4341 = vperm.xlu0 %4340, %v4167
      %v4342 = vpop.permute.xlu0 %4341
      %4345 = vset.pattern.permute.xlu0 0
      %4346 = vperm.xlu0 %4345, %v4168
      %v4347 = vpop.permute.xlu0 %4346
      %v4349 = vmul.f32 %v4097, %v4172
      %v4350 = vmul.f32 %v4098, %v4177
      %v4351 = vmul.f32 %v4099, %v4182
      %v4352 = vmul.f32 %v4100, %v4187
      %v4353 = vmul.f32 %v4101, %v4192
      %v4354 = vmul.f32 %v4102, %v4197
      %v4355 = vmul.f32 %v4103, %v4202
      %v4356 = vmul.f32 %v4104, %v4207
      %v4357 = vmul.f32 %v4105, %v4212
      %v4358 = vmul.f32 %v4106, %v4217
      %v4359 = vmul.f32 %v4107, %v4222
      %v4360 = vmul.f32 %v4108, %v4227
      %v4361 = vmul.f32 %v4109, %v4232
      %v4362 = vmul.f32 %v4110, %v4237
      %v4363 = vmul.f32 %v4111, %v4242
      %v4364 = vmul.f32 %v4112, %v4247
      %v4365 = vmul.f32 %v4113, %v4252
      %v4366 = vmul.f32 %v4114, %v4257
      %v4367 = vmul.f32 %v4115, %v4262
      %v4368 = vmul.f32 %v4116, %v4267
      %v4369 = vmul.f32 %v4117, %v4272
      %v4370 = vmul.f32 %v4118, %v4277
      %v4371 = vmul.f32 %v4119, %v4282
      %v4372 = vmul.f32 %v4120, %v4287
      %v4373 = vmul.f32 %v4121, %v4292
      %v4374 = vmul.f32 %v4122, %v4297
      %v4375 = vmul.f32 %v4123, %v4302
      %v4376 = vmul.f32 %v4124, %v4307
      %v4377 = vmul.f32 %v4125, %v4312
      %v4378 = vmul.f32 %v4126, %v4317
      %v4379 = vmul.f32 %v4127, %v4322
      %v4380 = vmul.f32 %v4128, %v4327
      %v4381 = vmul.f32 %v4129, %v4332
      %v4382 = vmul.f32 %v4130, %v4337
      %v4383 = vmul.f32 %v4131, %v4342
      %v4384 = vmul.f32 %v4132, %v4347
      %vm4385 = vcmask 130048
      %v4386 = vsel %vm4385, %v4349, 0.0
      %v4387 = vsel %vm4385, %v4350, 0.0
      %v4388 = vadd.f32 %v4386, %v4387
      %v4389 = vsel %vm4385, %v4351, 0.0
      %v4390 = vadd.f32 %v4388, %v4389
      %v4391 = vsel %vm4385, %v4352, 0.0
      %v4392 = vadd.f32 %v4390, %v4391
      %v4393 = vsel %vm4385, %v4353, 0.0
      %v4394 = vadd.f32 %v4392, %v4393
      %v4395 = vsel %vm4385, %v4354, 0.0
      %v4396 = vadd.f32 %v4394, %v4395
      %v4397 = vsel %vm4385, %v4355, 0.0
      %v4398 = vadd.f32 %v4396, %v4397
      %v4399 = vsel %vm4385, %v4356, 0.0
      %v4400 = vadd.f32 %v4398, %v4399
      %v4401 = vsel %vm4385, %v4357, 0.0
      %v4402 = vadd.f32 %v4400, %v4401
      %v4403 = vsel %vm4385, %v4358, 0.0
      %v4404 = vadd.f32 %v4402, %v4403
      %v4405 = vsel %vm4385, %v4359, 0.0
      %v4406 = vadd.f32 %v4404, %v4405
      %v4407 = vsel %vm4385, %v4360, 0.0
      %v4408 = vadd.f32 %v4406, %v4407
      %v4409 = vsel %vm4385, %v4361, 0.0
      %v4410 = vadd.f32 %v4408, %v4409
      %v4411 = vsel %vm4385, %v4362, 0.0
      %v4412 = vadd.f32 %v4410, %v4411
      %v4413 = vsel %vm4385, %v4363, 0.0
      %v4414 = vadd.f32 %v4412, %v4413
      %v4415 = vsel %vm4385, %v4364, 0.0
      %v4416 = vadd.f32 %v4414, %v4415
      %v4417 = vsel %vm4385, %v4365, 0.0
      %v4418 = vadd.f32 %v4416, %v4417
      %v4419 = vsel %vm4385, %v4366, 0.0
      %v4420 = vadd.f32 %v4418, %v4419
      %v4421 = vsel %vm4385, %v4367, 0.0
      %v4422 = vadd.f32 %v4420, %v4421
      %v4423 = vsel %vm4385, %v4368, 0.0
      %v4424 = vadd.f32 %v4422, %v4423
      %v4425 = vsel %vm4385, %v4369, 0.0
      %v4426 = vadd.f32 %v4424, %v4425
      %v4427 = vsel %vm4385, %v4370, 0.0
      %v4428 = vadd.f32 %v4426, %v4427
      %v4429 = vsel %vm4385, %v4371, 0.0
      %v4430 = vadd.f32 %v4428, %v4429
      %v4431 = vsel %vm4385, %v4372, 0.0
      %v4432 = vadd.f32 %v4430, %v4431
      %v4433 = vsel %vm4385, %v4373, 0.0
      %v4434 = vadd.f32 %v4432, %v4433
      %v4435 = vsel %vm4385, %v4374, 0.0
      %v4436 = vadd.f32 %v4434, %v4435
      %v4437 = vsel %vm4385, %v4375, 0.0
      %v4438 = vadd.f32 %v4436, %v4437
      %v4439 = vsel %vm4385, %v4376, 0.0
      %v4440 = vadd.f32 %v4438, %v4439
      %v4441 = vsel %vm4385, %v4377, 0.0
      %v4442 = vadd.f32 %v4440, %v4441
      %v4443 = vsel %vm4385, %v4378, 0.0
      %v4444 = vadd.f32 %v4442, %v4443
      %v4445 = vsel %vm4385, %v4379, 0.0
      %v4446 = vadd.f32 %v4444, %v4445
      %v4447 = vsel %vm4385, %v4380, 0.0
      %v4448 = vadd.f32 %v4446, %v4447
      %v4449 = vsel %vm4385, %v4381, 0.0
      %v4450 = vadd.f32 %v4448, %v4449
      %v4451 = vsel %vm4385, %v4382, 0.0
      %v4452 = vadd.f32 %v4450, %v4451
      %v4453 = vsel %vm4385, %v4383, 0.0
      %v4454 = vadd.f32 %v4452, %v4453
      %v4455 = vsel %vm4385, %v4384, 0.0
      %v4456 = vadd.f32 %v4454, %v4455
      %v4457 = vrot.slane %v4456, 4
      %v4458 = vadd.f32 %v4456, %v4457
      %v4459 = vrot.slane %v4458, 2
      %v4460 = vadd.f32 %v4458, %v4459
      %v4461 = vrot.slane %v4460, 1
      %v4462 = vadd.f32 %v4460, %v4461
      %v4463 = vmul.f32 %v4349, %v4097
      %v4464 = vmul.f32 %v4350, %v4098
      %v4465 = vmul.f32 %v4351, %v4099
      %v4466 = vmul.f32 %v4352, %v4100
      %v4467 = vmul.f32 %v4353, %v4101
      %v4468 = vmul.f32 %v4354, %v4102
      %v4469 = vmul.f32 %v4355, %v4103
      %v4470 = vmul.f32 %v4356, %v4104
      %v4471 = vmul.f32 %v4357, %v4105
      %v4472 = vmul.f32 %v4358, %v4106
      %v4473 = vmul.f32 %v4359, %v4107
      %v4474 = vmul.f32 %v4360, %v4108
      %v4475 = vmul.f32 %v4361, %v4109
      %v4476 = vmul.f32 %v4362, %v4110
      %v4477 = vmul.f32 %v4363, %v4111
      %v4478 = vmul.f32 %v4364, %v4112
      %v4479 = vmul.f32 %v4365, %v4113
      %v4480 = vmul.f32 %v4366, %v4114
      %v4481 = vmul.f32 %v4367, %v4115
      %v4482 = vmul.f32 %v4368, %v4116
      %v4483 = vmul.f32 %v4369, %v4117
      %v4484 = vmul.f32 %v4370, %v4118
      %v4485 = vmul.f32 %v4371, %v4119
      %v4486 = vmul.f32 %v4372, %v4120
      %v4487 = vmul.f32 %v4373, %v4121
      %v4488 = vmul.f32 %v4374, %v4122
      %v4489 = vmul.f32 %v4375, %v4123
      %v4490 = vmul.f32 %v4376, %v4124
      %v4491 = vmul.f32 %v4377, %v4125
      %v4492 = vmul.f32 %v4378, %v4126
      %v4493 = vmul.f32 %v4379, %v4127
      %v4494 = vmul.f32 %v4380, %v4128
      %v4495 = vmul.f32 %v4381, %v4129
      %v4496 = vmul.f32 %v4382, %v4130
      %v4497 = vmul.f32 %v4383, %v4131
      %v4498 = vmul.f32 %v4384, %v4132
      %v4499 = vsel %vm4385, %v4463, 0.0
      %v4500 = vsel %vm4385, %v4464, 0.0
      %v4501 = vadd.f32 %v4499, %v4500
      %v4502 = vsel %vm4385, %v4465, 0.0
      %v4503 = vadd.f32 %v4501, %v4502
      %v4504 = vsel %vm4385, %v4466, 0.0
      %v4505 = vadd.f32 %v4503, %v4504
      %v4506 = vsel %vm4385, %v4467, 0.0
      %v4507 = vadd.f32 %v4505, %v4506
      %v4508 = vsel %vm4385, %v4468, 0.0
      %v4509 = vadd.f32 %v4507, %v4508
      %v4510 = vsel %vm4385, %v4469, 0.0
      %v4511 = vadd.f32 %v4509, %v4510
      %v4512 = vsel %vm4385, %v4470, 0.0
      %v4513 = vadd.f32 %v4511, %v4512
      %v4514 = vsel %vm4385, %v4471, 0.0
      %v4515 = vadd.f32 %v4513, %v4514
      %v4516 = vsel %vm4385, %v4472, 0.0
      %v4517 = vadd.f32 %v4515, %v4516
      %v4518 = vsel %vm4385, %v4473, 0.0
      %v4519 = vadd.f32 %v4517, %v4518
      %v4520 = vsel %vm4385, %v4474, 0.0
      %v4521 = vadd.f32 %v4519, %v4520
      %v4522 = vsel %vm4385, %v4475, 0.0
      %v4523 = vadd.f32 %v4521, %v4522
      %v4524 = vsel %vm4385, %v4476, 0.0
      %v4525 = vadd.f32 %v4523, %v4524
      %v4526 = vsel %vm4385, %v4477, 0.0
      %v4527 = vadd.f32 %v4525, %v4526
      %v4528 = vsel %vm4385, %v4478, 0.0
      %v4529 = vadd.f32 %v4527, %v4528
      %v4530 = vsel %vm4385, %v4479, 0.0
      %v4531 = vadd.f32 %v4529, %v4530
      %v4532 = vsel %vm4385, %v4480, 0.0
      %v4533 = vadd.f32 %v4531, %v4532
      %v4534 = vsel %vm4385, %v4481, 0.0
      %v4535 = vadd.f32 %v4533, %v4534
      %v4536 = vsel %vm4385, %v4482, 0.0
      %v4537 = vadd.f32 %v4535, %v4536
      %v4538 = vsel %vm4385, %v4483, 0.0
      %v4539 = vadd.f32 %v4537, %v4538
      %v4540 = vsel %vm4385, %v4484, 0.0
      %v4541 = vadd.f32 %v4539, %v4540
      %v4542 = vsel %vm4385, %v4485, 0.0
      %v4543 = vadd.f32 %v4541, %v4542
      %v4544 = vsel %vm4385, %v4486, 0.0
      %v4545 = vadd.f32 %v4543, %v4544
      %v4546 = vsel %vm4385, %v4487, 0.0
      %v4547 = vadd.f32 %v4545, %v4546
      %v4548 = vsel %vm4385, %v4488, 0.0
      %v4549 = vadd.f32 %v4547, %v4548
      %v4550 = vsel %vm4385, %v4489, 0.0
      %v4551 = vadd.f32 %v4549, %v4550
      %v4552 = vsel %vm4385, %v4490, 0.0
      %v4553 = vadd.f32 %v4551, %v4552
      %v4554 = vsel %vm4385, %v4491, 0.0
      %v4555 = vadd.f32 %v4553, %v4554
      %v4556 = vsel %vm4385, %v4492, 0.0
      %v4557 = vadd.f32 %v4555, %v4556
      %v4558 = vsel %vm4385, %v4493, 0.0
      %v4559 = vadd.f32 %v4557, %v4558
      %v4560 = vsel %vm4385, %v4494, 0.0
      %v4561 = vadd.f32 %v4559, %v4560
      %v4562 = vsel %vm4385, %v4495, 0.0
      %v4563 = vadd.f32 %v4561, %v4562
      %v4564 = vsel %vm4385, %v4496, 0.0
      %v4565 = vadd.f32 %v4563, %v4564
      %v4566 = vsel %vm4385, %v4497, 0.0
      %v4567 = vadd.f32 %v4565, %v4566
      %v4568 = vsel %vm4385, %v4498, 0.0
      %v4569 = vadd.f32 %v4567, %v4568
      %v4570 = vrot.slane %v4569, 4
      %v4571 = vadd.f32 %v4569, %v4570
      %v4572 = vrot.slane %v4571, 2
      %v4573 = vadd.f32 %v4571, %v4572
      %v4574 = vrot.slane %v4573, 1
      %v4575 = vadd.f32 %v4573, %v4574
      %v4576 = vld [vmem:[%s4] sm:$0xff]
      %v4577 = vld [vmem:[%s4 + $0x8] sm:$0xff]
      %v4579 = vsel %vm4385, %v4462, 0
      %4581 = vmatprep.subr.mxu0 0.0
      %4582 = vmatpush1.msra.mxu0 %v4576
      %4583 = vmatprep.subr.mxu0 0.0
      %4584 = vmatpush1.msra.mxu0 %v4577
      %4585 = vmatprep.subr.mxu0 0.0
      %4586 = vmatpush1.msra.mxu0 0.0
      %4587 = vmatprep.subr.mxu0 0.0
      %4588 = vmatpush1.msra.mxu0 0.0
      %4589 = vmatprep.subr.mxu0 0.0
      %4590 = vmatpush1.msra.mxu0 0.0
      %4591 = vmatprep.subr.mxu0 0.0
      %4592 = vmatpush1.msra.mxu0 0.0
      %4593 = vmatprep.subr.mxu0 0.0
      %4594 = vmatpush1.msra.mxu0 0.0
      %4595 = vmatprep.subr.mxu0 0.0
      %4596 = vmatpush1.msra.mxu0 0.0
      %4597 = vmatprep.subr.mxu0 0.0
      %4598 = vmatpush1.msra.mxu0 0.0
      %4599 = vmatprep.subr.mxu0 0.0
      %4600 = vmatpush1.msra.mxu0 0.0
      %4601 = vmatprep.subr.mxu0 0.0
      %4602 = vmatpush1.msra.mxu0 0.0
      %4603 = vmatprep.subr.mxu0 0.0
      %4604 = vmatpush1.msra.mxu0 0.0
      %4605 = vmatprep.subr.mxu0 0.0
      %4606 = vmatpush1.msra.mxu0 0.0
      %4607 = vmatprep.subr.mxu0 0.0
      %4608 = vmatpush1.msra.mxu0 0.0
      %4609 = vmatprep.subr.mxu0 0.0
      %4610 = vmatpush1.msra.mxu0 0.0
      %4611 = vmatprep.subr.mxu0 0.0
      %4612 = vmatpush1.msra.mxu0 0.0
      %4613 = vmatprep.subr.mxu0 0.0
      %4614 = vmatpush1.msra.mxu0 0.0
      %4615 = vmatprep.subr.mxu0 0.0
      %4616 = vmatpush1.msra.mxu0 0.0
      %4617 = vmatprep.subr.mxu0 0.0
      %4618 = vmatpush1.msra.mxu0 0.0
      %4619 = vmatprep.subr.mxu0 0.0
      %4620 = vmatpush1.msra.mxu0 0.0
      %4621 = vmatprep.subr.mxu0 0.0
      %4622 = vmatpush1.msra.mxu0 0.0
      %4623 = vmatprep.subr.mxu0 0.0
      %4624 = vmatpush1.msra.mxu0 0.0
      %4625 = vmatprep.subr.mxu0 0.0
      %4626 = vmatpush1.msra.mxu0 0.0
      %4627 = vmatprep.subr.mxu0 0.0
      %4628 = vmatpush1.msra.mxu0 0.0
      %4629 = vmatprep.subr.mxu0 0.0
      %4630 = vmatpush1.msra.mxu0 0.0
      %4631 = vmatprep.subr.mxu0 0.0
      %4632 = vmatpush1.msra.mxu0 0.0
      %4633 = vmatprep.subr.mxu0 0.0
      %4634 = vmatpush1.msra.mxu0 0.0
      %4635 = vmatprep.subr.mxu0 0.0
      %4636 = vmatpush1.msra.mxu0 0.0
      %4637 = vmatprep.subr.mxu0 0.0
      %4638 = vmatpush1.msra.mxu0 0.0
      %4639 = vmatprep.subr.mxu0 0.0
      %4640 = vmatpush1.msra.mxu0 0.0
      %4641 = vmatprep.subr.mxu0 0.0
      %4642 = vmatpush1.msra.mxu0 0.0
      %4643 = vmatprep.subr.mxu0 0.0
      %4644 = vmatpush1.msra.mxu0 0.0
      %4645 = vmatprep.mubr.f32.mxu0 0.0
      %4646 = vmatmul.mubr.f32.gmra.mrb[0].mxu0 %v4579
      %v4647 = vpop.f32.mrb[0].mxu0
      %v4648 = vadd.f32 0.0, %v4647
      %v4649 = vpop.f32.mrb[0].mxu0
      %4650 = vdwg.mxu0
      %v4652 = vsel %vm4385, %v4575, 0
      %4654 = vmatprep.subr.mxu0 0.0
      %4655 = vmatpush1.msra.mxu0 %v4576
      %4656 = vmatprep.subr.mxu0 0.0
      %4657 = vmatpush1.msra.mxu0 %v4577
      %4658 = vmatprep.subr.mxu0 0.0
      %4659 = vmatpush1.msra.mxu0 0.0
      %4660 = vmatprep.subr.mxu0 0.0
      %4661 = vmatpush1.msra.mxu0 0.0
      %4662 = vmatprep.subr.mxu0 0.0
      %4663 = vmatpush1.msra.mxu0 0.0
      %4664 = vmatprep.subr.mxu0 0.0
      %4665 = vmatpush1.msra.mxu0 0.0
      %4666 = vmatprep.subr.mxu0 0.0
      %4667 = vmatpush1.msra.mxu0 0.0
      %4668 = vmatprep.subr.mxu0 0.0
      %4669 = vmatpush1.msra.mxu0 0.0
      %4670 = vmatprep.subr.mxu0 0.0
      %4671 = vmatpush1.msra.mxu0 0.0
      %4672 = vmatprep.subr.mxu0 0.0
      %4673 = vmatpush1.msra.mxu0 0.0
      %4674 = vmatprep.subr.mxu0 0.0
      %4675 = vmatpush1.msra.mxu0 0.0
      %4676 = vmatprep.subr.mxu0 0.0
      %4677 = vmatpush1.msra.mxu0 0.0
      %4678 = vmatprep.subr.mxu0 0.0
      %4679 = vmatpush1.msra.mxu0 0.0
      %4680 = vmatprep.subr.mxu0 0.0
      %4681 = vmatpush1.msra.mxu0 0.0
      %4682 = vmatprep.subr.mxu0 0.0
      %4683 = vmatpush1.msra.mxu0 0.0
      %4684 = vmatprep.subr.mxu0 0.0
      %4685 = vmatpush1.msra.mxu0 0.0
      %4686 = vmatprep.subr.mxu0 0.0
      %4687 = vmatpush1.msra.mxu0 0.0
      %4688 = vmatprep.subr.mxu0 0.0
      %4689 = vmatpush1.msra.mxu0 0.0
      %4690 = vmatprep.subr.mxu0 0.0
      %4691 = vmatpush1.msra.mxu0 0.0
      %4692 = vmatprep.subr.mxu0 0.0
      %4693 = vmatpush1.msra.mxu0 0.0
      %4694 = vmatprep.subr.mxu0 0.0
      %4695 = vmatpush1.msra.mxu0 0.0
      %4696 = vmatprep.subr.mxu0 0.0
      %4697 = vmatpush1.msra.mxu0 0.0
      %4698 = vmatprep.subr.mxu0 0.0
      %4699 = vmatpush1.msra.mxu0 0.0
      %4700 = vmatprep.subr.mxu0 0.0
      %4701 = vmatpush1.msra.mxu0 0.0
      %4702 = vmatprep.subr.mxu0 0.0
      %4703 = vmatpush1.msra.mxu0 0.0
      %4704 = vmatprep.subr.mxu0 0.0
      %4705 = vmatpush1.msra.mxu0 0.0
      %4706 = vmatprep.subr.mxu0 0.0
      %4707 = vmatpush1.msra.mxu0 0.0
      %4708 = vmatprep.subr.mxu0 0.0
      %4709 = vmatpush1.msra.mxu0 0.0
      %4710 = vmatprep.subr.mxu0 0.0
      %4711 = vmatpush1.msra.mxu0 0.0
      %4712 = vmatprep.subr.mxu0 0.0
      %4713 = vmatpush1.msra.mxu0 0.0
      %4714 = vmatprep.subr.mxu0 0.0
      %4715 = vmatpush1.msra.mxu0 0.0
      %4716 = vmatprep.subr.mxu0 0.0
      %4717 = vmatpush1.msra.mxu0 0.0
      %4718 = vmatprep.mubr.f32.mxu0 0.0
      %4719 = vmatmul.mubr.f32.gmra.mrb[0].mxu0 %v4652
      %v4720 = vpop.f32.mrb[0].mxu0
      %v4721 = vadd.f32 0.0, %v4720
      %v4722 = vpop.f32.mrb[0].mxu0
      %4723 = vdwg.mxu0
      %v4724 = vmul.f32 %v4648, %v4648
      %v4725 = vsub.f32 %v4721, %v4724
      %v4726 = vmax.f32 %v4725, 0.0
      %v4727 = vadd.f32 %v4726, 1e-05
      %v4728 = vrsqrt.pop %v4727
      %v4729 = vld [vmem:[%s2 + $0x1] sm:$0x1]
      %v4730 = vmul.f32 %v4728, %v4729
      %v4731 = vld [vmem:[%s2 + $0x2] sm:$0x1]
      %v4732 = vmul.f32 %v4648, %v4730
      %v4733 = vsub.f32 %v4731, %v4732
      %v4734 = vld [vmem:[%s287] sm:$0x1]
      %v4735 = vxor.u32 %v4734, 2147483648
      %v4736 = vmul.f32 %v4735, 1.442695
      %v4737 = vpow.pop %v4736
      %v4738 = vadd.f32 %v4737, 1.0
      %v4739 = vrcp.pop %v4738
      %v4740 = vmul.f32 1.0, %v4739
      %v4741 = vmul.f32 %v4734, %v4740
      %v4742 = vld [vmem:[%s6] sm:$0xff]
      %v4743 = vld [vmem:[%s6 + $0x8] sm:$0xff]
      %v4744 = vld [vmem:[%s6 + $0x10] sm:$0xff]
      %v4745 = vld [vmem:[%s6 + $0x18] sm:$0xff]
      %v4746 = vld [vmem:[%s2 + $0x4] sm:$0x1]
      %vm4747 = vcmask 261120
      %v4749 = vsel %vm4747, %v4741, 0
      %4751 = vmatprep.subr.mxu0 0.0
      %4752 = vmatpush1.msra.mxu0 %v4742
      %4753 = vmatprep.subr.mxu0 0.0
      %4754 = vmatpush1.msra.mxu0 %v4743
      %4755 = vmatprep.subr.mxu0 0.0
      %4756 = vmatpush1.msra.mxu0 %v4744
      %4757 = vmatprep.subr.mxu0 0.0
      %4758 = vmatpush1.msra.mxu0 %v4745
      %4759 = vmatprep.subr.mxu0 0.0
      %4760 = vmatpush1.msra.mxu0 0.0
      %4761 = vmatprep.subr.mxu0 0.0
      %4762 = vmatpush1.msra.mxu0 0.0
      %4763 = vmatprep.subr.mxu0 0.0
      %4764 = vmatpush1.msra.mxu0 0.0
      %4765 = vmatprep.subr.mxu0 0.0
      %4766 = vmatpush1.msra.mxu0 0.0
      %4767 = vmatprep.subr.mxu0 0.0
      %4768 = vmatpush1.msra.mxu0 0.0
      %4769 = vmatprep.subr.mxu0 0.0
      %4770 = vmatpush1.msra.mxu0 0.0
      %4771 = vmatprep.subr.mxu0 0.0
      %4772 = vmatpush1.msra.mxu0 0.0
      %4773 = vmatprep.subr.mxu0 0.0
      %4774 = vmatpush1.msra.mxu0 0.0
      %4775 = vmatprep.subr.mxu0 0.0
      %4776 = vmatpush1.msra.mxu0 0.0
      %4777 = vmatprep.subr.mxu0 0.0
      %4778 = vmatpush1.msra.mxu0 0.0
      %4779 = vmatprep.subr.mxu0 0.0
      %4780 = vmatpush1.msra.mxu0 0.0
      %4781 = vmatprep.subr.mxu0 0.0
      %4782 = vmatpush1.msra.mxu0 0.0
      %4783 = vmatprep.subr.mxu0 0.0
      %4784 = vmatpush1.msra.mxu0 0.0
      %4785 = vmatprep.subr.mxu0 0.0
      %4786 = vmatpush1.msra.mxu0 0.0
      %4787 = vmatprep.subr.mxu0 0.0
      %4788 = vmatpush1.msra.mxu0 0.0
      %4789 = vmatprep.subr.mxu0 0.0
      %4790 = vmatpush1.msra.mxu0 0.0
      %4791 = vmatprep.subr.mxu0 0.0
      %4792 = vmatpush1.msra.mxu0 0.0
      %4793 = vmatprep.subr.mxu0 0.0
      %4794 = vmatpush1.msra.mxu0 0.0
      %4795 = vmatprep.subr.mxu0 0.0
      %4796 = vmatpush1.msra.mxu0 0.0
      %4797 = vmatprep.subr.mxu0 0.0
      %4798 = vmatpush1.msra.mxu0 0.0
      %4799 = vmatprep.subr.mxu0 0.0
      %4800 = vmatpush1.msra.mxu0 0.0
      %4801 = vmatprep.subr.mxu0 0.0
      %4802 = vmatpush1.msra.mxu0 0.0
      %4803 = vmatprep.subr.mxu0 0.0
      %4804 = vmatpush1.msra.mxu0 0.0
      %4805 = vmatprep.subr.mxu0 0.0
      %4806 = vmatpush1.msra.mxu0 0.0
      %4807 = vmatprep.subr.mxu0 0.0
      %4808 = vmatpush1.msra.mxu0 0.0
      %4809 = vmatprep.subr.mxu0 0.0
      %4810 = vmatpush1.msra.mxu0 0.0
      %4811 = vmatprep.subr.mxu0 0.0
      %4812 = vmatpush1.msra.mxu0 0.0
      %4813 = vmatprep.subr.mxu0 0.0
      %4814 = vmatpush1.msra.mxu0 0.0
      %4815 = vmatprep.mubr.f32.mxu0 0.0
      %4816 = vmatmul.mubr.f32.gmra.mrb[0].mxu0 %v4749
      %v4817 = vpop.f32.mrb[0].mxu0
      %v4818 = vadd.f32 %v4746, %v4817
      %v4819 = vpop.f32.mrb[0].mxu0
      %4820 = vdwg.mxu0
      %s4821 = scalar_lea.vmem %s6, 32
      %v4822 = vld [vmem:[%s4821] sm:$0xff]
      %v4823 = vld [vmem:[%s4821 + $0x8] sm:$0xff]
      %v4824 = vld [vmem:[%s4821 + $0x10] sm:$0xff]
      %v4825 = vld [vmem:[%s4821 + $0x18] sm:$0xff]
      %v4826 = vld [vmem:[%s2 + $0x5] sm:$0x1]
      %4827 = vmatprep.subr.mxu0 0.0
      %4828 = vmatpush1.msra.mxu0 %v4822
      %4829 = vmatprep.subr.mxu0 0.0
      %4830 = vmatpush1.msra.mxu0 %v4823
      %4831 = vmatprep.subr.mxu0 0.0
      %4832 = vmatpush1.msra.mxu0 %v4824
      %4833 = vmatprep.subr.mxu0 0.0
      %4834 = vmatpush1.msra.mxu0 %v4825
      %4835 = vmatprep.subr.mxu0 0.0
      %4836 = vmatpush1.msra.mxu0 0.0
      %4837 = vmatprep.subr.mxu0 0.0
      %4838 = vmatpush1.msra.mxu0 0.0
      %4839 = vmatprep.subr.mxu0 0.0
      %4840 = vmatpush1.msra.mxu0 0.0
      %4841 = vmatprep.subr.mxu0 0.0
      %4842 = vmatpush1.msra.mxu0 0.0
      %4843 = vmatprep.subr.mxu0 0.0
      %4844 = vmatpush1.msra.mxu0 0.0
      %4845 = vmatprep.subr.mxu0 0.0
      %4846 = vmatpush1.msra.mxu0 0.0
      %4847 = vmatprep.subr.mxu0 0.0
      %4848 = vmatpush1.msra.mxu0 0.0
      %4849 = vmatprep.subr.mxu0 0.0
      %4850 = vmatpush1.msra.mxu0 0.0
      %4851 = vmatprep.subr.mxu0 0.0
      %4852 = vmatpush1.msra.mxu0 0.0
      %4853 = vmatprep.subr.mxu0 0.0
      %4854 = vmatpush1.msra.mxu0 0.0
      %4855 = vmatprep.subr.mxu0 0.0
      %4856 = vmatpush1.msra.mxu0 0.0
      %4857 = vmatprep.subr.mxu0 0.0
      %4858 = vmatpush1.msra.mxu0 0.0
      %4859 = vmatprep.subr.mxu0 0.0
      %4860 = vmatpush1.msra.mxu0 0.0
      %4861 = vmatprep.subr.mxu0 0.0
      %4862 = vmatpush1.msra.mxu0 0.0
      %4863 = vmatprep.subr.mxu0 0.0
      %4864 = vmatpush1.msra.mxu0 0.0
      %4865 = vmatprep.subr.mxu0 0.0
      %4866 = vmatpush1.msra.mxu0 0.0
      %4867 = vmatprep.subr.mxu0 0.0
      %4868 = vmatpush1.msra.mxu0 0.0
      %4869 = vmatprep.subr.mxu0 0.0
      %4870 = vmatpush1.msra.mxu0 0.0
      %4871 = vmatprep.subr.mxu0 0.0
      %4872 = vmatpush1.msra.mxu0 0.0
      %4873 = vmatprep.subr.mxu0 0.0
      %4874 = vmatpush1.msra.mxu0 0.0
      %4875 = vmatprep.subr.mxu0 0.0
      %4876 = vmatpush1.msra.mxu0 0.0
      %4877 = vmatprep.subr.mxu0 0.0
      %4878 = vmatpush1.msra.mxu0 0.0
      %4879 = vmatprep.subr.mxu0 0.0
      %4880 = vmatpush1.msra.mxu0 0.0
      %4881 = vmatprep.subr.mxu0 0.0
      %4882 = vmatpush1.msra.mxu0 0.0
      %4883 = vmatprep.subr.mxu0 0.0
      %4884 = vmatpush1.msra.mxu0 0.0
      %4885 = vmatprep.subr.mxu0 0.0
      %4886 = vmatpush1.msra.mxu0 0.0
      %4887 = vmatprep.subr.mxu0 0.0
      %4888 = vmatpush1.msra.mxu0 0.0
      %4889 = vmatprep.subr.mxu0 0.0
      %4890 = vmatpush1.msra.mxu0 0.0
      %4891 = vmatprep.mubr.f32.mxu0 0.0
      %4892 = vmatmul.mubr.f32.gmra.mrb[0].mxu0 %v4749
      %v4893 = vpop.f32.mrb[0].mxu0
      %v4894 = vadd.f32 %v4826, %v4893
      %v4895 = vpop.f32.mrb[0].mxu0
      %4896 = vdwg.mxu0
      %v4897 = vadd.f32 %v4818, 1.0
      %v4898 = vmul.f32 %v4730, %v4897
      %v4899 = vmul.f32 %v4733, %v4897
      %v4900 = vadd.f32 %v4899, %v4894
      %v4901 = vlaneseq
      %v4902 = vshrl.u32 %v4901, 7
      %v4903 = vsub.s32 0, %v4902
      %v4904 = vrot.slane %v4898, %v4903
      %v4905 = vmul.f32 %v4097, %v4904
      %v4906 = vmul.f32 %v4098, %v4904
      %v4907 = vmul.f32 %v4099, %v4904
      %v4908 = vmul.f32 %v4100, %v4904
      %v4909 = vmul.f32 %v4101, %v4904
      %v4910 = vmul.f32 %v4102, %v4904
      %v4911 = vmul.f32 %v4103, %v4904
      %v4912 = vmul.f32 %v4104, %v4904
      %v4913 = vmul.f32 %v4105, %v4904
      %v4914 = vmul.f32 %v4106, %v4904
      %v4915 = vmul.f32 %v4107, %v4904
      %v4916 = vmul.f32 %v4108, %v4904
      %v4917 = vmul.f32 %v4109, %v4904
      %v4918 = vmul.f32 %v4110, %v4904
      %v4919 = vmul.f32 %v4111, %v4904
      %v4920 = vmul.f32 %v4112, %v4904
      %v4921 = vmul.f32 %v4113, %v4904
      %v4922 = vmul.f32 %v4114, %v4904
      %v4923 = vmul.f32 %v4115, %v4904
      %v4924 = vmul.f32 %v4116, %v4904
      %v4925 = vmul.f32 %v4117, %v4904
      %v4926 = vmul.f32 %v4118, %v4904
      %v4927 = vmul.f32 %v4119, %v4904
      %v4928 = vmul.f32 %v4120, %v4904
      %v4929 = vmul.f32 %v4121, %v4904
      %v4930 = vmul.f32 %v4122, %v4904
      %v4931 = vmul.f32 %v4123, %v4904
      %v4932 = vmul.f32 %v4124, %v4904
      %v4933 = vmul.f32 %v4125, %v4904
      %v4934 = vmul.f32 %v4126, %v4904
      %v4935 = vmul.f32 %v4127, %v4904
      %v4936 = vmul.f32 %v4128, %v4904
      %v4937 = vmul.f32 %v4129, %v4904
      %v4938 = vmul.f32 %v4130, %v4904
      %v4939 = vmul.f32 %v4131, %v4904
      %v4940 = vmul.f32 %v4132, %v4904
      %v4941 = vlaneseq
      %v4942 = vshrl.u32 %v4941, 7
      %v4943 = vsub.s32 0, %v4942
      %v4944 = vrot.slane %v4900, %v4943
      %v4945 = vadd.f32 %v4905, %v4944
      %v4946 = vadd.f32 %v4906, %v4944
      %v4947 = vadd.f32 %v4907, %v4944
      %v4948 = vadd.f32 %v4908, %v4944
      %v4949 = vadd.f32 %v4909, %v4944
      %v4950 = vadd.f32 %v4910, %v4944
      %v4951 = vadd.f32 %v4911, %v4944
      %v4952 = vadd.f32 %v4912, %v4944
      %v4953 = vadd.f32 %v4913, %v4944
      %v4954 = vadd.f32 %v4914, %v4944
      %v4955 = vadd.f32 %v4915, %v4944
      %v4956 = vadd.f32 %v4916, %v4944
      %v4957 = vadd.f32 %v4917, %v4944
      %v4958 = vadd.f32 %v4918, %v4944
      %v4959 = vadd.f32 %v4919, %v4944
      %v4960 = vadd.f32 %v4920, %v4944
      %v4961 = vadd.f32 %v4921, %v4944
      %v4962 = vadd.f32 %v4922, %v4944
      %v4963 = vadd.f32 %v4923, %v4944
      %v4964 = vadd.f32 %v4924, %v4944
      %v4965 = vadd.f32 %v4925, %v4944
      %v4966 = vadd.f32 %v4926, %v4944
      %v4967 = vadd.f32 %v4927, %v4944
      %v4968 = vadd.f32 %v4928, %v4944
      %v4969 = vadd.f32 %v4929, %v4944
      %v4970 = vadd.f32 %v4930, %v4944
      %v4971 = vadd.f32 %v4931, %v4944
      %v4972 = vadd.f32 %v4932, %v4944
      %v4973 = vadd.f32 %v4933, %v4944
      %v4974 = vadd.f32 %v4934, %v4944
      %v4975 = vadd.f32 %v4935, %v4944
      %v4976 = vadd.f32 %v4936, %v4944
      %v4977 = vadd.f32 %v4937, %v4944
      %v4978 = vadd.f32 %v4938, %v4944
      %v4979 = vadd.f32 %v4939, %v4944
      %v4980 = vadd.f32 %v4940, %v4944
      %v4981 = vxor.u32 %v4945, 2147483648
      %v4982 = vxor.u32 %v4946, 2147483648
      %v4983 = vxor.u32 %v4947, 2147483648
      %v4984 = vxor.u32 %v4948, 2147483648
      %v4985 = vxor.u32 %v4949, 2147483648
      %v4986 = vxor.u32 %v4950, 2147483648
      %v4987 = vxor.u32 %v4951, 2147483648
      %v4988 = vxor.u32 %v4952, 2147483648
      %v4989 = vxor.u32 %v4953, 2147483648
      %v4990 = vxor.u32 %v4954, 2147483648
      %v4991 = vxor.u32 %v4955, 2147483648
      %v4992 = vxor.u32 %v4956, 2147483648
      %v4993 = vxor.u32 %v4957, 2147483648
      %v4994 = vxor.u32 %v4958, 2147483648
      %v4995 = vxor.u32 %v4959, 2147483648
      %v4996 = vxor.u32 %v4960, 2147483648
      %v4997 = vxor.u32 %v4961, 2147483648
      %v4998 = vxor.u32 %v4962, 2147483648
      %v4999 = vxor.u32 %v4963, 2147483648
      %v5000 = vxor.u32 %v4964, 2147483648
      %v5001 = vxor.u32 %v4965, 2147483648
      %v5002 = vxor.u32 %v4966, 2147483648
      %v5003 = vxor.u32 %v4967, 2147483648
      %v5004 = vxor.u32 %v4968, 2147483648
      %v5005 = vxor.u32 %v4969, 2147483648
      %v5006 = vxor.u32 %v4970, 2147483648
      %v5007 = vxor.u32 %v4971, 2147483648
      %v5008 = vxor.u32 %v4972, 2147483648
      %v5009 = vxor.u32 %v4973, 2147483648
      %v5010 = vxor.u32 %v4974, 2147483648
      %v5011 = vxor.u32 %v4975, 2147483648
      %v5012 = vxor.u32 %v4976, 2147483648
      %v5013 = vxor.u32 %v4977, 2147483648
      %v5014 = vxor.u32 %v4978, 2147483648
      %v5015 = vxor.u32 %v4979, 2147483648
      %v5016 = vxor.u32 %v4980, 2147483648
      %v5017 = vmul.f32 %v4981, 1.442695
      %v5018 = vpow.pop %v5017
      %v5019 = vmul.f32 %v4982, 1.442695
      %v5020 = vpow.pop %v5019
      %v5021 = vmul.f32 %v4983, 1.442695
      %v5022 = vpow.pop %v5021
      %v5023 = vmul.f32 %v4984, 1.442695
      %v5024 = vpow.pop %v5023
      %v5025 = vmul.f32 %v4985, 1.442695
      %v5026 = vpow.pop %v5025
      %v5027 = vmul.f32 %v4986, 1.442695
      %v5028 = vpow.pop %v5027
      %v5029 = vmul.f32 %v4987, 1.442695
      %v5030 = vpow.pop %v5029
      %v5031 = vmul.f32 %v4988, 1.442695
      %v5032 = vpow.pop %v5031
      %v5033 = vmul.f32 %v4989, 1.442695
      %v5034 = vpow.pop %v5033
      %v5035 = vmul.f32 %v4990, 1.442695
      %v5036 = vpow.pop %v5035
      %v5037 = vmul.f32 %v4991, 1.442695
      %v5038 = vpow.pop %v5037
      %v5039 = vmul.f32 %v4992, 1.442695
      %v5040 = vpow.pop %v5039
      %v5041 = vmul.f32 %v4993, 1.442695
      %v5042 = vpow.pop %v5041
      %v5043 = vmul.f32 %v4994, 1.442695
      %v5044 = vpow.pop %v5043
      %v5045 = vmul.f32 %v4995, 1.442695
      %v5046 = vpow.pop %v5045
      %v5047 = vmul.f32 %v4996, 1.442695
      %v5048 = vpow.pop %v5047
      %v5049 = vmul.f32 %v4997, 1.442695
      %v5050 = vpow.pop %v5049
      %v5051 = vmul.f32 %v4998, 1.442695
      %v5052 = vpow.pop %v5051
      %v5053 = vmul.f32 %v4999, 1.442695
      %v5054 = vpow.pop %v5053
      %v5055 = vmul.f32 %v5000, 1.442695
      %v5056 = vpow.pop %v5055
      %v5057 = vmul.f32 %v5001, 1.442695
      %v5058 = vpow.pop %v5057
      %v5059 = vmul.f32 %v5002, 1.442695
      %v5060 = vpow.pop %v5059
      %v5061 = vmul.f32 %v5003, 1.442695
      %v5062 = vpow.pop %v5061
      %v5063 = vmul.f32 %v5004, 1.442695
      %v5064 = vpow.pop %v5063
      %v5065 = vmul.f32 %v5005, 1.442695
      %v5066 = vpow.pop %v5065
      %v5067 = vmul.f32 %v5006, 1.442695
      %v5068 = vpow.pop %v5067
      %v5069 = vmul.f32 %v5007, 1.442695
      %v5070 = vpow.pop %v5069
      %v5071 = vmul.f32 %v5008, 1.442695
      %v5072 = vpow.pop %v5071
      %v5073 = vmul.f32 %v5009, 1.442695
      %v5074 = vpow.pop %v5073
      %v5075 = vmul.f32 %v5010, 1.442695
      %v5076 = vpow.pop %v5075
      %v5077 = vmul.f32 %v5011, 1.442695
      %v5078 = vpow.pop %v5077
      %v5079 = vmul.f32 %v5012, 1.442695
      %v5080 = vpow.pop %v5079
      %v5081 = vmul.f32 %v5013, 1.442695
      %v5082 = vpow.pop %v5081
      %v5083 = vmul.f32 %v5014, 1.442695
      %v5084 = vpow.pop %v5083
      %v5085 = vmul.f32 %v5015, 1.442695
      %v5086 = vpow.pop %v5085
      %v5087 = vmul.f32 %v5016, 1.442695
      %v5088 = vpow.pop %v5087
      %v5089 = vadd.f32 %v5018, 1.0
      %v5090 = vadd.f32 %v5020, 1.0
      %v5091 = vadd.f32 %v5022, 1.0
      %v5092 = vadd.f32 %v5024, 1.0
      %v5093 = vadd.f32 %v5026, 1.0
      %v5094 = vadd.f32 %v5028, 1.0
      %v5095 = vadd.f32 %v5030, 1.0
      %v5096 = vadd.f32 %v5032, 1.0
      %v5097 = vadd.f32 %v5034, 1.0
      %v5098 = vadd.f32 %v5036, 1.0
      %v5099 = vadd.f32 %v5038, 1.0
      %v5100 = vadd.f32 %v5040, 1.0
      %v5101 = vadd.f32 %v5042, 1.0
      %v5102 = vadd.f32 %v5044, 1.0
      %v5103 = vadd.f32 %v5046, 1.0
      %v5104 = vadd.f32 %v5048, 1.0
      %v5105 = vadd.f32 %v5050, 1.0
      %v5106 = vadd.f32 %v5052, 1.0
      %v5107 = vadd.f32 %v5054, 1.0
      %v5108 = vadd.f32 %v5056, 1.0
      %v5109 = vadd.f32 %v5058, 1.0
      %v5110 = vadd.f32 %v5060, 1.0
      %v5111 = vadd.f32 %v5062, 1.0
      %v5112 = vadd.f32 %v5064, 1.0
      %v5113 = vadd.f32 %v5066, 1.0
      %v5114 = vadd.f32 %v5068, 1.0
      %v5115 = vadd.f32 %v5070, 1.0
      %v5116 = vadd.f32 %v5072, 1.0
      %v5117 = vadd.f32 %v5074, 1.0
      %v5118 = vadd.f32 %v5076, 1.0
      %v5119 = vadd.f32 %v5078, 1.0
      %v5120 = vadd.f32 %v5080, 1.0
      %v5121 = vadd.f32 %v5082, 1.0
      %v5122 = vadd.f32 %v5084, 1.0
      %v5123 = vadd.f32 %v5086, 1.0
      %v5124 = vadd.f32 %v5088, 1.0
      %v5125 = vrcp.pop %v5089
      %v5126 = vmul.f32 1.0, %v5125
      %v5127 = vrcp.pop %v5090
      %v5128 = vmul.f32 1.0, %v5127
      %v5129 = vrcp.pop %v5091
      %v5130 = vmul.f32 1.0, %v5129
      %v5131 = vrcp.pop %v5092
      %v5132 = vmul.f32 1.0, %v5131
      %v5133 = vrcp.pop %v5093
      %v5134 = vmul.f32 1.0, %v5133
      %v5135 = vrcp.pop %v5094
      %v5136 = vmul.f32 1.0, %v5135
      %v5137 = vrcp.pop %v5095
      %v5138 = vmul.f32 1.0, %v5137
      %v5139 = vrcp.pop %v5096
      %v5140 = vmul.f32 1.0, %v5139
      %v5141 = vrcp.pop %v5097
      %v5142 = vmul.f32 1.0, %v5141
      %v5143 = vrcp.pop %v5098
      %v5144 = vmul.f32 1.0, %v5143
      %v5145 = vrcp.pop %v5099
      %v5146 = vmul.f32 1.0, %v5145
      %v5147 = vrcp.pop %v5100
      %v5148 = vmul.f32 1.0, %v5147
      %v5149 = vrcp.pop %v5101
      %v5150 = vmul.f32 1.0, %v5149
      %v5151 = vrcp.pop %v5102
      %v5152 = vmul.f32 1.0, %v5151
      %v5153 = vrcp.pop %v5103
      %v5154 = vmul.f32 1.0, %v5153
      %v5155 = vrcp.pop %v5104
      %v5156 = vmul.f32 1.0, %v5155
      %v5157 = vrcp.pop %v5105
      %v5158 = vmul.f32 1.0, %v5157
      %v5159 = vrcp.pop %v5106
      %v5160 = vmul.f32 1.0, %v5159
      %v5161 = vrcp.pop %v5107
      %v5162 = vmul.f32 1.0, %v5161
      %v5163 = vrcp.pop %v5108
      %v5164 = vmul.f32 1.0, %v5163
      %v5165 = vrcp.pop %v5109
      %v5166 = vmul.f32 1.0, %v5165
      %v5167 = vrcp.pop %v5110
      %v5168 = vmul.f32 1.0, %v5167
      %v5169 = vrcp.pop %v5111
      %v5170 = vmul.f32 1.0, %v5169
      %v5171 = vrcp.pop %v5112
      %v5172 = vmul.f32 1.0, %v5171
      %v5173 = vrcp.pop %v5113
      %v5174 = vmul.f32 1.0, %v5173
      %v5175 = vrcp.pop %v5114
      %v5176 = vmul.f32 1.0, %v5175
      %v5177 = vrcp.pop %v5115
      %v5178 = vmul.f32 1.0, %v5177
      %v5179 = vrcp.pop %v5116
      %v5180 = vmul.f32 1.0, %v5179
      %v5181 = vrcp.pop %v5117
      %v5182 = vmul.f32 1.0, %v5181
      %v5183 = vrcp.pop %v5118
      %v5184 = vmul.f32 1.0, %v5183
      %v5185 = vrcp.pop %v5119
      %v5186 = vmul.f32 1.0, %v5185
      %v5187 = vrcp.pop %v5120
      %v5188 = vmul.f32 1.0, %v5187
      %v5189 = vrcp.pop %v5121
      %v5190 = vmul.f32 1.0, %v5189
      %v5191 = vrcp.pop %v5122
      %v5192 = vmul.f32 1.0, %v5191
      %v5193 = vrcp.pop %v5123
      %v5194 = vmul.f32 1.0, %v5193
      %v5195 = vrcp.pop %v5124
      %v5196 = vmul.f32 1.0, %v5195
      %v5197 = vmul.f32 %v4945, %v5126
      %v5198 = vmul.f32 %v4946, %v5128
      %v5199 = vmul.f32 %v4947, %v5130
      %v5200 = vmul.f32 %v4948, %v5132
      %v5201 = vmul.f32 %v4949, %v5134
      %v5202 = vmul.f32 %v4950, %v5136
      %v5203 = vmul.f32 %v4951, %v5138
      %v5204 = vmul.f32 %v4952, %v5140
      %v5205 = vmul.f32 %v4953, %v5142
      %v5206 = vmul.f32 %v4954, %v5144
      %v5207 = vmul.f32 %v4955, %v5146
      %v5208 = vmul.f32 %v4956, %v5148
      %v5209 = vmul.f32 %v4957, %v5150
      %v5210 = vmul.f32 %v4958, %v5152
      %v5211 = vmul.f32 %v4959, %v5154
      %v5212 = vmul.f32 %v4960, %v5156
      %v5213 = vmul.f32 %v4961, %v5158
      %v5214 = vmul.f32 %v4962, %v5160
      %v5215 = vmul.f32 %v4963, %v5162
      %v5216 = vmul.f32 %v4964, %v5164
      %v5217 = vmul.f32 %v4965, %v5166
      %v5218 = vmul.f32 %v4966, %v5168
      %v5219 = vmul.f32 %v4967, %v5170
      %v5220 = vmul.f32 %v4968, %v5172
      %v5221 = vmul.f32 %v4969, %v5174
      %v5222 = vmul.f32 %v4970, %v5176
      %v5223 = vmul.f32 %v4971, %v5178
      %v5224 = vmul.f32 %v4972, %v5180
      %v5225 = vmul.f32 %v4973, %v5182
      %v5226 = vmul.f32 %v4974, %v5184
      %v5227 = vmul.f32 %v4975, %v5186
      %v5228 = vmul.f32 %v4976, %v5188
      %v5229 = vmul.f32 %v4977, %v5190
      %v5230 = vmul.f32 %v4978, %v5192
      %v5231 = vmul.f32 %v4979, %v5194
      %v5232 = vmul.f32 %v4980, %v5196
      %5233 = vst.msk [vmem:[%s292] sm:$0xff] %vm4385, %v5197
      %5234 = vst.msk [vmem:[%s292 + $0x8] sm:$0xff] %vm4385, %v5198
      %5235 = vst.msk [vmem:[%s292 + $0x10] sm:$0xff] %vm4385, %v5199
      %5236 = vst.msk [vmem:[%s292 + $0x18] sm:$0xff] %vm4385, %v5200
      %5237 = vst.msk [vmem:[%s292 + $0x20] sm:$0xff] %vm4385, %v5201
      %5238 = vst.msk [vmem:[%s292 + $0x28] sm:$0xff] %vm4385, %v5202
      %5239 = vst.msk [vmem:[%s292 + $0x30] sm:$0xff] %vm4385, %v5203
      %5240 = vst.msk [vmem:[%s292 + $0x38] sm:$0xff] %vm4385, %v5204
      %5241 = vst.msk [vmem:[%s292 + $0x40] sm:$0xff] %vm4385, %v5205
      %5242 = vst.msk [vmem:[%s292 + $0x48] sm:$0xff] %vm4385, %v5206
      %5243 = vst.msk [vmem:[%s292 + $0x50] sm:$0xff] %vm4385, %v5207
      %5244 = vst.msk [vmem:[%s292 + $0x58] sm:$0xff] %vm4385, %v5208
      %5245 = vst.msk [vmem:[%s292 + $0x60] sm:$0xff] %vm4385, %v5209
      %5246 = vst.msk [vmem:[%s292 + $0x68] sm:$0xff] %vm4385, %v5210
      %5247 = vst.msk [vmem:[%s292 + $0x70] sm:$0xff] %vm4385, %v5211
      %5248 = vst.msk [vmem:[%s292 + $0x78] sm:$0xff] %vm4385, %v5212
      %5249 = vst.msk [vmem:[%s292 + $0x80] sm:$0xff] %vm4385, %v5213
      %5250 = vst.msk [vmem:[%s292 + $0x88] sm:$0xff] %vm4385, %v5214
      %5251 = vst.msk [vmem:[%s292 + $0x90] sm:$0xff] %vm4385, %v5215
      %5252 = vst.msk [vmem:[%s292 + $0x98] sm:$0xff] %vm4385, %v5216
      %5253 = vst.msk [vmem:[%s292 + $0xa0] sm:$0xff] %vm4385, %v5217
      %5254 = vst.msk [vmem:[%s292 + $0xa8] sm:$0xff] %vm4385, %v5218
      %5255 = vst.msk [vmem:[%s292 + $0xb0] sm:$0xff] %vm4385, %v5219
      %5256 = vst.msk [vmem:[%s292 + $0xb8] sm:$0xff] %vm4385, %v5220
      %5257 = vst.msk [vmem:[%s292 + $0xc0] sm:$0xff] %vm4385, %v5221
      %5258 = vst.msk [vmem:[%s292 + $0xc8] sm:$0xff] %vm4385, %v5222
      %5259 = vst.msk [vmem:[%s292 + $0xd0] sm:$0xff] %vm4385, %v5223
      %5260 = vst.msk [vmem:[%s292 + $0xd8] sm:$0xff] %vm4385, %v5224
      %5261 = vst.msk [vmem:[%s292 + $0xe0] sm:$0xff] %vm4385, %v5225
      %5262 = vst.msk [vmem:[%s292 + $0xe8] sm:$0xff] %vm4385, %v5226
      %5263 = vst.msk [vmem:[%s292 + $0xf0] sm:$0xff] %vm4385, %v5227
      %5264 = vst.msk [vmem:[%s292 + $0xf8] sm:$0xff] %vm4385, %v5228
      %5265 = vst.msk [vmem:[%s292 + $0x100] sm:$0xff] %vm4385, %v5229
      %5266 = vst.msk [vmem:[%s292 + $0x108] sm:$0xff] %vm4385, %v5230
      %5267 = vst.msk [vmem:[%s292 + $0x110] sm:$0xff] %vm4385, %v5231
      %5268 = vst.msk [vmem:[%s292 + $0x118] sm:$0xff] %vm4385, %v5232
      %p5269 = scmp.lt.s32.totalorder %s18, 1
      %s5270 = scalar_select %p5269, %s18, 1
      %s5271 = smul.addr %s5270, 36
      %s5272 = smul.addr %s5271, 8
      %s5273 = scalar_lea.vmem %s7, %s5272
      // Predicated region
      $region49: #{resnet_block_forward.2} parent=47 // pred_check
        %p5274 = pneg %p193
      $region50: #{resnet_block_forward.2} parent=47 // pred_check_branch
        %5276 = sbr.rel (%p5274) target = $region52
      $region51: #{resnet_block_forward.2} parent=47 // pred_region
        _
      $region52: #{resnet_block_forward.2} parent=47 // pred_fallthru
        _
    $region48: #{resnet_block_forward.2} parent=5 // pred_fallthru
      _
    %p5277 = scmp.le.s32.totalorder 2, %s13
    // Predicated region
    $region53: #{resnet_block_forward.2} parent=5 // pred_check
      %p5278 = pneg %p5277
    $region54: #{resnet_block_forward.2} parent=5 // pred_check_branch
      %5280 = sbr.rel (%p5278) target = $region56
    $region55: #{resnet_block_forward.2} parent=5 // pred_region
      %s5281 = ssub.s32 %s13, 2
      // Predicated region
      $region57: #{resnet_block_forward.2} parent=55 // pred_check
        %p5282 = pneg %p199
      $region58: #{resnet_block_forward.2} parent=55 // pred_check_branch
        %5284 = sbr.rel (%p5282) target = $region60
      $region59: #{resnet_block_forward.2} parent=55 // pred_region
        %p5285 = scmp.lt.s32.totalorder %s19, 1
        %s5286 = scalar_select %p5285, %s19, 1
        %s5287 = smul.addr %s5286, 36
        %s5288 = smul.addr %s5287, 8
        %s5289 = scalar_lea.vmem %s7, %s5288
      $region60: #{resnet_block_forward.2} parent=55 // pred_fallthru
        _
    $region56: #{resnet_block_forward.2} parent=5 // pred_fallthru
      _
  $region6: #{resnet_block_forward.2} parent=0 // loop_footer
    %s17 = sadd.s32 1, %s13
  $region7: #{resnet_block_forward.2} parent=0 // loop_footer_branch
    %12 = sbr.rel target = $region3
  $region8: #{resnet_block_forward.2} parent=0 // loop_exit
    _

// kernel: resnet_block_forward.3
$region0: #{resnet_block_forward.3}
  #allocation0 [shape = 'u32[]', space=smem, size = 0x4, offset = 0x4, fixed_abs, tag = 'smem constant byte address 0x4 - core index']
  #allocation1 [shape = 'u32[144,128]{1,0:T(1,128)}', space=vmem, size = 0x12000, scoped, tag = 'internal scratch']
  %s0 = inlined_call_operand.vmem [shape: f32[2,342,16], index: 0, kind: input, shape index: {}]
  %s1 = inlined_call_operand.vmem [shape: f32[9,16,16], index: 1, kind: input, shape index: {}]
  %s2 = inlined_call_operand.vmem [shape: f32[6,16], index: 2, kind: input, shape index: {}]
  %s3 = inlined_call_operand.vmem [shape: f32[288,1], index: 3, kind: input, shape index: {}]
  %s4 = inlined_call_operand.vmem [shape: f32[16,16], index: 4, kind: input, shape index: {}]
  %s5 = inlined_call_operand.vmem [shape: f32[2,342,4], index: 5, kind: input, shape index: {}]
  %s6 = inlined_call_operand.vmem [shape: f32[4,16], index: 6, kind: input, shape index: {}]
  %s7 = inlined_call_operand.vmem [shape: f32[2,288,16], index: 7, kind: output, shape index: {}]
  %s8 = sld [smem:[#allocation0]]
  $region61: #{resnet_block_forward.3} parent=0
    _
  %s10 = ssub.s32 1, %s8
  %s11 = scalar_select 0, %s10, %s8
  loop: start=0, step=1, limit=4
  $region2: #{resnet_block_forward.3} parent=0 // loop_pre_header
    _
  $region3: #{resnet_block_forward.3} parent=0 // loop_header
    %s13 = sphi 0, %s17
    %p14 = scmp.ge.s32.totalorder %s13, 4
    %s23 = sphi 0, %s25
    %s26 = sphi 0, %s23
    %s27 = sphi 0, %s26
    %s43 = sphi 0, %s27
    %s47 = sphi 0, %s47
    %s49 = sphi 0, %s47
    %s50 = sphi 0, %s49
    %s64 = sphi 0, %s50
    %s68 = sphi 0, %s68
    %s70 = sphi 0, %s68
    %s71 = sphi 0, %s70
    %s85 = sphi 0, %s71
    %s89 = sphi 0, %s89
    %s91 = sphi 0, %s89
    %s92 = sphi 0, %s91
    %s106 = sphi 0, %s92
    %s110 = sphi 0, %s110
    %s112 = sphi 0, %s110
    %s113 = sphi 0, %s112
    %s127 = sphi 0, %s113
    %s133 = sphi 0, %s135
    %s136 = sphi 0, %s133
    %s137 = sphi 0, %s136
    %s153 = sphi 0, %s137
    %s157 = sphi 0, %s157
    %s159 = sphi 0, %s157
    %s160 = sphi 0, %s159
    %s174 = sphi 0, %s160
    %s180 = sphi 0, %s182
    %s183 = sphi 0, %s180
    %s184 = sphi 0, %s183
    %s200 = sphi 0, %s184
  $region4: #{resnet_block_forward.3} parent=0 // loop_header_branch
    %16 = sbr.rel (%p14) target = $region8
  $region5: #{resnet_block_forward.3} parent=0 // loop_body
    %s18 = ssub.s32 %s13, 1
    %s19 = ssub.s32 %s13, 2
    %s20 = sadd.s32 %s13, 1
    %s21 = ssub.s32 %s13, %s20
    %p22 = scmp.eq.s32.totalorder %s21, 0
    %s24 = sadd.s32 %s23, 1
    %s25 = scalar_select %p22, %s23, %s24
    %p28 = pneg %p22
    %p29 = scmp.eq.s32.totalorder %s13, 1
    %p30 = por %p28, %p29
    %p31 = scmp.ne.s32.totalorder %s23, %s26
    %p32 = scmp.eq.s32.totalorder %s13, 0
    %p33 = por %p31, %p32
    %p34 = scmp.ne.s32.totalorder %s23, %s26
    %p35 = scmp.eq.s32.totalorder %s18, 1
    %p36 = por %p34, %p35
    %p37 = scmp.ne.s32.totalorder %s26, %s27
    %p38 = scmp.eq.s32.totalorder %s18, 0
    %p39 = por %p37, %p38
    %p40 = scmp.ne.s32.totalorder %s26, %s27
    %p41 = scmp.eq.s32.totalorder %s19, 1
    %p42 = por %p40, %p41
    %p44 = scmp.ne.s32.totalorder %s27, %s43
    %p45 = scmp.eq.s32.totalorder %s19, 0
    %p46 = por %p44, %p45
    %s48 = sadd.s32 %s47, 1
    %p51 = scmp.eq.s32.totalorder %s13, 1
    %p52 = scmp.ne.s32.totalorder %s47, %s49
    %p53 = scmp.eq.s32.totalorder %s13, 0
    %p54 = por %p52, %p53
    %p55 = scmp.ne.s32.totalorder %s47, %s49
    %p56 = scmp.eq.s32.totalorder %s18, 1
    %p57 = por %p55, %p56
    %p58 = scmp.ne.s32.totalorder %s49, %s50
    %p59 = scmp.eq.s32.totalorder %s18, 0
    %p60 = por %p58, %p59
    %p61 = scmp.ne.s32.totalorder %s49, %s50
    %p62 = scmp.eq.s32.totalorder %s19, 1
    %p63 = por %p61, %p62
    %p65 = scmp.ne.s32.totalorder %s50, %s64
    %p66 = scmp.eq.s32.totalorder %s19, 0
    %p67 = por %p65, %p66
    %s69 = sadd.s32 %s68, 1
    %p72 = scmp.eq.s32.totalorder %s13, 1
    %p73 = scmp.ne.s32.totalorder %s68, %s70
    %p74 = scmp.eq.s32.totalorder %s13, 0
    %p75 = por %p73, %p74
    %p76 = scmp.ne.s32.totalorder %s68, %s70
    %p77 = scmp.eq.s32.totalorder %s18, 1
    %p78 = por %p76, %p77
    %p79 = scmp.ne.s32.totalorder %s70, %s71
    %p80 = scmp.eq.s32.totalorder %s18, 0
    %p81 = por %p79, %p80
    %p82 = scmp.ne.s32.totalorder %s70, %s71
    %p83 = scmp.eq.s32.totalorder %s19, 1
    %p84 = por %p82, %p83
    %p86 = scmp.ne.s32.totalorder %s71, %s85
    %p87 = scmp.eq.s32.totalorder %s19, 0
    %p88 = por %p86, %p87
    %s90 = sadd.s32 %s89, 1
    %p93 = scmp.eq.s32.totalorder %s13, 1
    %p94 = scmp.ne.s32.totalorder %s89, %s91
    %p95 = scmp.eq.s32.totalorder %s13, 0
    %p96 = por %p94, %p95
    %p97 = scmp.ne.s32.totalorder %s89, %s91
    %p98 = scmp.eq.s32.totalorder %s18, 1
    %p99 = por %p97, %p98
    %p100 = scmp.ne.s32.totalorder %s91, %s92
    %p101 = scmp.eq.s32.totalorder %s18, 0
    %p102 = por %p100, %p101
    %p103 = scmp.ne.s32.totalorder %s91, %s92
    %p104 = scmp.eq.s32.totalorder %s19, 1
    %p105 = por %p103, %p104
    %p107 = scmp.ne.s32.totalorder %s92, %s106
    %p108 = scmp.eq.s32.totalorder %s19, 0
    %p109 = por %p107, %p108
    %s111 = sadd.s32 %s110, 1
    %p114 = scmp.eq.s32.totalorder %s13, 1
    %p115 = scmp.ne.s32.totalorder %s110, %s112
    %p116 = scmp.eq.s32.totalorder %s13, 0
    %p117 = por %p115, %p116
    %p118 = scmp.ne.s32.totalorder %s110, %s112
    %p119 = scmp.eq.s32.totalorder %s18, 1
    %p120 = por %p118, %p119
    %p121 = scmp.ne.s32.totalorder %s112, %s113
    %p122 = scmp.eq.s32.totalorder %s18, 0
    %p123 = por %p121, %p122
    %p124 = scmp.ne.s32.totalorder %s112, %s113
    %p125 = scmp.eq.s32.totalorder %s19, 1
    %p126 = por %p124, %p125
    %p128 = scmp.ne.s32.totalorder %s113, %s127
    %p129 = scmp.eq.s32.totalorder %s19, 0
    %p130 = por %p128, %p129
    %s131 = ssub.s32 %s13, %s20
    %p132 = scmp.eq.s32.totalorder %s131, 0
    %s134 = sadd.s32 %s133, 1
    %s135 = scalar_select %p132, %s133, %s134
    %p138 = pneg %p132
    %p139 = scmp.eq.s32.totalorder %s13, 1
    %p140 = por %p138, %p139
    %p141 = scmp.ne.s32.totalorder %s133, %s136
    %p142 = scmp.eq.s32.totalorder %s13, 0
    %p143 = por %p141, %p142
    %p144 = scmp.ne.s32.totalorder %s133, %s136
    %p145 = scmp.eq.s32.totalorder %s18, 1
    %p146 = por %p144, %p145
    %p147 = scmp.ne.s32.totalorder %s136, %s137
    %p148 = scmp.eq.s32.totalorder %s18, 0
    %p149 = por %p147, %p148
    %p150 = scmp.ne.s32.totalorder %s136, %s137
    %p151 = scmp.eq.s32.totalorder %s19, 1
    %p152 = por %p150, %p151
    %p154 = scmp.ne.s32.totalorder %s137, %s153
    %p155 = scmp.eq.s32.totalorder %s19, 0
    %p156 = por %p154, %p155
    %s158 = sadd.s32 %s157, 1
    %p161 = scmp.eq.s32.totalorder %s13, 1
    %p162 = scmp.ne.s32.totalorder %s157, %s159
    %p163 = scmp.eq.s32.totalorder %s13, 0
    %p164 = por %p162, %p163
    %p165 = scmp.ne.s32.totalorder %s157, %s159
    %p166 = scmp.eq.s32.totalorder %s18, 1
    %p167 = por %p165, %p166
    %p168 = scmp.ne.s32.totalorder %s159, %s160
    %p169 = scmp.eq.s32.totalorder %s18, 0
    %p170 = por %p168, %p169
    %p171 = scmp.ne.s32.totalorder %s159, %s160
    %p172 = scmp.eq.s32.totalorder %s19, 1
    %p173 = por %p171, %p172
    %p175 = scmp.ne.s32.totalorder %s160, %s174
    %p176 = scmp.eq.s32.totalorder %s19, 0
    %p177 = por %p175, %p176
    %s178 = ssub.s32 %s13, %s20
    %p179 = scmp.eq.s32.totalorder %s178, 0
    %s181 = sadd.s32 %s180, 1
    %s182 = scalar_select %p179, %s180, %s181
    %p185 = pneg %p179
    %p186 = scmp.eq.s32.totalorder %s13, 1
    %p187 = por %p185, %p186
    %p188 = scmp.ne.s32.totalorder %s180, %s183
    %p189 = scmp.eq.s32.totalorder %s13, 0
    %p190 = por %p188, %p189
    %p191 = scmp.ne.s32.totalorder %s180, %s183
    %p192 = scmp.eq.s32.totalorder %s18, 1
    %p193 = por %p191, %p192
    %p194 = scmp.ne.s32.totalorder %s183, %s184
    %p195 = scmp.eq.s32.totalorder %s18, 0
    %p196 = por %p194, %p195
    %p197 = scmp.ne.s32.totalorder %s183, %s184
    %p198 = scmp.eq.s32.totalorder %s19, 1
    %p199 = por %p197, %p198
    %p201 = scmp.ne.s32.totalorder %s184, %s200
    %p202 = scmp.eq.s32.totalorder %s19, 0
    %p203 = por %p201, %p202
    %p204 = scmp.le.s32.totalorder 1, %s13
    %p205 = scmp.lt.s32.totalorder %s13, 3
    %p206 = pnand %p204, %p205
    %p207 = pneg %p206
    // Predicated region
    $region9: #{resnet_block_forward.3} parent=5 // pred_check
      _
    $region10: #{resnet_block_forward.3} parent=5 // pred_check_branch
      %209 = sbr.rel (%p206) target = $region12
    $region11: #{resnet_block_forward.3} parent=5 // pred_region
      %s210 = ssub.s32 %s13, 1
      // Predicated region
      $region13: #{resnet_block_forward.3} parent=11 // pred_check
        %p211 = pneg %p60
      $region14: #{resnet_block_forward.3} parent=11 // pred_check_branch
        %213 = sbr.rel (%p211) target = $region16
      $region15: #{resnet_block_forward.3} parent=11 // pred_region
        _
      $region16: #{resnet_block_forward.3} parent=11 // pred_fallthru
        _
      // Predicated region
      $region17: #{resnet_block_forward.3} parent=11 // pred_check
        %p214 = pneg %p81
      $region18: #{resnet_block_forward.3} parent=11 // pred_check_branch
        %216 = sbr.rel (%p214) target = $region20
      $region19: #{resnet_block_forward.3} parent=11 // pred_region
        _
      $region20: #{resnet_block_forward.3} parent=11 // pred_fallthru
        _
      // Predicated region
      $region21: #{resnet_block_forward.3} parent=11 // pred_check
        %p217 = pneg %p102
      $region22: #{resnet_block_forward.3} parent=11 // pred_check_branch
        %219 = sbr.rel (%p217) target = $region24
      $region23: #{resnet_block_forward.3} parent=11 // pred_region
        _
      $region24: #{resnet_block_forward.3} parent=11 // pred_fallthru
        _
      // Predicated region
      $region25: #{resnet_block_forward.3} parent=11 // pred_check
        %p220 = pneg %p123
      $region26: #{resnet_block_forward.3} parent=11 // pred_check_branch
        %222 = sbr.rel (%p220) target = $region28
      $region27: #{resnet_block_forward.3} parent=11 // pred_region
        _
      $region28: #{resnet_block_forward.3} parent=11 // pred_fallthru
        _
      // Predicated region
      $region29: #{resnet_block_forward.3} parent=11 // pred_check
        %p223 = pneg %p170
      $region30: #{resnet_block_forward.3} parent=11 // pred_check_branch
        %225 = sbr.rel (%p223) target = $region32
      $region31: #{resnet_block_forward.3} parent=11 // pred_region
        _
      $region32: #{resnet_block_forward.3} parent=11 // pred_fallthru
        _
    $region12: #{resnet_block_forward.3} parent=5 // pred_fallthru
      _
    %p226 = scmp.lt.s32.totalorder %s13, 2
    // Predicated region
    $region33: #{resnet_block_forward.3} parent=5 // pred_check
      %p227 = pneg %p226
    $region34: #{resnet_block_forward.3} parent=5 // pred_check_branch
      %229 = sbr.rel (%p227) target = $region36
    $region35: #{resnet_block_forward.3} parent=5 // pred_region
      // Predicated region
      $region37: #{resnet_block_forward.3} parent=35 // pred_check
        %p230 = pneg %p33
      $region38: #{resnet_block_forward.3} parent=35 // pred_check_branch
        %232 = sbr.rel (%p230) target = $region40
      $region39: #{resnet_block_forward.3} parent=35 // pred_region
        %p233 = scmp.lt.s32.totalorder %s13, 1
        %s234 = scalar_select %p233, %s13, 1
        %s235 = smul.addr %s234, 43
        %s236 = smul.addr %s235, 8
        %s237 = scalar_lea.vmem %s0, %s236
      $region40: #{resnet_block_forward.3} parent=35 // pred_fallthru
        _
      // Predicated region
      $region41: #{resnet_block_forward.3} parent=35 // pred_check
        %p238 = pneg %p143
      $region42: #{resnet_block_forward.3} parent=35 // pred_check_branch
        %240 = sbr.rel (%p238) target = $region44
      $region43: #{resnet_block_forward.3} parent=35 // pred_region
        %p241 = scmp.lt.s32.totalorder %s13, 1
        %s242 = scalar_select %p241, %s13, 1
        %s243 = smul.addr %s242, 43
        %s244 = smul.addr %s243, 8
        %s245 = scalar_lea.vmem %s5, %s244
      $region44: #{resnet_block_forward.3} parent=35 // pred_fallthru
        _
    $region36: #{resnet_block_forward.3} parent=5 // pred_fallthru
      _
    %p246 = scmp.le.s32.totalorder 1, %s13
    %p247 = scmp.lt.s32.totalorder %s13, 3
    %p248 = pnand %p246, %p247
    %p249 = pneg %p248
    // Predicated region
    $region45: #{resnet_block_forward.3} parent=5 // pred_check
      _
    $region46: #{resnet_block_forward.3} parent=5 // pred_check_branch
      %251 = sbr.rel (%p248) target = $region48
    $region47: #{resnet_block_forward.3} parent=5 // pred_region
      %s252 = ssub.s32 %s13, 1
      %p253 = scmp.lt.s32.totalorder %s18, 1
      %s254 = scalar_select %p253, %s18, 1
      %s255 = smul.addr %s254, 43
      %s256 = smul.addr %s255, 8
      %s257 = scalar_lea.vmem %s0, %s256
      %p258 = pneg %p39
      %p259 = pneg %p36
      %p260 = pneg %p60
      %p261 = pneg %p57
      %p262 = pneg %p81
      %p263 = pneg %p78
      %p264 = pneg %p102
      %p265 = pneg %p99
      %p266 = pneg %p123
      %p267 = pneg %p120
      %p268 = scmp.lt.s32.totalorder %s18, 1
      %s269 = scalar_select %p268, %s18, 1
      %s270 = smul.addr %s269, 43
      %s271 = smul.addr %s270, 8
      %s272 = scalar_lea.vmem %s5, %s271
      %p273 = pneg %p149
      %p274 = pneg %p146
      %p275 = pneg %p170
      %p276 = pneg %p167
      %p277 = pneg %p196
      %p278 = pneg %p193
      %p279 = scmp.lt.s32.totalorder %s18, 1
      %s280 = scalar_select %p279, %s18, 1
      %s281 = smul.addr %s280, 36
      %s282 = smul.addr %s281, 8
      %s283 = scalar_lea.vmem %s7, %s282
      %p284 = scmp.lt.s32.totalorder %s18, 1
      %s285 = scalar_select %p284, %s18, 1
      %s286 = smul.addr %s285, 43
      %s287 = smul.addr %s286, 8
      %s288 = scalar_lea.vmem %s0, %s287
      %p289 = scmp.lt.s32.totalorder %s18, 1
      %s290 = scalar_select %p289, %s18, 1
      %s291 = smul.addr %s290, 43
      %s292 = smul.addr %s291, 8
      %s293 = scalar_lea.vmem %s5, %s292
      %p294 = scmp.lt.s32.totalorder %s18, 1
      %s295 = scalar_select %p294, %s18, 1
      %s296 = smul.addr %s295, 36
      %s297 = smul.addr %s296, 8
      %s298 = scalar_lea.vmem %s7, %s297
      %v299 = vld [vmem:[%s288] sm:$0xff]
      %v300 = vld [vmem:[%s288 + $0x8] sm:$0xff]
      %v301 = vld [vmem:[%s288 + $0x10] sm:$0xff]
      %v302 = vld [vmem:[%s288 + $0x18] sm:$0xff]
      %v303 = vld [vmem:[%s288 + $0x20] sm:$0xff]
      %v304 = vld [vmem:[%s288 + $0x28] sm:$0xff]
      %v305 = vld [vmem:[%s288 + $0x30] sm:$0xff]
      %v306 = vld [vmem:[%s288 + $0x38] sm:$0xff]
      %v307 = vld [vmem:[%s288 + $0x40] sm:$0xff]
      %v308 = vld [vmem:[%s288 + $0x48] sm:$0xff]
      %v309 = vld [vmem:[%s288 + $0x50] sm:$0xff]
      %v310 = vld [vmem:[%s288 + $0x58] sm:$0xff]
      %v311 = vld [vmem:[%s288 + $0x60] sm:$0xff]
      %v312 = vld [vmem:[%s288 + $0x68] sm:$0xff]
      %v313 = vld [vmem:[%s288 + $0x70] sm:$0xff]
      %v314 = vld [vmem:[%s288 + $0x78] sm:$0xff]
      %v315 = vld [vmem:[%s288 + $0x80] sm:$0xff]
      %v316 = vld [vmem:[%s288 + $0x88] sm:$0xff]
      %v317 = vld [vmem:[%s288 + $0x90] sm:$0xff]
      %v318 = vld [vmem:[%s288 + $0x98] sm:$0xff]
      %v319 = vld [vmem:[%s288 + $0xa0] sm:$0xff]
      %v320 = vld [vmem:[%s288 + $0xa8] sm:$0xff]
      %v321 = vld [vmem:[%s288 + $0xb0] sm:$0xff]
      %v322 = vld [vmem:[%s288 + $0xb8] sm:$0xff]
      %v323 = vld [vmem:[%s288 + $0xc0] sm:$0xff]
      %v324 = vld [vmem:[%s288 + $0xc8] sm:$0xff]
      %v325 = vld [vmem:[%s288 + $0xd0] sm:$0xff]
      %v326 = vld [vmem:[%s288 + $0xd8] sm:$0xff]
      %v327 = vld [vmem:[%s288 + $0xe0] sm:$0xff]
      %v328 = vld [vmem:[%s288 + $0xe8] sm:$0xff]
      %v329 = vld [vmem:[%s288 + $0xf0] sm:$0xff]
      %v330 = vld [vmem:[%s288 + $0xf8] sm:$0xff]
      %v331 = vld [vmem:[%s288 + $0x100] sm:$0xff]
      %v332 = vld [vmem:[%s288 + $0x108] sm:$0xff]
      %v333 = vld [vmem:[%s288 + $0x110] sm:$0xff]
      %v334 = vld [vmem:[%s288 + $0x118] sm:$0xff]
      %v335 = vld [vmem:[%s1] sm:$0xff]
      %v336 = vld [vmem:[%s1 + $0x8] sm:$0xff]
      %v337 = vld [vmem:[%s288 + $0x1] sm:$0xff]
      %v338 = vld [vmem:[%s288 + $0x9] sm:$0xff]
      %v339 = vld [vmem:[%s288 + $0x11] sm:$0xff]
      %v340 = vld [vmem:[%s288 + $0x19] sm:$0xff]
      %v341 = vld [vmem:[%s288 + $0x21] sm:$0xff]
      %v342 = vld [vmem:[%s288 + $0x29] sm:$0xff]
      %v343 = vld [vmem:[%s288 + $0x31] sm:$0xff]
      %v344 = vld [vmem:[%s288 + $0x39] sm:$0xff]
      %v345 = vld [vmem:[%s288 + $0x41] sm:$0xff]
      %v346 = vld [vmem:[%s288 + $0x49] sm:$0xff]
      %v347 = vld [vmem:[%s288 + $0x51] sm:$0xff]
      %v348 = vld [vmem:[%s288 + $0x59] sm:$0xff]
      %v349 = vld [vmem:[%s288 + $0x61] sm:$0xff]
      %v350 = vld [vmem:[%s288 + $0x69] sm:$0xff]
      %v351 = vld [vmem:[%s288 + $0x71] sm:$0xff]
      %v352 = vld [vmem:[%s288 + $0x79] sm:$0xff]
      %v353 = vld [vmem:[%s288 + $0x81] sm:$0xff]
      %v354 = vld [vmem:[%s288 + $0x89] sm:$0xff]
      %v355 = vld [vmem:[%s288 + $0x91] sm:$0xff]
      %v356 = vld [vmem:[%s288 + $0x99] sm:$0xff]
      %v357 = vld [vmem:[%s288 + $0xa1] sm:$0xff]
      %v358 = vld [vmem:[%s288 + $0xa9] sm:$0xff]
      %v359 = vld [vmem:[%s288 + $0xb1] sm:$0xff]
      %v360 = vld [vmem:[%s288 + $0xb9] sm:$0xff]
      %v361 = vld [vmem:[%s288 + $0xc1] sm:$0xff]
      %v362 = vld [vmem:[%s288 + $0xc9] sm:$0xff]
      %v363 = vld [vmem:[%s288 + $0xd1] sm:$0xff]
      %v364 = vld [vmem:[%s288 + $0xd9] sm:$0xff]
      %v365 = vld [vmem:[%s288 + $0xe1] sm:$0xff]
      %v366 = vld [vmem:[%s288 + $0xe9] sm:$0xff]
      %v367 = vld [vmem:[%s288 + $0xf1] sm:$0xff]
      %v368 = vld [vmem:[%s288 + $0xf9] sm:$0xff]
      %v369 = vld [vmem:[%s288 + $0x101] sm:$0xff]
      %v370 = vld [vmem:[%s288 + $0x109] sm:$0xff]
      %v371 = vld [vmem:[%s288 + $0x111] sm:$0xff]
      %v372 = vld [vmem:[%s288 + $0x119] sm:$0xff]
      %s373 = scalar_lea.vmem %s1, 16
      %v374 = vld [vmem:[%s373] sm:$0xff]
      %v375 = vld [vmem:[%s373 + $0x8] sm:$0xff]
      %vm376 = vcmask 130048
      %v378 = vsel %vm376, %v337, 0
      %v381 = vsel %vm376, %v338, 0
      %v384 = vsel %vm376, %v339, 0
      %v387 = vsel %vm376, %v340, 0
      %v390 = vsel %vm376, %v341, 0
      %v393 = vsel %vm376, %v342, 0
      %v396 = vsel %vm376, %v343, 0
      %v399 = vsel %vm376, %v344, 0
      %v402 = vsel %vm376, %v345, 0
      %v405 = vsel %vm376, %v346, 0
      %v408 = vsel %vm376, %v347, 0
      %v411 = vsel %vm376, %v348, 0
      %v414 = vsel %vm376, %v349, 0
      %v417 = vsel %vm376, %v350, 0
      %v420 = vsel %vm376, %v351, 0
      %v423 = vsel %vm376, %v352, 0
      %v426 = vsel %vm376, %v353, 0
      %v429 = vsel %vm376, %v354, 0
      %v432 = vsel %vm376, %v355, 0
      %v435 = vsel %vm376, %v356, 0
      %v438 = vsel %vm376, %v357, 0
      %v441 = vsel %vm376, %v358, 0
      %v444 = vsel %vm376, %v359, 0
      %v447 = vsel %vm376, %v360, 0
      %v450 = vsel %vm376, %v361, 0
      %v453 = vsel %vm376, %v362, 0
      %v456 = vsel %vm376, %v363, 0
      %v459 = vsel %vm376, %v364, 0
      %v462 = vsel %vm376, %v365, 0
      %v465 = vsel %vm376, %v366, 0
      %v468 = vsel %vm376, %v367, 0
      %v471 = vsel %vm376, %v368, 0
      %v474 = vsel %vm376, %v369, 0
      %v477 = vsel %vm376, %v370, 0
      %v480 = vsel %vm376, %v371, 0
      %v483 = vsel %vm376, %v372, 0
      %485 = vmatprep.subr.mxu0 0.0
      %486 = vmatpush1.msra.mxu0 %v374
      %487 = vmatprep.subr.mxu0 0.0
      %488 = vmatpush1.msra.mxu0 %v375
      %489 = vmatprep.subr.mxu0 0.0
      %490 = vmatpush1.msra.mxu0 0.0
      %491 = vmatprep.subr.mxu0 0.0
      %492 = vmatpush1.msra.mxu0 0.0
      %493 = vmatprep.subr.mxu0 0.0
      %494 = vmatpush1.msra.mxu0 0.0
      %495 = vmatprep.subr.mxu0 0.0
      %496 = vmatpush1.msra.mxu0 0.0
      %497 = vmatprep.subr.mxu0 0.0
      %498 = vmatpush1.msra.mxu0 0.0
      %499 = vmatprep.subr.mxu0 0.0
      %500 = vmatpush1.msra.mxu0 0.0
      %501 = vmatprep.subr.mxu0 0.0
      %502 = vmatpush1.msra.mxu0 0.0
      %503 = vmatprep.subr.mxu0 0.0
      %504 = vmatpush1.msra.mxu0 0.0
      %505 = vmatprep.subr.mxu0 0.0
      %506 = vmatpush1.msra.mxu0 0.0
      %507 = vmatprep.subr.mxu0 0.0
      %508 = vmatpush1.msra.mxu0 0.0
      %509 = vmatprep.subr.mxu0 0.0
      %510 = vmatpush1.msra.mxu0 0.0
      %511 = vmatprep.subr.mxu0 0.0
      %512 = vmatpush1.msra.mxu0 0.0
      %513 = vmatprep.subr.mxu0 0.0
      %514 = vmatpush1.msra.mxu0 0.0
      %515 = vmatprep.subr.mxu0 0.0
      %516 = vmatpush1.msra.mxu0 0.0
      %517 = vmatprep.subr.mxu0 0.0
      %518 = vmatpush1.msra.mxu0 0.0
      %519 = vmatprep.subr.mxu0 0.0
      %520 = vmatpush1.msra.mxu0 0.0
      %521 = vmatprep.subr.mxu0 0.0
      %522 = vmatpush1.msra.mxu0 0.0
      %523 = vmatprep.subr.mxu0 0.0
      %524 = vmatpush1.msra.mxu0 0.0
      %525 = vmatprep.subr.mxu0 0.0
      %526 = vmatpush1.msra.mxu0 0.0
      %527 = vmatprep.subr.mxu0 0.0
      %528 = vmatpush1.msra.mxu0 0.0
      %529 = vmatprep.subr.mxu0 0.0
      %530 = vmatpush1.msra.mxu0 0.0
      %531 = vmatprep.subr.mxu0 0.0
      %532 = vmatpush1.msra.mxu0 0.0
      %533 = vmatprep.subr.mxu0 0.0
      %534 = vmatpush1.msra.mxu0 0.0
      %535 = vmatprep.subr.mxu0 0.0
      %536 = vmatpush1.msra.mxu0 0.0
      %537 = vmatprep.subr.mxu0 0.0
      %538 = vmatpush1.msra.mxu0 0.0
      %539 = vmatprep.subr.mxu0 0.0
      %540 = vmatpush1.msra.mxu0 0.0
      %541 = vmatprep.subr.mxu0 0.0
      %542 = vmatpush1.msra.mxu0 0.0
      %543 = vmatprep.subr.mxu0 0.0
      %544 = vmatpush1.msra.mxu0 0.0
      %545 = vmatprep.subr.mxu0 0.0
      %546 = vmatpush1.msra.mxu0 0.0
      %547 = vmatprep.subr.mxu0 0.0
      %548 = vmatpush1.msra.mxu0 0.0
      %549 = vmatprep.mubr.f32.mxu0 0.0
      %550 = vmatmul.mubr.f32.gmra.mrb[0].mxu0 %v378
      %v551 = vpop.f32.mrb[0].mxu0
      %v552 = vadd.f32 0.0, %v551
      %v553 = vpop.f32.mrb[0].mxu0
      %554 = vmatprep.mubr.f32.mxu0 0.0
      %555 = vmatmul.mubr.f32.gmra.mrb[0].mxu0 %v381
      %v556 = vpop.f32.mrb[0].mxu0
      %v557 = vadd.f32 0.0, %v556
      %v558 = vpop.f32.mrb[0].mxu0
      %559 = vmatprep.mubr.f32.mxu0 0.0
      %560 = vmatmul.mubr.f32.gmra.mrb[0].mxu0 %v384
      %v561 = vpop.f32.mrb[0].mxu0
      %v562 = vadd.f32 0.0, %v561
      %v563 = vpop.f32.mrb[0].mxu0
      %564 = vmatprep.mubr.f32.mxu0 0.0
      %565 = vmatmul.mubr.f32.gmra.mrb[0].mxu0 %v387
      %v566 = vpop.f32.mrb[0].mxu0
      %v567 = vadd.f32 0.0, %v566
      %v568 = vpop.f32.mrb[0].mxu0
      %569 = vmatprep.mubr.f32.mxu0 0.0
      %570 = vmatmul.mubr.f32.gmra.mrb[0].mxu0 %v390
      %v571 = vpop.f32.mrb[0].mxu0
      %v572 = vadd.f32 0.0, %v571
      %v573 = vpop.f32.mrb[0].mxu0
      %574 = vmatprep.mubr.f32.mxu0 0.0
      %575 = vmatmul.mubr.f32.gmra.mrb[0].mxu0 %v393
      %v576 = vpop.f32.mrb[0].mxu0
      %v577 = vadd.f32 0.0, %v576
      %v578 = vpop.f32.mrb[0].mxu0
      %579 = vmatprep.mubr.f32.mxu0 0.0
      %580 = vmatmul.mubr.f32.gmra.mrb[0].mxu0 %v396
      %v581 = vpop.f32.mrb[0].mxu0
      %v582 = vadd.f32 0.0, %v581
      %v583 = vpop.f32.mrb[0].mxu0
      %584 = vmatprep.mubr.f32.mxu0 0.0
      %585 = vmatmul.mubr.f32.gmra.mrb[0].mxu0 %v399
      %v586 = vpop.f32.mrb[0].mxu0
      %v587 = vadd.f32 0.0, %v586
      %v588 = vpop.f32.mrb[0].mxu0
      %589 = vmatprep.mubr.f32.mxu0 0.0
      %590 = vmatmul.mubr.f32.gmra.mrb[0].mxu0 %v402
      %v591 = vpop.f32.mrb[0].mxu0
      %v592 = vadd.f32 0.0, %v591
      %v593 = vpop.f32.mrb[0].mxu0
      %594 = vmatprep.mubr.f32.mxu0 0.0
      %595 = vmatmul.mubr.f32.gmra.mrb[0].mxu0 %v405
      %v596 = vpop.f32.mrb[0].mxu0
      %v597 = vadd.f32 0.0, %v596
      %v598 = vpop.f32.mrb[0].mxu0
      %599 = vmatprep.mubr.f32.mxu0 0.0
      %600 = vmatmul.mubr.f32.gmra.mrb[0].mxu0 %v408
      %v601 = vpop.f32.mrb[0].mxu0
      %v602 = vadd.f32 0.0, %v601
      %v603 = vpop.f32.mrb[0].mxu0
      %604 = vmatprep.mubr.f32.mxu0 0.0
      %605 = vmatmul.mubr.f32.gmra.mrb[0].mxu0 %v411
      %v606 = vpop.f32.mrb[0].mxu0
      %v607 = vadd.f32 0.0, %v606
      %v608 = vpop.f32.mrb[0].mxu0
      %609 = vmatprep.mubr.f32.mxu0 0.0
      %610 = vmatmul.mubr.f32.gmra.mrb[0].mxu0 %v414
      %v611 = vpop.f32.mrb[0].mxu0
      %v612 = vadd.f32 0.0, %v611
      %v613 = vpop.f32.mrb[0].mxu0
      %614 = vmatprep.mubr.f32.mxu0 0.0
      %615 = vmatmul.mubr.f32.gmra.mrb[0].mxu0 %v417
      %v616 = vpop.f32.mrb[0].mxu0
      %v617 = vadd.f32 0.0, %v616
      %v618 = vpop.f32.mrb[0].mxu0
      %619 = vmatprep.mubr.f32.mxu0 0.0
      %620 = vmatmul.mubr.f32.gmra.mrb[0].mxu0 %v420
      %v621 = vpop.f32.mrb[0].mxu0
      %v622 = vadd.f32 0.0, %v621
      %v623 = vpop.f32.mrb[0].mxu0
      %624 = vmatprep.mubr.f32.mxu0 0.0
      %625 = vmatmul.mubr.f32.gmra.mrb[0].mxu0 %v423
      %v626 = vpop.f32.mrb[0].mxu0
      %v627 = vadd.f32 0.0, %v626
      %v628 = vpop.f32.mrb[0].mxu0
      %629 = vmatprep.mubr.f32.mxu0 0.0
      %630 = vmatmul.mubr.f32.gmra.mrb[0].mxu0 %v426
      %v631 = vpop.f32.mrb[0].mxu0
      %v632 = vadd.f32 0.0, %v631
      %v633 = vpop.f32.mrb[0].mxu0
      %634 = vmatprep.mubr.f32.mxu0 0.0
      %635 = vmatmul.mubr.f32.gmra.mrb[0].mxu0 %v429
      %v636 = vpop.f32.mrb[0].mxu0
      %v637 = vadd.f32 0.0, %v636
      %v638 = vpop.f32.mrb[0].mxu0
      %639 = vmatprep.mubr.f32.mxu0 0.0
      %640 = vmatmul.mubr.f32.gmra.mrb[0].mxu0 %v432
      %v641 = vpop.f32.mrb[0].mxu0
      %v642 = vadd.f32 0.0, %v641
      %v643 = vpop.f32.mrb[0].mxu0
      %644 = vmatprep.mubr.f32.mxu0 0.0
      %645 = vmatmul.mubr.f32.gmra.mrb[0].mxu0 %v435
      %v646 = vpop.f32.mrb[0].mxu0
      %v647 = vadd.f32 0.0, %v646
      %v648 = vpop.f32.mrb[0].mxu0
      %649 = vmatprep.mubr.f32.mxu0 0.0
      %650 = vmatmul.mubr.f32.gmra.mrb[0].mxu0 %v438
      %v651 = vpop.f32.mrb[0].mxu0
      %v652 = vadd.f32 0.0, %v651
      %v653 = vpop.f32.mrb[0].mxu0
      %654 = vmatprep.mubr.f32.mxu0 0.0
      %655 = vmatmul.mubr.f32.gmra.mrb[0].mxu0 %v441
      %v656 = vpop.f32.mrb[0].mxu0
      %v657 = vadd.f32 0.0, %v656
      %v658 = vpop.f32.mrb[0].mxu0
      %659 = vmatprep.mubr.f32.mxu0 0.0
      %660 = vmatmul.mubr.f32.gmra.mrb[0].mxu0 %v444
      %v661 = vpop.f32.mrb[0].mxu0
      %v662 = vadd.f32 0.0, %v661
      %v663 = vpop.f32.mrb[0].mxu0
      %664 = vmatprep.mubr.f32.mxu0 0.0
      %665 = vmatmul.mubr.f32.gmra.mrb[0].mxu0 %v447
      %v666 = vpop.f32.mrb[0].mxu0
      %v667 = vadd.f32 0.0, %v666
      %v668 = vpop.f32.mrb[0].mxu0
      %669 = vmatprep.mubr.f32.mxu0 0.0
      %670 = vmatmul.mubr.f32.gmra.mrb[0].mxu0 %v450
      %v671 = vpop.f32.mrb[0].mxu0
      %v672 = vadd.f32 0.0, %v671
      %v673 = vpop.f32.mrb[0].mxu0
      %674 = vmatprep.mubr.f32.mxu0 0.0
      %675 = vmatmul.mubr.f32.gmra.mrb[0].mxu0 %v453
      %v676 = vpop.f32.mrb[0].mxu0
      %v677 = vadd.f32 0.0, %v676
      %v678 = vpop.f32.mrb[0].mxu0
      %679 = vmatprep.mubr.f32.mxu0 0.0
      %680 = vmatmul.mubr.f32.gmra.mrb[0].mxu0 %v456
      %v681 = vpop.f32.mrb[0].mxu0
      %v682 = vadd.f32 0.0, %v681
      %v683 = vpop.f32.mrb[0].mxu0
      %684 = vmatprep.mubr.f32.mxu0 0.0
      %685 = vmatmul.mubr.f32.gmra.mrb[0].mxu0 %v459
      %v686 = vpop.f32.mrb[0].mxu0
      %v687 = vadd.f32 0.0, %v686
      %v688 = vpop.f32.mrb[0].mxu0
      %689 = vmatprep.mubr.f32.mxu0 0.0
      %690 = vmatmul.mubr.f32.gmra.mrb[0].mxu0 %v462
      %v691 = vpop.f32.mrb[0].mxu0
      %v692 = vadd.f32 0.0, %v691
      %v693 = vpop.f32.mrb[0].mxu0
      %694 = vmatprep.mubr.f32.mxu0 0.0
      %695 = vmatmul.mubr.f32.gmra.mrb[0].mxu0 %v465
      %v696 = vpop.f32.mrb[0].mxu0
      %v697 = vadd.f32 0.0, %v696
      %v698 = vpop.f32.mrb[0].mxu0
      %699 = vmatprep.mubr.f32.mxu0 0.0
      %700 = vmatmul.mubr.f32.gmra.mrb[0].mxu0 %v468
      %v701 = vpop.f32.mrb[0].mxu0
      %v702 = vadd.f32 0.0, %v701
      %v703 = vpop.f32.mrb[0].mxu0
      %704 = vmatprep.mubr.f32.mxu0 0.0
      %705 = vmatmul.mubr.f32.gmra.mrb[0].mxu0 %v471
      %v706 = vpop.f32.mrb[0].mxu0
      %v707 = vadd.f32 0.0, %v706
      %v708 = vpop.f32.mrb[0].mxu0
      %709 = vmatprep.mubr.f32.mxu0 0.0
      %710 = vmatmul.mubr.f32.gmra.mrb[0].mxu0 %v474
      %v711 = vpop.f32.mrb[0].mxu0
      %v712 = vadd.f32 0.0, %v711
      %v713 = vpop.f32.mrb[0].mxu0
      %714 = vmatprep.mubr.f32.mxu0 0.0
      %715 = vmatmul.mubr.f32.gmra.mrb[0].mxu0 %v477
      %v716 = vpop.f32.mrb[0].mxu0
      %v717 = vadd.f32 0.0, %v716
      %v718 = vpop.f32.mrb[0].mxu0
      %719 = vmatprep.mubr.f32.mxu0 0.0
      %720 = vmatmul.mubr.f32.gmra.mrb[0].mxu0 %v480
      %v721 = vpop.f32.mrb[0].mxu0
      %v722 = vadd.f32 0.0, %v721
      %v723 = vpop.f32.mrb[0].mxu0
      %724 = vmatprep.mubr.f32.mxu0 0.0
      %725 = vmatmul.mubr.f32.gmra.mrb[0].mxu0 %v483
      %v726 = vpop.f32.mrb[0].mxu0
      %v727 = vadd.f32 0.0, %v726
      %v728 = vpop.f32.mrb[0].mxu0
      %729 = vdwg.mxu0
      %v731 = vsel %vm376, %v299, 0
      %v734 = vsel %vm376, %v300, 0
      %v737 = vsel %vm376, %v301, 0
      %v740 = vsel %vm376, %v302, 0
      %v743 = vsel %vm376, %v303, 0
      %v746 = vsel %vm376, %v304, 0
      %v749 = vsel %vm376, %v305, 0
      %v752 = vsel %vm376, %v306, 0
      %v755 = vsel %vm376, %v307, 0
      %v758 = vsel %vm376, %v308, 0
      %v761 = vsel %vm376, %v309, 0
      %v764 = vsel %vm376, %v310, 0
      %v767 = vsel %vm376, %v311, 0
      %v770 = vsel %vm376, %v312, 0
      %v773 = vsel %vm376, %v313, 0
      %v776 = vsel %vm376, %v314, 0
      %v779 = vsel %vm376, %v315, 0
      %v782 = vsel %vm376, %v316, 0
      %v785 = vsel %vm376, %v317, 0
      %v788 = vsel %vm376, %v318, 0
      %v791 = vsel %vm376, %v319, 0
      %v794 = vsel %vm376, %v320, 0
      %v797 = vsel %vm376, %v321, 0
      %v800 = vsel %vm376, %v322, 0
      %v803 = vsel %vm376, %v323, 0
      %v806 = vsel %vm376, %v324, 0
      %v809 = vsel %vm376, %v325, 0
      %v812 = vsel %vm376, %v326, 0
      %v815 = vsel %vm376, %v327, 0
      %v818 = vsel %vm376, %v328, 0
      %v821 = vsel %vm376, %v329, 0
      %v824 = vsel %vm376, %v330, 0
      %v827 = vsel %vm376, %v331, 0
      %v830 = vsel %vm376, %v332, 0
      %v833 = vsel %vm376, %v333, 0
      %v836 = vsel %vm376, %v334, 0
      %838 = vmatprep.subr.mxu0 0.0
      %839 = vmatpush1.msra.mxu0 %v335
      %840 = vmatprep.subr.mxu0 0.0
      %841 = vmatpush1.msra.mxu0 %v336
      %842 = vmatprep.subr.mxu0 0.0
      %843 = vmatpush1.msra.mxu0 0.0
      %844 = vmatprep.subr.mxu0 0.0
      %845 = vmatpush1.msra.mxu0 0.0
      %846 = vmatprep.subr.mxu0 0.0
      %847 = vmatpush1.msra.mxu0 0.0
      %848 = vmatprep.subr.mxu0 0.0
      %849 = vmatpush1.msra.mxu0 0.0
      %850 = vmatprep.subr.mxu0 0.0
      %851 = vmatpush1.msra.mxu0 0.0
      %852 = vmatprep.subr.mxu0 0.0
      %853 = vmatpush1.msra.mxu0 0.0
      %854 = vmatprep.subr.mxu0 0.0
      %855 = vmatpush1.msra.mxu0 0.0
      %856 = vmatprep.subr.mxu0 0.0
      %857 = vmatpush1.msra.mxu0 0.0
      %858 = vmatprep.subr.mxu0 0.0
      %859 = vmatpush1.msra.mxu0 0.0
      %860 = vmatprep.subr.mxu0 0.0
      %861 = vmatpush1.msra.mxu0 0.0
      %862 = vmatprep.subr.mxu0 0.0
      %863 = vmatpush1.msra.mxu0 0.0
      %864 = vmatprep.subr.mxu0 0.0
      %865 = vmatpush1.msra.mxu0 0.0
      %866 = vmatprep.subr.mxu0 0.0
      %867 = vmatpush1.msra.mxu0 0.0
      %868 = vmatprep.subr.mxu0 0.0
      %869 = vmatpush1.msra.mxu0 0.0
      %870 = vmatprep.subr.mxu0 0.0
      %871 = vmatpush1.msra.mxu0 0.0
      %872 = vmatprep.subr.mxu0 0.0
      %873 = vmatpush1.msra.mxu0 0.0
      %874 = vmatprep.subr.mxu0 0.0
      %875 = vmatpush1.msra.mxu0 0.0
      %876 = vmatprep.subr.mxu0 0.0
      %877 = vmatpush1.msra.mxu0 0.0
      %878 = vmatprep.subr.mxu0 0.0
      %879 = vmatpush1.msra.mxu0 0.0
      %880 = vmatprep.subr.mxu0 0.0
      %881 = vmatpush1.msra.mxu0 0.0
      %882 = vmatprep.subr.mxu0 0.0
      %883 = vmatpush1.msra.mxu0 0.0
      %884 = vmatprep.subr.mxu0 0.0
      %885 = vmatpush1.msra.mxu0 0.0
      %886 = vmatprep.subr.mxu0 0.0
      %887 = vmatpush1.msra.mxu0 0.0
      %888 = vmatprep.subr.mxu0 0.0
      %889 = vmatpush1.msra.mxu0 0.0
      %890 = vmatprep.subr.mxu0 0.0
      %891 = vmatpush1.msra.mxu0 0.0
      %892 = vmatprep.subr.mxu0 0.0
      %893 = vmatpush1.msra.mxu0 0.0
      %894 = vmatprep.subr.mxu0 0.0
      %895 = vmatpush1.msra.mxu0 0.0
      %896 = vmatprep.subr.mxu0 0.0
      %897 = vmatpush1.msra.mxu0 0.0
      %898 = vmatprep.subr.mxu0 0.0
      %899 = vmatpush1.msra.mxu0 0.0
      %900 = vmatprep.subr.mxu0 0.0
      %901 = vmatpush1.msra.mxu0 0.0
      %902 = vmatprep.mubr.f32.mxu0 0.0
      %903 = vmatmul.mubr.f32.gmra.mrb[0].mxu0 %v731
      %v904 = vpop.f32.mrb[0].mxu0
      %v905 = vadd.f32 %v552, %v904
      %v906 = vpop.f32.mrb[0].mxu0
      %907 = vmatprep.mubr.f32.mxu0 0.0
      %908 = vmatmul.mubr.f32.gmra.mrb[0].mxu0 %v734
      %v909 = vpop.f32.mrb[0].mxu0
      %v910 = vadd.f32 %v557, %v909
      %v911 = vpop.f32.mrb[0].mxu0
      %912 = vmatprep.mubr.f32.mxu0 0.0
      %913 = vmatmul.mubr.f32.gmra.mrb[0].mxu0 %v737
      %v914 = vpop.f32.mrb[0].mxu0
      %v915 = vadd.f32 %v562, %v914
      %v916 = vpop.f32.mrb[0].mxu0
      %917 = vmatprep.mubr.f32.mxu0 0.0
      %918 = vmatmul.mubr.f32.gmra.mrb[0].mxu0 %v740
      %v919 = vpop.f32.mrb[0].mxu0
      %v920 = vadd.f32 %v567, %v919
      %v921 = vpop.f32.mrb[0].mxu0
      %922 = vmatprep.mubr.f32.mxu0 0.0
      %923 = vmatmul.mubr.f32.gmra.mrb[0].mxu0 %v743
      %v924 = vpop.f32.mrb[0].mxu0
      %v925 = vadd.f32 %v572, %v924
      %v926 = vpop.f32.mrb[0].mxu0
      %927 = vmatprep.mubr.f32.mxu0 0.0
      %928 = vmatmul.mubr.f32.gmra.mrb[0].mxu0 %v746
      %v929 = vpop.f32.mrb[0].mxu0
      %v930 = vadd.f32 %v577, %v929
      %v931 = vpop.f32.mrb[0].mxu0
      %932 = vmatprep.mubr.f32.mxu0 0.0
      %933 = vmatmul.mubr.f32.gmra.mrb[0].mxu0 %v749
      %v934 = vpop.f32.mrb[0].mxu0
      %v935 = vadd.f32 %v582, %v934
      %v936 = vpop.f32.mrb[0].mxu0
      %937 = vmatprep.mubr.f32.mxu0 0.0
      %938 = vmatmul.mubr.f32.gmra.mrb[0].mxu0 %v752
      %v939 = vpop.f32.mrb[0].mxu0
      %v940 = vadd.f32 %v587, %v939
      %v941 = vpop.f32.mrb[0].mxu0
      %942 = vmatprep.mubr.f32.mxu0 0.0
      %943 = vmatmul.mubr.f32.gmra.mrb[0].mxu0 %v755
      %v944 = vpop.f32.mrb[0].mxu0
      %v945 = vadd.f32 %v592, %v944
      %v946 = vpop.f32.mrb[0].mxu0
      %947 = vmatprep.mubr.f32.mxu0 0.0
      %948 = vmatmul.mubr.f32.gmra.mrb[0].mxu0 %v758
      %v949 = vpop.f32.mrb[0].mxu0
      %v950 = vadd.f32 %v597, %v949
      %v951 = vpop.f32.mrb[0].mxu0
      %952 = vmatprep.mubr.f32.mxu0 0.0
      %953 = vmatmul.mubr.f32.gmra.mrb[0].mxu0 %v761
      %v954 = vpop.f32.mrb[0].mxu0
      %v955 = vadd.f32 %v602, %v954
      %v956 = vpop.f32.mrb[0].mxu0
      %957 = vmatprep.mubr.f32.mxu0 0.0
      %958 = vmatmul.mubr.f32.gmra.mrb[0].mxu0 %v764
      %v959 = vpop.f32.mrb[0].mxu0
      %v960 = vadd.f32 %v607, %v959
      %v961 = vpop.f32.mrb[0].mxu0
      %962 = vmatprep.mubr.f32.mxu0 0.0
      %963 = vmatmul.mubr.f32.gmra.mrb[0].mxu0 %v767
      %v964 = vpop.f32.mrb[0].mxu0
      %v965 = vadd.f32 %v612, %v964
      %v966 = vpop.f32.mrb[0].mxu0
      %967 = vmatprep.mubr.f32.mxu0 0.0
      %968 = vmatmul.mubr.f32.gmra.mrb[0].mxu0 %v770
      %v969 = vpop.f32.mrb[0].mxu0
      %v970 = vadd.f32 %v617, %v969
      %v971 = vpop.f32.mrb[0].mxu0
      %972 = vmatprep.mubr.f32.mxu0 0.0
      %973 = vmatmul.mubr.f32.gmra.mrb[0].mxu0 %v773
      %v974 = vpop.f32.mrb[0].mxu0
      %v975 = vadd.f32 %v622, %v974
      %v976 = vpop.f32.mrb[0].mxu0
      %977 = vmatprep.mubr.f32.mxu0 0.0
      %978 = vmatmul.mubr.f32.gmra.mrb[0].mxu0 %v776
      %v979 = vpop.f32.mrb[0].mxu0
      %v980 = vadd.f32 %v627, %v979
      %v981 = vpop.f32.mrb[0].mxu0
      %982 = vmatprep.mubr.f32.mxu0 0.0
      %983 = vmatmul.mubr.f32.gmra.mrb[0].mxu0 %v779
      %v984 = vpop.f32.mrb[0].mxu0
      %v985 = vadd.f32 %v632, %v984
      %v986 = vpop.f32.mrb[0].mxu0
      %987 = vmatprep.mubr.f32.mxu0 0.0
      %988 = vmatmul.mubr.f32.gmra.mrb[0].mxu0 %v782
      %v989 = vpop.f32.mrb[0].mxu0
      %v990 = vadd.f32 %v637, %v989
      %v991 = vpop.f32.mrb[0].mxu0
      %992 = vmatprep.mubr.f32.mxu0 0.0
      %993 = vmatmul.mubr.f32.gmra.mrb[0].mxu0 %v785
      %v994 = vpop.f32.mrb[0].mxu0
      %v995 = vadd.f32 %v642, %v994
      %v996 = vpop.f32.mrb[0].mxu0
      %997 = vmatprep.mubr.f32.mxu0 0.0
      %998 = vmatmul.mubr.f32.gmra.mrb[0].mxu0 %v788
      %v999 = vpop.f32.mrb[0].mxu0
      %v1000 = vadd.f32 %v647, %v999
      %v1001 = vpop.f32.mrb[0].mxu0
      %1002 = vmatprep.mubr.f32.mxu0 0.0
      %1003 = vmatmul.mubr.f32.gmra.mrb[0].mxu0 %v791
      %v1004 = vpop.f32.mrb[0].mxu0
      %v1005 = vadd.f32 %v652, %v1004
      %v1006 = vpop.f32.mrb[0].mxu0
      %1007 = vmatprep.mubr.f32.mxu0 0.0
      %1008 = vmatmul.mubr.f32.gmra.mrb[0].mxu0 %v794
      %v1009 = vpop.f32.mrb[0].mxu0
      %v1010 = vadd.f32 %v657, %v1009
      %v1011 = vpop.f32.mrb[0].mxu0
      %1012 = vmatprep.mubr.f32.mxu0 0.0
      %1013 = vmatmul.mubr.f32.gmra.mrb[0].mxu0 %v797
      %v1014 = vpop.f32.mrb[0].mxu0
      %v1015 = vadd.f32 %v662, %v1014
      %v1016 = vpop.f32.mrb[0].mxu0
      %1017 = vmatprep.mubr.f32.mxu0 0.0
      %1018 = vmatmul.mubr.f32.gmra.mrb[0].mxu0 %v800
      %v1019 = vpop.f32.mrb[0].mxu0
      %v1020 = vadd.f32 %v667, %v1019
      %v1021 = vpop.f32.mrb[0].mxu0
      %1022 = vmatprep.mubr.f32.mxu0 0.0
      %1023 = vmatmul.mubr.f32.gmra.mrb[0].mxu0 %v803
      %v1024 = vpop.f32.mrb[0].mxu0
      %v1025 = vadd.f32 %v672, %v1024
      %v1026 = vpop.f32.mrb[0].mxu0
      %1027 = vmatprep.mubr.f32.mxu0 0.0
      %1028 = vmatmul.mubr.f32.gmra.mrb[0].mxu0 %v806
      %v1029 = vpop.f32.mrb[0].mxu0
      %v1030 = vadd.f32 %v677, %v1029
      %v1031 = vpop.f32.mrb[0].mxu0
      %1032 = vmatprep.mubr.f32.mxu0 0.0
      %1033 = vmatmul.mubr.f32.gmra.mrb[0].mxu0 %v809
      %v1034 = vpop.f32.mrb[0].mxu0
      %v1035 = vadd.f32 %v682, %v1034
      %v1036 = vpop.f32.mrb[0].mxu0
      %1037 = vmatprep.mubr.f32.mxu0 0.0
      %1038 = vmatmul.mubr.f32.gmra.mrb[0].mxu0 %v812
      %v1039 = vpop.f32.mrb[0].mxu0
      %v1040 = vadd.f32 %v687, %v1039
      %v1041 = vpop.f32.mrb[0].mxu0
      %1042 = vmatprep.mubr.f32.mxu0 0.0
      %1043 = vmatmul.mubr.f32.gmra.mrb[0].mxu0 %v815
      %v1044 = vpop.f32.mrb[0].mxu0
      %v1045 = vadd.f32 %v692, %v1044
      %v1046 = vpop.f32.mrb[0].mxu0
      %1047 = vmatprep.mubr.f32.mxu0 0.0
      %1048 = vmatmul.mubr.f32.gmra.mrb[0].mxu0 %v818
      %v1049 = vpop.f32.mrb[0].mxu0
      %v1050 = vadd.f32 %v697, %v1049
      %v1051 = vpop.f32.mrb[0].mxu0
      %1052 = vmatprep.mubr.f32.mxu0 0.0
      %1053 = vmatmul.mubr.f32.gmra.mrb[0].mxu0 %v821
      %v1054 = vpop.f32.mrb[0].mxu0
      %v1055 = vadd.f32 %v702, %v1054
      %v1056 = vpop.f32.mrb[0].mxu0
      %1057 = vmatprep.mubr.f32.mxu0 0.0
      %1058 = vmatmul.mubr.f32.gmra.mrb[0].mxu0 %v824
      %v1059 = vpop.f32.mrb[0].mxu0
      %v1060 = vadd.f32 %v707, %v1059
      %v1061 = vpop.f32.mrb[0].mxu0
      %1062 = vmatprep.mubr.f32.mxu0 0.0
      %1063 = vmatmul.mubr.f32.gmra.mrb[0].mxu0 %v827
      %v1064 = vpop.f32.mrb[0].mxu0
      %v1065 = vadd.f32 %v712, %v1064
      %v1066 = vpop.f32.mrb[0].mxu0
      %1067 = vmatprep.mubr.f32.mxu0 0.0
      %1068 = vmatmul.mubr.f32.gmra.mrb[0].mxu0 %v830
      %v1069 = vpop.f32.mrb[0].mxu0
      %v1070 = vadd.f32 %v717, %v1069
      %v1071 = vpop.f32.mrb[0].mxu0
      %1072 = vmatprep.mubr.f32.mxu0 0.0
      %1073 = vmatmul.mubr.f32.gmra.mrb[0].mxu0 %v833
      %v1074 = vpop.f32.mrb[0].mxu0
      %v1075 = vadd.f32 %v722, %v1074
      %v1076 = vpop.f32.mrb[0].mxu0
      %1077 = vmatprep.mubr.f32.mxu0 0.0
      %1078 = vmatmul.mubr.f32.gmra.mrb[0].mxu0 %v836
      %v1079 = vpop.f32.mrb[0].mxu0
      %v1080 = vadd.f32 %v727, %v1079
      %v1081 = vpop.f32.mrb[0].mxu0
      %1082 = vdwg.mxu0
      %v1083 = vld [vmem:[%s288 + $0x2] sm:$0xff]
      %v1084 = vld [vmem:[%s288 + $0xa] sm:$0xff]
      %v1085 = vld [vmem:[%s288 + $0x12] sm:$0xff]
      %v1086 = vld [vmem:[%s288 + $0x1a] sm:$0xff]
      %v1087 = vld [vmem:[%s288 + $0x22] sm:$0xff]
      %v1088 = vld [vmem:[%s288 + $0x2a] sm:$0xff]
      %v1089 = vld [vmem:[%s288 + $0x32] sm:$0xff]
      %v1090 = vld [vmem:[%s288 + $0x3a] sm:$0xff]
      %v1091 = vld [vmem:[%s288 + $0x42] sm:$0xff]
      %v1092 = vld [vmem:[%s288 + $0x4a] sm:$0xff]
      %v1093 = vld [vmem:[%s288 + $0x52] sm:$0xff]
      %v1094 = vld [vmem:[%s288 + $0x5a] sm:$0xff]
      %v1095 = vld [vmem:[%s288 + $0x62] sm:$0xff]
      %v1096 = vld [vmem:[%s288 + $0x6a] sm:$0xff]
      %v1097 = vld [vmem:[%s288 + $0x72] sm:$0xff]
      %v1098 = vld [vmem:[%s288 + $0x7a] sm:$0xff]
      %v1099 = vld [vmem:[%s288 + $0x82] sm:$0xff]
      %v1100 = vld [vmem:[%s288 + $0x8a] sm:$0xff]
      %v1101 = vld [vmem:[%s288 + $0x92] sm:$0xff]
      %v1102 = vld [vmem:[%s288 + $0x9a] sm:$0xff]
      %v1103 = vld [vmem:[%s288 + $0xa2] sm:$0xff]
      %v1104 = vld [vmem:[%s288 + $0xaa] sm:$0xff]
      %v1105 = vld [vmem:[%s288 + $0xb2] sm:$0xff]
      %v1106 = vld [vmem:[%s288 + $0xba] sm:$0xff]
      %v1107 = vld [vmem:[%s288 + $0xc2] sm:$0xff]
      %v1108 = vld [vmem:[%s288 + $0xca] sm:$0xff]
      %v1109 = vld [vmem:[%s288 + $0xd2] sm:$0xff]
      %v1110 = vld [vmem:[%s288 + $0xda] sm:$0xff]
      %v1111 = vld [vmem:[%s288 + $0xe2] sm:$0xff]
      %v1112 = vld [vmem:[%s288 + $0xea] sm:$0xff]
      %v1113 = vld [vmem:[%s288 + $0xf2] sm:$0xff]
      %v1114 = vld [vmem:[%s288 + $0xfa] sm:$0xff]
      %v1115 = vld [vmem:[%s288 + $0x102] sm:$0xff]
      %v1116 = vld [vmem:[%s288 + $0x10a] sm:$0xff]
      %v1117 = vld [vmem:[%s288 + $0x112] sm:$0xff]
      %v1118 = vld [vmem:[%s288 + $0x11a] sm:$0xff]
      %s1119 = scalar_lea.vmem %s1, 32
      %v1120 = vld [vmem:[%s1119] sm:$0xff]
      %v1121 = vld [vmem:[%s1119 + $0x8] sm:$0xff]
      %v1123 = vsel %vm376, %v1083, 0
      %v1126 = vsel %vm376, %v1084, 0
      %v1129 = vsel %vm376, %v1085, 0
      %v1132 = vsel %vm376, %v1086, 0
      %v1135 = vsel %vm376, %v1087, 0
      %v1138 = vsel %vm376, %v1088, 0
      %v1141 = vsel %vm376, %v1089, 0
      %v1144 = vsel %vm376, %v1090, 0
      %v1147 = vsel %vm376, %v1091, 0
      %v1150 = vsel %vm376, %v1092, 0
      %v1153 = vsel %vm376, %v1093, 0
      %v1156 = vsel %vm376, %v1094, 0
      %v1159 = vsel %vm376, %v1095, 0
      %v1162 = vsel %vm376, %v1096, 0
      %v1165 = vsel %vm376, %v1097, 0
      %v1168 = vsel %vm376, %v1098, 0
      %v1171 = vsel %vm376, %v1099, 0
      %v1174 = vsel %vm376, %v1100, 0
      %v1177 = vsel %vm376, %v1101, 0
      %v1180 = vsel %vm376, %v1102, 0
      %v1183 = vsel %vm376, %v1103, 0
      %v1186 = vsel %vm376, %v1104, 0
      %v1189 = vsel %vm376, %v1105, 0
      %v1192 = vsel %vm376, %v1106, 0
      %v1195 = vsel %vm376, %v1107, 0
      %v1198 = vsel %vm376, %v1108, 0
      %v1201 = vsel %vm376, %v1109, 0
      %v1204 = vsel %vm376, %v1110, 0
      %v1207 = vsel %vm376, %v1111, 0
      %v1210 = vsel %vm376, %v1112, 0
      %v1213 = vsel %vm376, %v1113, 0
      %v1216 = vsel %vm376, %v1114, 0
      %v1219 = vsel %vm376, %v1115, 0
      %v1222 = vsel %vm376, %v1116, 0
      %v1225 = vsel %vm376, %v1117, 0
      %v1228 = vsel %vm376, %v1118, 0
      %1230 = vmatprep.subr.mxu0 0.0
      %1231 = vmatpush1.msra.mxu0 %v1120
      %1232 = vmatprep.subr.mxu0 0.0
      %1233 = vmatpush1.msra.mxu0 %v1121
      %1234 = vmatprep.subr.mxu0 0.0
      %1235 = vmatpush1.msra.mxu0 0.0
      %1236 = vmatprep.subr.mxu0 0.0
      %1237 = vmatpush1.msra.mxu0 0.0
      %1238 = vmatprep.subr.mxu0 0.0
      %1239 = vmatpush1.msra.mxu0 0.0
      %1240 = vmatprep.subr.mxu0 0.0
      %1241 = vmatpush1.msra.mxu0 0.0
      %1242 = vmatprep.subr.mxu0 0.0
      %1243 = vmatpush1.msra.mxu0 0.0
      %1244 = vmatprep.subr.mxu0 0.0
      %1245 = vmatpush1.msra.mxu0 0.0
      %1246 = vmatprep.subr.mxu0 0.0
      %1247 = vmatpush1.msra.mxu0 0.0
      %1248 = vmatprep.subr.mxu0 0.0
      %1249 = vmatpush1.msra.mxu0 0.0
      %1250 = vmatprep.subr.mxu0 0.0
      %1251 = vmatpush1.msra.mxu0 0.0
      %1252 = vmatprep.subr.mxu0 0.0
      %1253 = vmatpush1.msra.mxu0 0.0
      %1254 = vmatprep.subr.mxu0 0.0
      %1255 = vmatpush1.msra.mxu0 0.0
      %1256 = vmatprep.subr.mxu0 0.0
      %1257 = vmatpush1.msra.mxu0 0.0
      %1258 = vmatprep.subr.mxu0 0.0
      %1259 = vmatpush1.msra.mxu0 0.0
      %1260 = vmatprep.subr.mxu0 0.0
      %1261 = vmatpush1.msra.mxu0 0.0
      %1262 = vmatprep.subr.mxu0 0.0
      %1263 = vmatpush1.msra.mxu0 0.0
      %1264 = vmatprep.subr.mxu0 0.0
      %1265 = vmatpush1.msra.mxu0 0.0
      %1266 = vmatprep.subr.mxu0 0.0
      %1267 = vmatpush1.msra.mxu0 0.0
      %1268 = vmatprep.subr.mxu0 0.0
      %1269 = vmatpush1.msra.mxu0 0.0
      %1270 = vmatprep.subr.mxu0 0.0
      %1271 = vmatpush1.msra.mxu0 0.0
      %1272 = vmatprep.subr.mxu0 0.0
      %1273 = vmatpush1.msra.mxu0 0.0
      %1274 = vmatprep.subr.mxu0 0.0
      %1275 = vmatpush1.msra.mxu0 0.0
      %1276 = vmatprep.subr.mxu0 0.0
      %1277 = vmatpush1.msra.mxu0 0.0
      %1278 = vmatprep.subr.mxu0 0.0
      %1279 = vmatpush1.msra.mxu0 0.0
      %1280 = vmatprep.subr.mxu0 0.0
      %1281 = vmatpush1.msra.mxu0 0.0
      %1282 = vmatprep.subr.mxu0 0.0
      %1283 = vmatpush1.msra.mxu0 0.0
      %1284 = vmatprep.subr.mxu0 0.0
      %1285 = vmatpush1.msra.mxu0 0.0
      %1286 = vmatprep.subr.mxu0 0.0
      %1287 = vmatpush1.msra.mxu0 0.0
      %1288 = vmatprep.subr.mxu0 0.0
      %1289 = vmatpush1.msra.mxu0 0.0
      %1290 = vmatprep.subr.mxu0 0.0
      %1291 = vmatpush1.msra.mxu0 0.0
      %1292 = vmatprep.subr.mxu0 0.0
      %1293 = vmatpush1.msra.mxu0 0.0
      %1294 = vmatprep.mubr.f32.mxu0 0.0
      %1295 = vmatmul.mubr.f32.gmra.mrb[0].mxu0 %v1123
      %v1296 = vpop.f32.mrb[0].mxu0
      %v1297 = vadd.f32 0.0, %v1296
      %v1298 = vpop.f32.mrb[0].mxu0
      %1299 = vmatprep.mubr.f32.mxu0 0.0
      %1300 = vmatmul.mubr.f32.gmra.mrb[0].mxu0 %v1126
      %v1301 = vpop.f32.mrb[0].mxu0
      %v1302 = vadd.f32 0.0, %v1301
      %v1303 = vpop.f32.mrb[0].mxu0
      %1304 = vmatprep.mubr.f32.mxu0 0.0
      %1305 = vmatmul.mubr.f32.gmra.mrb[0].mxu0 %v1129
      %v1306 = vpop.f32.mrb[0].mxu0
      %v1307 = vadd.f32 0.0, %v1306
      %v1308 = vpop.f32.mrb[0].mxu0
      %1309 = vmatprep.mubr.f32.mxu0 0.0
      %1310 = vmatmul.mubr.f32.gmra.mrb[0].mxu0 %v1132
      %v1311 = vpop.f32.mrb[0].mxu0
      %v1312 = vadd.f32 0.0, %v1311
      %v1313 = vpop.f32.mrb[0].mxu0
      %1314 = vmatprep.mubr.f32.mxu0 0.0
      %1315 = vmatmul.mubr.f32.gmra.mrb[0].mxu0 %v1135
      %v1316 = vpop.f32.mrb[0].mxu0
      %v1317 = vadd.f32 0.0, %v1316
      %v1318 = vpop.f32.mrb[0].mxu0
      %1319 = vmatprep.mubr.f32.mxu0 0.0
      %1320 = vmatmul.mubr.f32.gmra.mrb[0].mxu0 %v1138
      %v1321 = vpop.f32.mrb[0].mxu0
      %v1322 = vadd.f32 0.0, %v1321
      %v1323 = vpop.f32.mrb[0].mxu0
      %1324 = vmatprep.mubr.f32.mxu0 0.0
      %1325 = vmatmul.mubr.f32.gmra.mrb[0].mxu0 %v1141
      %v1326 = vpop.f32.mrb[0].mxu0
      %v1327 = vadd.f32 0.0, %v1326
      %v1328 = vpop.f32.mrb[0].mxu0
      %1329 = vmatprep.mubr.f32.mxu0 0.0
      %1330 = vmatmul.mubr.f32.gmra.mrb[0].mxu0 %v1144
      %v1331 = vpop.f32.mrb[0].mxu0
      %v1332 = vadd.f32 0.0, %v1331
      %v1333 = vpop.f32.mrb[0].mxu0
      %1334 = vmatprep.mubr.f32.mxu0 0.0
      %1335 = vmatmul.mubr.f32.gmra.mrb[0].mxu0 %v1147
      %v1336 = vpop.f32.mrb[0].mxu0
      %v1337 = vadd.f32 0.0, %v1336
      %v1338 = vpop.f32.mrb[0].mxu0
      %1339 = vmatprep.mubr.f32.mxu0 0.0
      %1340 = vmatmul.mubr.f32.gmra.mrb[0].mxu0 %v1150
      %v1341 = vpop.f32.mrb[0].mxu0
      %v1342 = vadd.f32 0.0, %v1341
      %v1343 = vpop.f32.mrb[0].mxu0
      %1344 = vmatprep.mubr.f32.mxu0 0.0
      %1345 = vmatmul.mubr.f32.gmra.mrb[0].mxu0 %v1153
      %v1346 = vpop.f32.mrb[0].mxu0
      %v1347 = vadd.f32 0.0, %v1346
      %v1348 = vpop.f32.mrb[0].mxu0
      %1349 = vmatprep.mubr.f32.mxu0 0.0
      %1350 = vmatmul.mubr.f32.gmra.mrb[0].mxu0 %v1156
      %v1351 = vpop.f32.mrb[0].mxu0
      %v1352 = vadd.f32 0.0, %v1351
      %v1353 = vpop.f32.mrb[0].mxu0
      %1354 = vmatprep.mubr.f32.mxu0 0.0
      %1355 = vmatmul.mubr.f32.gmra.mrb[0].mxu0 %v1159
      %v1356 = vpop.f32.mrb[0].mxu0
      %v1357 = vadd.f32 0.0, %v1356
      %v1358 = vpop.f32.mrb[0].mxu0
      %1359 = vmatprep.mubr.f32.mxu0 0.0
      %1360 = vmatmul.mubr.f32.gmra.mrb[0].mxu0 %v1162
      %v1361 = vpop.f32.mrb[0].mxu0
      %v1362 = vadd.f32 0.0, %v1361
      %v1363 = vpop.f32.mrb[0].mxu0
      %1364 = vmatprep.mubr.f32.mxu0 0.0
      %1365 = vmatmul.mubr.f32.gmra.mrb[0].mxu0 %v1165
      %v1366 = vpop.f32.mrb[0].mxu0
      %v1367 = vadd.f32 0.0, %v1366
      %v1368 = vpop.f32.mrb[0].mxu0
      %1369 = vmatprep.mubr.f32.mxu0 0.0
      %1370 = vmatmul.mubr.f32.gmra.mrb[0].mxu0 %v1168
      %v1371 = vpop.f32.mrb[0].mxu0
      %v1372 = vadd.f32 0.0, %v1371
      %v1373 = vpop.f32.mrb[0].mxu0
      %1374 = vmatprep.mubr.f32.mxu0 0.0
      %1375 = vmatmul.mubr.f32.gmra.mrb[0].mxu0 %v1171
      %v1376 = vpop.f32.mrb[0].mxu0
      %v1377 = vadd.f32 0.0, %v1376
      %v1378 = vpop.f32.mrb[0].mxu0
      %1379 = vmatprep.mubr.f32.mxu0 0.0
      %1380 = vmatmul.mubr.f32.gmra.mrb[0].mxu0 %v1174
      %v1381 = vpop.f32.mrb[0].mxu0
      %v1382 = vadd.f32 0.0, %v1381
      %v1383 = vpop.f32.mrb[0].mxu0
      %1384 = vmatprep.mubr.f32.mxu0 0.0
      %1385 = vmatmul.mubr.f32.gmra.mrb[0].mxu0 %v1177
      %v1386 = vpop.f32.mrb[0].mxu0
      %v1387 = vadd.f32 0.0, %v1386
      %v1388 = vpop.f32.mrb[0].mxu0
      %1389 = vmatprep.mubr.f32.mxu0 0.0
      %1390 = vmatmul.mubr.f32.gmra.mrb[0].mxu0 %v1180
      %v1391 = vpop.f32.mrb[0].mxu0
      %v1392 = vadd.f32 0.0, %v1391
      %v1393 = vpop.f32.mrb[0].mxu0
      %1394 = vmatprep.mubr.f32.mxu0 0.0
      %1395 = vmatmul.mubr.f32.gmra.mrb[0].mxu0 %v1183
      %v1396 = vpop.f32.mrb[0].mxu0
      %v1397 = vadd.f32 0.0, %v1396
      %v1398 = vpop.f32.mrb[0].mxu0
      %1399 = vmatprep.mubr.f32.mxu0 0.0
      %1400 = vmatmul.mubr.f32.gmra.mrb[0].mxu0 %v1186
      %v1401 = vpop.f32.mrb[0].mxu0
      %v1402 = vadd.f32 0.0, %v1401
      %v1403 = vpop.f32.mrb[0].mxu0
      %1404 = vmatprep.mubr.f32.mxu0 0.0
      %1405 = vmatmul.mubr.f32.gmra.mrb[0].mxu0 %v1189
      %v1406 = vpop.f32.mrb[0].mxu0
      %v1407 = vadd.f32 0.0, %v1406
      %v1408 = vpop.f32.mrb[0].mxu0
      %1409 = vmatprep.mubr.f32.mxu0 0.0
      %1410 = vmatmul.mubr.f32.gmra.mrb[0].mxu0 %v1192
      %v1411 = vpop.f32.mrb[0].mxu0
      %v1412 = vadd.f32 0.0, %v1411
      %v1413 = vpop.f32.mrb[0].mxu0
      %1414 = vmatprep.mubr.f32.mxu0 0.0
      %1415 = vmatmul.mubr.f32.gmra.mrb[0].mxu0 %v1195
      %v1416 = vpop.f32.mrb[0].mxu0
      %v1417 = vadd.f32 0.0, %v1416
      %v1418 = vpop.f32.mrb[0].mxu0
      %1419 = vmatprep.mubr.f32.mxu0 0.0
      %1420 = vmatmul.mubr.f32.gmra.mrb[0].mxu0 %v1198
      %v1421 = vpop.f32.mrb[0].mxu0
      %v1422 = vadd.f32 0.0, %v1421
      %v1423 = vpop.f32.mrb[0].mxu0
      %1424 = vmatprep.mubr.f32.mxu0 0.0
      %1425 = vmatmul.mubr.f32.gmra.mrb[0].mxu0 %v1201
      %v1426 = vpop.f32.mrb[0].mxu0
      %v1427 = vadd.f32 0.0, %v1426
      %v1428 = vpop.f32.mrb[0].mxu0
      %1429 = vmatprep.mubr.f32.mxu0 0.0
      %1430 = vmatmul.mubr.f32.gmra.mrb[0].mxu0 %v1204
      %v1431 = vpop.f32.mrb[0].mxu0
      %v1432 = vadd.f32 0.0, %v1431
      %v1433 = vpop.f32.mrb[0].mxu0
      %1434 = vmatprep.mubr.f32.mxu0 0.0
      %1435 = vmatmul.mubr.f32.gmra.mrb[0].mxu0 %v1207
      %v1436 = vpop.f32.mrb[0].mxu0
      %v1437 = vadd.f32 0.0, %v1436
      %v1438 = vpop.f32.mrb[0].mxu0
      %1439 = vmatprep.mubr.f32.mxu0 0.0
      %1440 = vmatmul.mubr.f32.gmra.mrb[0].mxu0 %v1210
      %v1441 = vpop.f32.mrb[0].mxu0
      %v1442 = vadd.f32 0.0, %v1441
      %v1443 = vpop.f32.mrb[0].mxu0
      %1444 = vmatprep.mubr.f32.mxu0 0.0
      %1445 = vmatmul.mubr.f32.gmra.mrb[0].mxu0 %v1213
      %v1446 = vpop.f32.mrb[0].mxu0
      %v1447 = vadd.f32 0.0, %v1446
      %v1448 = vpop.f32.mrb[0].mxu0
      %1449 = vmatprep.mubr.f32.mxu0 0.0
      %1450 = vmatmul.mubr.f32.gmra.mrb[0].mxu0 %v1216
      %v1451 = vpop.f32.mrb[0].mxu0
      %v1452 = vadd.f32 0.0, %v1451
      %v1453 = vpop.f32.mrb[0].mxu0
      %1454 = vmatprep.mubr.f32.mxu0 0.0
      %1455 = vmatmul.mubr.f32.gmra.mrb[0].mxu0 %v1219
      %v1456 = vpop.f32.mrb[0].mxu0
      %v1457 = vadd.f32 0.0, %v1456
      %v1458 = vpop.f32.mrb[0].mxu0
      %1459 = vmatprep.mubr.f32.mxu0 0.0
      %1460 = vmatmul.mubr.f32.gmra.mrb[0].mxu0 %v1222
      %v1461 = vpop.f32.mrb[0].mxu0
      %v1462 = vadd.f32 0.0, %v1461
      %v1463 = vpop.f32.mrb[0].mxu0
      %1464 = vmatprep.mubr.f32.mxu0 0.0
      %1465 = vmatmul.mubr.f32.gmra.mrb[0].mxu0 %v1225
      %v1466 = vpop.f32.mrb[0].mxu0
      %v1467 = vadd.f32 0.0, %v1466
      %v1468 = vpop.f32.mrb[0].mxu0
      %1469 = vmatprep.mubr.f32.mxu0 0.0
      %1470 = vmatmul.mubr.f32.gmra.mrb[0].mxu0 %v1228
      %v1471 = vpop.f32.mrb[0].mxu0
      %v1472 = vadd.f32 0.0, %v1471
      %v1473 = vpop.f32.mrb[0].mxu0
      %1474 = vdwg.mxu0
      %v1475 = vadd.f32 %v905, %v1297
      %v1476 = vadd.f32 %v910, %v1302
      %v1477 = vadd.f32 %v915, %v1307
      %v1478 = vadd.f32 %v920, %v1312
      %v1479 = vadd.f32 %v925, %v1317
      %v1480 = vadd.f32 %v930, %v1322
      %v1481 = vadd.f32 %v935, %v1327
      %v1482 = vadd.f32 %v940, %v1332
      %v1483 = vadd.f32 %v945, %v1337
      %v1484 = vadd.f32 %v950, %v1342
      %v1485 = vadd.f32 %v955, %v1347
      %v1486 = vadd.f32 %v960, %v1352
      %v1487 = vadd.f32 %v965, %v1357
      %v1488 = vadd.f32 %v970, %v1362
      %v1489 = vadd.f32 %v975, %v1367
      %v1490 = vadd.f32 %v980, %v1372
      %v1491 = vadd.f32 %v985, %v1377
      %v1492 = vadd.f32 %v990, %v1382
      %v1493 = vadd.f32 %v995, %v1387
      %v1494 = vadd.f32 %v1000, %v1392
      %v1495 = vadd.f32 %v1005, %v1397
      %v1496 = vadd.f32 %v1010, %v1402
      %v1497 = vadd.f32 %v1015, %v1407
      %v1498 = vadd.f32 %v1020, %v1412
      %v1499 = vadd.f32 %v1025, %v1417
      %v1500 = vadd.f32 %v1030, %v1422
      %v1501 = vadd.f32 %v1035, %v1427
      %v1502 = vadd.f32 %v1040, %v1432
      %v1503 = vadd.f32 %v1045, %v1437
      %v1504 = vadd.f32 %v1050, %v1442
      %v1505 = vadd.f32 %v1055, %v1447
      %v1506 = vadd.f32 %v1060, %v1452
      %v1507 = vadd.f32 %v1065, %v1457
      %v1508 = vadd.f32 %v1070, %v1462
      %v1509 = vadd.f32 %v1075, %v1467
      %v1510 = vadd.f32 %v1080, %v1472
      %v1511 = vld [vmem:[%s288 + $0x12] sm:$0xff]
      %v1512 = vld [vmem:[%s288 + $0x1a] sm:$0xff]
      %v1513 = vld [vmem:[%s288 + $0x22] sm:$0xff]
      %v1514 = vld [vmem:[%s288 + $0x2a] sm:$0xff]
      %v1515 = vld [vmem:[%s288 + $0x32] sm:$0xff]
      %v1516 = vld [vmem:[%s288 + $0x3a] sm:$0xff]
      %v1517 = vld [vmem:[%s288 + $0x42] sm:$0xff]
      %v1518 = vld [vmem:[%s288 + $0x4a] sm:$0xff]
      %v1519 = vld [vmem:[%s288 + $0x52] sm:$0xff]
      %v1520 = vld [vmem:[%s288 + $0x5a] sm:$0xff]
      %v1521 = vld [vmem:[%s288 + $0x62] sm:$0xff]
      %v1522 = vld [vmem:[%s288 + $0x6a] sm:$0xff]
      %v1523 = vld [vmem:[%s288 + $0x72] sm:$0xff]
      %v1524 = vld [vmem:[%s288 + $0x7a] sm:$0xff]
      %v1525 = vld [vmem:[%s288 + $0x82] sm:$0xff]
      %v1526 = vld [vmem:[%s288 + $0x8a] sm:$0xff]
      %v1527 = vld [vmem:[%s288 + $0x92] sm:$0xff]
      %v1528 = vld [vmem:[%s288 + $0x9a] sm:$0xff]
      %v1529 = vld [vmem:[%s288 + $0xa2] sm:$0xff]
      %v1530 = vld [vmem:[%s288 + $0xaa] sm:$0xff]
      %v1531 = vld [vmem:[%s288 + $0xb2] sm:$0xff]
      %v1532 = vld [vmem:[%s288 + $0xba] sm:$0xff]
      %v1533 = vld [vmem:[%s288 + $0xc2] sm:$0xff]
      %v1534 = vld [vmem:[%s288 + $0xca] sm:$0xff]
      %v1535 = vld [vmem:[%s288 + $0xd2] sm:$0xff]
      %v1536 = vld [vmem:[%s288 + $0xda] sm:$0xff]
      %v1537 = vld [vmem:[%s288 + $0xe2] sm:$0xff]
      %v1538 = vld [vmem:[%s288 + $0xea] sm:$0xff]
      %v1539 = vld [vmem:[%s288 + $0xf2] sm:$0xff]
      %v1540 = vld [vmem:[%s288 + $0xfa] sm:$0xff]
      %v1541 = vld [vmem:[%s288 + $0x102] sm:$0xff]
      %v1542 = vld [vmem:[%s288 + $0x10a] sm:$0xff]
      %v1543 = vld [vmem:[%s288 + $0x112] sm:$0xff]
      %v1544 = vld [vmem:[%s288 + $0x11a] sm:$0xff]
      %v1545 = vld [vmem:[%s288 + $0x122] sm:$0xff]
      %v1546 = vld [vmem:[%s288 + $0x12a] sm:$0xff]
      %s1547 = scalar_lea.vmem %s1, 48
      %v1548 = vld [vmem:[%s1547] sm:$0xff]
      %v1549 = vld [vmem:[%s1547 + $0x8] sm:$0xff]
      %v1551 = vsel %vm376, %v1511, 0
      %v1554 = vsel %vm376, %v1512, 0
      %v1557 = vsel %vm376, %v1513, 0
      %v1560 = vsel %vm376, %v1514, 0
      %v1563 = vsel %vm376, %v1515, 0
      %v1566 = vsel %vm376, %v1516, 0
      %v1569 = vsel %vm376, %v1517, 0
      %v1572 = vsel %vm376, %v1518, 0
      %v1575 = vsel %vm376, %v1519, 0
      %v1578 = vsel %vm376, %v1520, 0
      %v1581 = vsel %vm376, %v1521, 0
      %v1584 = vsel %vm376, %v1522, 0
      %v1587 = vsel %vm376, %v1523, 0
      %v1590 = vsel %vm376, %v1524, 0
      %v1593 = vsel %vm376, %v1525, 0
      %v1596 = vsel %vm376, %v1526, 0
      %v1599 = vsel %vm376, %v1527, 0
      %v1602 = vsel %vm376, %v1528, 0
      %v1605 = vsel %vm376, %v1529, 0
      %v1608 = vsel %vm376, %v1530, 0
      %v1611 = vsel %vm376, %v1531, 0
      %v1614 = vsel %vm376, %v1532, 0
      %v1617 = vsel %vm376, %v1533, 0
      %v1620 = vsel %vm376, %v1534, 0
      %v1623 = vsel %vm376, %v1535, 0
      %v1626 = vsel %vm376, %v1536, 0
      %v1629 = vsel %vm376, %v1537, 0
      %v1632 = vsel %vm376, %v1538, 0
      %v1635 = vsel %vm376, %v1539, 0
      %v1638 = vsel %vm376, %v1540, 0
      %v1641 = vsel %vm376, %v1541, 0
      %v1644 = vsel %vm376, %v1542, 0
      %v1647 = vsel %vm376, %v1543, 0
      %v1650 = vsel %vm376, %v1544, 0
      %v1653 = vsel %vm376, %v1545, 0
      %v1656 = vsel %vm376, %v1546, 0
      %1658 = vmatprep.subr.mxu0 0.0
      %1659 = vmatpush1.msra.mxu0 %v1548
      %1660 = vmatprep.subr.mxu0 0.0
      %1661 = vmatpush1.msra.mxu0 %v1549
      %1662 = vmatprep.subr.mxu0 0.0
      %1663 = vmatpush1.msra.mxu0 0.0
      %1664 = vmatprep.subr.mxu0 0.0
      %1665 = vmatpush1.msra.mxu0 0.0
      %1666 = vmatprep.subr.mxu0 0.0
      %1667 = vmatpush1.msra.mxu0 0.0
      %1668 = vmatprep.subr.mxu0 0.0
      %1669 = vmatpush1.msra.mxu0 0.0
      %1670 = vmatprep.subr.mxu0 0.0
      %1671 = vmatpush1.msra.mxu0 0.0
      %1672 = vmatprep.subr.mxu0 0.0
      %1673 = vmatpush1.msra.mxu0 0.0
      %1674 = vmatprep.subr.mxu0 0.0
      %1675 = vmatpush1.msra.mxu0 0.0
      %1676 = vmatprep.subr.mxu0 0.0
      %1677 = vmatpush1.msra.mxu0 0.0
      %1678 = vmatprep.subr.mxu0 0.0
      %1679 = vmatpush1.msra.mxu0 0.0
      %1680 = vmatprep.subr.mxu0 0.0
      %1681 = vmatpush1.msra.mxu0 0.0
      %1682 = vmatprep.subr.mxu0 0.0
      %1683 = vmatpush1.msra.mxu0 0.0
      %1684 = vmatprep.subr.mxu0 0.0
      %1685 = vmatpush1.msra.mxu0 0.0
      %1686 = vmatprep.subr.mxu0 0.0
      %1687 = vmatpush1.msra.mxu0 0.0
      %1688 = vmatprep.subr.mxu0 0.0
      %1689 = vmatpush1.msra.mxu0 0.0
      %1690 = vmatprep.subr.mxu0 0.0
      %1691 = vmatpush1.msra.mxu0 0.0
      %1692 = vmatprep.subr.mxu0 0.0
      %1693 = vmatpush1.msra.mxu0 0.0
      %1694 = vmatprep.subr.mxu0 0.0
      %1695 = vmatpush1.msra.mxu0 0.0
      %1696 = vmatprep.subr.mxu0 0.0
      %1697 = vmatpush1.msra.mxu0 0.0
      %1698 = vmatprep.subr.mxu0 0.0
      %1699 = vmatpush1.msra.mxu0 0.0
      %1700 = vmatprep.subr.mxu0 0.0
      %1701 = vmatpush1.msra.mxu0 0.0
      %1702 = vmatprep.subr.mxu0 0.0
      %1703 = vmatpush1.msra.mxu0 0.0
      %1704 = vmatprep.subr.mxu0 0.0
      %1705 = vmatpush1.msra.mxu0 0.0
      %1706 = vmatprep.subr.mxu0 0.0
      %1707 = vmatpush1.msra.mxu0 0.0
      %1708 = vmatprep.subr.mxu0 0.0
      %1709 = vmatpush1.msra.mxu0 0.0
      %1710 = vmatprep.subr.mxu0 0.0
      %1711 = vmatpush1.msra.mxu0 0.0
      %1712 = vmatprep.subr.mxu0 0.0
      %1713 = vmatpush1.msra.mxu0 0.0
      %1714 = vmatprep.subr.mxu0 0.0
      %1715 = vmatpush1.msra.mxu0 0.0
      %1716 = vmatprep.subr.mxu0 0.0
      %1717 = vmatpush1.msra.mxu0 0.0
      %1718 = vmatprep.subr.mxu0 0.0
      %1719 = vmatpush1.msra.mxu0 0.0
      %1720 = vmatprep.subr.mxu0 0.0
      %1721 = vmatpush1.msra.mxu0 0.0
      %1722 = vmatprep.mubr.f32.mxu0 0.0
      %1723 = vmatmul.mubr.f32.gmra.mrb[0].mxu0 %v1551
      %v1724 = vpop.f32.mrb[0].mxu0
      %v1725 = vadd.f32 0.0, %v1724
      %v1726 = vpop.f32.mrb[0].mxu0
      %1727 = vmatprep.mubr.f32.mxu0 0.0
      %1728 = vmatmul.mubr.f32.gmra.mrb[0].mxu0 %v1554
      %v1729 = vpop.f32.mrb[0].mxu0
      %v1730 = vadd.f32 0.0, %v1729
      %v1731 = vpop.f32.mrb[0].mxu0
      %1732 = vmatprep.mubr.f32.mxu0 0.0
      %1733 = vmatmul.mubr.f32.gmra.mrb[0].mxu0 %v1557
      %v1734 = vpop.f32.mrb[0].mxu0
      %v1735 = vadd.f32 0.0, %v1734
      %v1736 = vpop.f32.mrb[0].mxu0
      %1737 = vmatprep.mubr.f32.mxu0 0.0
      %1738 = vmatmul.mubr.f32.gmra.mrb[0].mxu0 %v1560
      %v1739 = vpop.f32.mrb[0].mxu0
      %v1740 = vadd.f32 0.0, %v1739
      %v1741 = vpop.f32.mrb[0].mxu0
      %1742 = vmatprep.mubr.f32.mxu0 0.0
      %1743 = vmatmul.mubr.f32.gmra.mrb[0].mxu0 %v1563
      %v1744 = vpop.f32.mrb[0].mxu0
      %v1745 = vadd.f32 0.0, %v1744
      %v1746 = vpop.f32.mrb[0].mxu0
      %1747 = vmatprep.mubr.f32.mxu0 0.0
      %1748 = vmatmul.mubr.f32.gmra.mrb[0].mxu0 %v1566
      %v1749 = vpop.f32.mrb[0].mxu0
      %v1750 = vadd.f32 0.0, %v1749
      %v1751 = vpop.f32.mrb[0].mxu0
      %1752 = vmatprep.mubr.f32.mxu0 0.0
      %1753 = vmatmul.mubr.f32.gmra.mrb[0].mxu0 %v1569
      %v1754 = vpop.f32.mrb[0].mxu0
      %v1755 = vadd.f32 0.0, %v1754
      %v1756 = vpop.f32.mrb[0].mxu0
      %1757 = vmatprep.mubr.f32.mxu0 0.0
      %1758 = vmatmul.mubr.f32.gmra.mrb[0].mxu0 %v1572
      %v1759 = vpop.f32.mrb[0].mxu0
      %v1760 = vadd.f32 0.0, %v1759
      %v1761 = vpop.f32.mrb[0].mxu0
      %1762 = vmatprep.mubr.f32.mxu0 0.0
      %1763 = vmatmul.mubr.f32.gmra.mrb[0].mxu0 %v1575
      %v1764 = vpop.f32.mrb[0].mxu0
      %v1765 = vadd.f32 0.0, %v1764
      %v1766 = vpop.f32.mrb[0].mxu0
      %1767 = vmatprep.mubr.f32.mxu0 0.0
      %1768 = vmatmul.mubr.f32.gmra.mrb[0].mxu0 %v1578
      %v1769 = vpop.f32.mrb[0].mxu0
      %v1770 = vadd.f32 0.0, %v1769
      %v1771 = vpop.f32.mrb[0].mxu0
      %1772 = vmatprep.mubr.f32.mxu0 0.0
      %1773 = vmatmul.mubr.f32.gmra.mrb[0].mxu0 %v1581
      %v1774 = vpop.f32.mrb[0].mxu0
      %v1775 = vadd.f32 0.0, %v1774
      %v1776 = vpop.f32.mrb[0].mxu0
      %1777 = vmatprep.mubr.f32.mxu0 0.0
      %1778 = vmatmul.mubr.f32.gmra.mrb[0].mxu0 %v1584
      %v1779 = vpop.f32.mrb[0].mxu0
      %v1780 = vadd.f32 0.0, %v1779
      %v1781 = vpop.f32.mrb[0].mxu0
      %1782 = vmatprep.mubr.f32.mxu0 0.0
      %1783 = vmatmul.mubr.f32.gmra.mrb[0].mxu0 %v1587
      %v1784 = vpop.f32.mrb[0].mxu0
      %v1785 = vadd.f32 0.0, %v1784
      %v1786 = vpop.f32.mrb[0].mxu0
      %1787 = vmatprep.mubr.f32.mxu0 0.0
      %1788 = vmatmul.mubr.f32.gmra.mrb[0].mxu0 %v1590
      %v1789 = vpop.f32.mrb[0].mxu0
      %v1790 = vadd.f32 0.0, %v1789
      %v1791 = vpop.f32.mrb[0].mxu0
      %1792 = vmatprep.mubr.f32.mxu0 0.0
      %1793 = vmatmul.mubr.f32.gmra.mrb[0].mxu0 %v1593
      %v1794 = vpop.f32.mrb[0].mxu0
      %v1795 = vadd.f32 0.0, %v1794
      %v1796 = vpop.f32.mrb[0].mxu0
      %1797 = vmatprep.mubr.f32.mxu0 0.0
      %1798 = vmatmul.mubr.f32.gmra.mrb[0].mxu0 %v1596
      %v1799 = vpop.f32.mrb[0].mxu0
      %v1800 = vadd.f32 0.0, %v1799
      %v1801 = vpop.f32.mrb[0].mxu0
      %1802 = vmatprep.mubr.f32.mxu0 0.0
      %1803 = vmatmul.mubr.f32.gmra.mrb[0].mxu0 %v1599
      %v1804 = vpop.f32.mrb[0].mxu0
      %v1805 = vadd.f32 0.0, %v1804
      %v1806 = vpop.f32.mrb[0].mxu0
      %1807 = vmatprep.mubr.f32.mxu0 0.0
      %1808 = vmatmul.mubr.f32.gmra.mrb[0].mxu0 %v1602
      %v1809 = vpop.f32.mrb[0].mxu0
      %v1810 = vadd.f32 0.0, %v1809
      %v1811 = vpop.f32.mrb[0].mxu0
      %1812 = vmatprep.mubr.f32.mxu0 0.0
      %1813 = vmatmul.mubr.f32.gmra.mrb[0].mxu0 %v1605
      %v1814 = vpop.f32.mrb[0].mxu0
      %v1815 = vadd.f32 0.0, %v1814
      %v1816 = vpop.f32.mrb[0].mxu0
      %1817 = vmatprep.mubr.f32.mxu0 0.0
      %1818 = vmatmul.mubr.f32.gmra.mrb[0].mxu0 %v1608
      %v1819 = vpop.f32.mrb[0].mxu0
      %v1820 = vadd.f32 0.0, %v1819
      %v1821 = vpop.f32.mrb[0].mxu0
      %1822 = vmatprep.mubr.f32.mxu0 0.0
      %1823 = vmatmul.mubr.f32.gmra.mrb[0].mxu0 %v1611
      %v1824 = vpop.f32.mrb[0].mxu0
      %v1825 = vadd.f32 0.0, %v1824
      %v1826 = vpop.f32.mrb[0].mxu0
      %1827 = vmatprep.mubr.f32.mxu0 0.0
      %1828 = vmatmul.mubr.f32.gmra.mrb[0].mxu0 %v1614
      %v1829 = vpop.f32.mrb[0].mxu0
      %v1830 = vadd.f32 0.0, %v1829
      %v1831 = vpop.f32.mrb[0].mxu0
      %1832 = vmatprep.mubr.f32.mxu0 0.0
      %1833 = vmatmul.mubr.f32.gmra.mrb[0].mxu0 %v1617
      %v1834 = vpop.f32.mrb[0].mxu0
      %v1835 = vadd.f32 0.0, %v1834
      %v1836 = vpop.f32.mrb[0].mxu0
      %1837 = vmatprep.mubr.f32.mxu0 0.0
      %1838 = vmatmul.mubr.f32.gmra.mrb[0].mxu0 %v1620
      %v1839 = vpop.f32.mrb[0].mxu0
      %v1840 = vadd.f32 0.0, %v1839
      %v1841 = vpop.f32.mrb[0].mxu0
      %1842 = vmatprep.mubr.f32.mxu0 0.0
      %1843 = vmatmul.mubr.f32.gmra.mrb[0].mxu0 %v1623
      %v1844 = vpop.f32.mrb[0].mxu0
      %v1845 = vadd.f32 0.0, %v1844
      %v1846 = vpop.f32.mrb[0].mxu0
      %1847 = vmatprep.mubr.f32.mxu0 0.0
      %1848 = vmatmul.mubr.f32.gmra.mrb[0].mxu0 %v1626
      %v1849 = vpop.f32.mrb[0].mxu0
      %v1850 = vadd.f32 0.0, %v1849
      %v1851 = vpop.f32.mrb[0].mxu0
      %1852 = vmatprep.mubr.f32.mxu0 0.0
      %1853 = vmatmul.mubr.f32.gmra.mrb[0].mxu0 %v1629
      %v1854 = vpop.f32.mrb[0].mxu0
      %v1855 = vadd.f32 0.0, %v1854
      %v1856 = vpop.f32.mrb[0].mxu0
      %1857 = vmatprep.mubr.f32.mxu0 0.0
      %1858 = vmatmul.mubr.f32.gmra.mrb[0].mxu0 %v1632
      %v1859 = vpop.f32.mrb[0].mxu0
      %v1860 = vadd.f32 0.0, %v1859
      %v1861 = vpop.f32.mrb[0].mxu0
      %1862 = vmatprep.mubr.f32.mxu0 0.0
      %1863 = vmatmul.mubr.f32.gmra.mrb[0].mxu0 %v1635
      %v1864 = vpop.f32.mrb[0].mxu0
      %v1865 = vadd.f32 0.0, %v1864
      %v1866 = vpop.f32.mrb[0].mxu0
      %1867 = vmatprep.mubr.f32.mxu0 0.0
      %1868 = vmatmul.mubr.f32.gmra.mrb[0].mxu0 %v1638
      %v1869 = vpop.f32.mrb[0].mxu0
      %v1870 = vadd.f32 0.0, %v1869
      %v1871 = vpop.f32.mrb[0].mxu0
      %1872 = vmatprep.mubr.f32.mxu0 0.0
      %1873 = vmatmul.mubr.f32.gmra.mrb[0].mxu0 %v1641
      %v1874 = vpop.f32.mrb[0].mxu0
      %v1875 = vadd.f32 0.0, %v1874
      %v1876 = vpop.f32.mrb[0].mxu0
      %1877 = vmatprep.mubr.f32.mxu0 0.0
      %1878 = vmatmul.mubr.f32.gmra.mrb[0].mxu0 %v1644
      %v1879 = vpop.f32.mrb[0].mxu0
      %v1880 = vadd.f32 0.0, %v1879
      %v1881 = vpop.f32.mrb[0].mxu0
      %1882 = vmatprep.mubr.f32.mxu0 0.0
      %1883 = vmatmul.mubr.f32.gmra.mrb[0].mxu0 %v1647
      %v1884 = vpop.f32.mrb[0].mxu0
      %v1885 = vadd.f32 0.0, %v1884
      %v1886 = vpop.f32.mrb[0].mxu0
      %1887 = vmatprep.mubr.f32.mxu0 0.0
      %1888 = vmatmul.mubr.f32.gmra.mrb[0].mxu0 %v1650
      %v1889 = vpop.f32.mrb[0].mxu0
      %v1890 = vadd.f32 0.0, %v1889
      %v1891 = vpop.f32.mrb[0].mxu0
      %1892 = vmatprep.mubr.f32.mxu0 0.0
      %1893 = vmatmul.mubr.f32.gmra.mrb[0].mxu0 %v1653
      %v1894 = vpop.f32.mrb[0].mxu0
      %v1895 = vadd.f32 0.0, %v1894
      %v1896 = vpop.f32.mrb[0].mxu0
      %1897 = vmatprep.mubr.f32.mxu0 0.0
      %1898 = vmatmul.mubr.f32.gmra.mrb[0].mxu0 %v1656
      %v1899 = vpop.f32.mrb[0].mxu0
      %v1900 = vadd.f32 0.0, %v1899
      %v1901 = vpop.f32.mrb[0].mxu0
      %1902 = vdwg.mxu0
      %v1903 = vadd.f32 %v1475, %v1725
      %v1904 = vadd.f32 %v1476, %v1730
      %v1905 = vadd.f32 %v1477, %v1735
      %v1906 = vadd.f32 %v1478, %v1740
      %v1907 = vadd.f32 %v1479, %v1745
      %v1908 = vadd.f32 %v1480, %v1750
      %v1909 = vadd.f32 %v1481, %v1755
      %v1910 = vadd.f32 %v1482, %v1760
      %v1911 = vadd.f32 %v1483, %v1765
      %v1912 = vadd.f32 %v1484, %v1770
      %v1913 = vadd.f32 %v1485, %v1775
      %v1914 = vadd.f32 %v1486, %v1780
      %v1915 = vadd.f32 %v1487, %v1785
      %v1916 = vadd.f32 %v1488, %v1790
      %v1917 = vadd.f32 %v1489, %v1795
      %v1918 = vadd.f32 %v1490, %v1800
      %v1919 = vadd.f32 %v1491, %v1805
      %v1920 = vadd.f32 %v1492, %v1810
      %v1921 = vadd.f32 %v1493, %v1815
      %v1922 = vadd.f32 %v1494, %v1820
      %v1923 = vadd.f32 %v1495, %v1825
      %v1924 = vadd.f32 %v1496, %v1830
      %v1925 = vadd.f32 %v1497, %v1835
      %v1926 = vadd.f32 %v1498, %v1840
      %v1927 = vadd.f32 %v1499, %v1845
      %v1928 = vadd.f32 %v1500, %v1850
      %v1929 = vadd.f32 %v1501, %v1855
      %v1930 = vadd.f32 %v1502, %v1860
      %v1931 = vadd.f32 %v1503, %v1865
      %v1932 = vadd.f32 %v1504, %v1870
      %v1933 = vadd.f32 %v1505, %v1875
      %v1934 = vadd.f32 %v1506, %v1880
      %v1935 = vadd.f32 %v1507, %v1885
      %v1936 = vadd.f32 %v1508, %v1890
      %v1937 = vadd.f32 %v1509, %v1895
      %v1938 = vadd.f32 %v1510, %v1900
      %v1939 = vld [vmem:[%s288 + $0x13] sm:$0xff]
      %v1940 = vld [vmem:[%s288 + $0x1b] sm:$0xff]
      %v1941 = vld [vmem:[%s288 + $0x23] sm:$0xff]
      %v1942 = vld [vmem:[%s288 + $0x2b] sm:$0xff]
      %v1943 = vld [vmem:[%s288 + $0x33] sm:$0xff]
      %v1944 = vld [vmem:[%s288 + $0x3b] sm:$0xff]
      %v1945 = vld [vmem:[%s288 + $0x43] sm:$0xff]
      %v1946 = vld [vmem:[%s288 + $0x4b] sm:$0xff]
      %v1947 = vld [vmem:[%s288 + $0x53] sm:$0xff]
      %v1948 = vld [vmem:[%s288 + $0x5b] sm:$0xff]
      %v1949 = vld [vmem:[%s288 + $0x63] sm:$0xff]
      %v1950 = vld [vmem:[%s288 + $0x6b] sm:$0xff]
      %v1951 = vld [vmem:[%s288 + $0x73] sm:$0xff]
      %v1952 = vld [vmem:[%s288 + $0x7b] sm:$0xff]
      %v1953 = vld [vmem:[%s288 + $0x83] sm:$0xff]
      %v1954 = vld [vmem:[%s288 + $0x8b] sm:$0xff]
      %v1955 = vld [vmem:[%s288 + $0x93] sm:$0xff]
      %v1956 = vld [vmem:[%s288 + $0x9b] sm:$0xff]
      %v1957 = vld [vmem:[%s288 + $0xa3] sm:$0xff]
      %v1958 = vld [vmem:[%s288 + $0xab] sm:$0xff]
      %v1959 = vld [vmem:[%s288 + $0xb3] sm:$0xff]
      %v1960 = vld [vmem:[%s288 + $0xbb] sm:$0xff]
      %v1961 = vld [vmem:[%s288 + $0xc3] sm:$0xff]
      %v1962 = vld [vmem:[%s288 + $0xcb] sm:$0xff]
      %v1963 = vld [vmem:[%s288 + $0xd3] sm:$0xff]
      %v1964 = vld [vmem:[%s288 + $0xdb] sm:$0xff]
      %v1965 = vld [vmem:[%s288 + $0xe3] sm:$0xff]
      %v1966 = vld [vmem:[%s288 + $0xeb] sm:$0xff]
      %v1967 = vld [vmem:[%s288 + $0xf3] sm:$0xff]
      %v1968 = vld [vmem:[%s288 + $0xfb] sm:$0xff]
      %v1969 = vld [vmem:[%s288 + $0x103] sm:$0xff]
      %v1970 = vld [vmem:[%s288 + $0x10b] sm:$0xff]
      %v1971 = vld [vmem:[%s288 + $0x113] sm:$0xff]
      %v1972 = vld [vmem:[%s288 + $0x11b] sm:$0xff]
      %v1973 = vld [vmem:[%s288 + $0x123] sm:$0xff]
      %v1974 = vld [vmem:[%s288 + $0x12b] sm:$0xff]
      %s1975 = scalar_lea.vmem %s1, 64
      %v1976 = vld [vmem:[%s1975] sm:$0xff]
      %v1977 = vld [vmem:[%s1975 + $0x8] sm:$0xff]
      %v1979 = vsel %vm376, %v1939, 0
      %v1982 = vsel %vm376, %v1940, 0
      %v1985 = vsel %vm376, %v1941, 0
      %v1988 = vsel %vm376, %v1942, 0
      %v1991 = vsel %vm376, %v1943, 0
      %v1994 = vsel %vm376, %v1944, 0
      %v1997 = vsel %vm376, %v1945, 0
      %v2000 = vsel %vm376, %v1946, 0
      %v2003 = vsel %vm376, %v1947, 0
      %v2006 = vsel %vm376, %v1948, 0
      %v2009 = vsel %vm376, %v1949, 0
      %v2012 = vsel %vm376, %v1950, 0
      %v2015 = vsel %vm376, %v1951, 0
      %v2018 = vsel %vm376, %v1952, 0
      %v2021 = vsel %vm376, %v1953, 0
      %v2024 = vsel %vm376, %v1954, 0
      %v2027 = vsel %vm376, %v1955, 0
      %v2030 = vsel %vm376, %v1956, 0
      %v2033 = vsel %vm376, %v1957, 0
      %v2036 = vsel %vm376, %v1958, 0
      %v2039 = vsel %vm376, %v1959, 0
      %v2042 = vsel %vm376, %v1960, 0
      %v2045 = vsel %vm376, %v1961, 0
      %v2048 = vsel %vm376, %v1962, 0
      %v2051 = vsel %vm376, %v1963, 0
      %v2054 = vsel %vm376, %v1964, 0
      %v2057 = vsel %vm376, %v1965, 0
      %v2060 = vsel %vm376, %v1966, 0
      %v2063 = vsel %vm376, %v1967, 0
      %v2066 = vsel %vm376, %v1968, 0
      %v2069 = vsel %vm376, %v1969, 0
      %v2072 = vsel %vm376, %v1970, 0
      %v2075 = vsel %vm376, %v1971, 0
      %v2078 = vsel %vm376, %v1972, 0
      %v2081 = vsel %vm376, %v1973, 0
      %v2084 = vsel %vm376, %v1974, 0
      %2086 = vmatprep.subr.mxu0 0.0
      %2087 = vmatpush1.msra.mxu0 %v1976
      %2088 = vmatprep.subr.mxu0 0.0
      %2089 = vmatpush1.msra.mxu0 %v1977
      %2090 = vmatprep.subr.mxu0 0.0
      %2091 = vmatpush1.msra.mxu0 0.0
      %2092 = vmatprep.subr.mxu0 0.0
      %2093 = vmatpush1.msra.mxu0 0.0
      %2094 = vmatprep.subr.mxu0 0.0
      %2095 = vmatpush1.msra.mxu0 0.0
      %2096 = vmatprep.subr.mxu0 0.0
      %2097 = vmatpush1.msra.mxu0 0.0
      %2098 = vmatprep.subr.mxu0 0.0
      %2099 = vmatpush1.msra.mxu0 0.0
      %2100 = vmatprep.subr.mxu0 0.0
      %2101 = vmatpush1.msra.mxu0 0.0
      %2102 = vmatprep.subr.mxu0 0.0
      %2103 = vmatpush1.msra.mxu0 0.0
      %2104 = vmatprep.subr.mxu0 0.0
      %2105 = vmatpush1.msra.mxu0 0.0
      %2106 = vmatprep.subr.mxu0 0.0
      %2107 = vmatpush1.msra.mxu0 0.0
      %2108 = vmatprep.subr.mxu0 0.0
      %2109 = vmatpush1.msra.mxu0 0.0
      %2110 = vmatprep.subr.mxu0 0.0
      %2111 = vmatpush1.msra.mxu0 0.0
      %2112 = vmatprep.subr.mxu0 0.0
      %2113 = vmatpush1.msra.mxu0 0.0
      %2114 = vmatprep.subr.mxu0 0.0
      %2115 = vmatpush1.msra.mxu0 0.0
      %2116 = vmatprep.subr.mxu0 0.0
      %2117 = vmatpush1.msra.mxu0 0.0
      %2118 = vmatprep.subr.mxu0 0.0
      %2119 = vmatpush1.msra.mxu0 0.0
      %2120 = vmatprep.subr.mxu0 0.0
      %2121 = vmatpush1.msra.mxu0 0.0
      %2122 = vmatprep.subr.mxu0 0.0
      %2123 = vmatpush1.msra.mxu0 0.0
      %2124 = vmatprep.subr.mxu0 0.0
      %2125 = vmatpush1.msra.mxu0 0.0
      %2126 = vmatprep.subr.mxu0 0.0
      %2127 = vmatpush1.msra.mxu0 0.0
      %2128 = vmatprep.subr.mxu0 0.0
      %2129 = vmatpush1.msra.mxu0 0.0
      %2130 = vmatprep.subr.mxu0 0.0
      %2131 = vmatpush1.msra.mxu0 0.0
      %2132 = vmatprep.subr.mxu0 0.0
      %2133 = vmatpush1.msra.mxu0 0.0
      %2134 = vmatprep.subr.mxu0 0.0
      %2135 = vmatpush1.msra.mxu0 0.0
      %2136 = vmatprep.subr.mxu0 0.0
      %2137 = vmatpush1.msra.mxu0 0.0
      %2138 = vmatprep.subr.mxu0 0.0
      %2139 = vmatpush1.msra.mxu0 0.0
      %2140 = vmatprep.subr.mxu0 0.0
      %2141 = vmatpush1.msra.mxu0 0.0
      %2142 = vmatprep.subr.mxu0 0.0
      %2143 = vmatpush1.msra.mxu0 0.0
      %2144 = vmatprep.subr.mxu0 0.0
      %2145 = vmatpush1.msra.mxu0 0.0
      %2146 = vmatprep.subr.mxu0 0.0
      %2147 = vmatpush1.msra.mxu0 0.0
      %2148 = vmatprep.subr.mxu0 0.0
      %2149 = vmatpush1.msra.mxu0 0.0
      %2150 = vmatprep.mubr.f32.mxu0 0.0
      %2151 = vmatmul.mubr.f32.gmra.mrb[0].mxu0 %v1979
      %v2152 = vpop.f32.mrb[0].mxu0
      %v2153 = vadd.f32 0.0, %v2152
      %v2154 = vpop.f32.mrb[0].mxu0
      %2155 = vmatprep.mubr.f32.mxu0 0.0
      %2156 = vmatmul.mubr.f32.gmra.mrb[0].mxu0 %v1982
      %v2157 = vpop.f32.mrb[0].mxu0
      %v2158 = vadd.f32 0.0, %v2157
      %v2159 = vpop.f32.mrb[0].mxu0
      %2160 = vmatprep.mubr.f32.mxu0 0.0
      %2161 = vmatmul.mubr.f32.gmra.mrb[0].mxu0 %v1985
      %v2162 = vpop.f32.mrb[0].mxu0
      %v2163 = vadd.f32 0.0, %v2162
      %v2164 = vpop.f32.mrb[0].mxu0
      %2165 = vmatprep.mubr.f32.mxu0 0.0
      %2166 = vmatmul.mubr.f32.gmra.mrb[0].mxu0 %v1988
      %v2167 = vpop.f32.mrb[0].mxu0
      %v2168 = vadd.f32 0.0, %v2167
      %v2169 = vpop.f32.mrb[0].mxu0
      %2170 = vmatprep.mubr.f32.mxu0 0.0
      %2171 = vmatmul.mubr.f32.gmra.mrb[0].mxu0 %v1991
      %v2172 = vpop.f32.mrb[0].mxu0
      %v2173 = vadd.f32 0.0, %v2172
      %v2174 = vpop.f32.mrb[0].mxu0
      %2175 = vmatprep.mubr.f32.mxu0 0.0
      %2176 = vmatmul.mubr.f32.gmra.mrb[0].mxu0 %v1994
      %v2177 = vpop.f32.mrb[0].mxu0
      %v2178 = vadd.f32 0.0, %v2177
      %v2179 = vpop.f32.mrb[0].mxu0
      %2180 = vmatprep.mubr.f32.mxu0 0.0
      %2181 = vmatmul.mubr.f32.gmra.mrb[0].mxu0 %v1997
      %v2182 = vpop.f32.mrb[0].mxu0
      %v2183 = vadd.f32 0.0, %v2182
      %v2184 = vpop.f32.mrb[0].mxu0
      %2185 = vmatprep.mubr.f32.mxu0 0.0
      %2186 = vmatmul.mubr.f32.gmra.mrb[0].mxu0 %v2000
      %v2187 = vpop.f32.mrb[0].mxu0
      %v2188 = vadd.f32 0.0, %v2187
      %v2189 = vpop.f32.mrb[0].mxu0
      %2190 = vmatprep.mubr.f32.mxu0 0.0
      %2191 = vmatmul.mubr.f32.gmra.mrb[0].mxu0 %v2003
      %v2192 = vpop.f32.mrb[0].mxu0
      %v2193 = vadd.f32 0.0, %v2192
      %v2194 = vpop.f32.mrb[0].mxu0
      %2195 = vmatprep.mubr.f32.mxu0 0.0
      %2196 = vmatmul.mubr.f32.gmra.mrb[0].mxu0 %v2006
      %v2197 = vpop.f32.mrb[0].mxu0
      %v2198 = vadd.f32 0.0, %v2197
      %v2199 = vpop.f32.mrb[0].mxu0
      %2200 = vmatprep.mubr.f32.mxu0 0.0
      %2201 = vmatmul.mubr.f32.gmra.mrb[0].mxu0 %v2009
      %v2202 = vpop.f32.mrb[0].mxu0
      %v2203 = vadd.f32 0.0, %v2202
      %v2204 = vpop.f32.mrb[0].mxu0
      %2205 = vmatprep.mubr.f32.mxu0 0.0
      %2206 = vmatmul.mubr.f32.gmra.mrb[0].mxu0 %v2012
      %v2207 = vpop.f32.mrb[0].mxu0
      %v2208 = vadd.f32 0.0, %v2207
      %v2209 = vpop.f32.mrb[0].mxu0
      %2210 = vmatprep.mubr.f32.mxu0 0.0
      %2211 = vmatmul.mubr.f32.gmra.mrb[0].mxu0 %v2015
      %v2212 = vpop.f32.mrb[0].mxu0
      %v2213 = vadd.f32 0.0, %v2212
      %v2214 = vpop.f32.mrb[0].mxu0
      %2215 = vmatprep.mubr.f32.mxu0 0.0
      %2216 = vmatmul.mubr.f32.gmra.mrb[0].mxu0 %v2018
      %v2217 = vpop.f32.mrb[0].mxu0
      %v2218 = vadd.f32 0.0, %v2217
      %v2219 = vpop.f32.mrb[0].mxu0
      %2220 = vmatprep.mubr.f32.mxu0 0.0
      %2221 = vmatmul.mubr.f32.gmra.mrb[0].mxu0 %v2021
      %v2222 = vpop.f32.mrb[0].mxu0
      %v2223 = vadd.f32 0.0, %v2222
      %v2224 = vpop.f32.mrb[0].mxu0
      %2225 = vmatprep.mubr.f32.mxu0 0.0
      %2226 = vmatmul.mubr.f32.gmra.mrb[0].mxu0 %v2024
      %v2227 = vpop.f32.mrb[0].mxu0
      %v2228 = vadd.f32 0.0, %v2227
      %v2229 = vpop.f32.mrb[0].mxu0
      %2230 = vmatprep.mubr.f32.mxu0 0.0
      %2231 = vmatmul.mubr.f32.gmra.mrb[0].mxu0 %v2027
      %v2232 = vpop.f32.mrb[0].mxu0
      %v2233 = vadd.f32 0.0, %v2232
      %v2234 = vpop.f32.mrb[0].mxu0
      %2235 = vmatprep.mubr.f32.mxu0 0.0
      %2236 = vmatmul.mubr.f32.gmra.mrb[0].mxu0 %v2030
      %v2237 = vpop.f32.mrb[0].mxu0
      %v2238 = vadd.f32 0.0, %v2237
      %v2239 = vpop.f32.mrb[0].mxu0
      %2240 = vmatprep.mubr.f32.mxu0 0.0
      %2241 = vmatmul.mubr.f32.gmra.mrb[0].mxu0 %v2033
      %v2242 = vpop.f32.mrb[0].mxu0
      %v2243 = vadd.f32 0.0, %v2242
      %v2244 = vpop.f32.mrb[0].mxu0
      %2245 = vmatprep.mubr.f32.mxu0 0.0
      %2246 = vmatmul.mubr.f32.gmra.mrb[0].mxu0 %v2036
      %v2247 = vpop.f32.mrb[0].mxu0
      %v2248 = vadd.f32 0.0, %v2247
      %v2249 = vpop.f32.mrb[0].mxu0
      %2250 = vmatprep.mubr.f32.mxu0 0.0
      %2251 = vmatmul.mubr.f32.gmra.mrb[0].mxu0 %v2039
      %v2252 = vpop.f32.mrb[0].mxu0
      %v2253 = vadd.f32 0.0, %v2252
      %v2254 = vpop.f32.mrb[0].mxu0
      %2255 = vmatprep.mubr.f32.mxu0 0.0
      %2256 = vmatmul.mubr.f32.gmra.mrb[0].mxu0 %v2042
      %v2257 = vpop.f32.mrb[0].mxu0
      %v2258 = vadd.f32 0.0, %v2257
      %v2259 = vpop.f32.mrb[0].mxu0
      %2260 = vmatprep.mubr.f32.mxu0 0.0
      %2261 = vmatmul.mubr.f32.gmra.mrb[0].mxu0 %v2045
      %v2262 = vpop.f32.mrb[0].mxu0
      %v2263 = vadd.f32 0.0, %v2262
      %v2264 = vpop.f32.mrb[0].mxu0
      %2265 = vmatprep.mubr.f32.mxu0 0.0
      %2266 = vmatmul.mubr.f32.gmra.mrb[0].mxu0 %v2048
      %v2267 = vpop.f32.mrb[0].mxu0
      %v2268 = vadd.f32 0.0, %v2267
      %v2269 = vpop.f32.mrb[0].mxu0
      %2270 = vmatprep.mubr.f32.mxu0 0.0
      %2271 = vmatmul.mubr.f32.gmra.mrb[0].mxu0 %v2051
      %v2272 = vpop.f32.mrb[0].mxu0
      %v2273 = vadd.f32 0.0, %v2272
      %v2274 = vpop.f32.mrb[0].mxu0
      %2275 = vmatprep.mubr.f32.mxu0 0.0
      %2276 = vmatmul.mubr.f32.gmra.mrb[0].mxu0 %v2054
      %v2277 = vpop.f32.mrb[0].mxu0
      %v2278 = vadd.f32 0.0, %v2277
      %v2279 = vpop.f32.mrb[0].mxu0
      %2280 = vmatprep.mubr.f32.mxu0 0.0
      %2281 = vmatmul.mubr.f32.gmra.mrb[0].mxu0 %v2057
      %v2282 = vpop.f32.mrb[0].mxu0
      %v2283 = vadd.f32 0.0, %v2282
      %v2284 = vpop.f32.mrb[0].mxu0
      %2285 = vmatprep.mubr.f32.mxu0 0.0
      %2286 = vmatmul.mubr.f32.gmra.mrb[0].mxu0 %v2060
      %v2287 = vpop.f32.mrb[0].mxu0
      %v2288 = vadd.f32 0.0, %v2287
      %v2289 = vpop.f32.mrb[0].mxu0
      %2290 = vmatprep.mubr.f32.mxu0 0.0
      %2291 = vmatmul.mubr.f32.gmra.mrb[0].mxu0 %v2063
      %v2292 = vpop.f32.mrb[0].mxu0
      %v2293 = vadd.f32 0.0, %v2292
      %v2294 = vpop.f32.mrb[0].mxu0
      %2295 = vmatprep.mubr.f32.mxu0 0.0
      %2296 = vmatmul.mubr.f32.gmra.mrb[0].mxu0 %v2066
      %v2297 = vpop.f32.mrb[0].mxu0
      %v2298 = vadd.f32 0.0, %v2297
      %v2299 = vpop.f32.mrb[0].mxu0
      %2300 = vmatprep.mubr.f32.mxu0 0.0
      %2301 = vmatmul.mubr.f32.gmra.mrb[0].mxu0 %v2069
      %v2302 = vpop.f32.mrb[0].mxu0
      %v2303 = vadd.f32 0.0, %v2302
      %v2304 = vpop.f32.mrb[0].mxu0
      %2305 = vmatprep.mubr.f32.mxu0 0.0
      %2306 = vmatmul.mubr.f32.gmra.mrb[0].mxu0 %v2072
      %v2307 = vpop.f32.mrb[0].mxu0
      %v2308 = vadd.f32 0.0, %v2307
      %v2309 = vpop.f32.mrb[0].mxu0
      %2310 = vmatprep.mubr.f32.mxu0 0.0
      %2311 = vmatmul.mubr.f32.gmra.mrb[0].mxu0 %v2075
      %v2312 = vpop.f32.mrb[0].mxu0
      %v2313 = vadd.f32 0.0, %v2312
      %v2314 = vpop.f32.mrb[0].mxu0
      %2315 = vmatprep.mubr.f32.mxu0 0.0
      %2316 = vmatmul.mubr.f32.gmra.mrb[0].mxu0 %v2078
      %v2317 = vpop.f32.mrb[0].mxu0
      %v2318 = vadd.f32 0.0, %v2317
      %v2319 = vpop.f32.mrb[0].mxu0
      %2320 = vmatprep.mubr.f32.mxu0 0.0
      %2321 = vmatmul.mubr.f32.gmra.mrb[0].mxu0 %v2081
      %v2322 = vpop.f32.mrb[0].mxu0
      %v2323 = vadd.f32 0.0, %v2322
      %v2324 = vpop.f32.mrb[0].mxu0
      %2325 = vmatprep.mubr.f32.mxu0 0.0
      %2326 = vmatmul.mubr.f32.gmra.mrb[0].mxu0 %v2084
      %v2327 = vpop.f32.mrb[0].mxu0
      %v2328 = vadd.f32 0.0, %v2327
      %v2329 = vpop.f32.mrb[0].mxu0
      %2330 = vdwg.mxu0
      %v2331 = vadd.f32 %v1903, %v2153
      %v2332 = vadd.f32 %v1904, %v2158
      %v2333 = vadd.f32 %v1905, %v2163
      %v2334 = vadd.f32 %v1906, %v2168
      %v2335 = vadd.f32 %v1907, %v2173
      %v2336 = vadd.f32 %v1908, %v2178
      %v2337 = vadd.f32 %v1909, %v2183
      %v2338 = vadd.f32 %v1910, %v2188
      %v2339 = vadd.f32 %v1911, %v2193
      %v2340 = vadd.f32 %v1912, %v2198
      %v2341 = vadd.f32 %v1913, %v2203
      %v2342 = vadd.f32 %v1914, %v2208
      %v2343 = vadd.f32 %v1915, %v2213
      %v2344 = vadd.f32 %v1916, %v2218
      %v2345 = vadd.f32 %v1917, %v2223
      %v2346 = vadd.f32 %v1918, %v2228
      %v2347 = vadd.f32 %v1919, %v2233
      %v2348 = vadd.f32 %v1920, %v2238
      %v2349 = vadd.f32 %v1921, %v2243
      %v2350 = vadd.f32 %v1922, %v2248
      %v2351 = vadd.f32 %v1923, %v2253
      %v2352 = vadd.f32 %v1924, %v2258
      %v2353 = vadd.f32 %v1925, %v2263
      %v2354 = vadd.f32 %v1926, %v2268
      %v2355 = vadd.f32 %v1927, %v2273
      %v2356 = vadd.f32 %v1928, %v2278
      %v2357 = vadd.f32 %v1929, %v2283
      %v2358 = vadd.f32 %v1930, %v2288
      %v2359 = vadd.f32 %v1931, %v2293
      %v2360 = vadd.f32 %v1932, %v2298
      %v2361 = vadd.f32 %v1933, %v2303
      %v2362 = vadd.f32 %v1934, %v2308
      %v2363 = vadd.f32 %v1935, %v2313
      %v2364 = vadd.f32 %v1936, %v2318
      %v2365 = vadd.f32 %v1937, %v2323
      %v2366 = vadd.f32 %v1938, %v2328
      %v2367 = vld [vmem:[%s288 + $0x14] sm:$0xff]
      %v2368 = vld [vmem:[%s288 + $0x1c] sm:$0xff]
      %v2369 = vld [vmem:[%s288 + $0x24] sm:$0xff]
      %v2370 = vld [vmem:[%s288 + $0x2c] sm:$0xff]
      %v2371 = vld [vmem:[%s288 + $0x34] sm:$0xff]
      %v2372 = vld [vmem:[%s288 + $0x3c] sm:$0xff]
      %v2373 = vld [vmem:[%s288 + $0x44] sm:$0xff]
      %v2374 = vld [vmem:[%s288 + $0x4c] sm:$0xff]
      %v2375 = vld [vmem:[%s288 + $0x54] sm:$0xff]
      %v2376 = vld [vmem:[%s288 + $0x5c] sm:$0xff]
      %v2377 = vld [vmem:[%s288 + $0x64] sm:$0xff]
      %v2378 = vld [vmem:[%s288 + $0x6c] sm:$0xff]
      %v2379 = vld [vmem:[%s288 + $0x74] sm:$0xff]
      %v2380 = vld [vmem:[%s288 + $0x7c] sm:$0xff]
      %v2381 = vld [vmem:[%s288 + $0x84] sm:$0xff]
      %v2382 = vld [vmem:[%s288 + $0x8c] sm:$0xff]
      %v2383 = vld [vmem:[%s288 + $0x94] sm:$0xff]
      %v2384 = vld [vmem:[%s288 + $0x9c] sm:$0xff]
      %v2385 = vld [vmem:[%s288 + $0xa4] sm:$0xff]
      %v2386 = vld [vmem:[%s288 + $0xac] sm:$0xff]
      %v2387 = vld [vmem:[%s288 + $0xb4] sm:$0xff]
      %v2388 = vld [vmem:[%s288 + $0xbc] sm:$0xff]
      %v2389 = vld [vmem:[%s288 + $0xc4] sm:$0xff]
      %v2390 = vld [vmem:[%s288 + $0xcc] sm:$0xff]
      %v2391 = vld [vmem:[%s288 + $0xd4] sm:$0xff]
      %v2392 = vld [vmem:[%s288 + $0xdc] sm:$0xff]
      %v2393 = vld [vmem:[%s288 + $0xe4] sm:$0xff]
      %v2394 = vld [vmem:[%s288 + $0xec] sm:$0xff]
      %v2395 = vld [vmem:[%s288 + $0xf4] sm:$0xff]
      %v2396 = vld [vmem:[%s288 + $0xfc] sm:$0xff]
      %v2397 = vld [vmem:[%s288 + $0x104] sm:$0xff]
      %v2398 = vld [vmem:[%s288 + $0x10c] sm:$0xff]
      %v2399 = vld [vmem:[%s288 + $0x114] sm:$0xff]
      %v2400 = vld [vmem:[%s288 + $0x11c] sm:$0xff]
      %v2401 = vld [vmem:[%s288 + $0x124] sm:$0xff]
      %v2402 = vld [vmem:[%s288 + $0x12c] sm:$0xff]
      %s2403 = scalar_lea.vmem %s1, 80
      %v2404 = vld [vmem:[%s2403] sm:$0xff]
      %v2405 = vld [vmem:[%s2403 + $0x8] sm:$0xff]
      %v2407 = vsel %vm376, %v2367, 0
      %v2410 = vsel %vm376, %v2368, 0
      %v2413 = vsel %vm376, %v2369, 0
      %v2416 = vsel %vm376, %v2370, 0
      %v2419 = vsel %vm376, %v2371, 0
      %v2422 = vsel %vm376, %v2372, 0
      %v2425 = vsel %vm376, %v2373, 0
      %v2428 = vsel %vm376, %v2374, 0
      %v2431 = vsel %vm376, %v2375, 0
      %v2434 = vsel %vm376, %v2376, 0
      %v2437 = vsel %vm376, %v2377, 0
      %v2440 = vsel %vm376, %v2378, 0
      %v2443 = vsel %vm376, %v2379, 0
      %v2446 = vsel %vm376, %v2380, 0
      %v2449 = vsel %vm376, %v2381, 0
      %v2452 = vsel %vm376, %v2382, 0
      %v2455 = vsel %vm376, %v2383, 0
      %v2458 = vsel %vm376, %v2384, 0
      %v2461 = vsel %vm376, %v2385, 0
      %v2464 = vsel %vm376, %v2386, 0
      %v2467 = vsel %vm376, %v2387, 0
      %v2470 = vsel %vm376, %v2388, 0
      %v2473 = vsel %vm376, %v2389, 0
      %v2476 = vsel %vm376, %v2390, 0
      %v2479 = vsel %vm376, %v2391, 0
      %v2482 = vsel %vm376, %v2392, 0
      %v2485 = vsel %vm376, %v2393, 0
      %v2488 = vsel %vm376, %v2394, 0
      %v2491 = vsel %vm376, %v2395, 0
      %v2494 = vsel %vm376, %v2396, 0
      %v2497 = vsel %vm376, %v2397, 0
      %v2500 = vsel %vm376, %v2398, 0
      %v2503 = vsel %vm376, %v2399, 0
      %v2506 = vsel %vm376, %v2400, 0
      %v2509 = vsel %vm376, %v2401, 0
      %v2512 = vsel %vm376, %v2402, 0
      %2514 = vmatprep.subr.mxu0 0.0
      %2515 = vmatpush1.msra.mxu0 %v2404
      %2516 = vmatprep.subr.mxu0 0.0
      %2517 = vmatpush1.msra.mxu0 %v2405
      %2518 = vmatprep.subr.mxu0 0.0
      %2519 = vmatpush1.msra.mxu0 0.0
      %2520 = vmatprep.subr.mxu0 0.0
      %2521 = vmatpush1.msra.mxu0 0.0
      %2522 = vmatprep.subr.mxu0 0.0
      %2523 = vmatpush1.msra.mxu0 0.0
      %2524 = vmatprep.subr.mxu0 0.0
      %2525 = vmatpush1.msra.mxu0 0.0
      %2526 = vmatprep.subr.mxu0 0.0
      %2527 = vmatpush1.msra.mxu0 0.0
      %2528 = vmatprep.subr.mxu0 0.0
      %2529 = vmatpush1.msra.mxu0 0.0
      %2530 = vmatprep.subr.mxu0 0.0
      %2531 = vmatpush1.msra.mxu0 0.0
      %2532 = vmatprep.subr.mxu0 0.0
      %2533 = vmatpush1.msra.mxu0 0.0
      %2534 = vmatprep.subr.mxu0 0.0
      %2535 = vmatpush1.msra.mxu0 0.0
      %2536 = vmatprep.subr.mxu0 0.0
      %2537 = vmatpush1.msra.mxu0 0.0
      %2538 = vmatprep.subr.mxu0 0.0
      %2539 = vmatpush1.msra.mxu0 0.0
      %2540 = vmatprep.subr.mxu0 0.0
      %2541 = vmatpush1.msra.mxu0 0.0
      %2542 = vmatprep.subr.mxu0 0.0
      %2543 = vmatpush1.msra.mxu0 0.0
      %2544 = vmatprep.subr.mxu0 0.0
      %2545 = vmatpush1.msra.mxu0 0.0
      %2546 = vmatprep.subr.mxu0 0.0
      %2547 = vmatpush1.msra.mxu0 0.0
      %2548 = vmatprep.subr.mxu0 0.0
      %2549 = vmatpush1.msra.mxu0 0.0
      %2550 = vmatprep.subr.mxu0 0.0
      %2551 = vmatpush1.msra.mxu0 0.0
      %2552 = vmatprep.subr.mxu0 0.0
      %2553 = vmatpush1.msra.mxu0 0.0
      %2554 = vmatprep.subr.mxu0 0.0
      %2555 = vmatpush1.msra.mxu0 0.0
      %2556 = vmatprep.subr.mxu0 0.0
      %2557 = vmatpush1.msra.mxu0 0.0
      %2558 = vmatprep.subr.mxu0 0.0
      %2559 = vmatpush1.msra.mxu0 0.0
      %2560 = vmatprep.subr.mxu0 0.0
      %2561 = vmatpush1.msra.mxu0 0.0
      %2562 = vmatprep.subr.mxu0 0.0
      %2563 = vmatpush1.msra.mxu0 0.0
      %2564 = vmatprep.subr.mxu0 0.0
      %2565 = vmatpush1.msra.mxu0 0.0
      %2566 = vmatprep.subr.mxu0 0.0
      %2567 = vmatpush1.msra.mxu0 0.0
      %2568 = vmatprep.subr.mxu0 0.0
      %2569 = vmatpush1.msra.mxu0 0.0
      %2570 = vmatprep.subr.mxu0 0.0
      %2571 = vmatpush1.msra.mxu0 0.0
      %2572 = vmatprep.subr.mxu0 0.0
      %2573 = vmatpush1.msra.mxu0 0.0
      %2574 = vmatprep.subr.mxu0 0.0
      %2575 = vmatpush1.msra.mxu0 0.0
      %2576 = vmatprep.subr.mxu0 0.0
      %2577 = vmatpush1.msra.mxu0 0.0
      %2578 = vmatprep.mubr.f32.mxu0 0.0
      %2579 = vmatmul.mubr.f32.gmra.mrb[0].mxu0 %v2407
      %v2580 = vpop.f32.mrb[0].mxu0
      %v2581 = vadd.f32 0.0, %v2580
      %v2582 = vpop.f32.mrb[0].mxu0
      %2583 = vmatprep.mubr.f32.mxu0 0.0
      %2584 = vmatmul.mubr.f32.gmra.mrb[0].mxu0 %v2410
      %v2585 = vpop.f32.mrb[0].mxu0
      %v2586 = vadd.f32 0.0, %v2585
      %v2587 = vpop.f32.mrb[0].mxu0
      %2588 = vmatprep.mubr.f32.mxu0 0.0
      %2589 = vmatmul.mubr.f32.gmra.mrb[0].mxu0 %v2413
      %v2590 = vpop.f32.mrb[0].mxu0
      %v2591 = vadd.f32 0.0, %v2590
      %v2592 = vpop.f32.mrb[0].mxu0
      %2593 = vmatprep.mubr.f32.mxu0 0.0
      %2594 = vmatmul.mubr.f32.gmra.mrb[0].mxu0 %v2416
      %v2595 = vpop.f32.mrb[0].mxu0
      %v2596 = vadd.f32 0.0, %v2595
      %v2597 = vpop.f32.mrb[0].mxu0
      %2598 = vmatprep.mubr.f32.mxu0 0.0
      %2599 = vmatmul.mubr.f32.gmra.mrb[0].mxu0 %v2419
      %v2600 = vpop.f32.mrb[0].mxu0
      %v2601 = vadd.f32 0.0, %v2600
      %v2602 = vpop.f32.mrb[0].mxu0
      %2603 = vmatprep.mubr.f32.mxu0 0.0
      %2604 = vmatmul.mubr.f32.gmra.mrb[0].mxu0 %v2422
      %v2605 = vpop.f32.mrb[0].mxu0
      %v2606 = vadd.f32 0.0, %v2605
      %v2607 = vpop.f32.mrb[0].mxu0
      %2608 = vmatprep.mubr.f32.mxu0 0.0
      %2609 = vmatmul.mubr.f32.gmra.mrb[0].mxu0 %v2425
      %v2610 = vpop.f32.mrb[0].mxu0
      %v2611 = vadd.f32 0.0, %v2610
      %v2612 = vpop.f32.mrb[0].mxu0
      %2613 = vmatprep.mubr.f32.mxu0 0.0
      %2614 = vmatmul.mubr.f32.gmra.mrb[0].mxu0 %v2428
      %v2615 = vpop.f32.mrb[0].mxu0
      %v2616 = vadd.f32 0.0, %v2615
      %v2617 = vpop.f32.mrb[0].mxu0
      %2618 = vmatprep.mubr.f32.mxu0 0.0
      %2619 = vmatmul.mubr.f32.gmra.mrb[0].mxu0 %v2431
      %v2620 = vpop.f32.mrb[0].mxu0
      %v2621 = vadd.f32 0.0, %v2620
      %v2622 = vpop.f32.mrb[0].mxu0
      %2623 = vmatprep.mubr.f32.mxu0 0.0
      %2624 = vmatmul.mubr.f32.gmra.mrb[0].mxu0 %v2434
      %v2625 = vpop.f32.mrb[0].mxu0
      %v2626 = vadd.f32 0.0, %v2625
      %v2627 = vpop.f32.mrb[0].mxu0
      %2628 = vmatprep.mubr.f32.mxu0 0.0
      %2629 = vmatmul.mubr.f32.gmra.mrb[0].mxu0 %v2437
      %v2630 = vpop.f32.mrb[0].mxu0
      %v2631 = vadd.f32 0.0, %v2630
      %v2632 = vpop.f32.mrb[0].mxu0
      %2633 = vmatprep.mubr.f32.mxu0 0.0
      %2634 = vmatmul.mubr.f32.gmra.mrb[0].mxu0 %v2440
      %v2635 = vpop.f32.mrb[0].mxu0
      %v2636 = vadd.f32 0.0, %v2635
      %v2637 = vpop.f32.mrb[0].mxu0
      %2638 = vmatprep.mubr.f32.mxu0 0.0
      %2639 = vmatmul.mubr.f32.gmra.mrb[0].mxu0 %v2443
      %v2640 = vpop.f32.mrb[0].mxu0
      %v2641 = vadd.f32 0.0, %v2640
      %v2642 = vpop.f32.mrb[0].mxu0
      %2643 = vmatprep.mubr.f32.mxu0 0.0
      %2644 = vmatmul.mubr.f32.gmra.mrb[0].mxu0 %v2446
      %v2645 = vpop.f32.mrb[0].mxu0
      %v2646 = vadd.f32 0.0, %v2645
      %v2647 = vpop.f32.mrb[0].mxu0
      %2648 = vmatprep.mubr.f32.mxu0 0.0
      %2649 = vmatmul.mubr.f32.gmra.mrb[0].mxu0 %v2449
      %v2650 = vpop.f32.mrb[0].mxu0
      %v2651 = vadd.f32 0.0, %v2650
      %v2652 = vpop.f32.mrb[0].mxu0
      %2653 = vmatprep.mubr.f32.mxu0 0.0
      %2654 = vmatmul.mubr.f32.gmra.mrb[0].mxu0 %v2452
      %v2655 = vpop.f32.mrb[0].mxu0
      %v2656 = vadd.f32 0.0, %v2655
      %v2657 = vpop.f32.mrb[0].mxu0
      %2658 = vmatprep.mubr.f32.mxu0 0.0
      %2659 = vmatmul.mubr.f32.gmra.mrb[0].mxu0 %v2455
      %v2660 = vpop.f32.mrb[0].mxu0
      %v2661 = vadd.f32 0.0, %v2660
      %v2662 = vpop.f32.mrb[0].mxu0
      %2663 = vmatprep.mubr.f32.mxu0 0.0
      %2664 = vmatmul.mubr.f32.gmra.mrb[0].mxu0 %v2458
      %v2665 = vpop.f32.mrb[0].mxu0
      %v2666 = vadd.f32 0.0, %v2665
      %v2667 = vpop.f32.mrb[0].mxu0
      %2668 = vmatprep.mubr.f32.mxu0 0.0
      %2669 = vmatmul.mubr.f32.gmra.mrb[0].mxu0 %v2461
      %v2670 = vpop.f32.mrb[0].mxu0
      %v2671 = vadd.f32 0.0, %v2670
      %v2672 = vpop.f32.mrb[0].mxu0
      %2673 = vmatprep.mubr.f32.mxu0 0.0
      %2674 = vmatmul.mubr.f32.gmra.mrb[0].mxu0 %v2464
      %v2675 = vpop.f32.mrb[0].mxu0
      %v2676 = vadd.f32 0.0, %v2675
      %v2677 = vpop.f32.mrb[0].mxu0
      %2678 = vmatprep.mubr.f32.mxu0 0.0
      %2679 = vmatmul.mubr.f32.gmra.mrb[0].mxu0 %v2467
      %v2680 = vpop.f32.mrb[0].mxu0
      %v2681 = vadd.f32 0.0, %v2680
      %v2682 = vpop.f32.mrb[0].mxu0
      %2683 = vmatprep.mubr.f32.mxu0 0.0
      %2684 = vmatmul.mubr.f32.gmra.mrb[0].mxu0 %v2470
      %v2685 = vpop.f32.mrb[0].mxu0
      %v2686 = vadd.f32 0.0, %v2685
      %v2687 = vpop.f32.mrb[0].mxu0
      %2688 = vmatprep.mubr.f32.mxu0 0.0
      %2689 = vmatmul.mubr.f32.gmra.mrb[0].mxu0 %v2473
      %v2690 = vpop.f32.mrb[0].mxu0
      %v2691 = vadd.f32 0.0, %v2690
      %v2692 = vpop.f32.mrb[0].mxu0
      %2693 = vmatprep.mubr.f32.mxu0 0.0
      %2694 = vmatmul.mubr.f32.gmra.mrb[0].mxu0 %v2476
      %v2695 = vpop.f32.mrb[0].mxu0
      %v2696 = vadd.f32 0.0, %v2695
      %v2697 = vpop.f32.mrb[0].mxu0
      %2698 = vmatprep.mubr.f32.mxu0 0.0
      %2699 = vmatmul.mubr.f32.gmra.mrb[0].mxu0 %v2479
      %v2700 = vpop.f32.mrb[0].mxu0
      %v2701 = vadd.f32 0.0, %v2700
      %v2702 = vpop.f32.mrb[0].mxu0
      %2703 = vmatprep.mubr.f32.mxu0 0.0
      %2704 = vmatmul.mubr.f32.gmra.mrb[0].mxu0 %v2482
      %v2705 = vpop.f32.mrb[0].mxu0
      %v2706 = vadd.f32 0.0, %v2705
      %v2707 = vpop.f32.mrb[0].mxu0
      %2708 = vmatprep.mubr.f32.mxu0 0.0
      %2709 = vmatmul.mubr.f32.gmra.mrb[0].mxu0 %v2485
      %v2710 = vpop.f32.mrb[0].mxu0
      %v2711 = vadd.f32 0.0, %v2710
      %v2712 = vpop.f32.mrb[0].mxu0
      %2713 = vmatprep.mubr.f32.mxu0 0.0
      %2714 = vmatmul.mubr.f32.gmra.mrb[0].mxu0 %v2488
      %v2715 = vpop.f32.mrb[0].mxu0
      %v2716 = vadd.f32 0.0, %v2715
      %v2717 = vpop.f32.mrb[0].mxu0
      %2718 = vmatprep.mubr.f32.mxu0 0.0
      %2719 = vmatmul.mubr.f32.gmra.mrb[0].mxu0 %v2491
      %v2720 = vpop.f32.mrb[0].mxu0
      %v2721 = vadd.f32 0.0, %v2720
      %v2722 = vpop.f32.mrb[0].mxu0
      %2723 = vmatprep.mubr.f32.mxu0 0.0
      %2724 = vmatmul.mubr.f32.gmra.mrb[0].mxu0 %v2494
      %v2725 = vpop.f32.mrb[0].mxu0
      %v2726 = vadd.f32 0.0, %v2725
      %v2727 = vpop.f32.mrb[0].mxu0
      %2728 = vmatprep.mubr.f32.mxu0 0.0
      %2729 = vmatmul.mubr.f32.gmra.mrb[0].mxu0 %v2497
      %v2730 = vpop.f32.mrb[0].mxu0
      %v2731 = vadd.f32 0.0, %v2730
      %v2732 = vpop.f32.mrb[0].mxu0
      %2733 = vmatprep.mubr.f32.mxu0 0.0
      %2734 = vmatmul.mubr.f32.gmra.mrb[0].mxu0 %v2500
      %v2735 = vpop.f32.mrb[0].mxu0
      %v2736 = vadd.f32 0.0, %v2735
      %v2737 = vpop.f32.mrb[0].mxu0
      %2738 = vmatprep.mubr.f32.mxu0 0.0
      %2739 = vmatmul.mubr.f32.gmra.mrb[0].mxu0 %v2503
      %v2740 = vpop.f32.mrb[0].mxu0
      %v2741 = vadd.f32 0.0, %v2740
      %v2742 = vpop.f32.mrb[0].mxu0
      %2743 = vmatprep.mubr.f32.mxu0 0.0
      %2744 = vmatmul.mubr.f32.gmra.mrb[0].mxu0 %v2506
      %v2745 = vpop.f32.mrb[0].mxu0
      %v2746 = vadd.f32 0.0, %v2745
      %v2747 = vpop.f32.mrb[0].mxu0
      %2748 = vmatprep.mubr.f32.mxu0 0.0
      %2749 = vmatmul.mubr.f32.gmra.mrb[0].mxu0 %v2509
      %v2750 = vpop.f32.mrb[0].mxu0
      %v2751 = vadd.f32 0.0, %v2750
      %v2752 = vpop.f32.mrb[0].mxu0
      %2753 = vmatprep.mubr.f32.mxu0 0.0
      %2754 = vmatmul.mubr.f32.gmra.mrb[0].mxu0 %v2512
      %v2755 = vpop.f32.mrb[0].mxu0
      %v2756 = vadd.f32 0.0, %v2755
      %v2757 = vpop.f32.mrb[0].mxu0
      %2758 = vdwg.mxu0
      %v2759 = vadd.f32 %v2331, %v2581
      %v2760 = vadd.f32 %v2332, %v2586
      %v2761 = vadd.f32 %v2333, %v2591
      %v2762 = vadd.f32 %v2334, %v2596
      %v2763 = vadd.f32 %v2335, %v2601
      %v2764 = vadd.f32 %v2336, %v2606
      %v2765 = vadd.f32 %v2337, %v2611
      %v2766 = vadd.f32 %v2338, %v2616
      %v2767 = vadd.f32 %v2339, %v2621
      %v2768 = vadd.f32 %v2340, %v2626
      %v2769 = vadd.f32 %v2341, %v2631
      %v2770 = vadd.f32 %v2342, %v2636
      %v2771 = vadd.f32 %v2343, %v2641
      %v2772 = vadd.f32 %v2344, %v2646
      %v2773 = vadd.f32 %v2345, %v2651
      %v2774 = vadd.f32 %v2346, %v2656
      %v2775 = vadd.f32 %v2347, %v2661
      %v2776 = vadd.f32 %v2348, %v2666
      %v2777 = vadd.f32 %v2349, %v2671
      %v2778 = vadd.f32 %v2350, %v2676
      %v2779 = vadd.f32 %v2351, %v2681
      %v2780 = vadd.f32 %v2352, %v2686
      %v2781 = vadd.f32 %v2353, %v2691
      %v2782 = vadd.f32 %v2354, %v2696
      %v2783 = vadd.f32 %v2355, %v2701
      %v2784 = vadd.f32 %v2356, %v2706
      %v2785 = vadd.f32 %v2357, %v2711
      %v2786 = vadd.f32 %v2358, %v2716
      %v2787 = vadd.f32 %v2359, %v2721
      %v2788 = vadd.f32 %v2360, %v2726
      %v2789 = vadd.f32 %v2361, %v2731
      %v2790 = vadd.f32 %v2362, %v2736
      %v2791 = vadd.f32 %v2363, %v2741
      %v2792 = vadd.f32 %v2364, %v2746
      %v2793 = vadd.f32 %v2365, %v2751
      %v2794 = vadd.f32 %v2366, %v2756
      %v2795 = vld [vmem:[%s288 + $0x24] sm:$0xff]
      %v2796 = vld [vmem:[%s288 + $0x2c] sm:$0xff]
      %v2797 = vld [vmem:[%s288 + $0x34] sm:$0xff]
      %v2798 = vld [vmem:[%s288 + $0x3c] sm:$0xff]
      %v2799 = vld [vmem:[%s288 + $0x44] sm:$0xff]
      %v2800 = vld [vmem:[%s288 + $0x4c] sm:$0xff]
      %v2801 = vld [vmem:[%s288 + $0x54] sm:$0xff]
      %v2802 = vld [vmem:[%s288 + $0x5c] sm:$0xff]
      %v2803 = vld [vmem:[%s288 + $0x64] sm:$0xff]
      %v2804 = vld [vmem:[%s288 + $0x6c] sm:$0xff]
      %v2805 = vld [vmem:[%s288 + $0x74] sm:$0xff]
      %v2806 = vld [vmem:[%s288 + $0x7c] sm:$0xff]
      %v2807 = vld [vmem:[%s288 + $0x84] sm:$0xff]
      %v2808 = vld [vmem:[%s288 + $0x8c] sm:$0xff]
      %v2809 = vld [vmem:[%s288 + $0x94] sm:$0xff]
      %v2810 = vld [vmem:[%s288 + $0x9c] sm:$0xff]
      %v2811 = vld [vmem:[%s288 + $0xa4] sm:$0xff]
      %v2812 = vld [vmem:[%s288 + $0xac] sm:$0xff]
      %v2813 = vld [vmem:[%s288 + $0xb4] sm:$0xff]
      %v2814 = vld [vmem:[%s288 + $0xbc] sm:$0xff]
      %v2815 = vld [vmem:[%s288 + $0xc4] sm:$0xff]
      %v2816 = vld [vmem:[%s288 + $0xcc] sm:$0xff]
      %v2817 = vld [vmem:[%s288 + $0xd4] sm:$0xff]
      %v2818 = vld [vmem:[%s288 + $0xdc] sm:$0xff]
      %v2819 = vld [vmem:[%s288 + $0xe4] sm:$0xff]
      %v2820 = vld [vmem:[%s288 + $0xec] sm:$0xff]
      %v2821 = vld [vmem:[%s288 + $0xf4] sm:$0xff]
      %v2822 = vld [vmem:[%s288 + $0xfc] sm:$0xff]
      %v2823 = vld [vmem:[%s288 + $0x104] sm:$0xff]
      %v2824 = vld [vmem:[%s288 + $0x10c] sm:$0xff]
      %v2825 = vld [vmem:[%s288 + $0x114] sm:$0xff]
      %v2826 = vld [vmem:[%s288 + $0x11c] sm:$0xff]
      %v2827 = vld [vmem:[%s288 + $0x124] sm:$0xff]
      %v2828 = vld [vmem:[%s288 + $0x12c] sm:$0xff]
      %v2829 = vld [vmem:[%s288 + $0x134] sm:$0xff]
      %v2830 = vld [vmem:[%s288 + $0x13c] sm:$0xff]
      %s2831 = scalar_lea.vmem %s1, 96
      %v2832 = vld [vmem:[%s2831] sm:$0xff]
      %v2833 = vld [vmem:[%s2831 + $0x8] sm:$0xff]
      %v2835 = vsel %vm376, %v2795, 0
      %v2838 = vsel %vm376, %v2796, 0
      %v2841 = vsel %vm376, %v2797, 0
      %v2844 = vsel %vm376, %v2798, 0
      %v2847 = vsel %vm376, %v2799, 0
      %v2850 = vsel %vm376, %v2800, 0
      %v2853 = vsel %vm376, %v2801, 0
      %v2856 = vsel %vm376, %v2802, 0
      %v2859 = vsel %vm376, %v2803, 0
      %v2862 = vsel %vm376, %v2804, 0
      %v2865 = vsel %vm376, %v2805, 0
      %v2868 = vsel %vm376, %v2806, 0
      %v2871 = vsel %vm376, %v2807, 0
      %v2874 = vsel %vm376, %v2808, 0
      %v2877 = vsel %vm376, %v2809, 0
      %v2880 = vsel %vm376, %v2810, 0
      %v2883 = vsel %vm376, %v2811, 0
      %v2886 = vsel %vm376, %v2812, 0
      %v2889 = vsel %vm376, %v2813, 0
      %v2892 = vsel %vm376, %v2814, 0
      %v2895 = vsel %vm376, %v2815, 0
      %v2898 = vsel %vm376, %v2816, 0
      %v2901 = vsel %vm376, %v2817, 0
      %v2904 = vsel %vm376, %v2818, 0
      %v2907 = vsel %vm376, %v2819, 0
      %v2910 = vsel %vm376, %v2820, 0
      %v2913 = vsel %vm376, %v2821, 0
      %v2916 = vsel %vm376, %v2822, 0
      %v2919 = vsel %vm376, %v2823, 0
      %v2922 = vsel %vm376, %v2824, 0
      %v2925 = vsel %vm376, %v2825, 0
      %v2928 = vsel %vm376, %v2826, 0
      %v2931 = vsel %vm376, %v2827, 0
      %v2934 = vsel %vm376, %v2828, 0
      %v2937 = vsel %vm376, %v2829, 0
      %v2940 = vsel %vm376, %v2830, 0
      %2942 = vmatprep.subr.mxu0 0.0
      %2943 = vmatpush1.msra.mxu0 %v2832
      %2944 = vmatprep.subr.mxu0 0.0
      %2945 = vmatpush1.msra.mxu0 %v2833
      %2946 = vmatprep.subr.mxu0 0.0
      %2947 = vmatpush1.msra.mxu0 0.0
      %2948 = vmatprep.subr.mxu0 0.0
      %2949 = vmatpush1.msra.mxu0 0.0
      %2950 = vmatprep.subr.mxu0 0.0
      %2951 = vmatpush1.msra.mxu0 0.0
      %2952 = vmatprep.subr.mxu0 0.0
      %2953 = vmatpush1.msra.mxu0 0.0
      %2954 = vmatprep.subr.mxu0 0.0
      %2955 = vmatpush1.msra.mxu0 0.0
      %2956 = vmatprep.subr.mxu0 0.0
      %2957 = vmatpush1.msra.mxu0 0.0
      %2958 = vmatprep.subr.mxu0 0.0
      %2959 = vmatpush1.msra.mxu0 0.0
      %2960 = vmatprep.subr.mxu0 0.0
      %2961 = vmatpush1.msra.mxu0 0.0
      %2962 = vmatprep.subr.mxu0 0.0
      %2963 = vmatpush1.msra.mxu0 0.0
      %2964 = vmatprep.subr.mxu0 0.0
      %2965 = vmatpush1.msra.mxu0 0.0
      %2966 = vmatprep.subr.mxu0 0.0
      %2967 = vmatpush1.msra.mxu0 0.0
      %2968 = vmatprep.subr.mxu0 0.0
      %2969 = vmatpush1.msra.mxu0 0.0
      %2970 = vmatprep.subr.mxu0 0.0
      %2971 = vmatpush1.msra.mxu0 0.0
      %2972 = vmatprep.subr.mxu0 0.0
      %2973 = vmatpush1.msra.mxu0 0.0
      %2974 = vmatprep.subr.mxu0 0.0
      %2975 = vmatpush1.msra.mxu0 0.0
      %2976 = vmatprep.subr.mxu0 0.0
      %2977 = vmatpush1.msra.mxu0 0.0
      %2978 = vmatprep.subr.mxu0 0.0
      %2979 = vmatpush1.msra.mxu0 0.0
      %2980 = vmatprep.subr.mxu0 0.0
      %2981 = vmatpush1.msra.mxu0 0.0
      %2982 = vmatprep.subr.mxu0 0.0
      %2983 = vmatpush1.msra.mxu0 0.0
      %2984 = vmatprep.subr.mxu0 0.0
      %2985 = vmatpush1.msra.mxu0 0.0
      %2986 = vmatprep.subr.mxu0 0.0
      %2987 = vmatpush1.msra.mxu0 0.0
      %2988 = vmatprep.subr.mxu0 0.0
      %2989 = vmatpush1.msra.mxu0 0.0
      %2990 = vmatprep.subr.mxu0 0.0
      %2991 = vmatpush1.msra.mxu0 0.0
      %2992 = vmatprep.subr.mxu0 0.0
      %2993 = vmatpush1.msra.mxu0 0.0
      %2994 = vmatprep.subr.mxu0 0.0
      %2995 = vmatpush1.msra.mxu0 0.0
      %2996 = vmatprep.subr.mxu0 0.0
      %2997 = vmatpush1.msra.mxu0 0.0
      %2998 = vmatprep.subr.mxu0 0.0
      %2999 = vmatpush1.msra.mxu0 0.0
      %3000 = vmatprep.subr.mxu0 0.0
      %3001 = vmatpush1.msra.mxu0 0.0
      %3002 = vmatprep.subr.mxu0 0.0
      %3003 = vmatpush1.msra.mxu0 0.0
      %3004 = vmatprep.subr.mxu0 0.0
      %3005 = vmatpush1.msra.mxu0 0.0
      %3006 = vmatprep.mubr.f32.mxu0 0.0
      %3007 = vmatmul.mubr.f32.gmra.mrb[0].mxu0 %v2835
      %v3008 = vpop.f32.mrb[0].mxu0
      %v3009 = vadd.f32 0.0, %v3008
      %v3010 = vpop.f32.mrb[0].mxu0
      %3011 = vmatprep.mubr.f32.mxu0 0.0
      %3012 = vmatmul.mubr.f32.gmra.mrb[0].mxu0 %v2838
      %v3013 = vpop.f32.mrb[0].mxu0
      %v3014 = vadd.f32 0.0, %v3013
      %v3015 = vpop.f32.mrb[0].mxu0
      %3016 = vmatprep.mubr.f32.mxu0 0.0
      %3017 = vmatmul.mubr.f32.gmra.mrb[0].mxu0 %v2841
      %v3018 = vpop.f32.mrb[0].mxu0
      %v3019 = vadd.f32 0.0, %v3018
      %v3020 = vpop.f32.mrb[0].mxu0
      %3021 = vmatprep.mubr.f32.mxu0 0.0
      %3022 = vmatmul.mubr.f32.gmra.mrb[0].mxu0 %v2844
      %v3023 = vpop.f32.mrb[0].mxu0
      %v3024 = vadd.f32 0.0, %v3023
      %v3025 = vpop.f32.mrb[0].mxu0
      %3026 = vmatprep.mubr.f32.mxu0 0.0
      %3027 = vmatmul.mubr.f32.gmra.mrb[0].mxu0 %v2847
      %v3028 = vpop.f32.mrb[0].mxu0
      %v3029 = vadd.f32 0.0, %v3028
      %v3030 = vpop.f32.mrb[0].mxu0
      %3031 = vmatprep.mubr.f32.mxu0 0.0
      %3032 = vmatmul.mubr.f32.gmra.mrb[0].mxu0 %v2850
      %v3033 = vpop.f32.mrb[0].mxu0
      %v3034 = vadd.f32 0.0, %v3033
      %v3035 = vpop.f32.mrb[0].mxu0
      %3036 = vmatprep.mubr.f32.mxu0 0.0
      %3037 = vmatmul.mubr.f32.gmra.mrb[0].mxu0 %v2853
      %v3038 = vpop.f32.mrb[0].mxu0
      %v3039 = vadd.f32 0.0, %v3038
      %v3040 = vpop.f32.mrb[0].mxu0
      %3041 = vmatprep.mubr.f32.mxu0 0.0
      %3042 = vmatmul.mubr.f32.gmra.mrb[0].mxu0 %v2856
      %v3043 = vpop.f32.mrb[0].mxu0
      %v3044 = vadd.f32 0.0, %v3043
      %v3045 = vpop.f32.mrb[0].mxu0
      %3046 = vmatprep.mubr.f32.mxu0 0.0
      %3047 = vmatmul.mubr.f32.gmra.mrb[0].mxu0 %v2859
      %v3048 = vpop.f32.mrb[0].mxu0
      %v3049 = vadd.f32 0.0, %v3048
      %v3050 = vpop.f32.mrb[0].mxu0
      %3051 = vmatprep.mubr.f32.mxu0 0.0
      %3052 = vmatmul.mubr.f32.gmra.mrb[0].mxu0 %v2862
      %v3053 = vpop.f32.mrb[0].mxu0
      %v3054 = vadd.f32 0.0, %v3053
      %v3055 = vpop.f32.mrb[0].mxu0
      %3056 = vmatprep.mubr.f32.mxu0 0.0
      %3057 = vmatmul.mubr.f32.gmra.mrb[0].mxu0 %v2865
      %v3058 = vpop.f32.mrb[0].mxu0
      %v3059 = vadd.f32 0.0, %v3058
      %v3060 = vpop.f32.mrb[0].mxu0
      %3061 = vmatprep.mubr.f32.mxu0 0.0
      %3062 = vmatmul.mubr.f32.gmra.mrb[0].mxu0 %v2868
      %v3063 = vpop.f32.mrb[0].mxu0
      %v3064 = vadd.f32 0.0, %v3063
      %v3065 = vpop.f32.mrb[0].mxu0
      %3066 = vmatprep.mubr.f32.mxu0 0.0
      %3067 = vmatmul.mubr.f32.gmra.mrb[0].mxu0 %v2871
      %v3068 = vpop.f32.mrb[0].mxu0
      %v3069 = vadd.f32 0.0, %v3068
      %v3070 = vpop.f32.mrb[0].mxu0
      %3071 = vmatprep.mubr.f32.mxu0 0.0
      %3072 = vmatmul.mubr.f32.gmra.mrb[0].mxu0 %v2874
      %v3073 = vpop.f32.mrb[0].mxu0
      %v3074 = vadd.f32 0.0, %v3073
      %v3075 = vpop.f32.mrb[0].mxu0
      %3076 = vmatprep.mubr.f32.mxu0 0.0
      %3077 = vmatmul.mubr.f32.gmra.mrb[0].mxu0 %v2877
      %v3078 = vpop.f32.mrb[0].mxu0
      %v3079 = vadd.f32 0.0, %v3078
      %v3080 = vpop.f32.mrb[0].mxu0
      %3081 = vmatprep.mubr.f32.mxu0 0.0
      %3082 = vmatmul.mubr.f32.gmra.mrb[0].mxu0 %v2880
      %v3083 = vpop.f32.mrb[0].mxu0
      %v3084 = vadd.f32 0.0, %v3083
      %v3085 = vpop.f32.mrb[0].mxu0
      %3086 = vmatprep.mubr.f32.mxu0 0.0
      %3087 = vmatmul.mubr.f32.gmra.mrb[0].mxu0 %v2883
      %v3088 = vpop.f32.mrb[0].mxu0
      %v3089 = vadd.f32 0.0, %v3088
      %v3090 = vpop.f32.mrb[0].mxu0
      %3091 = vmatprep.mubr.f32.mxu0 0.0
      %3092 = vmatmul.mubr.f32.gmra.mrb[0].mxu0 %v2886
      %v3093 = vpop.f32.mrb[0].mxu0
      %v3094 = vadd.f32 0.0, %v3093
      %v3095 = vpop.f32.mrb[0].mxu0
      %3096 = vmatprep.mubr.f32.mxu0 0.0
      %3097 = vmatmul.mubr.f32.gmra.mrb[0].mxu0 %v2889
      %v3098 = vpop.f32.mrb[0].mxu0
      %v3099 = vadd.f32 0.0, %v3098
      %v3100 = vpop.f32.mrb[0].mxu0
      %3101 = vmatprep.mubr.f32.mxu0 0.0
      %3102 = vmatmul.mubr.f32.gmra.mrb[0].mxu0 %v2892
      %v3103 = vpop.f32.mrb[0].mxu0
      %v3104 = vadd.f32 0.0, %v3103
      %v3105 = vpop.f32.mrb[0].mxu0
      %3106 = vmatprep.mubr.f32.mxu0 0.0
      %3107 = vmatmul.mubr.f32.gmra.mrb[0].mxu0 %v2895
      %v3108 = vpop.f32.mrb[0].mxu0
      %v3109 = vadd.f32 0.0, %v3108
      %v3110 = vpop.f32.mrb[0].mxu0
      %3111 = vmatprep.mubr.f32.mxu0 0.0
      %3112 = vmatmul.mubr.f32.gmra.mrb[0].mxu0 %v2898
      %v3113 = vpop.f32.mrb[0].mxu0
      %v3114 = vadd.f32 0.0, %v3113
      %v3115 = vpop.f32.mrb[0].mxu0
      %3116 = vmatprep.mubr.f32.mxu0 0.0
      %3117 = vmatmul.mubr.f32.gmra.mrb[0].mxu0 %v2901
      %v3118 = vpop.f32.mrb[0].mxu0
      %v3119 = vadd.f32 0.0, %v3118
      %v3120 = vpop.f32.mrb[0].mxu0
      %3121 = vmatprep.mubr.f32.mxu0 0.0
      %3122 = vmatmul.mubr.f32.gmra.mrb[0].mxu0 %v2904
      %v3123 = vpop.f32.mrb[0].mxu0
      %v3124 = vadd.f32 0.0, %v3123
      %v3125 = vpop.f32.mrb[0].mxu0
      %3126 = vmatprep.mubr.f32.mxu0 0.0
      %3127 = vmatmul.mubr.f32.gmra.mrb[0].mxu0 %v2907
      %v3128 = vpop.f32.mrb[0].mxu0
      %v3129 = vadd.f32 0.0, %v3128
      %v3130 = vpop.f32.mrb[0].mxu0
      %3131 = vmatprep.mubr.f32.mxu0 0.0
      %3132 = vmatmul.mubr.f32.gmra.mrb[0].mxu0 %v2910
      %v3133 = vpop.f32.mrb[0].mxu0
      %v3134 = vadd.f32 0.0, %v3133
      %v3135 = vpop.f32.mrb[0].mxu0
      %3136 = vmatprep.mubr.f32.mxu0 0.0
      %3137 = vmatmul.mubr.f32.gmra.mrb[0].mxu0 %v2913
      %v3138 = vpop.f32.mrb[0].mxu0
      %v3139 = vadd.f32 0.0, %v3138
      %v3140 = vpop.f32.mrb[0].mxu0
      %3141 = vmatprep.mubr.f32.mxu0 0.0
      %3142 = vmatmul.mubr.f32.gmra.mrb[0].mxu0 %v2916
      %v3143 = vpop.f32.mrb[0].mxu0
      %v3144 = vadd.f32 0.0, %v3143
      %v3145 = vpop.f32.mrb[0].mxu0
      %3146 = vmatprep.mubr.f32.mxu0 0.0
      %3147 = vmatmul.mubr.f32.gmra.mrb[0].mxu0 %v2919
      %v3148 = vpop.f32.mrb[0].mxu0
      %v3149 = vadd.f32 0.0, %v3148
      %v3150 = vpop.f32.mrb[0].mxu0
      %3151 = vmatprep.mubr.f32.mxu0 0.0
      %3152 = vmatmul.mubr.f32.gmra.mrb[0].mxu0 %v2922
      %v3153 = vpop.f32.mrb[0].mxu0
      %v3154 = vadd.f32 0.0, %v3153
      %v3155 = vpop.f32.mrb[0].mxu0
      %3156 = vmatprep.mubr.f32.mxu0 0.0
      %3157 = vmatmul.mubr.f32.gmra.mrb[0].mxu0 %v2925
      %v3158 = vpop.f32.mrb[0].mxu0
      %v3159 = vadd.f32 0.0, %v3158
      %v3160 = vpop.f32.mrb[0].mxu0
      %3161 = vmatprep.mubr.f32.mxu0 0.0
      %3162 = vmatmul.mubr.f32.gmra.mrb[0].mxu0 %v2928
      %v3163 = vpop.f32.mrb[0].mxu0
      %v3164 = vadd.f32 0.0, %v3163
      %v3165 = vpop.f32.mrb[0].mxu0
      %3166 = vmatprep.mubr.f32.mxu0 0.0
      %3167 = vmatmul.mubr.f32.gmra.mrb[0].mxu0 %v2931
      %v3168 = vpop.f32.mrb[0].mxu0
      %v3169 = vadd.f32 0.0, %v3168
      %v3170 = vpop.f32.mrb[0].mxu0
      %3171 = vmatprep.mubr.f32.mxu0 0.0
      %3172 = vmatmul.mubr.f32.gmra.mrb[0].mxu0 %v2934
      %v3173 = vpop.f32.mrb[0].mxu0
      %v3174 = vadd.f32 0.0, %v3173
      %v3175 = vpop.f32.mrb[0].mxu0
      %3176 = vmatprep.mubr.f32.mxu0 0.0
      %3177 = vmatmul.mubr.f32.gmra.mrb[0].mxu0 %v2937
      %v3178 = vpop.f32.mrb[0].mxu0
      %v3179 = vadd.f32 0.0, %v3178
      %v3180 = vpop.f32.mrb[0].mxu0
      %3181 = vmatprep.mubr.f32.mxu0 0.0
      %3182 = vmatmul.mubr.f32.gmra.mrb[0].mxu0 %v2940
      %v3183 = vpop.f32.mrb[0].mxu0
      %v3184 = vadd.f32 0.0, %v3183
      %v3185 = vpop.f32.mrb[0].mxu0
      %3186 = vdwg.mxu0
      %v3187 = vadd.f32 %v2759, %v3009
      %v3188 = vadd.f32 %v2760, %v3014
      %v3189 = vadd.f32 %v2761, %v3019
      %v3190 = vadd.f32 %v2762, %v3024
      %v3191 = vadd.f32 %v2763, %v3029
      %v3192 = vadd.f32 %v2764, %v3034
      %v3193 = vadd.f32 %v2765, %v3039
      %v3194 = vadd.f32 %v2766, %v3044
      %v3195 = vadd.f32 %v2767, %v3049
      %v3196 = vadd.f32 %v2768, %v3054
      %v3197 = vadd.f32 %v2769, %v3059
      %v3198 = vadd.f32 %v2770, %v3064
      %v3199 = vadd.f32 %v2771, %v3069
      %v3200 = vadd.f32 %v2772, %v3074
      %v3201 = vadd.f32 %v2773, %v3079
      %v3202 = vadd.f32 %v2774, %v3084
      %v3203 = vadd.f32 %v2775, %v3089
      %v3204 = vadd.f32 %v2776, %v3094
      %v3205 = vadd.f32 %v2777, %v3099
      %v3206 = vadd.f32 %v2778, %v3104
      %v3207 = vadd.f32 %v2779, %v3109
      %v3208 = vadd.f32 %v2780, %v3114
      %v3209 = vadd.f32 %v2781, %v3119
      %v3210 = vadd.f32 %v2782, %v3124
      %v3211 = vadd.f32 %v2783, %v3129
      %v3212 = vadd.f32 %v2784, %v3134
      %v3213 = vadd.f32 %v2785, %v3139
      %v3214 = vadd.f32 %v2786, %v3144
      %v3215 = vadd.f32 %v2787, %v3149
      %v3216 = vadd.f32 %v2788, %v3154
      %v3217 = vadd.f32 %v2789, %v3159
      %v3218 = vadd.f32 %v2790, %v3164
      %v3219 = vadd.f32 %v2791, %v3169
      %v3220 = vadd.f32 %v2792, %v3174
      %v3221 = vadd.f32 %v2793, %v3179
      %v3222 = vadd.f32 %v2794, %v3184
      %v3223 = vld [vmem:[%s288 + $0x25] sm:$0xff]
      %v3224 = vld [vmem:[%s288 + $0x2d] sm:$0xff]
      %v3225 = vld [vmem:[%s288 + $0x35] sm:$0xff]
      %v3226 = vld [vmem:[%s288 + $0x3d] sm:$0xff]
      %v3227 = vld [vmem:[%s288 + $0x45] sm:$0xff]
      %v3228 = vld [vmem:[%s288 + $0x4d] sm:$0xff]
      %v3229 = vld [vmem:[%s288 + $0x55] sm:$0xff]
      %v3230 = vld [vmem:[%s288 + $0x5d] sm:$0xff]
      %v3231 = vld [vmem:[%s288 + $0x65] sm:$0xff]
      %v3232 = vld [vmem:[%s288 + $0x6d] sm:$0xff]
      %v3233 = vld [vmem:[%s288 + $0x75] sm:$0xff]
      %v3234 = vld [vmem:[%s288 + $0x7d] sm:$0xff]
      %v3235 = vld [vmem:[%s288 + $0x85] sm:$0xff]
      %v3236 = vld [vmem:[%s288 + $0x8d] sm:$0xff]
      %v3237 = vld [vmem:[%s288 + $0x95] sm:$0xff]
      %v3238 = vld [vmem:[%s288 + $0x9d] sm:$0xff]
      %v3239 = vld [vmem:[%s288 + $0xa5] sm:$0xff]
      %v3240 = vld [vmem:[%s288 + $0xad] sm:$0xff]
      %v3241 = vld [vmem:[%s288 + $0xb5] sm:$0xff]
      %v3242 = vld [vmem:[%s288 + $0xbd] sm:$0xff]
      %v3243 = vld [vmem:[%s288 + $0xc5] sm:$0xff]
      %v3244 = vld [vmem:[%s288 + $0xcd] sm:$0xff]
      %v3245 = vld [vmem:[%s288 + $0xd5] sm:$0xff]
      %v3246 = vld [vmem:[%s288 + $0xdd] sm:$0xff]
      %v3247 = vld [vmem:[%s288 + $0xe5] sm:$0xff]
      %v3248 = vld [vmem:[%s288 + $0xed] sm:$0xff]
      %v3249 = vld [vmem:[%s288 + $0xf5] sm:$0xff]
      %v3250 = vld [vmem:[%s288 + $0xfd] sm:$0xff]
      %v3251 = vld [vmem:[%s288 + $0x105] sm:$0xff]
      %v3252 = vld [vmem:[%s288 + $0x10d] sm:$0xff]
      %v3253 = vld [vmem:[%s288 + $0x115] sm:$0xff]
      %v3254 = vld [vmem:[%s288 + $0x11d] sm:$0xff]
      %v3255 = vld [vmem:[%s288 + $0x125] sm:$0xff]
      %v3256 = vld [vmem:[%s288 + $0x12d] sm:$0xff]
      %v3257 = vld [vmem:[%s288 + $0x135] sm:$0xff]
      %v3258 = vld [vmem:[%s288 + $0x13d] sm:$0xff]
      %s3259 = scalar_lea.vmem %s1, 112
      %v3260 = vld [vmem:[%s3259] sm:$0xff]
      %v3261 = vld [vmem:[%s3259 + $0x8] sm:$0xff]
      %v3263 = vsel %vm376, %v3223, 0
      %v3266 = vsel %vm376, %v3224, 0
      %v3269 = vsel %vm376, %v3225, 0
      %v3272 = vsel %vm376, %v3226, 0
      %v3275 = vsel %vm376, %v3227, 0
      %v3278 = vsel %vm376, %v3228, 0
      %v3281 = vsel %vm376, %v3229, 0
      %v3284 = vsel %vm376, %v3230, 0
      %v3287 = vsel %vm376, %v3231, 0
      %v3290 = vsel %vm376, %v3232, 0
      %v3293 = vsel %vm376, %v3233, 0
      %v3296 = vsel %vm376, %v3234, 0
      %v3299 = vsel %vm376, %v3235, 0
      %v3302 = vsel %vm376, %v3236, 0
      %v3305 = vsel %vm376, %v3237, 0
      %v3308 = vsel %vm376, %v3238, 0
      %v3311 = vsel %vm376, %v3239, 0
      %v3314 = vsel %vm376, %v3240, 0
      %v3317 = vsel %vm376, %v3241, 0
      %v3320 = vsel %vm376, %v3242, 0
      %v3323 = vsel %vm376, %v3243, 0
      %v3326 = vsel %vm376, %v3244, 0
      %v3329 = vsel %vm376, %v3245, 0
      %v3332 = vsel %vm376, %v3246, 0
      %v3335 = vsel %vm376, %v3247, 0
      %v3338 = vsel %vm376, %v3248, 0
      %v3341 = vsel %vm376, %v3249, 0
      %v3344 = vsel %vm376, %v3250, 0
      %v3347 = vsel %vm376, %v3251, 0
      %v3350 = vsel %vm376, %v3252, 0
      %v3353 = vsel %vm376, %v3253, 0
      %v3356 = vsel %vm376, %v3254, 0
      %v3359 = vsel %vm376, %v3255, 0
      %v3362 = vsel %vm376, %v3256, 0
      %v3365 = vsel %vm376, %v3257, 0
      %v3368 = vsel %vm376, %v3258, 0
      %3370 = vmatprep.subr.mxu0 0.0
      %3371 = vmatpush1.msra.mxu0 %v3260
      %3372 = vmatprep.subr.mxu0 0.0
      %3373 = vmatpush1.msra.mxu0 %v3261
      %3374 = vmatprep.subr.mxu0 0.0
      %3375 = vmatpush1.msra.mxu0 0.0
      %3376 = vmatprep.subr.mxu0 0.0
      %3377 = vmatpush1.msra.mxu0 0.0
      %3378 = vmatprep.subr.mxu0 0.0
      %3379 = vmatpush1.msra.mxu0 0.0
      %3380 = vmatprep.subr.mxu0 0.0
      %3381 = vmatpush1.msra.mxu0 0.0
      %3382 = vmatprep.subr.mxu0 0.0
      %3383 = vmatpush1.msra.mxu0 0.0
      %3384 = vmatprep.subr.mxu0 0.0
      %3385 = vmatpush1.msra.mxu0 0.0
      %3386 = vmatprep.subr.mxu0 0.0
      %3387 = vmatpush1.msra.mxu0 0.0
      %3388 = vmatprep.subr.mxu0 0.0
      %3389 = vmatpush1.msra.mxu0 0.0
      %3390 = vmatprep.subr.mxu0 0.0
      %3391 = vmatpush1.msra.mxu0 0.0
      %3392 = vmatprep.subr.mxu0 0.0
      %3393 = vmatpush1.msra.mxu0 0.0
      %3394 = vmatprep.subr.mxu0 0.0
      %3395 = vmatpush1.msra.mxu0 0.0
      %3396 = vmatprep.subr.mxu0 0.0
      %3397 = vmatpush1.msra.mxu0 0.0
      %3398 = vmatprep.subr.mxu0 0.0
      %3399 = vmatpush1.msra.mxu0 0.0
      %3400 = vmatprep.subr.mxu0 0.0
      %3401 = vmatpush1.msra.mxu0 0.0
      %3402 = vmatprep.subr.mxu0 0.0
      %3403 = vmatpush1.msra.mxu0 0.0
      %3404 = vmatprep.subr.mxu0 0.0
      %3405 = vmatpush1.msra.mxu0 0.0
      %3406 = vmatprep.subr.mxu0 0.0
      %3407 = vmatpush1.msra.mxu0 0.0
      %3408 = vmatprep.subr.mxu0 0.0
      %3409 = vmatpush1.msra.mxu0 0.0
      %3410 = vmatprep.subr.mxu0 0.0
      %3411 = vmatpush1.msra.mxu0 0.0
      %3412 = vmatprep.subr.mxu0 0.0
      %3413 = vmatpush1.msra.mxu0 0.0
      %3414 = vmatprep.subr.mxu0 0.0
      %3415 = vmatpush1.msra.mxu0 0.0
      %3416 = vmatprep.subr.mxu0 0.0
      %3417 = vmatpush1.msra.mxu0 0.0
      %3418 = vmatprep.subr.mxu0 0.0
      %3419 = vmatpush1.msra.mxu0 0.0
      %3420 = vmatprep.subr.mxu0 0.0
      %3421 = vmatpush1.msra.mxu0 0.0
      %3422 = vmatprep.subr.mxu0 0.0
      %3423 = vmatpush1.msra.mxu0 0.0
      %3424 = vmatprep.subr.mxu0 0.0
      %3425 = vmatpush1.msra.mxu0 0.0
      %3426 = vmatprep.subr.mxu0 0.0
      %3427 = vmatpush1.msra.mxu0 0.0
      %3428 = vmatprep.subr.mxu0 0.0
      %3429 = vmatpush1.msra.mxu0 0.0
      %3430 = vmatprep.subr.mxu0 0.0
      %3431 = vmatpush1.msra.mxu0 0.0
      %3432 = vmatprep.subr.mxu0 0.0
      %3433 = vmatpush1.msra.mxu0 0.0
      %3434 = vmatprep.mubr.f32.mxu0 0.0
      %3435 = vmatmul.mubr.f32.gmra.mrb[0].mxu0 %v3263
      %v3436 = vpop.f32.mrb[0].mxu0
      %v3437 = vadd.f32 0.0, %v3436
      %v3438 = vpop.f32.mrb[0].mxu0
      %3439 = vmatprep.mubr.f32.mxu0 0.0
      %3440 = vmatmul.mubr.f32.gmra.mrb[0].mxu0 %v3266
      %v3441 = vpop.f32.mrb[0].mxu0
      %v3442 = vadd.f32 0.0, %v3441
      %v3443 = vpop.f32.mrb[0].mxu0
      %3444 = vmatprep.mubr.f32.mxu0 0.0
      %3445 = vmatmul.mubr.f32.gmra.mrb[0].mxu0 %v3269
      %v3446 = vpop.f32.mrb[0].mxu0
      %v3447 = vadd.f32 0.0, %v3446
      %v3448 = vpop.f32.mrb[0].mxu0
      %3449 = vmatprep.mubr.f32.mxu0 0.0
      %3450 = vmatmul.mubr.f32.gmra.mrb[0].mxu0 %v3272
      %v3451 = vpop.f32.mrb[0].mxu0
      %v3452 = vadd.f32 0.0, %v3451
      %v3453 = vpop.f32.mrb[0].mxu0
      %3454 = vmatprep.mubr.f32.mxu0 0.0
      %3455 = vmatmul.mubr.f32.gmra.mrb[0].mxu0 %v3275
      %v3456 = vpop.f32.mrb[0].mxu0
      %v3457 = vadd.f32 0.0, %v3456
      %v3458 = vpop.f32.mrb[0].mxu0
      %3459 = vmatprep.mubr.f32.mxu0 0.0
      %3460 = vmatmul.mubr.f32.gmra.mrb[0].mxu0 %v3278
      %v3461 = vpop.f32.mrb[0].mxu0
      %v3462 = vadd.f32 0.0, %v3461
      %v3463 = vpop.f32.mrb[0].mxu0
      %3464 = vmatprep.mubr.f32.mxu0 0.0
      %3465 = vmatmul.mubr.f32.gmra.mrb[0].mxu0 %v3281
      %v3466 = vpop.f32.mrb[0].mxu0
      %v3467 = vadd.f32 0.0, %v3466
      %v3468 = vpop.f32.mrb[0].mxu0
      %3469 = vmatprep.mubr.f32.mxu0 0.0
      %3470 = vmatmul.mubr.f32.gmra.mrb[0].mxu0 %v3284
      %v3471 = vpop.f32.mrb[0].mxu0
      %v3472 = vadd.f32 0.0, %v3471
      %v3473 = vpop.f32.mrb[0].mxu0
      %3474 = vmatprep.mubr.f32.mxu0 0.0
      %3475 = vmatmul.mubr.f32.gmra.mrb[0].mxu0 %v3287
      %v3476 = vpop.f32.mrb[0].mxu0
      %v3477 = vadd.f32 0.0, %v3476
      %v3478 = vpop.f32.mrb[0].mxu0
      %3479 = vmatprep.mubr.f32.mxu0 0.0
      %3480 = vmatmul.mubr.f32.gmra.mrb[0].mxu0 %v3290
      %v3481 = vpop.f32.mrb[0].mxu0
      %v3482 = vadd.f32 0.0, %v3481
      %v3483 = vpop.f32.mrb[0].mxu0
      %3484 = vmatprep.mubr.f32.mxu0 0.0
      %3485 = vmatmul.mubr.f32.gmra.mrb[0].mxu0 %v3293
      %v3486 = vpop.f32.mrb[0].mxu0
      %v3487 = vadd.f32 0.0, %v3486
      %v3488 = vpop.f32.mrb[0].mxu0
      %3489 = vmatprep.mubr.f32.mxu0 0.0
      %3490 = vmatmul.mubr.f32.gmra.mrb[0].mxu0 %v3296
      %v3491 = vpop.f32.mrb[0].mxu0
      %v3492 = vadd.f32 0.0, %v3491
      %v3493 = vpop.f32.mrb[0].mxu0
      %3494 = vmatprep.mubr.f32.mxu0 0.0
      %3495 = vmatmul.mubr.f32.gmra.mrb[0].mxu0 %v3299
      %v3496 = vpop.f32.mrb[0].mxu0
      %v3497 = vadd.f32 0.0, %v3496
      %v3498 = vpop.f32.mrb[0].mxu0
      %3499 = vmatprep.mubr.f32.mxu0 0.0
      %3500 = vmatmul.mubr.f32.gmra.mrb[0].mxu0 %v3302
      %v3501 = vpop.f32.mrb[0].mxu0
      %v3502 = vadd.f32 0.0, %v3501
      %v3503 = vpop.f32.mrb[0].mxu0
      %3504 = vmatprep.mubr.f32.mxu0 0.0
      %3505 = vmatmul.mubr.f32.gmra.mrb[0].mxu0 %v3305
      %v3506 = vpop.f32.mrb[0].mxu0
      %v3507 = vadd.f32 0.0, %v3506
      %v3508 = vpop.f32.mrb[0].mxu0
      %3509 = vmatprep.mubr.f32.mxu0 0.0
      %3510 = vmatmul.mubr.f32.gmra.mrb[0].mxu0 %v3308
      %v3511 = vpop.f32.mrb[0].mxu0
      %v3512 = vadd.f32 0.0, %v3511
      %v3513 = vpop.f32.mrb[0].mxu0
      %3514 = vmatprep.mubr.f32.mxu0 0.0
      %3515 = vmatmul.mubr.f32.gmra.mrb[0].mxu0 %v3311
      %v3516 = vpop.f32.mrb[0].mxu0
      %v3517 = vadd.f32 0.0, %v3516
      %v3518 = vpop.f32.mrb[0].mxu0
      %3519 = vmatprep.mubr.f32.mxu0 0.0
      %3520 = vmatmul.mubr.f32.gmra.mrb[0].mxu0 %v3314
      %v3521 = vpop.f32.mrb[0].mxu0
      %v3522 = vadd.f32 0.0, %v3521
      %v3523 = vpop.f32.mrb[0].mxu0
      %3524 = vmatprep.mubr.f32.mxu0 0.0
      %3525 = vmatmul.mubr.f32.gmra.mrb[0].mxu0 %v3317
      %v3526 = vpop.f32.mrb[0].mxu0
      %v3527 = vadd.f32 0.0, %v3526
      %v3528 = vpop.f32.mrb[0].mxu0
      %3529 = vmatprep.mubr.f32.mxu0 0.0
      %3530 = vmatmul.mubr.f32.gmra.mrb[0].mxu0 %v3320
      %v3531 = vpop.f32.mrb[0].mxu0
      %v3532 = vadd.f32 0.0, %v3531
      %v3533 = vpop.f32.mrb[0].mxu0
      %3534 = vmatprep.mubr.f32.mxu0 0.0
      %3535 = vmatmul.mubr.f32.gmra.mrb[0].mxu0 %v3323
      %v3536 = vpop.f32.mrb[0].mxu0
      %v3537 = vadd.f32 0.0, %v3536
      %v3538 = vpop.f32.mrb[0].mxu0
      %3539 = vmatprep.mubr.f32.mxu0 0.0
      %3540 = vmatmul.mubr.f32.gmra.mrb[0].mxu0 %v3326
      %v3541 = vpop.f32.mrb[0].mxu0
      %v3542 = vadd.f32 0.0, %v3541
      %v3543 = vpop.f32.mrb[0].mxu0
      %3544 = vmatprep.mubr.f32.mxu0 0.0
      %3545 = vmatmul.mubr.f32.gmra.mrb[0].mxu0 %v3329
      %v3546 = vpop.f32.mrb[0].mxu0
      %v3547 = vadd.f32 0.0, %v3546
      %v3548 = vpop.f32.mrb[0].mxu0
      %3549 = vmatprep.mubr.f32.mxu0 0.0
      %3550 = vmatmul.mubr.f32.gmra.mrb[0].mxu0 %v3332
      %v3551 = vpop.f32.mrb[0].mxu0
      %v3552 = vadd.f32 0.0, %v3551
      %v3553 = vpop.f32.mrb[0].mxu0
      %3554 = vmatprep.mubr.f32.mxu0 0.0
      %3555 = vmatmul.mubr.f32.gmra.mrb[0].mxu0 %v3335
      %v3556 = vpop.f32.mrb[0].mxu0
      %v3557 = vadd.f32 0.0, %v3556
      %v3558 = vpop.f32.mrb[0].mxu0
      %3559 = vmatprep.mubr.f32.mxu0 0.0
      %3560 = vmatmul.mubr.f32.gmra.mrb[0].mxu0 %v3338
      %v3561 = vpop.f32.mrb[0].mxu0
      %v3562 = vadd.f32 0.0, %v3561
      %v3563 = vpop.f32.mrb[0].mxu0
      %3564 = vmatprep.mubr.f32.mxu0 0.0
      %3565 = vmatmul.mubr.f32.gmra.mrb[0].mxu0 %v3341
      %v3566 = vpop.f32.mrb[0].mxu0
      %v3567 = vadd.f32 0.0, %v3566
      %v3568 = vpop.f32.mrb[0].mxu0
      %3569 = vmatprep.mubr.f32.mxu0 0.0
      %3570 = vmatmul.mubr.f32.gmra.mrb[0].mxu0 %v3344
      %v3571 = vpop.f32.mrb[0].mxu0
      %v3572 = vadd.f32 0.0, %v3571
      %v3573 = vpop.f32.mrb[0].mxu0
      %3574 = vmatprep.mubr.f32.mxu0 0.0
      %3575 = vmatmul.mubr.f32.gmra.mrb[0].mxu0 %v3347
      %v3576 = vpop.f32.mrb[0].mxu0
      %v3577 = vadd.f32 0.0, %v3576
      %v3578 = vpop.f32.mrb[0].mxu0
      %3579 = vmatprep.mubr.f32.mxu0 0.0
      %3580 = vmatmul.mubr.f32.gmra.mrb[0].mxu0 %v3350
      %v3581 = vpop.f32.mrb[0].mxu0
      %v3582 = vadd.f32 0.0, %v3581
      %v3583 = vpop.f32.mrb[0].mxu0
      %3584 = vmatprep.mubr.f32.mxu0 0.0
      %3585 = vmatmul.mubr.f32.gmra.mrb[0].mxu0 %v3353
      %v3586 = vpop.f32.mrb[0].mxu0
      %v3587 = vadd.f32 0.0, %v3586
      %v3588 = vpop.f32.mrb[0].mxu0
      %3589 = vmatprep.mubr.f32.mxu0 0.0
      %3590 = vmatmul.mubr.f32.gmra.mrb[0].mxu0 %v3356
      %v3591 = vpop.f32.mrb[0].mxu0
      %v3592 = vadd.f32 0.0, %v3591
      %v3593 = vpop.f32.mrb[0].mxu0
      %3594 = vmatprep.mubr.f32.mxu0 0.0
      %3595 = vmatmul.mubr.f32.gmra.mrb[0].mxu0 %v3359
      %v3596 = vpop.f32.mrb[0].mxu0
      %v3597 = vadd.f32 0.0, %v3596
      %v3598 = vpop.f32.mrb[0].mxu0
      %3599 = vmatprep.mubr.f32.mxu0 0.0
      %3600 = vmatmul.mubr.f32.gmra.mrb[0].mxu0 %v3362
      %v3601 = vpop.f32.mrb[0].mxu0
      %v3602 = vadd.f32 0.0, %v3601
      %v3603 = vpop.f32.mrb[0].mxu0
      %3604 = vmatprep.mubr.f32.mxu0 0.0
      %3605 = vmatmul.mubr.f32.gmra.mrb[0].mxu0 %v3365
      %v3606 = vpop.f32.mrb[0].mxu0
      %v3607 = vadd.f32 0.0, %v3606
      %v3608 = vpop.f32.mrb[0].mxu0
      %3609 = vmatprep.mubr.f32.mxu0 0.0
      %3610 = vmatmul.mubr.f32.gmra.mrb[0].mxu0 %v3368
      %v3611 = vpop.f32.mrb[0].mxu0
      %v3612 = vadd.f32 0.0, %v3611
      %v3613 = vpop.f32.mrb[0].mxu0
      %3614 = vdwg.mxu0
      %v3615 = vadd.f32 %v3187, %v3437
      %v3616 = vadd.f32 %v3188, %v3442
      %v3617 = vadd.f32 %v3189, %v3447
      %v3618 = vadd.f32 %v3190, %v3452
      %v3619 = vadd.f32 %v3191, %v3457
      %v3620 = vadd.f32 %v3192, %v3462
      %v3621 = vadd.f32 %v3193, %v3467
      %v3622 = vadd.f32 %v3194, %v3472
      %v3623 = vadd.f32 %v3195, %v3477
      %v3624 = vadd.f32 %v3196, %v3482
      %v3625 = vadd.f32 %v3197, %v3487
      %v3626 = vadd.f32 %v3198, %v3492
      %v3627 = vadd.f32 %v3199, %v3497
      %v3628 = vadd.f32 %v3200, %v3502
      %v3629 = vadd.f32 %v3201, %v3507
      %v3630 = vadd.f32 %v3202, %v3512
      %v3631 = vadd.f32 %v3203, %v3517
      %v3632 = vadd.f32 %v3204, %v3522
      %v3633 = vadd.f32 %v3205, %v3527
      %v3634 = vadd.f32 %v3206, %v3532
      %v3635 = vadd.f32 %v3207, %v3537
      %v3636 = vadd.f32 %v3208, %v3542
      %v3637 = vadd.f32 %v3209, %v3547
      %v3638 = vadd.f32 %v3210, %v3552
      %v3639 = vadd.f32 %v3211, %v3557
      %v3640 = vadd.f32 %v3212, %v3562
      %v3641 = vadd.f32 %v3213, %v3567
      %v3642 = vadd.f32 %v3214, %v3572
      %v3643 = vadd.f32 %v3215, %v3577
      %v3644 = vadd.f32 %v3216, %v3582
      %v3645 = vadd.f32 %v3217, %v3587
      %v3646 = vadd.f32 %v3218, %v3592
      %v3647 = vadd.f32 %v3219, %v3597
      %v3648 = vadd.f32 %v3220, %v3602
      %v3649 = vadd.f32 %v3221, %v3607
      %v3650 = vadd.f32 %v3222, %v3612
      %v3651 = vld [vmem:[%s288 + $0x26] sm:$0xff]
      %v3652 = vld [vmem:[%s288 + $0x2e] sm:$0xff]
      %v3653 = vld [vmem:[%s288 + $0x36] sm:$0xff]
      %v3654 = vld [vmem:[%s288 + $0x3e] sm:$0xff]
      %v3655 = vld [vmem:[%s288 + $0x46] sm:$0xff]
      %v3656 = vld [vmem:[%s288 + $0x4e] sm:$0xff]
      %v3657 = vld [vmem:[%s288 + $0x56] sm:$0xff]
      %v3658 = vld [vmem:[%s288 + $0x5e] sm:$0xff]
      %v3659 = vld [vmem:[%s288 + $0x66] sm:$0xff]
      %v3660 = vld [vmem:[%s288 + $0x6e] sm:$0xff]
      %v3661 = vld [vmem:[%s288 + $0x76] sm:$0xff]
      %v3662 = vld [vmem:[%s288 + $0x7e] sm:$0xff]
      %v3663 = vld [vmem:[%s288 + $0x86] sm:$0xff]
      %v3664 = vld [vmem:[%s288 + $0x8e] sm:$0xff]
      %v3665 = vld [vmem:[%s288 + $0x96] sm:$0xff]
      %v3666 = vld [vmem:[%s288 + $0x9e] sm:$0xff]
      %v3667 = vld [vmem:[%s288 + $0xa6] sm:$0xff]
      %v3668 = vld [vmem:[%s288 + $0xae] sm:$0xff]
      %v3669 = vld [vmem:[%s288 + $0xb6] sm:$0xff]
      %v3670 = vld [vmem:[%s288 + $0xbe] sm:$0xff]
      %v3671 = vld [vmem:[%s288 + $0xc6] sm:$0xff]
      %v3672 = vld [vmem:[%s288 + $0xce] sm:$0xff]
      %v3673 = vld [vmem:[%s288 + $0xd6] sm:$0xff]
      %v3674 = vld [vmem:[%s288 + $0xde] sm:$0xff]
      %v3675 = vld [vmem:[%s288 + $0xe6] sm:$0xff]
      %v3676 = vld [vmem:[%s288 + $0xee] sm:$0xff]
      %v3677 = vld [vmem:[%s288 + $0xf6] sm:$0xff]
      %v3678 = vld [vmem:[%s288 + $0xfe] sm:$0xff]
      %v3679 = vld [vmem:[%s288 + $0x106] sm:$0xff]
      %v3680 = vld [vmem:[%s288 + $0x10e] sm:$0xff]
      %v3681 = vld [vmem:[%s288 + $0x116] sm:$0xff]
      %v3682 = vld [vmem:[%s288 + $0x11e] sm:$0xff]
      %v3683 = vld [vmem:[%s288 + $0x126] sm:$0xff]
      %v3684 = vld [vmem:[%s288 + $0x12e] sm:$0xff]
      %v3685 = vld [vmem:[%s288 + $0x136] sm:$0xff]
      %v3686 = vld [vmem:[%s288 + $0x13e] sm:$0xff]
      %s3687 = scalar_lea.vmem %s1, 128
      %v3688 = vld [vmem:[%s3687] sm:$0xff]
      %v3689 = vld [vmem:[%s3687 + $0x8] sm:$0xff]
      %v3691 = vsel %vm376, %v3651, 0
      %v3694 = vsel %vm376, %v3652, 0
      %v3697 = vsel %vm376, %v3653, 0
      %v3700 = vsel %vm376, %v3654, 0
      %v3703 = vsel %vm376, %v3655, 0
      %v3706 = vsel %vm376, %v3656, 0
      %v3709 = vsel %vm376, %v3657, 0
      %v3712 = vsel %vm376, %v3658, 0
      %v3715 = vsel %vm376, %v3659, 0
      %v3718 = vsel %vm376, %v3660, 0
      %v3721 = vsel %vm376, %v3661, 0
      %v3724 = vsel %vm376, %v3662, 0
      %v3727 = vsel %vm376, %v3663, 0
      %v3730 = vsel %vm376, %v3664, 0
      %v3733 = vsel %vm376, %v3665, 0
      %v3736 = vsel %vm376, %v3666, 0
      %v3739 = vsel %vm376, %v3667, 0
      %v3742 = vsel %vm376, %v3668, 0
      %v3745 = vsel %vm376, %v3669, 0
      %v3748 = vsel %vm376, %v3670, 0
      %v3751 = vsel %vm376, %v3671, 0
      %v3754 = vsel %vm376, %v3672, 0
      %v3757 = vsel %vm376, %v3673, 0
      %v3760 = vsel %vm376, %v3674, 0
      %v3763 = vsel %vm376, %v3675, 0
      %v3766 = vsel %vm376, %v3676, 0
      %v3769 = vsel %vm376, %v3677, 0
      %v3772 = vsel %vm376, %v3678, 0
      %v3775 = vsel %vm376, %v3679, 0
      %v3778 = vsel %vm376, %v3680, 0
      %v3781 = vsel %vm376, %v3681, 0
      %v3784 = vsel %vm376, %v3682, 0
      %v3787 = vsel %vm376, %v3683, 0
      %v3790 = vsel %vm376, %v3684, 0
      %v3793 = vsel %vm376, %v3685, 0
      %v3796 = vsel %vm376, %v3686, 0
      %3798 = vmatprep.subr.mxu0 0.0
      %3799 = vmatpush1.msra.mxu0 %v3688
      %3800 = vmatprep.subr.mxu0 0.0
      %3801 = vmatpush1.msra.mxu0 %v3689
      %3802 = vmatprep.subr.mxu0 0.0
      %3803 = vmatpush1.msra.mxu0 0.0
      %3804 = vmatprep.subr.mxu0 0.0
      %3805 = vmatpush1.msra.mxu0 0.0
      %3806 = vmatprep.subr.mxu0 0.0
      %3807 = vmatpush1.msra.mxu0 0.0
      %3808 = vmatprep.subr.mxu0 0.0
      %3809 = vmatpush1.msra.mxu0 0.0
      %3810 = vmatprep.subr.mxu0 0.0
      %3811 = vmatpush1.msra.mxu0 0.0
      %3812 = vmatprep.subr.mxu0 0.0
      %3813 = vmatpush1.msra.mxu0 0.0
      %3814 = vmatprep.subr.mxu0 0.0
      %3815 = vmatpush1.msra.mxu0 0.0
      %3816 = vmatprep.subr.mxu0 0.0
      %3817 = vmatpush1.msra.mxu0 0.0
      %3818 = vmatprep.subr.mxu0 0.0
      %3819 = vmatpush1.msra.mxu0 0.0
      %3820 = vmatprep.subr.mxu0 0.0
      %3821 = vmatpush1.msra.mxu0 0.0
      %3822 = vmatprep.subr.mxu0 0.0
      %3823 = vmatpush1.msra.mxu0 0.0
      %3824 = vmatprep.subr.mxu0 0.0
      %3825 = vmatpush1.msra.mxu0 0.0
      %3826 = vmatprep.subr.mxu0 0.0
      %3827 = vmatpush1.msra.mxu0 0.0
      %3828 = vmatprep.subr.mxu0 0.0
      %3829 = vmatpush1.msra.mxu0 0.0
      %3830 = vmatprep.subr.mxu0 0.0
      %3831 = vmatpush1.msra.mxu0 0.0
      %3832 = vmatprep.subr.mxu0 0.0
      %3833 = vmatpush1.msra.mxu0 0.0
      %3834 = vmatprep.subr.mxu0 0.0
      %3835 = vmatpush1.msra.mxu0 0.0
      %3836 = vmatprep.subr.mxu0 0.0
      %3837 = vmatpush1.msra.mxu0 0.0
      %3838 = vmatprep.subr.mxu0 0.0
      %3839 = vmatpush1.msra.mxu0 0.0
      %3840 = vmatprep.subr.mxu0 0.0
      %3841 = vmatpush1.msra.mxu0 0.0
      %3842 = vmatprep.subr.mxu0 0.0
      %3843 = vmatpush1.msra.mxu0 0.0
      %3844 = vmatprep.subr.mxu0 0.0
      %3845 = vmatpush1.msra.mxu0 0.0
      %3846 = vmatprep.subr.mxu0 0.0
      %3847 = vmatpush1.msra.mxu0 0.0
      %3848 = vmatprep.subr.mxu0 0.0
      %3849 = vmatpush1.msra.mxu0 0.0
      %3850 = vmatprep.subr.mxu0 0.0
      %3851 = vmatpush1.msra.mxu0 0.0
      %3852 = vmatprep.subr.mxu0 0.0
      %3853 = vmatpush1.msra.mxu0 0.0
      %3854 = vmatprep.subr.mxu0 0.0
      %3855 = vmatpush1.msra.mxu0 0.0
      %3856 = vmatprep.subr.mxu0 0.0
      %3857 = vmatpush1.msra.mxu0 0.0
      %3858 = vmatprep.subr.mxu0 0.0
      %3859 = vmatpush1.msra.mxu0 0.0
      %3860 = vmatprep.subr.mxu0 0.0
      %3861 = vmatpush1.msra.mxu0 0.0
      %3862 = vmatprep.mubr.f32.mxu0 0.0
      %3863 = vmatmul.mubr.f32.gmra.mrb[0].mxu0 %v3691
      %v3864 = vpop.f32.mrb[0].mxu0
      %v3865 = vadd.f32 0.0, %v3864
      %v3866 = vpop.f32.mrb[0].mxu0
      %3867 = vmatprep.mubr.f32.mxu0 0.0
      %3868 = vmatmul.mubr.f32.gmra.mrb[0].mxu0 %v3694
      %v3869 = vpop.f32.mrb[0].mxu0
      %v3870 = vadd.f32 0.0, %v3869
      %v3871 = vpop.f32.mrb[0].mxu0
      %3872 = vmatprep.mubr.f32.mxu0 0.0
      %3873 = vmatmul.mubr.f32.gmra.mrb[0].mxu0 %v3697
      %v3874 = vpop.f32.mrb[0].mxu0
      %v3875 = vadd.f32 0.0, %v3874
      %v3876 = vpop.f32.mrb[0].mxu0
      %3877 = vmatprep.mubr.f32.mxu0 0.0
      %3878 = vmatmul.mubr.f32.gmra.mrb[0].mxu0 %v3700
      %v3879 = vpop.f32.mrb[0].mxu0
      %v3880 = vadd.f32 0.0, %v3879
      %v3881 = vpop.f32.mrb[0].mxu0
      %3882 = vmatprep.mubr.f32.mxu0 0.0
      %3883 = vmatmul.mubr.f32.gmra.mrb[0].mxu0 %v3703
      %v3884 = vpop.f32.mrb[0].mxu0
      %v3885 = vadd.f32 0.0, %v3884
      %v3886 = vpop.f32.mrb[0].mxu0
      %3887 = vmatprep.mubr.f32.mxu0 0.0
      %3888 = vmatmul.mubr.f32.gmra.mrb[0].mxu0 %v3706
      %v3889 = vpop.f32.mrb[0].mxu0
      %v3890 = vadd.f32 0.0, %v3889
      %v3891 = vpop.f32.mrb[0].mxu0
      %3892 = vmatprep.mubr.f32.mxu0 0.0
      %3893 = vmatmul.mubr.f32.gmra.mrb[0].mxu0 %v3709
      %v3894 = vpop.f32.mrb[0].mxu0
      %v3895 = vadd.f32 0.0, %v3894
      %v3896 = vpop.f32.mrb[0].mxu0
      %3897 = vmatprep.mubr.f32.mxu0 0.0
      %3898 = vmatmul.mubr.f32.gmra.mrb[0].mxu0 %v3712
      %v3899 = vpop.f32.mrb[0].mxu0
      %v3900 = vadd.f32 0.0, %v3899
      %v3901 = vpop.f32.mrb[0].mxu0
      %3902 = vmatprep.mubr.f32.mxu0 0.0
      %3903 = vmatmul.mubr.f32.gmra.mrb[0].mxu0 %v3715
      %v3904 = vpop.f32.mrb[0].mxu0
      %v3905 = vadd.f32 0.0, %v3904
      %v3906 = vpop.f32.mrb[0].mxu0
      %3907 = vmatprep.mubr.f32.mxu0 0.0
      %3908 = vmatmul.mubr.f32.gmra.mrb[0].mxu0 %v3718
      %v3909 = vpop.f32.mrb[0].mxu0
      %v3910 = vadd.f32 0.0, %v3909
      %v3911 = vpop.f32.mrb[0].mxu0
      %3912 = vmatprep.mubr.f32.mxu0 0.0
      %3913 = vmatmul.mubr.f32.gmra.mrb[0].mxu0 %v3721
      %v3914 = vpop.f32.mrb[0].mxu0
      %v3915 = vadd.f32 0.0, %v3914
      %v3916 = vpop.f32.mrb[0].mxu0
      %3917 = vmatprep.mubr.f32.mxu0 0.0
      %3918 = vmatmul.mubr.f32.gmra.mrb[0].mxu0 %v3724
      %v3919 = vpop.f32.mrb[0].mxu0
      %v3920 = vadd.f32 0.0, %v3919
      %v3921 = vpop.f32.mrb[0].mxu0
      %3922 = vmatprep.mubr.f32.mxu0 0.0
      %3923 = vmatmul.mubr.f32.gmra.mrb[0].mxu0 %v3727
      %v3924 = vpop.f32.mrb[0].mxu0
      %v3925 = vadd.f32 0.0, %v3924
      %v3926 = vpop.f32.mrb[0].mxu0
      %3927 = vmatprep.mubr.f32.mxu0 0.0
      %3928 = vmatmul.mubr.f32.gmra.mrb[0].mxu0 %v3730
      %v3929 = vpop.f32.mrb[0].mxu0
      %v3930 = vadd.f32 0.0, %v3929
      %v3931 = vpop.f32.mrb[0].mxu0
      %3932 = vmatprep.mubr.f32.mxu0 0.0
      %3933 = vmatmul.mubr.f32.gmra.mrb[0].mxu0 %v3733
      %v3934 = vpop.f32.mrb[0].mxu0
      %v3935 = vadd.f32 0.0, %v3934
      %v3936 = vpop.f32.mrb[0].mxu0
      %3937 = vmatprep.mubr.f32.mxu0 0.0
      %3938 = vmatmul.mubr.f32.gmra.mrb[0].mxu0 %v3736
      %v3939 = vpop.f32.mrb[0].mxu0
      %v3940 = vadd.f32 0.0, %v3939
      %v3941 = vpop.f32.mrb[0].mxu0
      %3942 = vmatprep.mubr.f32.mxu0 0.0
      %3943 = vmatmul.mubr.f32.gmra.mrb[0].mxu0 %v3739
      %v3944 = vpop.f32.mrb[0].mxu0
      %v3945 = vadd.f32 0.0, %v3944
      %v3946 = vpop.f32.mrb[0].mxu0
      %3947 = vmatprep.mubr.f32.mxu0 0.0
      %3948 = vmatmul.mubr.f32.gmra.mrb[0].mxu0 %v3742
      %v3949 = vpop.f32.mrb[0].mxu0
      %v3950 = vadd.f32 0.0, %v3949
      %v3951 = vpop.f32.mrb[0].mxu0
      %3952 = vmatprep.mubr.f32.mxu0 0.0
      %3953 = vmatmul.mubr.f32.gmra.mrb[0].mxu0 %v3745
      %v3954 = vpop.f32.mrb[0].mxu0
      %v3955 = vadd.f32 0.0, %v3954
      %v3956 = vpop.f32.mrb[0].mxu0
      %3957 = vmatprep.mubr.f32.mxu0 0.0
      %3958 = vmatmul.mubr.f32.gmra.mrb[0].mxu0 %v3748
      %v3959 = vpop.f32.mrb[0].mxu0
      %v3960 = vadd.f32 0.0, %v3959
      %v3961 = vpop.f32.mrb[0].mxu0
      %3962 = vmatprep.mubr.f32.mxu0 0.0
      %3963 = vmatmul.mubr.f32.gmra.mrb[0].mxu0 %v3751
      %v3964 = vpop.f32.mrb[0].mxu0
      %v3965 = vadd.f32 0.0, %v3964
      %v3966 = vpop.f32.mrb[0].mxu0
      %3967 = vmatprep.mubr.f32.mxu0 0.0
      %3968 = vmatmul.mubr.f32.gmra.mrb[0].mxu0 %v3754
      %v3969 = vpop.f32.mrb[0].mxu0
      %v3970 = vadd.f32 0.0, %v3969
      %v3971 = vpop.f32.mrb[0].mxu0
      %3972 = vmatprep.mubr.f32.mxu0 0.0
      %3973 = vmatmul.mubr.f32.gmra.mrb[0].mxu0 %v3757
      %v3974 = vpop.f32.mrb[0].mxu0
      %v3975 = vadd.f32 0.0, %v3974
      %v3976 = vpop.f32.mrb[0].mxu0
      %3977 = vmatprep.mubr.f32.mxu0 0.0
      %3978 = vmatmul.mubr.f32.gmra.mrb[0].mxu0 %v3760
      %v3979 = vpop.f32.mrb[0].mxu0
      %v3980 = vadd.f32 0.0, %v3979
      %v3981 = vpop.f32.mrb[0].mxu0
      %3982 = vmatprep.mubr.f32.mxu0 0.0
      %3983 = vmatmul.mubr.f32.gmra.mrb[0].mxu0 %v3763
      %v3984 = vpop.f32.mrb[0].mxu0
      %v3985 = vadd.f32 0.0, %v3984
      %v3986 = vpop.f32.mrb[0].mxu0
      %3987 = vmatprep.mubr.f32.mxu0 0.0
      %3988 = vmatmul.mubr.f32.gmra.mrb[0].mxu0 %v3766
      %v3989 = vpop.f32.mrb[0].mxu0
      %v3990 = vadd.f32 0.0, %v3989
      %v3991 = vpop.f32.mrb[0].mxu0
      %3992 = vmatprep.mubr.f32.mxu0 0.0
      %3993 = vmatmul.mubr.f32.gmra.mrb[0].mxu0 %v3769
      %v3994 = vpop.f32.mrb[0].mxu0
      %v3995 = vadd.f32 0.0, %v3994
      %v3996 = vpop.f32.mrb[0].mxu0
      %3997 = vmatprep.mubr.f32.mxu0 0.0
      %3998 = vmatmul.mubr.f32.gmra.mrb[0].mxu0 %v3772
      %v3999 = vpop.f32.mrb[0].mxu0
      %v4000 = vadd.f32 0.0, %v3999
      %v4001 = vpop.f32.mrb[0].mxu0
      %4002 = vmatprep.mubr.f32.mxu0 0.0
      %4003 = vmatmul.mubr.f32.gmra.mrb[0].mxu0 %v3775
      %v4004 = vpop.f32.mrb[0].mxu0
      %v4005 = vadd.f32 0.0, %v4004
      %v4006 = vpop.f32.mrb[0].mxu0
      %4007 = vmatprep.mubr.f32.mxu0 0.0
      %4008 = vmatmul.mubr.f32.gmra.mrb[0].mxu0 %v3778
      %v4009 = vpop.f32.mrb[0].mxu0
      %v4010 = vadd.f32 0.0, %v4009
      %v4011 = vpop.f32.mrb[0].mxu0
      %4012 = vmatprep.mubr.f32.mxu0 0.0
      %4013 = vmatmul.mubr.f32.gmra.mrb[0].mxu0 %v3781
      %v4014 = vpop.f32.mrb[0].mxu0
      %v4015 = vadd.f32 0.0, %v4014
      %v4016 = vpop.f32.mrb[0].mxu0
      %4017 = vmatprep.mubr.f32.mxu0 0.0
      %4018 = vmatmul.mubr.f32.gmra.mrb[0].mxu0 %v3784
      %v4019 = vpop.f32.mrb[0].mxu0
      %v4020 = vadd.f32 0.0, %v4019
      %v4021 = vpop.f32.mrb[0].mxu0
      %4022 = vmatprep.mubr.f32.mxu0 0.0
      %4023 = vmatmul.mubr.f32.gmra.mrb[0].mxu0 %v3787
      %v4024 = vpop.f32.mrb[0].mxu0
      %v4025 = vadd.f32 0.0, %v4024
      %v4026 = vpop.f32.mrb[0].mxu0
      %4027 = vmatprep.mubr.f32.mxu0 0.0
      %4028 = vmatmul.mubr.f32.gmra.mrb[0].mxu0 %v3790
      %v4029 = vpop.f32.mrb[0].mxu0
      %v4030 = vadd.f32 0.0, %v4029
      %v4031 = vpop.f32.mrb[0].mxu0
      %4032 = vmatprep.mubr.f32.mxu0 0.0
      %4033 = vmatmul.mubr.f32.gmra.mrb[0].mxu0 %v3793
      %v4034 = vpop.f32.mrb[0].mxu0
      %v4035 = vadd.f32 0.0, %v4034
      %v4036 = vpop.f32.mrb[0].mxu0
      %4037 = vmatprep.mubr.f32.mxu0 0.0
      %4038 = vmatmul.mubr.f32.gmra.mrb[0].mxu0 %v3796
      %v4039 = vpop.f32.mrb[0].mxu0
      %v4040 = vadd.f32 0.0, %v4039
      %v4041 = vpop.f32.mrb[0].mxu0
      %4042 = vdwg.mxu0
      %v4043 = vadd.f32 %v3615, %v3865
      %v4044 = vadd.f32 %v3616, %v3870
      %v4045 = vadd.f32 %v3617, %v3875
      %v4046 = vadd.f32 %v3618, %v3880
      %v4047 = vadd.f32 %v3619, %v3885
      %v4048 = vadd.f32 %v3620, %v3890
      %v4049 = vadd.f32 %v3621, %v3895
      %v4050 = vadd.f32 %v3622, %v3900
      %v4051 = vadd.f32 %v3623, %v3905
      %v4052 = vadd.f32 %v3624, %v3910
      %v4053 = vadd.f32 %v3625, %v3915
      %v4054 = vadd.f32 %v3626, %v3920
      %v4055 = vadd.f32 %v3627, %v3925
      %v4056 = vadd.f32 %v3628, %v3930
      %v4057 = vadd.f32 %v3629, %v3935
      %v4058 = vadd.f32 %v3630, %v3940
      %v4059 = vadd.f32 %v3631, %v3945
      %v4060 = vadd.f32 %v3632, %v3950
      %v4061 = vadd.f32 %v3633, %v3955
      %v4062 = vadd.f32 %v3634, %v3960
      %v4063 = vadd.f32 %v3635, %v3965
      %v4064 = vadd.f32 %v3636, %v3970
      %v4065 = vadd.f32 %v3637, %v3975
      %v4066 = vadd.f32 %v3638, %v3980
      %v4067 = vadd.f32 %v3639, %v3985
      %v4068 = vadd.f32 %v3640, %v3990
      %v4069 = vadd.f32 %v3641, %v3995
      %v4070 = vadd.f32 %v3642, %v4000
      %v4071 = vadd.f32 %v3643, %v4005
      %v4072 = vadd.f32 %v3644, %v4010
      %v4073 = vadd.f32 %v3645, %v4015
      %v4074 = vadd.f32 %v3646, %v4020
      %v4075 = vadd.f32 %v3647, %v4025
      %v4076 = vadd.f32 %v3648, %v4030
      %v4077 = vadd.f32 %v3649, %v4035
      %v4078 = vadd.f32 %v3650, %v4040
      %v4079 = vld [vmem:[%s2] sm:$0x1]
      %v4080 = vlaneseq
      %v4081 = vshrl.u32 %v4080, 7
      %v4082 = vsub.s32 0, %v4081
      %v4083 = vrot.slane %v4079, %v4082
      %v4084 = vadd.f32 %v4043, %v4083
      %v4085 = vadd.f32 %v4044, %v4083
      %v4086 = vadd.f32 %v4045, %v4083
      %v4087 = vadd.f32 %v4046, %v4083
      %v4088 = vadd.f32 %v4047, %v4083
      %v4089 = vadd.f32 %v4048, %v4083
      %v4090 = vadd.f32 %v4049, %v4083
      %v4091 = vadd.f32 %v4050, %v4083
      %v4092 = vadd.f32 %v4051, %v4083
      %v4093 = vadd.f32 %v4052, %v4083
      %v4094 = vadd.f32 %v4053, %v4083
      %v4095 = vadd.f32 %v4054, %v4083
      %v4096 = vadd.f32 %v4055, %v4083
      %v4097 = vadd.f32 %v4056, %v4083
      %v4098 = vadd.f32 %v4057, %v4083
      %v4099 = vadd.f32 %v4058, %v4083
      %v4100 = vadd.f32 %v4059, %v4083
      %v4101 = vadd.f32 %v4060, %v4083
      %v4102 = vadd.f32 %v4061, %v4083
      %v4103 = vadd.f32 %v4062, %v4083
      %v4104 = vadd.f32 %v4063, %v4083
      %v4105 = vadd.f32 %v4064, %v4083
      %v4106 = vadd.f32 %v4065, %v4083
      %v4107 = vadd.f32 %v4066, %v4083
      %v4108 = vadd.f32 %v4067, %v4083
      %v4109 = vadd.f32 %v4068, %v4083
      %v4110 = vadd.f32 %v4069, %v4083
      %v4111 = vadd.f32 %v4070, %v4083
      %v4112 = vadd.f32 %v4071, %v4083
      %v4113 = vadd.f32 %v4072, %v4083
      %v4114 = vadd.f32 %v4073, %v4083
      %v4115 = vadd.f32 %v4074, %v4083
      %v4116 = vadd.f32 %v4075, %v4083
      %v4117 = vadd.f32 %v4076, %v4083
      %v4118 = vadd.f32 %v4077, %v4083
      %v4119 = vadd.f32 %v4078, %v4083
      %v4120 = vld [vmem:[%s3] sm:$0xff]
      %v4121 = vld [vmem:[%s3 + $0x8] sm:$0xff]
      %v4122 = vld [vmem:[%s3 + $0x10] sm:$0xff]
      %v4123 = vld [vmem:[%s3 + $0x18] sm:$0xff]
      %v4124 = vld [vmem:[%s3 + $0x20] sm:$0xff]
      %v4125 = vld [vmem:[%s3 + $0x28] sm:$0xff]
      %v4126 = vld [vmem:[%s3 + $0x30] sm:$0xff]
      %v4127 = vld [vmem:[%s3 + $0x38] sm:$0xff]
      %v4128 = vld [vmem:[%s3 + $0x40] sm:$0xff]
      %v4129 = vld [vmem:[%s3 + $0x48] sm:$0xff]
      %v4130 = vld [vmem:[%s3 + $0x50] sm:$0xff]
      %v4131 = vld [vmem:[%s3 + $0x58] sm:$0xff]
      %v4132 = vld [vmem:[%s3 + $0x60] sm:$0xff]
      %v4133 = vld [vmem:[%s3 + $0x68] sm:$0xff]
      %v4134 = vld [vmem:[%s3 + $0x70] sm:$0xff]
      %v4135 = vld [vmem:[%s3 + $0x78] sm:$0xff]
      %v4136 = vld [vmem:[%s3 + $0x80] sm:$0xff]
      %v4137 = vld [vmem:[%s3 + $0x88] sm:$0xff]
      %v4138 = vld [vmem:[%s3 + $0x90] sm:$0xff]
      %v4139 = vld [vmem:[%s3 + $0x98] sm:$0xff]
      %v4140 = vld [vmem:[%s3 + $0xa0] sm:$0xff]
      %v4141 = vld [vmem:[%s3 + $0xa8] sm:$0xff]
      %v4142 = vld [vmem:[%s3 + $0xb0] sm:$0xff]
      %v4143 = vld [vmem:[%s3 + $0xb8] sm:$0xff]
      %v4144 = vld [vmem:[%s3 + $0xc0] sm:$0xff]
      %v4145 = vld [vmem:[%s3 + $0xc8] sm:$0xff]
      %v4146 = vld [vmem:[%s3 + $0xd0] sm:$0xff]
      %v4147 = vld [vmem:[%s3 + $0xd8] sm:$0xff]
      %v4148 = vld [vmem:[%s3 + $0xe0] sm:$0xff]
      %v4149 = vld [vmem:[%s3 + $0xe8] sm:$0xff]
      %v4150 = vld [vmem:[%s3 + $0xf0] sm:$0xff]
      %v4151 = vld [vmem:[%s3 + $0xf8] sm:$0xff]
      %v4152 = vld [vmem:[%s3 + $0x100] sm:$0xff]
      %v4153 = vld [vmem:[%s3 + $0x108] sm:$0xff]
      %v4154 = vld [vmem:[%s3 + $0x110] sm:$0xff]
      %v4155 = vld [vmem:[%s3 + $0x118] sm:$0xff]
      %4157 = vset.pattern.permute.xlu0 0
      %4158 = vperm.xlu0 %4157, %v4120
      %v4159 = vpop.permute.xlu0 %4158
      %4162 = vset.pattern.permute.xlu0 0
      %4163 = vperm.xlu0 %4162, %v4121
      %v4164 = vpop.permute.xlu0 %4163
      %4167 = vset.pattern.permute.xlu0 0
      %4168 = vperm.xlu0 %4167, %v4122
      %v4169 = vpop.permute.xlu0 %4168
      %4172 = vset.pattern.permute.xlu0 0
      %4173 = vperm.xlu0 %4172, %v4123
      %v4174 = vpop.permute.xlu0 %4173
      %4177 = vset.pattern.permute.xlu0 0
      %4178 = vperm.xlu0 %4177, %v4124
      %v4179 = vpop.permute.xlu0 %4178
      %4182 = vset.pattern.permute.xlu0 0
      %4183 = vperm.xlu0 %4182, %v4125
      %v4184 = vpop.permute.xlu0 %4183
      %4187 = vset.pattern.permute.xlu0 0
      %4188 = vperm.xlu0 %4187, %v4126
      %v4189 = vpop.permute.xlu0 %4188
      %4192 = vset.pattern.permute.xlu0 0
      %4193 = vperm.xlu0 %4192, %v4127
      %v4194 = vpop.permute.xlu0 %4193
      %4197 = vset.pattern.permute.xlu0 0
      %4198 = vperm.xlu0 %4197, %v4128
      %v4199 = vpop.permute.xlu0 %4198
      %4202 = vset.pattern.permute.xlu0 0
      %4203 = vperm.xlu0 %4202, %v4129
      %v4204 = vpop.permute.xlu0 %4203
      %4207 = vset.pattern.permute.xlu0 0
      %4208 = vperm.xlu0 %4207, %v4130
      %v4209 = vpop.permute.xlu0 %4208
      %4212 = vset.pattern.permute.xlu0 0
      %4213 = vperm.xlu0 %4212, %v4131
      %v4214 = vpop.permute.xlu0 %4213
      %4217 = vset.pattern.permute.xlu0 0
      %4218 = vperm.xlu0 %4217, %v4132
      %v4219 = vpop.permute.xlu0 %4218
      %4222 = vset.pattern.permute.xlu0 0
      %4223 = vperm.xlu0 %4222, %v4133
      %v4224 = vpop.permute.xlu0 %4223
      %4227 = vset.pattern.permute.xlu0 0
      %4228 = vperm.xlu0 %4227, %v4134
      %v4229 = vpop.permute.xlu0 %4228
      %4232 = vset.pattern.permute.xlu0 0
      %4233 = vperm.xlu0 %4232, %v4135
      %v4234 = vpop.permute.xlu0 %4233
      %4237 = vset.pattern.permute.xlu0 0
      %4238 = vperm.xlu0 %4237, %v4136
      %v4239 = vpop.permute.xlu0 %4238
      %4242 = vset.pattern.permute.xlu0 0
      %4243 = vperm.xlu0 %4242, %v4137
      %v4244 = vpop.permute.xlu0 %4243
      %4247 = vset.pattern.permute.xlu0 0
      %4248 = vperm.xlu0 %4247, %v4138
      %v4249 = vpop.permute.xlu0 %4248
      %4252 = vset.pattern.permute.xlu0 0
      %4253 = vperm.xlu0 %4252, %v4139
      %v4254 = vpop.permute.xlu0 %4253
      %4257 = vset.pattern.permute.xlu0 0
      %4258 = vperm.xlu0 %4257, %v4140
      %v4259 = vpop.permute.xlu0 %4258
      %4262 = vset.pattern.permute.xlu0 0
      %4263 = vperm.xlu0 %4262, %v4141
      %v4264 = vpop.permute.xlu0 %4263
      %4267 = vset.pattern.permute.xlu0 0
      %4268 = vperm.xlu0 %4267, %v4142
      %v4269 = vpop.permute.xlu0 %4268
      %4272 = vset.pattern.permute.xlu0 0
      %4273 = vperm.xlu0 %4272, %v4143
      %v4274 = vpop.permute.xlu0 %4273
      %4277 = vset.pattern.permute.xlu0 0
      %4278 = vperm.xlu0 %4277, %v4144
      %v4279 = vpop.permute.xlu0 %4278
      %4282 = vset.pattern.permute.xlu0 0
      %4283 = vperm.xlu0 %4282, %v4145
      %v4284 = vpop.permute.xlu0 %4283
      %4287 = vset.pattern.permute.xlu0 0
      %4288 = vperm.xlu0 %4287, %v4146
      %v4289 = vpop.permute.xlu0 %4288
      %4292 = vset.pattern.permute.xlu0 0
      %4293 = vperm.xlu0 %4292, %v4147
      %v4294 = vpop.permute.xlu0 %4293
      %4297 = vset.pattern.permute.xlu0 0
      %4298 = vperm.xlu0 %4297, %v4148
      %v4299 = vpop.permute.xlu0 %4298
      %4302 = vset.pattern.permute.xlu0 0
      %4303 = vperm.xlu0 %4302, %v4149
      %v4304 = vpop.permute.xlu0 %4303
      %4307 = vset.pattern.permute.xlu0 0
      %4308 = vperm.xlu0 %4307, %v4150
      %v4309 = vpop.permute.xlu0 %4308
      %4312 = vset.pattern.permute.xlu0 0
      %4313 = vperm.xlu0 %4312, %v4151
      %v4314 = vpop.permute.xlu0 %4313
      %4317 = vset.pattern.permute.xlu0 0
      %4318 = vperm.xlu0 %4317, %v4152
      %v4319 = vpop.permute.xlu0 %4318
      %4322 = vset.pattern.permute.xlu0 0
      %4323 = vperm.xlu0 %4322, %v4153
      %v4324 = vpop.permute.xlu0 %4323
      %4327 = vset.pattern.permute.xlu0 0
      %4328 = vperm.xlu0 %4327, %v4154
      %v4329 = vpop.permute.xlu0 %4328
      %4332 = vset.pattern.permute.xlu0 0
      %4333 = vperm.xlu0 %4332, %v4155
      %v4334 = vpop.permute.xlu0 %4333
      %v4336 = vmul.f32 %v4084, %v4159
      %v4337 = vmul.f32 %v4085, %v4164
      %v4338 = vmul.f32 %v4086, %v4169
      %v4339 = vmul.f32 %v4087, %v4174
      %v4340 = vmul.f32 %v4088, %v4179
      %v4341 = vmul.f32 %v4089, %v4184
      %v4342 = vmul.f32 %v4090, %v4189
      %v4343 = vmul.f32 %v4091, %v4194
      %v4344 = vmul.f32 %v4092, %v4199
      %v4345 = vmul.f32 %v4093, %v4204
      %v4346 = vmul.f32 %v4094, %v4209
      %v4347 = vmul.f32 %v4095, %v4214
      %v4348 = vmul.f32 %v4096, %v4219
      %v4349 = vmul.f32 %v4097, %v4224
      %v4350 = vmul.f32 %v4098, %v4229
      %v4351 = vmul.f32 %v4099, %v4234
      %v4352 = vmul.f32 %v4100, %v4239
      %v4353 = vmul.f32 %v4101, %v4244
      %v4354 = vmul.f32 %v4102, %v4249
      %v4355 = vmul.f32 %v4103, %v4254
      %v4356 = vmul.f32 %v4104, %v4259
      %v4357 = vmul.f32 %v4105, %v4264
      %v4358 = vmul.f32 %v4106, %v4269
      %v4359 = vmul.f32 %v4107, %v4274
      %v4360 = vmul.f32 %v4108, %v4279
      %v4361 = vmul.f32 %v4109, %v4284
      %v4362 = vmul.f32 %v4110, %v4289
      %v4363 = vmul.f32 %v4111, %v4294
      %v4364 = vmul.f32 %v4112, %v4299
      %v4365 = vmul.f32 %v4113, %v4304
      %v4366 = vmul.f32 %v4114, %v4309
      %v4367 = vmul.f32 %v4115, %v4314
      %v4368 = vmul.f32 %v4116, %v4319
      %v4369 = vmul.f32 %v4117, %v4324
      %v4370 = vmul.f32 %v4118, %v4329
      %v4371 = vmul.f32 %v4119, %v4334
      %v4372 = vsel %vm376, %v4336, 0.0
      %v4373 = vsel %vm376, %v4337, 0.0
      %v4374 = vadd.f32 %v4372, %v4373
      %v4375 = vsel %vm376, %v4338, 0.0
      %v4376 = vadd.f32 %v4374, %v4375
      %v4377 = vsel %vm376, %v4339, 0.0
      %v4378 = vadd.f32 %v4376, %v4377
      %v4379 = vsel %vm376, %v4340, 0.0
      %v4380 = vadd.f32 %v4378, %v4379
      %v4381 = vsel %vm376, %v4341, 0.0
      %v4382 = vadd.f32 %v4380, %v4381
      %v4383 = vsel %vm376, %v4342, 0.0
      %v4384 = vadd.f32 %v4382, %v4383
      %v4385 = vsel %vm376, %v4343, 0.0
      %v4386 = vadd.f32 %v4384, %v4385
      %v4387 = vsel %vm376, %v4344, 0.0
      %v4388 = vadd.f32 %v4386, %v4387
      %v4389 = vsel %vm376, %v4345, 0.0
      %v4390 = vadd.f32 %v4388, %v4389
      %v4391 = vsel %vm376, %v4346, 0.0
      %v4392 = vadd.f32 %v4390, %v4391
      %v4393 = vsel %vm376, %v4347, 0.0
      %v4394 = vadd.f32 %v4392, %v4393
      %v4395 = vsel %vm376, %v4348, 0.0
      %v4396 = vadd.f32 %v4394, %v4395
      %v4397 = vsel %vm376, %v4349, 0.0
      %v4398 = vadd.f32 %v4396, %v4397
      %v4399 = vsel %vm376, %v4350, 0.0
      %v4400 = vadd.f32 %v4398, %v4399
      %v4401 = vsel %vm376, %v4351, 0.0
      %v4402 = vadd.f32 %v4400, %v4401
      %v4403 = vsel %vm376, %v4352, 0.0
      %v4404 = vadd.f32 %v4402, %v4403
      %v4405 = vsel %vm376, %v4353, 0.0
      %v4406 = vadd.f32 %v4404, %v4405
      %v4407 = vsel %vm376, %v4354, 0.0
      %v4408 = vadd.f32 %v4406, %v4407
      %v4409 = vsel %vm376, %v4355, 0.0
      %v4410 = vadd.f32 %v4408, %v4409
      %v4411 = vsel %vm376, %v4356, 0.0
      %v4412 = vadd.f32 %v4410, %v4411
      %v4413 = vsel %vm376, %v4357, 0.0
      %v4414 = vadd.f32 %v4412, %v4413
      %v4415 = vsel %vm376, %v4358, 0.0
      %v4416 = vadd.f32 %v4414, %v4415
      %v4417 = vsel %vm376, %v4359, 0.0
      %v4418 = vadd.f32 %v4416, %v4417
      %v4419 = vsel %vm376, %v4360, 0.0
      %v4420 = vadd.f32 %v4418, %v4419
      %v4421 = vsel %vm376, %v4361, 0.0
      %v4422 = vadd.f32 %v4420, %v4421
      %v4423 = vsel %vm376, %v4362, 0.0
      %v4424 = vadd.f32 %v4422, %v4423
      %v4425 = vsel %vm376, %v4363, 0.0
      %v4426 = vadd.f32 %v4424, %v4425
      %v4427 = vsel %vm376, %v4364, 0.0
      %v4428 = vadd.f32 %v4426, %v4427
      %v4429 = vsel %vm376, %v4365, 0.0
      %v4430 = vadd.f32 %v4428, %v4429
      %v4431 = vsel %vm376, %v4366, 0.0
      %v4432 = vadd.f32 %v4430, %v4431
      %v4433 = vsel %vm376, %v4367, 0.0
      %v4434 = vadd.f32 %v4432, %v4433
      %v4435 = vsel %vm376, %v4368, 0.0
      %v4436 = vadd.f32 %v4434, %v4435
      %v4437 = vsel %vm376, %v4369, 0.0
      %v4438 = vadd.f32 %v4436, %v4437
      %v4439 = vsel %vm376, %v4370, 0.0
      %v4440 = vadd.f32 %v4438, %v4439
      %v4441 = vsel %vm376, %v4371, 0.0
      %v4442 = vadd.f32 %v4440, %v4441
      %v4443 = vrot.slane %v4442, 4
      %v4444 = vadd.f32 %v4442, %v4443
      %v4445 = vrot.slane %v4444, 2
      %v4446 = vadd.f32 %v4444, %v4445
      %v4447 = vrot.slane %v4446, 1
      %v4448 = vadd.f32 %v4446, %v4447
      %v4449 = vmul.f32 %v4336, %v4084
      %v4450 = vmul.f32 %v4337, %v4085
      %v4451 = vmul.f32 %v4338, %v4086
      %v4452 = vmul.f32 %v4339, %v4087
      %v4453 = vmul.f32 %v4340, %v4088
      %v4454 = vmul.f32 %v4341, %v4089
      %v4455 = vmul.f32 %v4342, %v4090
      %v4456 = vmul.f32 %v4343, %v4091
      %v4457 = vmul.f32 %v4344, %v4092
      %v4458 = vmul.f32 %v4345, %v4093
      %v4459 = vmul.f32 %v4346, %v4094
      %v4460 = vmul.f32 %v4347, %v4095
      %v4461 = vmul.f32 %v4348, %v4096
      %v4462 = vmul.f32 %v4349, %v4097
      %v4463 = vmul.f32 %v4350, %v4098
      %v4464 = vmul.f32 %v4351, %v4099
      %v4465 = vmul.f32 %v4352, %v4100
      %v4466 = vmul.f32 %v4353, %v4101
      %v4467 = vmul.f32 %v4354, %v4102
      %v4468 = vmul.f32 %v4355, %v4103
      %v4469 = vmul.f32 %v4356, %v4104
      %v4470 = vmul.f32 %v4357, %v4105
      %v4471 = vmul.f32 %v4358, %v4106
      %v4472 = vmul.f32 %v4359, %v4107
      %v4473 = vmul.f32 %v4360, %v4108
      %v4474 = vmul.f32 %v4361, %v4109
      %v4475 = vmul.f32 %v4362, %v4110
      %v4476 = vmul.f32 %v4363, %v4111
      %v4477 = vmul.f32 %v4364, %v4112
      %v4478 = vmul.f32 %v4365, %v4113
      %v4479 = vmul.f32 %v4366, %v4114
      %v4480 = vmul.f32 %v4367, %v4115
      %v4481 = vmul.f32 %v4368, %v4116
      %v4482 = vmul.f32 %v4369, %v4117
      %v4483 = vmul.f32 %v4370, %v4118
      %v4484 = vmul.f32 %v4371, %v4119
      %v4485 = vsel %vm376, %v4449, 0.0
      %v4486 = vsel %vm376, %v4450, 0.0
      %v4487 = vadd.f32 %v4485, %v4486
      %v4488 = vsel %vm376, %v4451, 0.0
      %v4489 = vadd.f32 %v4487, %v4488
      %v4490 = vsel %vm376, %v4452, 0.0
      %v4491 = vadd.f32 %v4489, %v4490
      %v4492 = vsel %vm376, %v4453, 0.0
      %v4493 = vadd.f32 %v4491, %v4492
      %v4494 = vsel %vm376, %v4454, 0.0
      %v4495 = vadd.f32 %v4493, %v4494
      %v4496 = vsel %vm376, %v4455, 0.0
      %v4497 = vadd.f32 %v4495, %v4496
      %v4498 = vsel %vm376, %v4456, 0.0
      %v4499 = vadd.f32 %v4497, %v4498
      %v4500 = vsel %vm376, %v4457, 0.0
      %v4501 = vadd.f32 %v4499, %v4500
      %v4502 = vsel %vm376, %v4458, 0.0
      %v4503 = vadd.f32 %v4501, %v4502
      %v4504 = vsel %vm376, %v4459, 0.0
      %v4505 = vadd.f32 %v4503, %v4504
      %v4506 = vsel %vm376, %v4460, 0.0
      %v4507 = vadd.f32 %v4505, %v4506
      %v4508 = vsel %vm376, %v4461, 0.0
      %v4509 = vadd.f32 %v4507, %v4508
      %v4510 = vsel %vm376, %v4462, 0.0
      %v4511 = vadd.f32 %v4509, %v4510
      %v4512 = vsel %vm376, %v4463, 0.0
      %v4513 = vadd.f32 %v4511, %v4512
      %v4514 = vsel %vm376, %v4464, 0.0
      %v4515 = vadd.f32 %v4513, %v4514
      %v4516 = vsel %vm376, %v4465, 0.0
      %v4517 = vadd.f32 %v4515, %v4516
      %v4518 = vsel %vm376, %v4466, 0.0
      %v4519 = vadd.f32 %v4517, %v4518
      %v4520 = vsel %vm376, %v4467, 0.0
      %v4521 = vadd.f32 %v4519, %v4520
      %v4522 = vsel %vm376, %v4468, 0.0
      %v4523 = vadd.f32 %v4521, %v4522
      %v4524 = vsel %vm376, %v4469, 0.0
      %v4525 = vadd.f32 %v4523, %v4524
      %v4526 = vsel %vm376, %v4470, 0.0
      %v4527 = vadd.f32 %v4525, %v4526
      %v4528 = vsel %vm376, %v4471, 0.0
      %v4529 = vadd.f32 %v4527, %v4528
      %v4530 = vsel %vm376, %v4472, 0.0
      %v4531 = vadd.f32 %v4529, %v4530
      %v4532 = vsel %vm376, %v4473, 0.0
      %v4533 = vadd.f32 %v4531, %v4532
      %v4534 = vsel %vm376, %v4474, 0.0
      %v4535 = vadd.f32 %v4533, %v4534
      %v4536 = vsel %vm376, %v4475, 0.0
      %v4537 = vadd.f32 %v4535, %v4536
      %v4538 = vsel %vm376, %v4476, 0.0
      %v4539 = vadd.f32 %v4537, %v4538
      %v4540 = vsel %vm376, %v4477, 0.0
      %v4541 = vadd.f32 %v4539, %v4540
      %v4542 = vsel %vm376, %v4478, 0.0
      %v4543 = vadd.f32 %v4541, %v4542
      %v4544 = vsel %vm376, %v4479, 0.0
      %v4545 = vadd.f32 %v4543, %v4544
      %v4546 = vsel %vm376, %v4480, 0.0
      %v4547 = vadd.f32 %v4545, %v4546
      %v4548 = vsel %vm376, %v4481, 0.0
      %v4549 = vadd.f32 %v4547, %v4548
      %v4550 = vsel %vm376, %v4482, 0.0
      %v4551 = vadd.f32 %v4549, %v4550
      %v4552 = vsel %vm376, %v4483, 0.0
      %v4553 = vadd.f32 %v4551, %v4552
      %v4554 = vsel %vm376, %v4484, 0.0
      %v4555 = vadd.f32 %v4553, %v4554
      %v4556 = vrot.slane %v4555, 4
      %v4557 = vadd.f32 %v4555, %v4556
      %v4558 = vrot.slane %v4557, 2
      %v4559 = vadd.f32 %v4557, %v4558
      %v4560 = vrot.slane %v4559, 1
      %v4561 = vadd.f32 %v4559, %v4560
      %v4562 = vld [vmem:[%s4] sm:$0xff]
      %v4563 = vld [vmem:[%s4 + $0x8] sm:$0xff]
      %v4565 = vsel %vm376, %v4448, 0
      %4567 = vmatprep.subr.mxu0 0.0
      %4568 = vmatpush1.msra.mxu0 %v4562
      %4569 = vmatprep.subr.mxu0 0.0
      %4570 = vmatpush1.msra.mxu0 %v4563
      %4571 = vmatprep.subr.mxu0 0.0
      %4572 = vmatpush1.msra.mxu0 0.0
      %4573 = vmatprep.subr.mxu0 0.0
      %4574 = vmatpush1.msra.mxu0 0.0
      %4575 = vmatprep.subr.mxu0 0.0
      %4576 = vmatpush1.msra.mxu0 0.0
      %4577 = vmatprep.subr.mxu0 0.0
      %4578 = vmatpush1.msra.mxu0 0.0
      %4579 = vmatprep.subr.mxu0 0.0
      %4580 = vmatpush1.msra.mxu0 0.0
      %4581 = vmatprep.subr.mxu0 0.0
      %4582 = vmatpush1.msra.mxu0 0.0
      %4583 = vmatprep.subr.mxu0 0.0
      %4584 = vmatpush1.msra.mxu0 0.0
      %4585 = vmatprep.subr.mxu0 0.0
      %4586 = vmatpush1.msra.mxu0 0.0
      %4587 = vmatprep.subr.mxu0 0.0
      %4588 = vmatpush1.msra.mxu0 0.0
      %4589 = vmatprep.subr.mxu0 0.0
      %4590 = vmatpush1.msra.mxu0 0.0
      %4591 = vmatprep.subr.mxu0 0.0
      %4592 = vmatpush1.msra.mxu0 0.0
      %4593 = vmatprep.subr.mxu0 0.0
      %4594 = vmatpush1.msra.mxu0 0.0
      %4595 = vmatprep.subr.mxu0 0.0
      %4596 = vmatpush1.msra.mxu0 0.0
      %4597 = vmatprep.subr.mxu0 0.0
      %4598 = vmatpush1.msra.mxu0 0.0
      %4599 = vmatprep.subr.mxu0 0.0
      %4600 = vmatpush1.msra.mxu0 0.0
      %4601 = vmatprep.subr.mxu0 0.0
      %4602 = vmatpush1.msra.mxu0 0.0
      %4603 = vmatprep.subr.mxu0 0.0
      %4604 = vmatpush1.msra.mxu0 0.0
      %4605 = vmatprep.subr.mxu0 0.0
      %4606 = vmatpush1.msra.mxu0 0.0
      %4607 = vmatprep.subr.mxu0 0.0
      %4608 = vmatpush1.msra.mxu0 0.0
      %4609 = vmatprep.subr.mxu0 0.0
      %4610 = vmatpush1.msra.mxu0 0.0
      %4611 = vmatprep.subr.mxu0 0.0
      %4612 = vmatpush1.msra.mxu0 0.0
      %4613 = vmatprep.subr.mxu0 0.0
      %4614 = vmatpush1.msra.mxu0 0.0
      %4615 = vmatprep.subr.mxu0 0.0
      %4616 = vmatpush1.msra.mxu0 0.0
      %4617 = vmatprep.subr.mxu0 0.0
      %4618 = vmatpush1.msra.mxu0 0.0
      %4619 = vmatprep.subr.mxu0 0.0
      %4620 = vmatpush1.msra.mxu0 0.0
      %4621 = vmatprep.subr.mxu0 0.0
      %4622 = vmatpush1.msra.mxu0 0.0
      %4623 = vmatprep.subr.mxu0 0.0
      %4624 = vmatpush1.msra.mxu0 0.0
      %4625 = vmatprep.subr.mxu0 0.0
      %4626 = vmatpush1.msra.mxu0 0.0
      %4627 = vmatprep.subr.mxu0 0.0
      %4628 = vmatpush1.msra.mxu0 0.0
      %4629 = vmatprep.subr.mxu0 0.0
      %4630 = vmatpush1.msra.mxu0 0.0
      %4631 = vmatprep.mubr.f32.mxu0 0.0
      %4632 = vmatmul.mubr.f32.gmra.mrb[0].mxu0 %v4565
      %v4633 = vpop.f32.mrb[0].mxu0
      %v4634 = vadd.f32 0.0, %v4633
      %v4635 = vpop.f32.mrb[0].mxu0
      %4636 = vdwg.mxu0
      %v4638 = vsel %vm376, %v4561, 0
      %4640 = vmatprep.subr.mxu0 0.0
      %4641 = vmatpush1.msra.mxu0 %v4562
      %4642 = vmatprep.subr.mxu0 0.0
      %4643 = vmatpush1.msra.mxu0 %v4563
      %4644 = vmatprep.subr.mxu0 0.0
      %4645 = vmatpush1.msra.mxu0 0.0
      %4646 = vmatprep.subr.mxu0 0.0
      %4647 = vmatpush1.msra.mxu0 0.0
      %4648 = vmatprep.subr.mxu0 0.0
      %4649 = vmatpush1.msra.mxu0 0.0
      %4650 = vmatprep.subr.mxu0 0.0
      %4651 = vmatpush1.msra.mxu0 0.0
      %4652 = vmatprep.subr.mxu0 0.0
      %4653 = vmatpush1.msra.mxu0 0.0
      %4654 = vmatprep.subr.mxu0 0.0
      %4655 = vmatpush1.msra.mxu0 0.0
      %4656 = vmatprep.subr.mxu0 0.0
      %4657 = vmatpush1.msra.mxu0 0.0
      %4658 = vmatprep.subr.mxu0 0.0
      %4659 = vmatpush1.msra.mxu0 0.0
      %4660 = vmatprep.subr.mxu0 0.0
      %4661 = vmatpush1.msra.mxu0 0.0
      %4662 = vmatprep.subr.mxu0 0.0
      %4663 = vmatpush1.msra.mxu0 0.0
      %4664 = vmatprep.subr.mxu0 0.0
      %4665 = vmatpush1.msra.mxu0 0.0
      %4666 = vmatprep.subr.mxu0 0.0
      %4667 = vmatpush1.msra.mxu0 0.0
      %4668 = vmatprep.subr.mxu0 0.0
      %4669 = vmatpush1.msra.mxu0 0.0
      %4670 = vmatprep.subr.mxu0 0.0
      %4671 = vmatpush1.msra.mxu0 0.0
      %4672 = vmatprep.subr.mxu0 0.0
      %4673 = vmatpush1.msra.mxu0 0.0
      %4674 = vmatprep.subr.mxu0 0.0
      %4675 = vmatpush1.msra.mxu0 0.0
      %4676 = vmatprep.subr.mxu0 0.0
      %4677 = vmatpush1.msra.mxu0 0.0
      %4678 = vmatprep.subr.mxu0 0.0
      %4679 = vmatpush1.msra.mxu0 0.0
      %4680 = vmatprep.subr.mxu0 0.0
      %4681 = vmatpush1.msra.mxu0 0.0
      %4682 = vmatprep.subr.mxu0 0.0
      %4683 = vmatpush1.msra.mxu0 0.0
      %4684 = vmatprep.subr.mxu0 0.0
      %4685 = vmatpush1.msra.mxu0 0.0
      %4686 = vmatprep.subr.mxu0 0.0
      %4687 = vmatpush1.msra.mxu0 0.0
      %4688 = vmatprep.subr.mxu0 0.0
      %4689 = vmatpush1.msra.mxu0 0.0
      %4690 = vmatprep.subr.mxu0 0.0
      %4691 = vmatpush1.msra.mxu0 0.0
      %4692 = vmatprep.subr.mxu0 0.0
      %4693 = vmatpush1.msra.mxu0 0.0
      %4694 = vmatprep.subr.mxu0 0.0
      %4695 = vmatpush1.msra.mxu0 0.0
      %4696 = vmatprep.subr.mxu0 0.0
      %4697 = vmatpush1.msra.mxu0 0.0
      %4698 = vmatprep.subr.mxu0 0.0
      %4699 = vmatpush1.msra.mxu0 0.0
      %4700 = vmatprep.subr.mxu0 0.0
      %4701 = vmatpush1.msra.mxu0 0.0
      %4702 = vmatprep.subr.mxu0 0.0
      %4703 = vmatpush1.msra.mxu0 0.0
      %4704 = vmatprep.mubr.f32.mxu0 0.0
      %4705 = vmatmul.mubr.f32.gmra.mrb[0].mxu0 %v4638
      %v4706 = vpop.f32.mrb[0].mxu0
      %v4707 = vadd.f32 0.0, %v4706
      %v4708 = vpop.f32.mrb[0].mxu0
      %4709 = vdwg.mxu0
      %v4710 = vmul.f32 %v4634, %v4634
      %v4711 = vsub.f32 %v4707, %v4710
      %v4712 = vmax.f32 %v4711, 0.0
      %v4713 = vadd.f32 %v4712, 1e-05
      %v4714 = vrsqrt.pop %v4713
      %v4715 = vld [vmem:[%s2 + $0x1] sm:$0x1]
      %v4716 = vmul.f32 %v4714, %v4715
      %v4717 = vld [vmem:[%s2 + $0x2] sm:$0x1]
      %v4718 = vmul.f32 %v4634, %v4716
      %v4719 = vsub.f32 %v4717, %v4718
      %v4720 = vlaneseq
      %v4721 = vshrl.u32 %v4720, 7
      %v4722 = vsub.s32 0, %v4721
      %v4723 = vrot.slane %v4716, %v4722
      %v4724 = vmul.f32 %v4084, %v4723
      %v4725 = vmul.f32 %v4085, %v4723
      %v4726 = vmul.f32 %v4086, %v4723
      %v4727 = vmul.f32 %v4087, %v4723
      %v4728 = vmul.f32 %v4088, %v4723
      %v4729 = vmul.f32 %v4089, %v4723
      %v4730 = vmul.f32 %v4090, %v4723
      %v4731 = vmul.f32 %v4091, %v4723
      %v4732 = vmul.f32 %v4092, %v4723
      %v4733 = vmul.f32 %v4093, %v4723
      %v4734 = vmul.f32 %v4094, %v4723
      %v4735 = vmul.f32 %v4095, %v4723
      %v4736 = vmul.f32 %v4096, %v4723
      %v4737 = vmul.f32 %v4097, %v4723
      %v4738 = vmul.f32 %v4098, %v4723
      %v4739 = vmul.f32 %v4099, %v4723
      %v4740 = vmul.f32 %v4100, %v4723
      %v4741 = vmul.f32 %v4101, %v4723
      %v4742 = vmul.f32 %v4102, %v4723
      %v4743 = vmul.f32 %v4103, %v4723
      %v4744 = vmul.f32 %v4104, %v4723
      %v4745 = vmul.f32 %v4105, %v4723
      %v4746 = vmul.f32 %v4106, %v4723
      %v4747 = vmul.f32 %v4107, %v4723
      %v4748 = vmul.f32 %v4108, %v4723
      %v4749 = vmul.f32 %v4109, %v4723
      %v4750 = vmul.f32 %v4110, %v4723
      %v4751 = vmul.f32 %v4111, %v4723
      %v4752 = vmul.f32 %v4112, %v4723
      %v4753 = vmul.f32 %v4113, %v4723
      %v4754 = vmul.f32 %v4114, %v4723
      %v4755 = vmul.f32 %v4115, %v4723
      %v4756 = vmul.f32 %v4116, %v4723
      %v4757 = vmul.f32 %v4117, %v4723
      %v4758 = vmul.f32 %v4118, %v4723
      %v4759 = vmul.f32 %v4119, %v4723
      %v4760 = vlaneseq
      %v4761 = vshrl.u32 %v4760, 7
      %v4762 = vsub.s32 0, %v4761
      %v4763 = vrot.slane %v4719, %v4762
      %v4764 = vadd.f32 %v4724, %v4763
      %v4765 = vadd.f32 %v4725, %v4763
      %v4766 = vadd.f32 %v4726, %v4763
      %v4767 = vadd.f32 %v4727, %v4763
      %v4768 = vadd.f32 %v4728, %v4763
      %v4769 = vadd.f32 %v4729, %v4763
      %v4770 = vadd.f32 %v4730, %v4763
      %v4771 = vadd.f32 %v4731, %v4763
      %v4772 = vadd.f32 %v4732, %v4763
      %v4773 = vadd.f32 %v4733, %v4763
      %v4774 = vadd.f32 %v4734, %v4763
      %v4775 = vadd.f32 %v4735, %v4763
      %v4776 = vadd.f32 %v4736, %v4763
      %v4777 = vadd.f32 %v4737, %v4763
      %v4778 = vadd.f32 %v4738, %v4763
      %v4779 = vadd.f32 %v4739, %v4763
      %v4780 = vadd.f32 %v4740, %v4763
      %v4781 = vadd.f32 %v4741, %v4763
      %v4782 = vadd.f32 %v4742, %v4763
      %v4783 = vadd.f32 %v4743, %v4763
      %v4784 = vadd.f32 %v4744, %v4763
      %v4785 = vadd.f32 %v4745, %v4763
      %v4786 = vadd.f32 %v4746, %v4763
      %v4787 = vadd.f32 %v4747, %v4763
      %v4788 = vadd.f32 %v4748, %v4763
      %v4789 = vadd.f32 %v4749, %v4763
      %v4790 = vadd.f32 %v4750, %v4763
      %v4791 = vadd.f32 %v4751, %v4763
      %v4792 = vadd.f32 %v4752, %v4763
      %v4793 = vadd.f32 %v4753, %v4763
      %v4794 = vadd.f32 %v4754, %v4763
      %v4795 = vadd.f32 %v4755, %v4763
      %v4796 = vadd.f32 %v4756, %v4763
      %v4797 = vadd.f32 %v4757, %v4763
      %v4798 = vadd.f32 %v4758, %v4763
      %v4799 = vadd.f32 %v4759, %v4763
      %v4800 = vxor.u32 %v4764, 2147483648
      %v4801 = vxor.u32 %v4765, 2147483648
      %v4802 = vxor.u32 %v4766, 2147483648
      %v4803 = vxor.u32 %v4767, 2147483648
      %v4804 = vxor.u32 %v4768, 2147483648
      %v4805 = vxor.u32 %v4769, 2147483648
      %v4806 = vxor.u32 %v4770, 2147483648
      %v4807 = vxor.u32 %v4771, 2147483648
      %v4808 = vxor.u32 %v4772, 2147483648
      %v4809 = vxor.u32 %v4773, 2147483648
      %v4810 = vxor.u32 %v4774, 2147483648
      %v4811 = vxor.u32 %v4775, 2147483648
      %v4812 = vxor.u32 %v4776, 2147483648
      %v4813 = vxor.u32 %v4777, 2147483648
      %v4814 = vxor.u32 %v4778, 2147483648
      %v4815 = vxor.u32 %v4779, 2147483648
      %v4816 = vxor.u32 %v4780, 2147483648
      %v4817 = vxor.u32 %v4781, 2147483648
      %v4818 = vxor.u32 %v4782, 2147483648
      %v4819 = vxor.u32 %v4783, 2147483648
      %v4820 = vxor.u32 %v4784, 2147483648
      %v4821 = vxor.u32 %v4785, 2147483648
      %v4822 = vxor.u32 %v4786, 2147483648
      %v4823 = vxor.u32 %v4787, 2147483648
      %v4824 = vxor.u32 %v4788, 2147483648
      %v4825 = vxor.u32 %v4789, 2147483648
      %v4826 = vxor.u32 %v4790, 2147483648
      %v4827 = vxor.u32 %v4791, 2147483648
      %v4828 = vxor.u32 %v4792, 2147483648
      %v4829 = vxor.u32 %v4793, 2147483648
      %v4830 = vxor.u32 %v4794, 2147483648
      %v4831 = vxor.u32 %v4795, 2147483648
      %v4832 = vxor.u32 %v4796, 2147483648
      %v4833 = vxor.u32 %v4797, 2147483648
      %v4834 = vxor.u32 %v4798, 2147483648
      %v4835 = vxor.u32 %v4799, 2147483648
      %v4836 = vmul.f32 %v4800, 1.442695
      %v4837 = vpow.pop %v4836
      %v4838 = vmul.f32 %v4801, 1.442695
      %v4839 = vpow.pop %v4838
      %v4840 = vmul.f32 %v4802, 1.442695
      %v4841 = vpow.pop %v4840
      %v4842 = vmul.f32 %v4803, 1.442695
      %v4843 = vpow.pop %v4842
      %v4844 = vmul.f32 %v4804, 1.442695
      %v4845 = vpow.pop %v4844
      %v4846 = vmul.f32 %v4805, 1.442695
      %v4847 = vpow.pop %v4846
      %v4848 = vmul.f32 %v4806, 1.442695
      %v4849 = vpow.pop %v4848
      %v4850 = vmul.f32 %v4807, 1.442695
      %v4851 = vpow.pop %v4850
      %v4852 = vmul.f32 %v4808, 1.442695
      %v4853 = vpow.pop %v4852
      %v4854 = vmul.f32 %v4809, 1.442695
      %v4855 = vpow.pop %v4854
      %v4856 = vmul.f32 %v4810, 1.442695
      %v4857 = vpow.pop %v4856
      %v4858 = vmul.f32 %v4811, 1.442695
      %v4859 = vpow.pop %v4858
      %v4860 = vmul.f32 %v4812, 1.442695
      %v4861 = vpow.pop %v4860
      %v4862 = vmul.f32 %v4813, 1.442695
      %v4863 = vpow.pop %v4862
      %v4864 = vmul.f32 %v4814, 1.442695
      %v4865 = vpow.pop %v4864
      %v4866 = vmul.f32 %v4815, 1.442695
      %v4867 = vpow.pop %v4866
      %v4868 = vmul.f32 %v4816, 1.442695
      %v4869 = vpow.pop %v4868
      %v4870 = vmul.f32 %v4817, 1.442695
      %v4871 = vpow.pop %v4870
      %v4872 = vmul.f32 %v4818, 1.442695
      %v4873 = vpow.pop %v4872
      %v4874 = vmul.f32 %v4819, 1.442695
      %v4875 = vpow.pop %v4874
      %v4876 = vmul.f32 %v4820, 1.442695
      %v4877 = vpow.pop %v4876
      %v4878 = vmul.f32 %v4821, 1.442695
      %v4879 = vpow.pop %v4878
      %v4880 = vmul.f32 %v4822, 1.442695
      %v4881 = vpow.pop %v4880
      %v4882 = vmul.f32 %v4823, 1.442695
      %v4883 = vpow.pop %v4882
      %v4884 = vmul.f32 %v4824, 1.442695
      %v4885 = vpow.pop %v4884
      %v4886 = vmul.f32 %v4825, 1.442695
      %v4887 = vpow.pop %v4886
      %v4888 = vmul.f32 %v4826, 1.442695
      %v4889 = vpow.pop %v4888
      %v4890 = vmul.f32 %v4827, 1.442695
      %v4891 = vpow.pop %v4890
      %v4892 = vmul.f32 %v4828, 1.442695
      %v4893 = vpow.pop %v4892
      %v4894 = vmul.f32 %v4829, 1.442695
      %v4895 = vpow.pop %v4894
      %v4896 = vmul.f32 %v4830, 1.442695
      %v4897 = vpow.pop %v4896
      %v4898 = vmul.f32 %v4831, 1.442695
      %v4899 = vpow.pop %v4898
      %v4900 = vmul.f32 %v4832, 1.442695
      %v4901 = vpow.pop %v4900
      %v4902 = vmul.f32 %v4833, 1.442695
      %v4903 = vpow.pop %v4902
      %v4904 = vmul.f32 %v4834, 1.442695
      %v4905 = vpow.pop %v4904
      %v4906 = vmul.f32 %v4835, 1.442695
      %v4907 = vpow.pop %v4906
      %v4908 = vadd.f32 %v4837, 1.0
      %v4909 = vadd.f32 %v4839, 1.0
      %v4910 = vadd.f32 %v4841, 1.0
      %v4911 = vadd.f32 %v4843, 1.0
      %v4912 = vadd.f32 %v4845, 1.0
      %v4913 = vadd.f32 %v4847, 1.0
      %v4914 = vadd.f32 %v4849, 1.0
      %v4915 = vadd.f32 %v4851, 1.0
      %v4916 = vadd.f32 %v4853, 1.0
      %v4917 = vadd.f32 %v4855, 1.0
      %v4918 = vadd.f32 %v4857, 1.0
      %v4919 = vadd.f32 %v4859, 1.0
      %v4920 = vadd.f32 %v4861, 1.0
      %v4921 = vadd.f32 %v4863, 1.0
      %v4922 = vadd.f32 %v4865, 1.0
      %v4923 = vadd.f32 %v4867, 1.0
      %v4924 = vadd.f32 %v4869, 1.0
      %v4925 = vadd.f32 %v4871, 1.0
      %v4926 = vadd.f32 %v4873, 1.0
      %v4927 = vadd.f32 %v4875, 1.0
      %v4928 = vadd.f32 %v4877, 1.0
      %v4929 = vadd.f32 %v4879, 1.0
      %v4930 = vadd.f32 %v4881, 1.0
      %v4931 = vadd.f32 %v4883, 1.0
      %v4932 = vadd.f32 %v4885, 1.0
      %v4933 = vadd.f32 %v4887, 1.0
      %v4934 = vadd.f32 %v4889, 1.0
      %v4935 = vadd.f32 %v4891, 1.0
      %v4936 = vadd.f32 %v4893, 1.0
      %v4937 = vadd.f32 %v4895, 1.0
      %v4938 = vadd.f32 %v4897, 1.0
      %v4939 = vadd.f32 %v4899, 1.0
      %v4940 = vadd.f32 %v4901, 1.0
      %v4941 = vadd.f32 %v4903, 1.0
      %v4942 = vadd.f32 %v4905, 1.0
      %v4943 = vadd.f32 %v4907, 1.0
      %v4944 = vrcp.pop %v4908
      %v4945 = vmul.f32 1.0, %v4944
      %v4946 = vrcp.pop %v4909
      %v4947 = vmul.f32 1.0, %v4946
      %v4948 = vrcp.pop %v4910
      %v4949 = vmul.f32 1.0, %v4948
      %v4950 = vrcp.pop %v4911
      %v4951 = vmul.f32 1.0, %v4950
      %v4952 = vrcp.pop %v4912
      %v4953 = vmul.f32 1.0, %v4952
      %v4954 = vrcp.pop %v4913
      %v4955 = vmul.f32 1.0, %v4954
      %v4956 = vrcp.pop %v4914
      %v4957 = vmul.f32 1.0, %v4956
      %v4958 = vrcp.pop %v4915
      %v4959 = vmul.f32 1.0, %v4958
      %v4960 = vrcp.pop %v4916
      %v4961 = vmul.f32 1.0, %v4960
      %v4962 = vrcp.pop %v4917
      %v4963 = vmul.f32 1.0, %v4962
      %v4964 = vrcp.pop %v4918
      %v4965 = vmul.f32 1.0, %v4964
      %v4966 = vrcp.pop %v4919
      %v4967 = vmul.f32 1.0, %v4966
      %v4968 = vrcp.pop %v4920
      %v4969 = vmul.f32 1.0, %v4968
      %v4970 = vrcp.pop %v4921
      %v4971 = vmul.f32 1.0, %v4970
      %v4972 = vrcp.pop %v4922
      %v4973 = vmul.f32 1.0, %v4972
      %v4974 = vrcp.pop %v4923
      %v4975 = vmul.f32 1.0, %v4974
      %v4976 = vrcp.pop %v4924
      %v4977 = vmul.f32 1.0, %v4976
      %v4978 = vrcp.pop %v4925
      %v4979 = vmul.f32 1.0, %v4978
      %v4980 = vrcp.pop %v4926
      %v4981 = vmul.f32 1.0, %v4980
      %v4982 = vrcp.pop %v4927
      %v4983 = vmul.f32 1.0, %v4982
      %v4984 = vrcp.pop %v4928
      %v4985 = vmul.f32 1.0, %v4984
      %v4986 = vrcp.pop %v4929
      %v4987 = vmul.f32 1.0, %v4986
      %v4988 = vrcp.pop %v4930
      %v4989 = vmul.f32 1.0, %v4988
      %v4990 = vrcp.pop %v4931
      %v4991 = vmul.f32 1.0, %v4990
      %v4992 = vrcp.pop %v4932
      %v4993 = vmul.f32 1.0, %v4992
      %v4994 = vrcp.pop %v4933
      %v4995 = vmul.f32 1.0, %v4994
      %v4996 = vrcp.pop %v4934
      %v4997 = vmul.f32 1.0, %v4996
      %v4998 = vrcp.pop %v4935
      %v4999 = vmul.f32 1.0, %v4998
      %v5000 = vrcp.pop %v4936
      %v5001 = vmul.f32 1.0, %v5000
      %v5002 = vrcp.pop %v4937
      %v5003 = vmul.f32 1.0, %v5002
      %v5004 = vrcp.pop %v4938
      %v5005 = vmul.f32 1.0, %v5004
      %v5006 = vrcp.pop %v4939
      %v5007 = vmul.f32 1.0, %v5006
      %v5008 = vrcp.pop %v4940
      %v5009 = vmul.f32 1.0, %v5008
      %v5010 = vrcp.pop %v4941
      %v5011 = vmul.f32 1.0, %v5010
      %v5012 = vrcp.pop %v4942
      %v5013 = vmul.f32 1.0, %v5012
      %v5014 = vrcp.pop %v4943
      %v5015 = vmul.f32 1.0, %v5014
      %v5016 = vmul.f32 %v4764, %v4945
      %v5017 = vmul.f32 %v4765, %v4947
      %v5018 = vmul.f32 %v4766, %v4949
      %v5019 = vmul.f32 %v4767, %v4951
      %v5020 = vmul.f32 %v4768, %v4953
      %v5021 = vmul.f32 %v4769, %v4955
      %v5022 = vmul.f32 %v4770, %v4957
      %v5023 = vmul.f32 %v4771, %v4959
      %v5024 = vmul.f32 %v4772, %v4961
      %v5025 = vmul.f32 %v4773, %v4963
      %v5026 = vmul.f32 %v4774, %v4965
      %v5027 = vmul.f32 %v4775, %v4967
      %v5028 = vmul.f32 %v4776, %v4969
      %v5029 = vmul.f32 %v4777, %v4971
      %v5030 = vmul.f32 %v4778, %v4973
      %v5031 = vmul.f32 %v4779, %v4975
      %v5032 = vmul.f32 %v4780, %v4977
      %v5033 = vmul.f32 %v4781, %v4979
      %v5034 = vmul.f32 %v4782, %v4981
      %v5035 = vmul.f32 %v4783, %v4983
      %v5036 = vmul.f32 %v4784, %v4985
      %v5037 = vmul.f32 %v4785, %v4987
      %v5038 = vmul.f32 %v4786, %v4989
      %v5039 = vmul.f32 %v4787, %v4991
      %v5040 = vmul.f32 %v4788, %v4993
      %v5041 = vmul.f32 %v4789, %v4995
      %v5042 = vmul.f32 %v4790, %v4997
      %v5043 = vmul.f32 %v4791, %v4999
      %v5044 = vmul.f32 %v4792, %v5001
      %v5045 = vmul.f32 %v4793, %v5003
      %v5046 = vmul.f32 %v4794, %v5005
      %v5047 = vmul.f32 %v4795, %v5007
      %v5048 = vmul.f32 %v4796, %v5009
      %v5049 = vmul.f32 %v4797, %v5011
      %v5050 = vmul.f32 %v4798, %v5013
      %v5051 = vmul.f32 %v4799, %v5015
      %v5052 = vld [vmem:[%s293 + $0x13] sm:$0xff]
      %v5053 = vld [vmem:[%s293 + $0x1b] sm:$0xff]
      %v5054 = vld [vmem:[%s293 + $0x23] sm:$0xff]
      %v5055 = vld [vmem:[%s293 + $0x2b] sm:$0xff]
      %v5056 = vld [vmem:[%s293 + $0x33] sm:$0xff]
      %v5057 = vld [vmem:[%s293 + $0x3b] sm:$0xff]
      %v5058 = vld [vmem:[%s293 + $0x43] sm:$0xff]
      %v5059 = vld [vmem:[%s293 + $0x4b] sm:$0xff]
      %v5060 = vld [vmem:[%s293 + $0x53] sm:$0xff]
      %v5061 = vld [vmem:[%s293 + $0x5b] sm:$0xff]
      %v5062 = vld [vmem:[%s293 + $0x63] sm:$0xff]
      %v5063 = vld [vmem:[%s293 + $0x6b] sm:$0xff]
      %v5064 = vld [vmem:[%s293 + $0x73] sm:$0xff]
      %v5065 = vld [vmem:[%s293 + $0x7b] sm:$0xff]
      %v5066 = vld [vmem:[%s293 + $0x83] sm:$0xff]
      %v5067 = vld [vmem:[%s293 + $0x8b] sm:$0xff]
      %v5068 = vld [vmem:[%s293 + $0x93] sm:$0xff]
      %v5069 = vld [vmem:[%s293 + $0x9b] sm:$0xff]
      %v5070 = vld [vmem:[%s293 + $0xa3] sm:$0xff]
      %v5071 = vld [vmem:[%s293 + $0xab] sm:$0xff]
      %v5072 = vld [vmem:[%s293 + $0xb3] sm:$0xff]
      %v5073 = vld [vmem:[%s293 + $0xbb] sm:$0xff]
      %v5074 = vld [vmem:[%s293 + $0xc3] sm:$0xff]
      %v5075 = vld [vmem:[%s293 + $0xcb] sm:$0xff]
      %v5076 = vld [vmem:[%s293 + $0xd3] sm:$0xff]
      %v5077 = vld [vmem:[%s293 + $0xdb] sm:$0xff]
      %v5078 = vld [vmem:[%s293 + $0xe3] sm:$0xff]
      %v5079 = vld [vmem:[%s293 + $0xeb] sm:$0xff]
      %v5080 = vld [vmem:[%s293 + $0xf3] sm:$0xff]
      %v5081 = vld [vmem:[%s293 + $0xfb] sm:$0xff]
      %v5082 = vld [vmem:[%s293 + $0x103] sm:$0xff]
      %v5083 = vld [vmem:[%s293 + $0x10b] sm:$0xff]
      %v5084 = vld [vmem:[%s293 + $0x113] sm:$0xff]
      %v5085 = vld [vmem:[%s293 + $0x11b] sm:$0xff]
      %v5086 = vld [vmem:[%s293 + $0x123] sm:$0xff]
      %v5087 = vld [vmem:[%s293 + $0x12b] sm:$0xff]
      %v5088 = vld [vmem:[%s6] sm:$0xf]
      %vm5089 = vcmask 31744
      %v5091 = vsel %vm5089, %v5052, 0
      %v5094 = vsel %vm5089, %v5053, 0
      %v5097 = vsel %vm5089, %v5054, 0
      %v5100 = vsel %vm5089, %v5055, 0
      %v5103 = vsel %vm5089, %v5056, 0
      %v5106 = vsel %vm5089, %v5057, 0
      %v5109 = vsel %vm5089, %v5058, 0
      %v5112 = vsel %vm5089, %v5059, 0
      %v5115 = vsel %vm5089, %v5060, 0
      %v5118 = vsel %vm5089, %v5061, 0
      %v5121 = vsel %vm5089, %v5062, 0
      %v5124 = vsel %vm5089, %v5063, 0
      %v5127 = vsel %vm5089, %v5064, 0
      %v5130 = vsel %vm5089, %v5065, 0
      %v5133 = vsel %vm5089, %v5066, 0
      %v5136 = vsel %vm5089, %v5067, 0
      %v5139 = vsel %vm5089, %v5068, 0
      %v5142 = vsel %vm5089, %v5069, 0
      %v5145 = vsel %vm5089, %v5070, 0
      %v5148 = vsel %vm5089, %v5071, 0
      %v5151 = vsel %vm5089, %v5072, 0
      %v5154 = vsel %vm5089, %v5073, 0
      %v5157 = vsel %vm5089, %v5074, 0
      %v5160 = vsel %vm5089, %v5075, 0
      %v5163 = vsel %vm5089, %v5076, 0
      %v5166 = vsel %vm5089, %v5077, 0
      %v5169 = vsel %vm5089, %v5078, 0
      %v5172 = vsel %vm5089, %v5079, 0
      %v5175 = vsel %vm5089, %v5080, 0
      %v5178 = vsel %vm5089, %v5081, 0
      %v5181 = vsel %vm5089, %v5082, 0
      %v5184 = vsel %vm5089, %v5083, 0
      %v5187 = vsel %vm5089, %v5084, 0
      %v5190 = vsel %vm5089, %v5085, 0
      %v5193 = vsel %vm5089, %v5086, 0
      %v5196 = vsel %vm5089, %v5087, 0
      %vm5198 = vcmask 1043456
      %v5200 = vsel %vm5198, %v5088, 0
      %5202 = vmatprep.subr.mxu0 0.0
      %5203 = vmatpush1.msra.mxu0 %v5200
      %5204 = vmatprep.subr.mxu0 0.0
      %5205 = vmatpush1.msra.mxu0 0.0
      %5206 = vmatprep.subr.mxu0 0.0
      %5207 = vmatpush1.msra.mxu0 0.0
      %5208 = vmatprep.subr.mxu0 0.0
      %5209 = vmatpush1.msra.mxu0 0.0
      %5210 = vmatprep.subr.mxu0 0.0
      %5211 = vmatpush1.msra.mxu0 0.0
      %5212 = vmatprep.subr.mxu0 0.0
      %5213 = vmatpush1.msra.mxu0 0.0
      %5214 = vmatprep.subr.mxu0 0.0
      %5215 = vmatpush1.msra.mxu0 0.0
      %5216 = vmatprep.subr.mxu0 0.0
      %5217 = vmatpush1.msra.mxu0 0.0
      %5218 = vmatprep.subr.mxu0 0.0
      %5219 = vmatpush1.msra.mxu0 0.0
      %5220 = vmatprep.subr.mxu0 0.0
      %5221 = vmatpush1.msra.mxu0 0.0
      %5222 = vmatprep.subr.mxu0 0.0
      %5223 = vmatpush1.msra.mxu0 0.0
      %5224 = vmatprep.subr.mxu0 0.0
      %5225 = vmatpush1.msra.mxu0 0.0
      %5226 = vmatprep.subr.mxu0 0.0
      %5227 = vmatpush1.msra.mxu0 0.0
      %5228 = vmatprep.subr.mxu0 0.0
      %5229 = vmatpush1.msra.mxu0 0.0
      %5230 = vmatprep.subr.mxu0 0.0
      %5231 = vmatpush1.msra.mxu0 0.0
      %5232 = vmatprep.subr.mxu0 0.0
      %5233 = vmatpush1.msra.mxu0 0.0
      %5234 = vmatprep.subr.mxu0 0.0
      %5235 = vmatpush1.msra.mxu0 0.0
      %5236 = vmatprep.subr.mxu0 0.0
      %5237 = vmatpush1.msra.mxu0 0.0
      %5238 = vmatprep.subr.mxu0 0.0
      %5239 = vmatpush1.msra.mxu0 0.0
      %5240 = vmatprep.subr.mxu0 0.0
      %5241 = vmatpush1.msra.mxu0 0.0
      %5242 = vmatprep.subr.mxu0 0.0
      %5243 = vmatpush1.msra.mxu0 0.0
      %5244 = vmatprep.subr.mxu0 0.0
      %5245 = vmatpush1.msra.mxu0 0.0
      %5246 = vmatprep.subr.mxu0 0.0
      %5247 = vmatpush1.msra.mxu0 0.0
      %5248 = vmatprep.subr.mxu0 0.0
      %5249 = vmatpush1.msra.mxu0 0.0
      %5250 = vmatprep.subr.mxu0 0.0
      %5251 = vmatpush1.msra.mxu0 0.0
      %5252 = vmatprep.subr.mxu0 0.0
      %5253 = vmatpush1.msra.mxu0 0.0
      %5254 = vmatprep.subr.mxu0 0.0
      %5255 = vmatpush1.msra.mxu0 0.0
      %5256 = vmatprep.subr.mxu0 0.0
      %5257 = vmatpush1.msra.mxu0 0.0
      %5258 = vmatprep.subr.mxu0 0.0
      %5259 = vmatpush1.msra.mxu0 0.0
      %5260 = vmatprep.subr.mxu0 0.0
      %5261 = vmatpush1.msra.mxu0 0.0
      %5262 = vmatprep.subr.mxu0 0.0
      %5263 = vmatpush1.msra.mxu0 0.0
      %5264 = vmatprep.subr.mxu0 0.0
      %5265 = vmatpush1.msra.mxu0 0.0
      %5266 = vmatprep.mubr.f32.mxu0 0.0
      %5267 = vmatmul.mubr.f32.gmra.mrb[0].mxu0 %v5091
      %v5268 = vpop.f32.mrb[0].mxu0
      %v5269 = vadd.f32 0.0, %v5268
      %v5270 = vpop.f32.mrb[0].mxu0
      %5271 = vmatprep.mubr.f32.mxu0 0.0
      %5272 = vmatmul.mubr.f32.gmra.mrb[0].mxu0 %v5094
      %v5273 = vpop.f32.mrb[0].mxu0
      %v5274 = vadd.f32 0.0, %v5273
      %v5275 = vpop.f32.mrb[0].mxu0
      %5276 = vmatprep.mubr.f32.mxu0 0.0
      %5277 = vmatmul.mubr.f32.gmra.mrb[0].mxu0 %v5097
      %v5278 = vpop.f32.mrb[0].mxu0
      %v5279 = vadd.f32 0.0, %v5278
      %v5280 = vpop.f32.mrb[0].mxu0
      %5281 = vmatprep.mubr.f32.mxu0 0.0
      %5282 = vmatmul.mubr.f32.gmra.mrb[0].mxu0 %v5100
      %v5283 = vpop.f32.mrb[0].mxu0
      %v5284 = vadd.f32 0.0, %v5283
      %v5285 = vpop.f32.mrb[0].mxu0
      %5286 = vmatprep.mubr.f32.mxu0 0.0
      %5287 = vmatmul.mubr.f32.gmra.mrb[0].mxu0 %v5103
      %v5288 = vpop.f32.mrb[0].mxu0
      %v5289 = vadd.f32 0.0, %v5288
      %v5290 = vpop.f32.mrb[0].mxu0
      %5291 = vmatprep.mubr.f32.mxu0 0.0
      %5292 = vmatmul.mubr.f32.gmra.mrb[0].mxu0 %v5106
      %v5293 = vpop.f32.mrb[0].mxu0
      %v5294 = vadd.f32 0.0, %v5293
      %v5295 = vpop.f32.mrb[0].mxu0
      %5296 = vmatprep.mubr.f32.mxu0 0.0
      %5297 = vmatmul.mubr.f32.gmra.mrb[0].mxu0 %v5109
      %v5298 = vpop.f32.mrb[0].mxu0
      %v5299 = vadd.f32 0.0, %v5298
      %v5300 = vpop.f32.mrb[0].mxu0
      %5301 = vmatprep.mubr.f32.mxu0 0.0
      %5302 = vmatmul.mubr.f32.gmra.mrb[0].mxu0 %v5112
      %v5303 = vpop.f32.mrb[0].mxu0
      %v5304 = vadd.f32 0.0, %v5303
      %v5305 = vpop.f32.mrb[0].mxu0
      %5306 = vmatprep.mubr.f32.mxu0 0.0
      %5307 = vmatmul.mubr.f32.gmra.mrb[0].mxu0 %v5115
      %v5308 = vpop.f32.mrb[0].mxu0
      %v5309 = vadd.f32 0.0, %v5308
      %v5310 = vpop.f32.mrb[0].mxu0
      %5311 = vmatprep.mubr.f32.mxu0 0.0
      %5312 = vmatmul.mubr.f32.gmra.mrb[0].mxu0 %v5118
      %v5313 = vpop.f32.mrb[0].mxu0
      %v5314 = vadd.f32 0.0, %v5313
      %v5315 = vpop.f32.mrb[0].mxu0
      %5316 = vmatprep.mubr.f32.mxu0 0.0
      %5317 = vmatmul.mubr.f32.gmra.mrb[0].mxu0 %v5121
      %v5318 = vpop.f32.mrb[0].mxu0
      %v5319 = vadd.f32 0.0, %v5318
      %v5320 = vpop.f32.mrb[0].mxu0
      %5321 = vmatprep.mubr.f32.mxu0 0.0
      %5322 = vmatmul.mubr.f32.gmra.mrb[0].mxu0 %v5124
      %v5323 = vpop.f32.mrb[0].mxu0
      %v5324 = vadd.f32 0.0, %v5323
      %v5325 = vpop.f32.mrb[0].mxu0
      %5326 = vmatprep.mubr.f32.mxu0 0.0
      %5327 = vmatmul.mubr.f32.gmra.mrb[0].mxu0 %v5127
      %v5328 = vpop.f32.mrb[0].mxu0
      %v5329 = vadd.f32 0.0, %v5328
      %v5330 = vpop.f32.mrb[0].mxu0
      %5331 = vmatprep.mubr.f32.mxu0 0.0
      %5332 = vmatmul.mubr.f32.gmra.mrb[0].mxu0 %v5130
      %v5333 = vpop.f32.mrb[0].mxu0
      %v5334 = vadd.f32 0.0, %v5333
      %v5335 = vpop.f32.mrb[0].mxu0
      %5336 = vmatprep.mubr.f32.mxu0 0.0
      %5337 = vmatmul.mubr.f32.gmra.mrb[0].mxu0 %v5133
      %v5338 = vpop.f32.mrb[0].mxu0
      %v5339 = vadd.f32 0.0, %v5338
      %v5340 = vpop.f32.mrb[0].mxu0
      %5341 = vmatprep.mubr.f32.mxu0 0.0
      %5342 = vmatmul.mubr.f32.gmra.mrb[0].mxu0 %v5136
      %v5343 = vpop.f32.mrb[0].mxu0
      %v5344 = vadd.f32 0.0, %v5343
      %v5345 = vpop.f32.mrb[0].mxu0
      %5346 = vmatprep.mubr.f32.mxu0 0.0
      %5347 = vmatmul.mubr.f32.gmra.mrb[0].mxu0 %v5139
      %v5348 = vpop.f32.mrb[0].mxu0
      %v5349 = vadd.f32 0.0, %v5348
      %v5350 = vpop.f32.mrb[0].mxu0
      %5351 = vmatprep.mubr.f32.mxu0 0.0
      %5352 = vmatmul.mubr.f32.gmra.mrb[0].mxu0 %v5142
      %v5353 = vpop.f32.mrb[0].mxu0
      %v5354 = vadd.f32 0.0, %v5353
      %v5355 = vpop.f32.mrb[0].mxu0
      %5356 = vmatprep.mubr.f32.mxu0 0.0
      %5357 = vmatmul.mubr.f32.gmra.mrb[0].mxu0 %v5145
      %v5358 = vpop.f32.mrb[0].mxu0
      %v5359 = vadd.f32 0.0, %v5358
      %v5360 = vpop.f32.mrb[0].mxu0
      %5361 = vmatprep.mubr.f32.mxu0 0.0
      %5362 = vmatmul.mubr.f32.gmra.mrb[0].mxu0 %v5148
      %v5363 = vpop.f32.mrb[0].mxu0
      %v5364 = vadd.f32 0.0, %v5363
      %v5365 = vpop.f32.mrb[0].mxu0
      %5366 = vmatprep.mubr.f32.mxu0 0.0
      %5367 = vmatmul.mubr.f32.gmra.mrb[0].mxu0 %v5151
      %v5368 = vpop.f32.mrb[0].mxu0
      %v5369 = vadd.f32 0.0, %v5368
      %v5370 = vpop.f32.mrb[0].mxu0
      %5371 = vmatprep.mubr.f32.mxu0 0.0
      %5372 = vmatmul.mubr.f32.gmra.mrb[0].mxu0 %v5154
      %v5373 = vpop.f32.mrb[0].mxu0
      %v5374 = vadd.f32 0.0, %v5373
      %v5375 = vpop.f32.mrb[0].mxu0
      %5376 = vmatprep.mubr.f32.mxu0 0.0
      %5377 = vmatmul.mubr.f32.gmra.mrb[0].mxu0 %v5157
      %v5378 = vpop.f32.mrb[0].mxu0
      %v5379 = vadd.f32 0.0, %v5378
      %v5380 = vpop.f32.mrb[0].mxu0
      %5381 = vmatprep.mubr.f32.mxu0 0.0
      %5382 = vmatmul.mubr.f32.gmra.mrb[0].mxu0 %v5160
      %v5383 = vpop.f32.mrb[0].mxu0
      %v5384 = vadd.f32 0.0, %v5383
      %v5385 = vpop.f32.mrb[0].mxu0
      %5386 = vmatprep.mubr.f32.mxu0 0.0
      %5387 = vmatmul.mubr.f32.gmra.mrb[0].mxu0 %v5163
      %v5388 = vpop.f32.mrb[0].mxu0
      %v5389 = vadd.f32 0.0, %v5388
      %v5390 = vpop.f32.mrb[0].mxu0
      %5391 = vmatprep.mubr.f32.mxu0 0.0
      %5392 = vmatmul.mubr.f32.gmra.mrb[0].mxu0 %v5166
      %v5393 = vpop.f32.mrb[0].mxu0
      %v5394 = vadd.f32 0.0, %v5393
      %v5395 = vpop.f32.mrb[0].mxu0
      %5396 = vmatprep.mubr.f32.mxu0 0.0
      %5397 = vmatmul.mubr.f32.gmra.mrb[0].mxu0 %v5169
      %v5398 = vpop.f32.mrb[0].mxu0
      %v5399 = vadd.f32 0.0, %v5398
      %v5400 = vpop.f32.mrb[0].mxu0
      %5401 = vmatprep.mubr.f32.mxu0 0.0
      %5402 = vmatmul.mubr.f32.gmra.mrb[0].mxu0 %v5172
      %v5403 = vpop.f32.mrb[0].mxu0
      %v5404 = vadd.f32 0.0, %v5403
      %v5405 = vpop.f32.mrb[0].mxu0
      %5406 = vmatprep.mubr.f32.mxu0 0.0
      %5407 = vmatmul.mubr.f32.gmra.mrb[0].mxu0 %v5175
      %v5408 = vpop.f32.mrb[0].mxu0
      %v5409 = vadd.f32 0.0, %v5408
      %v5410 = vpop.f32.mrb[0].mxu0
      %5411 = vmatprep.mubr.f32.mxu0 0.0
      %5412 = vmatmul.mubr.f32.gmra.mrb[0].mxu0 %v5178
      %v5413 = vpop.f32.mrb[0].mxu0
      %v5414 = vadd.f32 0.0, %v5413
      %v5415 = vpop.f32.mrb[0].mxu0
      %5416 = vmatprep.mubr.f32.mxu0 0.0
      %5417 = vmatmul.mubr.f32.gmra.mrb[0].mxu0 %v5181
      %v5418 = vpop.f32.mrb[0].mxu0
      %v5419 = vadd.f32 0.0, %v5418
      %v5420 = vpop.f32.mrb[0].mxu0
      %5421 = vmatprep.mubr.f32.mxu0 0.0
      %5422 = vmatmul.mubr.f32.gmra.mrb[0].mxu0 %v5184
      %v5423 = vpop.f32.mrb[0].mxu0
      %v5424 = vadd.f32 0.0, %v5423
      %v5425 = vpop.f32.mrb[0].mxu0
      %5426 = vmatprep.mubr.f32.mxu0 0.0
      %5427 = vmatmul.mubr.f32.gmra.mrb[0].mxu0 %v5187
      %v5428 = vpop.f32.mrb[0].mxu0
      %v5429 = vadd.f32 0.0, %v5428
      %v5430 = vpop.f32.mrb[0].mxu0
      %5431 = vmatprep.mubr.f32.mxu0 0.0
      %5432 = vmatmul.mubr.f32.gmra.mrb[0].mxu0 %v5190
      %v5433 = vpop.f32.mrb[0].mxu0
      %v5434 = vadd.f32 0.0, %v5433
      %v5435 = vpop.f32.mrb[0].mxu0
      %5436 = vmatprep.mubr.f32.mxu0 0.0
      %5437 = vmatmul.mubr.f32.gmra.mrb[0].mxu0 %v5193
      %v5438 = vpop.f32.mrb[0].mxu0
      %v5439 = vadd.f32 0.0, %v5438
      %v5440 = vpop.f32.mrb[0].mxu0
      %5441 = vmatprep.mubr.f32.mxu0 0.0
      %5442 = vmatmul.mubr.f32.gmra.mrb[0].mxu0 %v5196
      %v5443 = vpop.f32.mrb[0].mxu0
      %v5444 = vadd.f32 0.0, %v5443
      %v5445 = vpop.f32.mrb[0].mxu0
      %5446 = vdwg.mxu0
      %v5447 = vadd.f32 %v5016, %v5269
      %v5448 = vadd.f32 %v5017, %v5274
      %v5449 = vadd.f32 %v5018, %v5279
      %v5450 = vadd.f32 %v5019, %v5284
      %v5451 = vadd.f32 %v5020, %v5289
      %v5452 = vadd.f32 %v5021, %v5294
      %v5453 = vadd.f32 %v5022, %v5299
      %v5454 = vadd.f32 %v5023, %v5304
      %v5455 = vadd.f32 %v5024, %v5309
      %v5456 = vadd.f32 %v5025, %v5314
      %v5457 = vadd.f32 %v5026, %v5319
      %v5458 = vadd.f32 %v5027, %v5324
      %v5459 = vadd.f32 %v5028, %v5329
      %v5460 = vadd.f32 %v5029, %v5334
      %v5461 = vadd.f32 %v5030, %v5339
      %v5462 = vadd.f32 %v5031, %v5344
      %v5463 = vadd.f32 %v5032, %v5349
      %v5464 = vadd.f32 %v5033, %v5354
      %v5465 = vadd.f32 %v5034, %v5359
      %v5466 = vadd.f32 %v5035, %v5364
      %v5467 = vadd.f32 %v5036, %v5369
      %v5468 = vadd.f32 %v5037, %v5374
      %v5469 = vadd.f32 %v5038, %v5379
      %v5470 = vadd.f32 %v5039, %v5384
      %v5471 = vadd.f32 %v5040, %v5389
      %v5472 = vadd.f32 %v5041, %v5394
      %v5473 = vadd.f32 %v5042, %v5399
      %v5474 = vadd.f32 %v5043, %v5404
      %v5475 = vadd.f32 %v5044, %v5409
      %v5476 = vadd.f32 %v5045, %v5414
      %v5477 = vadd.f32 %v5046, %v5419
      %v5478 = vadd.f32 %v5047, %v5424
      %v5479 = vadd.f32 %v5048, %v5429
      %v5480 = vadd.f32 %v5049, %v5434
      %v5481 = vadd.f32 %v5050, %v5439
      %v5482 = vadd.f32 %v5051, %v5444
      %v5483 = vld [vmem:[%s2 + $0x3] sm:$0x1]
      %v5484 = vlaneseq
      %v5485 = vshrl.u32 %v5484, 7
      %v5486 = vsub.s32 0, %v5485
      %v5487 = vrot.slane %v5483, %v5486
      %v5488 = vadd.f32 %v5447, %v5487
      %v5489 = vadd.f32 %v5448, %v5487
      %v5490 = vadd.f32 %v5449, %v5487
      %v5491 = vadd.f32 %v5450, %v5487
      %v5492 = vadd.f32 %v5451, %v5487
      %v5493 = vadd.f32 %v5452, %v5487
      %v5494 = vadd.f32 %v5453, %v5487
      %v5495 = vadd.f32 %v5454, %v5487
      %v5496 = vadd.f32 %v5455, %v5487
      %v5497 = vadd.f32 %v5456, %v5487
      %v5498 = vadd.f32 %v5457, %v5487
      %v5499 = vadd.f32 %v5458, %v5487
      %v5500 = vadd.f32 %v5459, %v5487
      %v5501 = vadd.f32 %v5460, %v5487
      %v5502 = vadd.f32 %v5461, %v5487
      %v5503 = vadd.f32 %v5462, %v5487
      %v5504 = vadd.f32 %v5463, %v5487
      %v5505 = vadd.f32 %v5464, %v5487
      %v5506 = vadd.f32 %v5465, %v5487
      %v5507 = vadd.f32 %v5466, %v5487
      %v5508 = vadd.f32 %v5467, %v5487
      %v5509 = vadd.f32 %v5468, %v5487
      %v5510 = vadd.f32 %v5469, %v5487
      %v5511 = vadd.f32 %v5470, %v5487
      %v5512 = vadd.f32 %v5471, %v5487
      %v5513 = vadd.f32 %v5472, %v5487
      %v5514 = vadd.f32 %v5473, %v5487
      %v5515 = vadd.f32 %v5474, %v5487
      %v5516 = vadd.f32 %v5475, %v5487
      %v5517 = vadd.f32 %v5476, %v5487
      %v5518 = vadd.f32 %v5477, %v5487
      %v5519 = vadd.f32 %v5478, %v5487
      %v5520 = vadd.f32 %v5479, %v5487
      %v5521 = vadd.f32 %v5480, %v5487
      %v5522 = vadd.f32 %v5481, %v5487
      %v5523 = vadd.f32 %v5482, %v5487
      %5524 = vst.msk [vmem:[%s298] sm:$0xff] %vm376, %v5488
      %5525 = vst.msk [vmem:[%s298 + $0x8] sm:$0xff] %vm376, %v5489
      %5526 = vst.msk [vmem:[%s298 + $0x10] sm:$0xff] %vm376, %v5490
      %5527 = vst.msk [vmem:[%s298 + $0x18] sm:$0xff] %vm376, %v5491
      %5528 = vst.msk [vmem:[%s298 + $0x20] sm:$0xff] %vm376, %v5492
      %5529 = vst.msk [vmem:[%s298 + $0x28] sm:$0xff] %vm376, %v5493
      %5530 = vst.msk [vmem:[%s298 + $0x30] sm:$0xff] %vm376, %v5494
      %5531 = vst.msk [vmem:[%s298 + $0x38] sm:$0xff] %vm376, %v5495
      %5532 = vst.msk [vmem:[%s298 + $0x40] sm:$0xff] %vm376, %v5496
      %5533 = vst.msk [vmem:[%s298 + $0x48] sm:$0xff] %vm376, %v5497
      %5534 = vst.msk [vmem:[%s298 + $0x50] sm:$0xff] %vm376, %v5498
      %5535 = vst.msk [vmem:[%s298 + $0x58] sm:$0xff] %vm376, %v5499
      %5536 = vst.msk [vmem:[%s298 + $0x60] sm:$0xff] %vm376, %v5500
      %5537 = vst.msk [vmem:[%s298 + $0x68] sm:$0xff] %vm376, %v5501
      %5538 = vst.msk [vmem:[%s298 + $0x70] sm:$0xff] %vm376, %v5502
      %5539 = vst.msk [vmem:[%s298 + $0x78] sm:$0xff] %vm376, %v5503
      %5540 = vst.msk [vmem:[%s298 + $0x80] sm:$0xff] %vm376, %v5504
      %5541 = vst.msk [vmem:[%s298 + $0x88] sm:$0xff] %vm376, %v5505
      %5542 = vst.msk [vmem:[%s298 + $0x90] sm:$0xff] %vm376, %v5506
      %5543 = vst.msk [vmem:[%s298 + $0x98] sm:$0xff] %vm376, %v5507
      %5544 = vst.msk [vmem:[%s298 + $0xa0] sm:$0xff] %vm376, %v5508
      %5545 = vst.msk [vmem:[%s298 + $0xa8] sm:$0xff] %vm376, %v5509
      %5546 = vst.msk [vmem:[%s298 + $0xb0] sm:$0xff] %vm376, %v5510
      %5547 = vst.msk [vmem:[%s298 + $0xb8] sm:$0xff] %vm376, %v5511
      %5548 = vst.msk [vmem:[%s298 + $0xc0] sm:$0xff] %vm376, %v5512
      %5549 = vst.msk [vmem:[%s298 + $0xc8] sm:$0xff] %vm376, %v5513
      %5550 = vst.msk [vmem:[%s298 + $0xd0] sm:$0xff] %vm376, %v5514
      %5551 = vst.msk [vmem:[%s298 + $0xd8] sm:$0xff] %vm376, %v5515
      %5552 = vst.msk [vmem:[%s298 + $0xe0] sm:$0xff] %vm376, %v5516
      %5553 = vst.msk [vmem:[%s298 + $0xe8] sm:$0xff] %vm376, %v5517
      %5554 = vst.msk [vmem:[%s298 + $0xf0] sm:$0xff] %vm376, %v5518
      %5555 = vst.msk [vmem:[%s298 + $0xf8] sm:$0xff] %vm376, %v5519
      %5556 = vst.msk [vmem:[%s298 + $0x100] sm:$0xff] %vm376, %v5520
      %5557 = vst.msk [vmem:[%s298 + $0x108] sm:$0xff] %vm376, %v5521
      %5558 = vst.msk [vmem:[%s298 + $0x110] sm:$0xff] %vm376, %v5522
      %5559 = vst.msk [vmem:[%s298 + $0x118] sm:$0xff] %vm376, %v5523
      %p5560 = scmp.lt.s32.totalorder %s18, 1
      %s5561 = scalar_select %p5560, %s18, 1
      %s5562 = smul.addr %s5561, 36
      %s5563 = smul.addr %s5562, 8
      %s5564 = scalar_lea.vmem %s7, %s5563
      // Predicated region
      $region49: #{resnet_block_forward.3} parent=47 // pred_check
        %p5565 = pneg %p193
      $region50: #{resnet_block_forward.3} parent=47 // pred_check_branch
        %5567 = sbr.rel (%p5565) target = $region52
      $region51: #{resnet_block_forward.3} parent=47 // pred_region
        _
      $region52: #{resnet_block_forward.3} parent=47 // pred_fallthru
        _
    $region48: #{resnet_block_forward.3} parent=5 // pred_fallthru
      _
    %p5568 = scmp.le.s32.totalorder 2, %s13
    // Predicated region
    $region53: #{resnet_block_forward.3} parent=5 // pred_check
      %p5569 = pneg %p5568
    $region54: #{resnet_block_forward.3} parent=5 // pred_check_branch
      %5571 = sbr.rel (%p5569) target = $region56
    $region55: #{resnet_block_forward.3} parent=5 // pred_region
      %s5572 = ssub.s32 %s13, 2
      // Predicated region
      $region57: #{resnet_block_forward.3} parent=55 // pred_check
        %p5573 = pneg %p199
      $region58: #{resnet_block_forward.3} parent=55 // pred_check_branch
        %5575 = sbr.rel (%p5573) target = $region60
      $region59: #{resnet_block_forward.3} parent=55 // pred_region
        %p5576 = scmp.lt.s32.totalorder %s19, 1
        %s5577 = scalar_select %p5576, %s19, 1
        %s5578 = smul.addr %s5577, 36
        %s5579 = smul.addr %s5578, 8
        %s5580 = scalar_lea.vmem %s7, %s5579
      $region60: #{resnet_block_forward.3} parent=55 // pred_fallthru
        _
    $region56: #{resnet_block_forward.3} parent=5 // pred_fallthru
      _
  $region6: #{resnet_block_forward.3} parent=0 // loop_footer
    %s17 = sadd.s32 1, %s13
  $region7: #{resnet_block_forward.3} parent=0 // loop_footer_branch
    %12 = sbr.rel target = $region3
  $region8: #{resnet_block_forward.3} parent=0 // loop_exit
    _

</llo_original>
